<compile_context>
chip_gen: v5e
topology: v5e:2x2
jax: 0.10.0
libtpu: 0.0.40
codegen_flags: <defaults>
</compile_context>

<pallas_src>
import functools

import jax
import jax.numpy as jnp
from jax.experimental import pallas as pl
from jax.experimental.pallas import tpu as pltpu


# ----------------------------------------------------------------------------
# In-kernel building blocks
# ----------------------------------------------------------------------------
def _tap_group_size(cin):
    """How many of the 9 taps to concatenate along K per MXU matmul.

    Keeps K = group*Cin roughly in [128, 768]: big enough to feed the MXU's
    native K (128 on v5e, 256 on v6e/v7x), small enough that the materialized
    patch is at most ~3x the input tile (the old full im2col was 9x and blew
    v7x's 64 MiB VMEM at real model sizes)."""
    if cin >= 256:
        return 1          # per-tap accumulated dots
    if cin >= 64:
        return 3          # one dy-row of taps per matmul
    return 9              # tiny Cin: full im2col still pays for itself


def _conv3x3_mxu(x, w_ref, b_ref, *, relu):
    """3x3 stride-1 'same' conv of an (H, W, Cin) tile, MXU matmuls, f32 out.

    Zero padding is built in VMEM in bf16: one zero row above/below
    (leading-axis concat) and a 16-column zero apron left/right so the
    sublane-axis concat stays aligned for bf16 packing.  The 9 taps are
    plain static slices of the widened slab, grouped along channels and
    multiplied against the matching rows of the (9*Cin, Cout) bf16 weight
    matrix with f32 accumulation.

    relu=True applies ReLU to the input first; zero padding commutes with
    ReLU (relu(0) == 0), matching PyTorch's conv(relu(x))."""
    H, W, cin = x.shape
    cout = b_ref.shape[-1]

    xb = x.astype(jnp.bfloat16)
    if relu:
        xb = jnp.maximum(xb, 0)

    zrow = jnp.zeros((1, W, cin), jnp.bfloat16)
    xh = jnp.concatenate([zrow, xb, zrow], axis=0)            # (H+2, W, Cin)
    ap = 16                                                   # bf16-aligned apron
    zcol = jnp.zeros((H + 2, ap, cin), jnp.bfloat16)
    wide = jnp.concatenate([zcol, xh, zcol], axis=1)          # (H+2, W+2*ap, Cin)

    g = _tap_group_size(cin)
    taps = [(dy, dx) for dy in range(3) for dx in range(3)]   # dy-major == weight order
    acc = jnp.zeros((H * W, cout), jnp.float32)
    for gi in range(9 // g):
        cols = []
        for dy, dx in taps[gi * g:(gi + 1) * g]:
            # tap offset (dy-1, dx-1): rows dy..dy+H, cols (ap-1+dx)..(+W)
            cols.append(wide[dy:dy + H, ap - 1 + dx:ap - 1 + dx + W, :]
                        .reshape(H * W, cin))
        patch = cols[0] if g == 1 else jnp.concatenate(cols, axis=1)
        wk = w_ref[pl.ds(gi * g * cin, g * cin), :]           # matching weight rows
        acc = acc + jnp.dot(patch, wk, preferred_element_type=jnp.float32)
    return (acc + b_ref[...]).reshape(H, W, cout)             # bias fused, f32 out


def _upsample2x_bilinear(p):
    """2x bilinear upsample (align_corners=False) of an (h, w, c) f32 tile.

    Separable fixed stencil, edge-clamped, fully in VMEM:
      out[2i]   = 0.75*x[i] + 0.25*x[i-1]
      out[2i+1] = 0.75*x[i] + 0.25*x[i+1]
    applied along H then W (matches PyTorch F.interpolate, scale_factor=2)."""
    h, w, c = p.shape
    prev = jnp.concatenate([p[:1], p[:-1]], axis=0)
    nxt = jnp.concatenate([p[1:], p[-1:]], axis=0)
    ph = jnp.stack([0.75 * p + 0.25 * prev, 0.75 * p + 0.25 * nxt],
                   axis=1).reshape(2 * h, w, c)
    prev = jnp.concatenate([ph[:, :1], ph[:, :-1]], axis=1)
    nxt = jnp.concatenate([ph[:, 1:], ph[:, -1:]], axis=1)
    return jnp.stack([0.75 * ph + 0.25 * prev, 0.75 * ph + 0.25 * nxt],
                     axis=2).reshape(2 * h, 2 * w, c)


# ----------------------------------------------------------------------------
# Fused kernel: whole Refine forward for one batch element
# ----------------------------------------------------------------------------
def _refine_kernel(f_ref, pm_ref,
                   wcf_ref, bcf_ref, w1f_ref, b1f_ref, w2f_ref, b2f_ref,
                   w1m_ref, b1m_ref, w2m_ref, b2m_ref,
                   o_ref, s_buf, m0_buf):
    """f_ref: (1,H,W,Cin) bf16, pm_ref: (1,H/2,W/2,Cp) f32, o_ref: (1,H,W,Cp) f32.
    s_buf / m0_buf: (H,W,Cp) f32 VMEM scratch for the residual-carrying tensors."""
    # ---- stage 1: s = ResFS(convFS(f)), entirely in VMEM ----
    s_buf[...] = _conv3x3_mxu(f_ref[0], wcf_ref, bcf_ref, relu=False)   # convFS(f)
    r = _conv3x3_mxu(s_buf[...], w1f_ref, b1f_ref, relu=True)           # conv1(relu)
    r = _conv3x3_mxu(r, w2f_ref, b2f_ref, relu=True)                    # conv2(relu)
    s = s_buf[...] + r                                                  # f32 residual

    # ---- fused 2x bilinear upsample of pm + residual merge ----
    m0_buf[...] = s + _upsample2x_bilinear(pm_ref[0].astype(jnp.float32))

    # ---- stage 2: m = ResMM(m0) ----
    r = _conv3x3_mxu(m0_buf[...], w1m_ref, b1m_ref, relu=True)
    r = _conv3x3_mxu(r, w2m_ref, b2m_ref, relu=True)
    o_ref[0] = (m0_buf[...] + r).astype(o_ref.dtype)


# ----------------------------------------------------------------------------
# pallas_call wrapper
# ----------------------------------------------------------------------------
def _vmem_limit_bytes():
    """Generation-aware scoped-VMEM limit: ~3/4 of physical, capped at 100 MiB
    (~96 MiB on v5e/v6e's 128 MiB, ~48 MiB on v7x's 64 MiB)."""
    cap = 128 * 1024 * 1024
    try:
        cap = int(getattr(pltpu.get_tpu_info(), "vmem_capacity_bytes", cap))
    except Exception:  # non-TPU / interpret fallback
        pass
    return max(16 * 1024 * 1024, min(cap * 3 // 4, 100 * 1024 * 1024))


def _refine_call(f, pm, mats):
    N, H, W, cin = f.shape
    planes = mats["bcf"].shape[-1]
    h, w = pm.shape[1], pm.shape[2]
    names = ("wcf", "bcf", "w1f", "b1f", "w2f", "b2f",
             "w1m", "b1m", "w2m", "b2m")
    weights = [mats[k] for k in names]
    weight_specs = [pl.BlockSpec(m.shape, lambda n: (0, 0)) for m in weights]

    return pl.pallas_call(
        _refine_kernel,
        out_shape=jax.ShapeDtypeStruct((N, H, W, planes), jnp.float32),
        grid=(N,),
        in_specs=[pl.BlockSpec((1, H, W, cin), lambda n: (n, 0, 0, 0)),
                  pl.BlockSpec((1, h, w, planes), lambda n: (n, 0, 0, 0))]
                 + weight_specs,
        out_specs=pl.BlockSpec((1, H, W, planes), lambda n: (n, 0, 0, 0)),
        scratch_shapes=[pltpu.VMEM((H, W, planes), jnp.float32),
                        pltpu.VMEM((H, W, planes), jnp.float32)],
        compiler_params=pltpu.CompilerParams(
            dimension_semantics=("parallel",),          # batch across megacores
            vmem_limit_bytes=_vmem_limit_bytes()),
    )(f, pm, *weights)


# ----------------------------------------------------------------------------
# Forward wrapper
# ----------------------------------------------------------------------------
def _prep_conv_params(w, b):
    """HWIO (3,3,Cin,Cout) weights -> (9*Cin, Cout) bf16 im2col matrix
    (rows in dy-major, dx, then Cin order); bias -> (1, Cout) f32."""
    cin, cout = w.shape[2], w.shape[3]
    return (w.reshape(9 * cin, cout).astype(jnp.bfloat16),
            b.reshape(1, cout).astype(jnp.float32))


def refine_forward(f, pm, params, *, scale_factor=2):
    """f: (N, inplanes, H, W) f32 NCHW;  pm: (N, planes, H/2, W/2) f32 NCHW."""
    assert scale_factor == 2, "fused stencil upsample implemented for scale_factor=2"
    # TODO(synk): NCHW<->NHWC transposes kept at the module boundary; carrying
    # NHWC through the surrounding model would drop these two full HBM passes.
    f = jnp.transpose(f, (0, 2, 3, 1)).astype(jnp.bfloat16)
    pm = jnp.transpose(pm, (0, 2, 3, 1))        # tiny; kept f32 for accuracy

    wcf, bcf = _prep_conv_params(params["convFS_w"], params["convFS_b"])
    w1f, b1f = _prep_conv_params(params["ResFS"]["w1"], params["ResFS"]["b1"])
    w2f, b2f = _prep_conv_params(params["ResFS"]["w2"], params["ResFS"]["b2"])
    w1m, b1m = _prep_conv_params(params["ResMM"]["w1"], params["ResMM"]["b1"])
    w2m, b2m = _prep_conv_params(params["ResMM"]["w2"], params["ResMM"]["b2"])
    mats = {"wcf": wcf, "bcf": bcf, "w1f": w1f, "b1f": b1f, "w2f": w2f,
            "b2f": b2f, "w1m": w1m, "b1m": b1m, "w2m": w2m, "b2m": b2m}

    m = _refine_call(f, pm, mats)               # f32 (N, H, W, planes)
    return jnp.transpose(m, (0, 3, 1, 2))       # back to NCHW


# ----------------------------------------------------------------------------
# Params + pure-JAX reference (numerical cross-check)
# ----------------------------------------------------------------------------
def _init_conv(key, cin, cout):
    k1, k2 = jax.random.split(key)
    w = jax.random.normal(k1, (3, 3, cin, cout), jnp.float32) * 0.05
    b = jax.random.normal(k2, (cout,), jnp.float32) * 0.05
    return w, b


def init_refine_params(key, inplanes, planes):
    ks = jax.random.split(key, 5)
    convFS_w, convFS_b = _init_conv(ks[0], inplanes, planes)
    fs_w1, fs_b1 = _init_conv(ks[1], planes, planes)
    fs_w2, fs_b2 = _init_conv(ks[2], planes, planes)
    mm_w1, mm_b1 = _init_conv(ks[3], planes, planes)
    mm_w2, mm_b2 = _init_conv(ks[4], planes, planes)
    return {
        "convFS_w": convFS_w, "convFS_b": convFS_b,
        "ResFS": {"w1": fs_w1, "b1": fs_b1, "w2": fs_w2, "b2": fs_b2},
        "ResMM": {"w1": mm_w1, "b1": mm_b1, "w2": mm_w2, "b2": mm_b2},
    }


def _conv3x3_ref(x, w, b):
    y = jax.lax.conv_general_dilated(
        x, w, window_strides=(1, 1), padding=((1, 1), (1, 1)),
        dimension_numbers=("NHWC", "HWIO", "NHWC"),
        precision=jax.lax.Precision.HIGHEST)
    return y + b


def _upsample_bilinear_ref(x, scale):
    N, H, W, C = x.shape

    def coords(out_size, in_size):
        src = (jnp.arange(out_size, dtype=jnp.float32) + 0.5) / scale - 0.5
        src = jnp.clip(src, 0.0, in_size - 1)
        i0 = jnp.floor(src).astype(jnp.int32)
        i1 = jnp.minimum(i0 + 1, in_size - 1)
        t = src - i0.astype(jnp.float32)
        return i0, i1, t

    h0, h1, th = coords(H * scale, H)
    w0, w1, tw = coords(W * scale, W)
    rows = (x[:, h0] * (1.0 - th)[None, :, None, None]
            + x[:, h1] * th[None, :, None, None])
    return (rows[:, :, w0] * (1.0 - tw)[None, None, :, None]
            + rows[:, :, w1] * tw[None, None, :, None])


def refine_forward_ref(f, pm, params, *, scale_factor=2):
    f = jnp.transpose(f, (0, 2, 3, 1))
    pm = jnp.transpose(pm, (0, 2, 3, 1))
    s0 = _conv3x3_ref(f, params["convFS_w"], params["convFS_b"])
    r = _conv3x3_ref(jax.nn.relu(s0), params["ResFS"]["w1"], params["ResFS"]["b1"])
    s = s0 + _conv3x3_ref(jax.nn.relu(r), params["ResFS"]["w2"], params["ResFS"]["b2"])
    m0 = s + _upsample_bilinear_ref(pm, scale_factor)
    r = _conv3x3_ref(jax.nn.relu(m0), params["ResMM"]["w1"], params["ResMM"]["b1"])
    m = m0 + _conv3x3_ref(jax.nn.relu(r), params["ResMM"]["w2"], params["ResMM"]["b2"])
    return jnp.transpose(m, (0, 3, 1, 2))


if __name__ == "__main__":
    key = jax.random.PRNGKey(0)
    # Lane-aligned channel counts (the real model uses inplanes in {512, 1024},
    # planes=256); small spatial extent keeps the demo tiny.
    N, inplanes, planes, H, W, scale = 2, 128, 128, 16, 16, 2

    k_f, k_pm, k_p = jax.random.split(key, 3)
    f = jax.random.normal(k_f, (N, inplanes, H, W), jnp.float32)
    pm = jax.random.normal(k_pm, (N, planes, H // scale, W // scale), jnp.float32)
    params = init_refine_params(k_p, inplanes, planes)

    fwd = jax.jit(functools.partial(refine_forward, scale_factor=scale))
    out = fwd(f, pm, params)
    jax.block_until_ready(out)

    assert out.shape == (N, planes, H, W), out.shape
    assert out.dtype == jnp.float32

    # Cross-check vs. an all-f32 XLA reference (kernel uses bf16 MXU operands
    # and a bf16 HBM copy of f, so allow a few-percent deviation).
    ref = refine_forward_ref(f, pm, params, scale_factor=scale)
    max_ref = float(jnp.max(jnp.abs(ref)))
    err = float(jnp.max(jnp.abs(out - ref)))
    assert err <= 0.05 * max_ref + 1e-3, (err, max_ref)

    print("KERNEL_OK")
</pallas_src>

<mosaic_0001>
module attributes {stable_mosaic.version = 11 : i64} {
  func.func @_refine_kernel(%arg0: i32, %arg1: memref<1x16x16x128xbf16, #tpu.memory_space<vmem>>, %arg2: memref<1x8x8x128xf32, #tpu.memory_space<vmem>>, %arg3: memref<1152x128xbf16, #tpu.memory_space<vmem>>, %arg4: memref<1x128xf32, #tpu.memory_space<vmem>>, %arg5: memref<1152x128xbf16, #tpu.memory_space<vmem>>, %arg6: memref<1x128xf32, #tpu.memory_space<vmem>>, %arg7: memref<1152x128xbf16, #tpu.memory_space<vmem>>, %arg8: memref<1x128xf32, #tpu.memory_space<vmem>>, %arg9: memref<1152x128xbf16, #tpu.memory_space<vmem>>, %arg10: memref<1x128xf32, #tpu.memory_space<vmem>>, %arg11: memref<1152x128xbf16, #tpu.memory_space<vmem>>, %arg12: memref<1x128xf32, #tpu.memory_space<vmem>>, %arg13: memref<1x16x16x128xf32, #tpu.memory_space<vmem>>, %arg14: memref<16x16x128xf32, #tpu.memory_space<vmem>>, %arg15: memref<16x16x128xf32, #tpu.memory_space<vmem>>) attributes {dimension_semantics = [#tpu.dimension_semantics<parallel>], iteration_bounds = array<i64: 2>, scalar_prefetch = 0 : i64, scratch_operands = 2 : i64, tpu.core_type = #tpu.core_type<tc>, window_params = [{transform_indices = @transform_0, window_bounds = array<i64: 1, 16, 16, 128>}, {transform_indices = @transform_1, window_bounds = array<i64: 1, 8, 8, 128>}, {pipeline_mode = #tpu.pipeline_mode<synchronous>, transform_indices = @transform_2, window_bounds = array<i64: 1152, 128>}, {pipeline_mode = #tpu.pipeline_mode<synchronous>, transform_indices = @transform_3, window_bounds = array<i64: 1, 128>}, {pipeline_mode = #tpu.pipeline_mode<synchronous>, transform_indices = @transform_4, window_bounds = array<i64: 1152, 128>}, {pipeline_mode = #tpu.pipeline_mode<synchronous>, transform_indices = @transform_5, window_bounds = array<i64: 1, 128>}, {pipeline_mode = #tpu.pipeline_mode<synchronous>, transform_indices = @transform_6, window_bounds = array<i64: 1152, 128>}, {pipeline_mode = #tpu.pipeline_mode<synchronous>, transform_indices = @transform_7, window_bounds = array<i64: 1, 128>}, {pipeline_mode = #tpu.pipeline_mode<synchronous>, transform_indices = @transform_8, window_bounds = array<i64: 1152, 128>}, {pipeline_mode = #tpu.pipeline_mode<synchronous>, transform_indices = @transform_9, window_bounds = array<i64: 1, 128>}, {pipeline_mode = #tpu.pipeline_mode<synchronous>, transform_indices = @transform_10, window_bounds = array<i64: 1152, 128>}, {pipeline_mode = #tpu.pipeline_mode<synchronous>, transform_indices = @transform_11, window_bounds = array<i64: 1, 128>}, {transform_indices = @transform_12, window_bounds = array<i64: 1, 16, 16, 128>}]} {
    %c0 = arith.constant 0 : index
    %c0_0 = arith.constant 0 : index
    %c0_1 = arith.constant 0 : index
    %c0_2 = arith.constant 0 : index
    %0 = vector.load %arg1[%c0, %c0_0, %c0_1, %c0_2] : memref<1x16x16x128xbf16, #tpu.memory_space<vmem>>, vector<1x16x16x128xbf16>
    %1 = vector.shape_cast %0 : vector<1x16x16x128xbf16> to vector<16x16x128xbf16>
    %cst = arith.constant 0.000000e+00 : bf16
    %2 = vector.broadcast %cst : bf16 to vector<1x16x128xbf16>
    %3 = tpu.concatenate %2, %1, %2 in 0 : vector<1x16x128xbf16>, vector<16x16x128xbf16>, vector<1x16x128xbf16> -> vector<18x16x128xbf16>
    %cst_3 = arith.constant 0.000000e+00 : bf16
    %4 = vector.broadcast %cst_3 : bf16 to vector<18x16x128xbf16>
    %5 = tpu.concatenate %4, %3, %4 in 1 : vector<18x16x128xbf16>, vector<18x16x128xbf16>, vector<18x16x128xbf16> -> vector<18x48x128xbf16>
    %cst_4 = arith.constant 0.000000e+00 : f32
    %6 = vector.broadcast %cst_4 : f32 to vector<256x128xf32>
    %7 = vector.extract_strided_slice %5 {offsets = [0, 15, 0], sizes = [16, 16, 128], strides = [1, 1, 1]} : vector<18x48x128xbf16> to vector<16x16x128xbf16>
    %8 = vector.shape_cast %7 : vector<16x16x128xbf16> to vector<256x128xbf16>
    %9 = vector.extract_strided_slice %5 {offsets = [0, 16, 0], sizes = [16, 16, 128], strides = [1, 1, 1]} : vector<18x48x128xbf16> to vector<16x16x128xbf16>
    %10 = vector.shape_cast %9 : vector<16x16x128xbf16> to vector<256x128xbf16>
    %11 = vector.extract_strided_slice %5 {offsets = [0, 17, 0], sizes = [16, 16, 128], strides = [1, 1, 1]} : vector<18x48x128xbf16> to vector<16x16x128xbf16>
    %12 = vector.shape_cast %11 : vector<16x16x128xbf16> to vector<256x128xbf16>
    %13 = tpu.concatenate %8, %10, %12 in 1 : vector<256x128xbf16>, vector<256x128xbf16>, vector<256x128xbf16> -> vector<256x384xbf16>
    %c0_5 = arith.constant 0 : index
    %c0_6 = arith.constant 0 : index
    %14 = vector.load %arg3[%c0_5, %c0_6] : memref<1152x128xbf16, #tpu.memory_space<vmem>>, vector<384x128xbf16>
    %cst_7 = arith.constant dense<0.000000e+00> : vector<256x128xf32>
    %15 = tpu.matmul %13, %14, %cst_7 {dimension_numbers = #tpu.dot_dimension_numbers<[1], [0], [0], [1], [0, 0, 1, 1], [], []>} : vector<256x384xbf16>, vector<384x128xbf16>, vector<256x128xf32> -> vector<256x128xf32>
    %16 = arith.addf %6, %15 : vector<256x128xf32>
    %17 = vector.extract_strided_slice %5 {offsets = [1, 15, 0], sizes = [16, 16, 128], strides = [1, 1, 1]} : vector<18x48x128xbf16> to vector<16x16x128xbf16>
    %18 = vector.shape_cast %17 : vector<16x16x128xbf16> to vector<256x128xbf16>
    %19 = vector.extract_strided_slice %5 {offsets = [1, 16, 0], sizes = [16, 16, 128], strides = [1, 1, 1]} : vector<18x48x128xbf16> to vector<16x16x128xbf16>
    %20 = vector.shape_cast %19 : vector<16x16x128xbf16> to vector<256x128xbf16>
    %21 = vector.extract_strided_slice %5 {offsets = [1, 17, 0], sizes = [16, 16, 128], strides = [1, 1, 1]} : vector<18x48x128xbf16> to vector<16x16x128xbf16>
    %22 = vector.shape_cast %21 : vector<16x16x128xbf16> to vector<256x128xbf16>
    %23 = tpu.concatenate %18, %20, %22 in 1 : vector<256x128xbf16>, vector<256x128xbf16>, vector<256x128xbf16> -> vector<256x384xbf16>
    %c384 = arith.constant 384 : index
    %c0_8 = arith.constant 0 : index
    %24 = vector.load %arg3[%c384, %c0_8] : memref<1152x128xbf16, #tpu.memory_space<vmem>>, vector<384x128xbf16>
    %cst_9 = arith.constant dense<0.000000e+00> : vector<256x128xf32>
    %25 = tpu.matmul %23, %24, %cst_9 {dimension_numbers = #tpu.dot_dimension_numbers<[1], [0], [0], [1], [0, 0, 1, 1], [], []>} : vector<256x384xbf16>, vector<384x128xbf16>, vector<256x128xf32> -> vector<256x128xf32>
    %26 = arith.addf %16, %25 : vector<256x128xf32>
    %27 = vector.extract_strided_slice %5 {offsets = [2, 15, 0], sizes = [16, 16, 128], strides = [1, 1, 1]} : vector<18x48x128xbf16> to vector<16x16x128xbf16>
    %28 = vector.shape_cast %27 : vector<16x16x128xbf16> to vector<256x128xbf16>
    %29 = vector.extract_strided_slice %5 {offsets = [2, 16, 0], sizes = [16, 16, 128], strides = [1, 1, 1]} : vector<18x48x128xbf16> to vector<16x16x128xbf16>
    %30 = vector.shape_cast %29 : vector<16x16x128xbf16> to vector<256x128xbf16>
    %31 = vector.extract_strided_slice %5 {offsets = [2, 17, 0], sizes = [16, 16, 128], strides = [1, 1, 1]} : vector<18x48x128xbf16> to vector<16x16x128xbf16>
    %32 = vector.shape_cast %31 : vector<16x16x128xbf16> to vector<256x128xbf16>
    %33 = tpu.concatenate %28, %30, %32 in 1 : vector<256x128xbf16>, vector<256x128xbf16>, vector<256x128xbf16> -> vector<256x384xbf16>
    %c768 = arith.constant 768 : index
    %c0_10 = arith.constant 0 : index
    %34 = vector.load %arg3[%c768, %c0_10] : memref<1152x128xbf16, #tpu.memory_space<vmem>>, vector<384x128xbf16>
    %cst_11 = arith.constant dense<0.000000e+00> : vector<256x128xf32>
    %35 = tpu.matmul %33, %34, %cst_11 {dimension_numbers = #tpu.dot_dimension_numbers<[1], [0], [0], [1], [0, 0, 1, 1], [], []>} : vector<256x384xbf16>, vector<384x128xbf16>, vector<256x128xf32> -> vector<256x128xf32>
    %36 = arith.addf %26, %35 : vector<256x128xf32>
    %c0_12 = arith.constant 0 : index
    %c0_13 = arith.constant 0 : index
    %37 = vector.load %arg4[%c0_12, %c0_13] : memref<1x128xf32, #tpu.memory_space<vmem>>, vector<1x128xf32>
    %38 = vector.broadcast %37 : vector<1x128xf32> to vector<256x128xf32>
    %39 = arith.addf %36, %38 : vector<256x128xf32>
    %40 = vector.shape_cast %39 : vector<256x128xf32> to vector<16x16x128xf32>
    %c0_14 = arith.constant 0 : index
    %c0_15 = arith.constant 0 : index
    %c0_16 = arith.constant 0 : index
    %41 = vector.load %arg14[%c0_14, %c0_15, %c0_16] : memref<16x16x128xf32, #tpu.memory_space<vmem>>, vector<16x16x128xf32>
    tpu.vector_store %arg14[%c0_14, %c0_15, %c0_16], %40 {strides = array<i32>} : memref<16x16x128xf32, #tpu.memory_space<vmem>>, vector<16x16x128xf32>,
    %c0_17 = arith.constant 0 : index
    %c0_18 = arith.constant 0 : index
    %c0_19 = arith.constant 0 : index
    %42 = vector.load %arg14[%c0_17, %c0_18, %c0_19] : memref<16x16x128xf32, #tpu.memory_space<vmem>>, vector<16x16x128xf32>
    %43 = arith.truncf %42 : vector<16x16x128xf32> to vector<16x16x128xbf16>
    %cst_20 = arith.constant 0.000000e+00 : bf16
    %44 = vector.broadcast %cst_20 : bf16 to vector<16x16x128xbf16>
    %45 = arith.maximumf %43, %44 : vector<16x16x128xbf16>
    %cst_21 = arith.constant 0.000000e+00 : bf16
    %46 = vector.broadcast %cst_21 : bf16 to vector<1x16x128xbf16>
    %47 = tpu.concatenate %46, %45, %46 in 0 : vector<1x16x128xbf16>, vector<16x16x128xbf16>, vector<1x16x128xbf16> -> vector<18x16x128xbf16>
    %cst_22 = arith.constant 0.000000e+00 : bf16
    %48 = vector.broadcast %cst_22 : bf16 to vector<18x16x128xbf16>
    %49 = tpu.concatenate %48, %47, %48 in 1 : vector<18x16x128xbf16>, vector<18x16x128xbf16>, vector<18x16x128xbf16> -> vector<18x48x128xbf16>
    %cst_23 = arith.constant 0.000000e+00 : f32
    %50 = vector.broadcast %cst_23 : f32 to vector<256x128xf32>
    %51 = vector.extract_strided_slice %49 {offsets = [0, 15, 0], sizes = [16, 16, 128], strides = [1, 1, 1]} : vector<18x48x128xbf16> to vector<16x16x128xbf16>
    %52 = vector.shape_cast %51 : vector<16x16x128xbf16> to vector<256x128xbf16>
    %53 = vector.extract_strided_slice %49 {offsets = [0, 16, 0], sizes = [16, 16, 128], strides = [1, 1, 1]} : vector<18x48x128xbf16> to vector<16x16x128xbf16>
    %54 = vector.shape_cast %53 : vector<16x16x128xbf16> to vector<256x128xbf16>
    %55 = vector.extract_strided_slice %49 {offsets = [0, 17, 0], sizes = [16, 16, 128], strides = [1, 1, 1]} : vector<18x48x128xbf16> to vector<16x16x128xbf16>
    %56 = vector.shape_cast %55 : vector<16x16x128xbf16> to vector<256x128xbf16>
    %57 = tpu.concatenate %52, %54, %56 in 1 : vector<256x128xbf16>, vector<256x128xbf16>, vector<256x128xbf16> -> vector<256x384xbf16>
    %c0_24 = arith.constant 0 : index
    %c0_25 = arith.constant 0 : index
    %58 = vector.load %arg5[%c0_24, %c0_25] : memref<1152x128xbf16, #tpu.memory_space<vmem>>, vector<384x128xbf16>
    %cst_26 = arith.constant dense<0.000000e+00> : vector<256x128xf32>
    %59 = tpu.matmul %57, %58, %cst_26 {dimension_numbers = #tpu.dot_dimension_numbers<[1], [0], [0], [1], [0, 0, 1, 1], [], []>} : vector<256x384xbf16>, vector<384x128xbf16>, vector<256x128xf32> -> vector<256x128xf32>
    %60 = arith.addf %50, %59 : vector<256x128xf32>
    %61 = vector.extract_strided_slice %49 {offsets = [1, 15, 0], sizes = [16, 16, 128], strides = [1, 1, 1]} : vector<18x48x128xbf16> to vector<16x16x128xbf16>
    %62 = vector.shape_cast %61 : vector<16x16x128xbf16> to vector<256x128xbf16>
    %63 = vector.extract_strided_slice %49 {offsets = [1, 16, 0], sizes = [16, 16, 128], strides = [1, 1, 1]} : vector<18x48x128xbf16> to vector<16x16x128xbf16>
    %64 = vector.shape_cast %63 : vector<16x16x128xbf16> to vector<256x128xbf16>
    %65 = vector.extract_strided_slice %49 {offsets = [1, 17, 0], sizes = [16, 16, 128], strides = [1, 1, 1]} : vector<18x48x128xbf16> to vector<16x16x128xbf16>
    %66 = vector.shape_cast %65 : vector<16x16x128xbf16> to vector<256x128xbf16>
    %67 = tpu.concatenate %62, %64, %66 in 1 : vector<256x128xbf16>, vector<256x128xbf16>, vector<256x128xbf16> -> vector<256x384xbf16>
    %c384_27 = arith.constant 384 : index
    %c0_28 = arith.constant 0 : index
    %68 = vector.load %arg5[%c384_27, %c0_28] : memref<1152x128xbf16, #tpu.memory_space<vmem>>, vector<384x128xbf16>
    %cst_29 = arith.constant dense<0.000000e+00> : vector<256x128xf32>
    %69 = tpu.matmul %67, %68, %cst_29 {dimension_numbers = #tpu.dot_dimension_numbers<[1], [0], [0], [1], [0, 0, 1, 1], [], []>} : vector<256x384xbf16>, vector<384x128xbf16>, vector<256x128xf32> -> vector<256x128xf32>
    %70 = arith.addf %60, %69 : vector<256x128xf32>
    %71 = vector.extract_strided_slice %49 {offsets = [2, 15, 0], sizes = [16, 16, 128], strides = [1, 1, 1]} : vector<18x48x128xbf16> to vector<16x16x128xbf16>
    %72 = vector.shape_cast %71 : vector<16x16x128xbf16> to vector<256x128xbf16>
    %73 = vector.extract_strided_slice %49 {offsets = [2, 16, 0], sizes = [16, 16, 128], strides = [1, 1, 1]} : vector<18x48x128xbf16> to vector<16x16x128xbf16>
    %74 = vector.shape_cast %73 : vector<16x16x128xbf16> to vector<256x128xbf16>
    %75 = vector.extract_strided_slice %49 {offsets = [2, 17, 0], sizes = [16, 16, 128], strides = [1, 1, 1]} : vector<18x48x128xbf16> to vector<16x16x128xbf16>
    %76 = vector.shape_cast %75 : vector<16x16x128xbf16> to vector<256x128xbf16>
    %77 = tpu.concatenate %72, %74, %76 in 1 : vector<256x128xbf16>, vector<256x128xbf16>, vector<256x128xbf16> -> vector<256x384xbf16>
    %c768_30 = arith.constant 768 : index
    %c0_31 = arith.constant 0 : index
    %78 = vector.load %arg5[%c768_30, %c0_31] : memref<1152x128xbf16, #tpu.memory_space<vmem>>, vector<384x128xbf16>
    %cst_32 = arith.constant dense<0.000000e+00> : vector<256x128xf32>
    %79 = tpu.matmul %77, %78, %cst_32 {dimension_numbers = #tpu.dot_dimension_numbers<[1], [0], [0], [1], [0, 0, 1, 1], [], []>} : vector<256x384xbf16>, vector<384x128xbf16>, vector<256x128xf32> -> vector<256x128xf32>
    %80 = arith.addf %70, %79 : vector<256x128xf32>
    %c0_33 = arith.constant 0 : index
    %c0_34 = arith.constant 0 : index
    %81 = vector.load %arg6[%c0_33, %c0_34] : memref<1x128xf32, #tpu.memory_space<vmem>>, vector<1x128xf32>
    %82 = vector.broadcast %81 : vector<1x128xf32> to vector<256x128xf32>
    %83 = arith.addf %80, %82 : vector<256x128xf32>
    %84 = vector.shape_cast %83 : vector<256x128xf32> to vector<16x16x128xf32>
    %85 = arith.truncf %84 : vector<16x16x128xf32> to vector<16x16x128xbf16>
    %cst_35 = arith.constant 0.000000e+00 : bf16
    %86 = vector.broadcast %cst_35 : bf16 to vector<16x16x128xbf16>
    %87 = arith.maximumf %85, %86 : vector<16x16x128xbf16>
    %cst_36 = arith.constant 0.000000e+00 : bf16
    %88 = vector.broadcast %cst_36 : bf16 to vector<1x16x128xbf16>
    %89 = tpu.concatenate %88, %87, %88 in 0 : vector<1x16x128xbf16>, vector<16x16x128xbf16>, vector<1x16x128xbf16> -> vector<18x16x128xbf16>
    %cst_37 = arith.constant 0.000000e+00 : bf16
    %90 = vector.broadcast %cst_37 : bf16 to vector<18x16x128xbf16>
    %91 = tpu.concatenate %90, %89, %90 in 1 : vector<18x16x128xbf16>, vector<18x16x128xbf16>, vector<18x16x128xbf16> -> vector<18x48x128xbf16>
    %cst_38 = arith.constant 0.000000e+00 : f32
    %92 = vector.broadcast %cst_38 : f32 to vector<256x128xf32>
    %93 = vector.extract_strided_slice %91 {offsets = [0, 15, 0], sizes = [16, 16, 128], strides = [1, 1, 1]} : vector<18x48x128xbf16> to vector<16x16x128xbf16>
    %94 = vector.shape_cast %93 : vector<16x16x128xbf16> to vector<256x128xbf16>
    %95 = vector.extract_strided_slice %91 {offsets = [0, 16, 0], sizes = [16, 16, 128], strides = [1, 1, 1]} : vector<18x48x128xbf16> to vector<16x16x128xbf16>
    %96 = vector.shape_cast %95 : vector<16x16x128xbf16> to vector<256x128xbf16>
    %97 = vector.extract_strided_slice %91 {offsets = [0, 17, 0], sizes = [16, 16, 128], strides = [1, 1, 1]} : vector<18x48x128xbf16> to vector<16x16x128xbf16>
    %98 = vector.shape_cast %97 : vector<16x16x128xbf16> to vector<256x128xbf16>
    %99 = tpu.concatenate %94, %96, %98 in 1 : vector<256x128xbf16>, vector<256x128xbf16>, vector<256x128xbf16> -> vector<256x384xbf16>
    %c0_39 = arith.constant 0 : index
    %c0_40 = arith.constant 0 : index
    %100 = vector.load %arg7[%c0_39, %c0_40] : memref<1152x128xbf16, #tpu.memory_space<vmem>>, vector<384x128xbf16>
    %cst_41 = arith.constant dense<0.000000e+00> : vector<256x128xf32>
    %101 = tpu.matmul %99, %100, %cst_41 {dimension_numbers = #tpu.dot_dimension_numbers<[1], [0], [0], [1], [0, 0, 1, 1], [], []>} : vector<256x384xbf16>, vector<384x128xbf16>, vector<256x128xf32> -> vector<256x128xf32>
    %102 = arith.addf %92, %101 : vector<256x128xf32>
    %103 = vector.extract_strided_slice %91 {offsets = [1, 15, 0], sizes = [16, 16, 128], strides = [1, 1, 1]} : vector<18x48x128xbf16> to vector<16x16x128xbf16>
    %104 = vector.shape_cast %103 : vector<16x16x128xbf16> to vector<256x128xbf16>
    %105 = vector.extract_strided_slice %91 {offsets = [1, 16, 0], sizes = [16, 16, 128], strides = [1, 1, 1]} : vector<18x48x128xbf16> to vector<16x16x128xbf16>
    %106 = vector.shape_cast %105 : vector<16x16x128xbf16> to vector<256x128xbf16>
    %107 = vector.extract_strided_slice %91 {offsets = [1, 17, 0], sizes = [16, 16, 128], strides = [1, 1, 1]} : vector<18x48x128xbf16> to vector<16x16x128xbf16>
    %108 = vector.shape_cast %107 : vector<16x16x128xbf16> to vector<256x128xbf16>
    %109 = tpu.concatenate %104, %106, %108 in 1 : vector<256x128xbf16>, vector<256x128xbf16>, vector<256x128xbf16> -> vector<256x384xbf16>
    %c384_42 = arith.constant 384 : index
    %c0_43 = arith.constant 0 : index
    %110 = vector.load %arg7[%c384_42, %c0_43] : memref<1152x128xbf16, #tpu.memory_space<vmem>>, vector<384x128xbf16>
    %cst_44 = arith.constant dense<0.000000e+00> : vector<256x128xf32>
    %111 = tpu.matmul %109, %110, %cst_44 {dimension_numbers = #tpu.dot_dimension_numbers<[1], [0], [0], [1], [0, 0, 1, 1], [], []>} : vector<256x384xbf16>, vector<384x128xbf16>, vector<256x128xf32> -> vector<256x128xf32>
    %112 = arith.addf %102, %111 : vector<256x128xf32>
    %113 = vector.extract_strided_slice %91 {offsets = [2, 15, 0], sizes = [16, 16, 128], strides = [1, 1, 1]} : vector<18x48x128xbf16> to vector<16x16x128xbf16>
    %114 = vector.shape_cast %113 : vector<16x16x128xbf16> to vector<256x128xbf16>
    %115 = vector.extract_strided_slice %91 {offsets = [2, 16, 0], sizes = [16, 16, 128], strides = [1, 1, 1]} : vector<18x48x128xbf16> to vector<16x16x128xbf16>
    %116 = vector.shape_cast %115 : vector<16x16x128xbf16> to vector<256x128xbf16>
    %117 = vector.extract_strided_slice %91 {offsets = [2, 17, 0], sizes = [16, 16, 128], strides = [1, 1, 1]} : vector<18x48x128xbf16> to vector<16x16x128xbf16>
    %118 = vector.shape_cast %117 : vector<16x16x128xbf16> to vector<256x128xbf16>
    %119 = tpu.concatenate %114, %116, %118 in 1 : vector<256x128xbf16>, vector<256x128xbf16>, vector<256x128xbf16> -> vector<256x384xbf16>
    %c768_45 = arith.constant 768 : index
    %c0_46 = arith.constant 0 : index
    %120 = vector.load %arg7[%c768_45, %c0_46] : memref<1152x128xbf16, #tpu.memory_space<vmem>>, vector<384x128xbf16>
    %cst_47 = arith.constant dense<0.000000e+00> : vector<256x128xf32>
    %121 = tpu.matmul %119, %120, %cst_47 {dimension_numbers = #tpu.dot_dimension_numbers<[1], [0], [0], [1], [0, 0, 1, 1], [], []>} : vector<256x384xbf16>, vector<384x128xbf16>, vector<256x128xf32> -> vector<256x128xf32>
    %122 = arith.addf %112, %121 : vector<256x128xf32>
    %c0_48 = arith.constant 0 : index
    %c0_49 = arith.constant 0 : index
    %123 = vector.load %arg8[%c0_48, %c0_49] : memref<1x128xf32, #tpu.memory_space<vmem>>, vector<1x128xf32>
    %124 = vector.broadcast %123 : vector<1x128xf32> to vector<256x128xf32>
    %125 = arith.addf %122, %124 : vector<256x128xf32>
    %126 = vector.shape_cast %125 : vector<256x128xf32> to vector<16x16x128xf32>
    %c0_50 = arith.constant 0 : index
    %c0_51 = arith.constant 0 : index
    %c0_52 = arith.constant 0 : index
    %127 = vector.load %arg14[%c0_50, %c0_51, %c0_52] : memref<16x16x128xf32, #tpu.memory_space<vmem>>, vector<16x16x128xf32>
    %128 = arith.addf %127, %126 : vector<16x16x128xf32>
    %c0_53 = arith.constant 0 : index
    %c0_54 = arith.constant 0 : index
    %c0_55 = arith.constant 0 : index
    %c0_56 = arith.constant 0 : index
    %129 = vector.load %arg2[%c0_53, %c0_54, %c0_55, %c0_56] : memref<1x8x8x128xf32, #tpu.memory_space<vmem>>, vector<1x8x8x128xf32>
    %130 = vector.shape_cast %129 : vector<1x8x8x128xf32> to vector<8x8x128xf32>
    %131 = vector.extract_strided_slice %130 {offsets = [0, 0, 0], sizes = [1, 8, 128], strides = [1, 1, 1]} : vector<8x8x128xf32> to vector<1x8x128xf32>
    %132 = vector.extract_strided_slice %130 {offsets = [0, 0, 0], sizes = [7, 8, 128], strides = [1, 1, 1]} : vector<8x8x128xf32> to vector<7x8x128xf32>
    %133 = tpu.concatenate %131, %132 in 0 : vector<1x8x128xf32>, vector<7x8x128xf32> -> vector<8x8x128xf32>
    %134 = vector.extract_strided_slice %130 {offsets = [1, 0, 0], sizes = [7, 8, 128], strides = [1, 1, 1]} : vector<8x8x128xf32> to vector<7x8x128xf32>
    %135 = vector.extract_strided_slice %130 {offsets = [7, 0, 0], sizes = [1, 8, 128], strides = [1, 1, 1]} : vector<8x8x128xf32> to vector<1x8x128xf32>
    %136 = tpu.concatenate %134, %135 in 0 : vector<7x8x128xf32>, vector<1x8x128xf32> -> vector<8x8x128xf32>
    %cst_57 = arith.constant 7.500000e-01 : f32
    %137 = vector.broadcast %cst_57 : f32 to vector<8x8x128xf32>
    %138 = arith.mulf %137, %130 : vector<8x8x128xf32>
    %cst_58 = arith.constant 2.500000e-01 : f32
    %139 = vector.broadcast %cst_58 : f32 to vector<8x8x128xf32>
    %140 = arith.mulf %139, %133 : vector<8x8x128xf32>
    %141 = arith.addf %138, %140 : vector<8x8x128xf32>
    %cst_59 = arith.constant 7.500000e-01 : f32
    %142 = vector.broadcast %cst_59 : f32 to vector<8x8x128xf32>
    %143 = arith.mulf %142, %130 : vector<8x8x128xf32>
    %cst_60 = arith.constant 2.500000e-01 : f32
    %144 = vector.broadcast %cst_60 : f32 to vector<8x8x128xf32>
    %145 = arith.mulf %144, %136 : vector<8x8x128xf32>
    %146 = arith.addf %143, %145 : vector<8x8x128xf32>
    %147 = vector.shape_cast %141 : vector<8x8x128xf32> to vector<8x1x8x128xf32>
    %148 = vector.shape_cast %146 : vector<8x8x128xf32> to vector<8x1x8x128xf32>
    %149 = tpu.concatenate %147, %148 in 1 : vector<8x1x8x128xf32>, vector<8x1x8x128xf32> -> vector<8x2x8x128xf32>
    %150 = vector.shape_cast %149 : vector<8x2x8x128xf32> to vector<16x8x128xf32>
    %151 = vector.extract_strided_slice %150 {offsets = [0, 0, 0], sizes = [16, 1, 128], strides = [1, 1, 1]} : vector<16x8x128xf32> to vector<16x1x128xf32>
    %152 = vector.extract_strided_slice %150 {offsets = [0, 0, 0], sizes = [16, 7, 128], strides = [1, 1, 1]} : vector<16x8x128xf32> to vector<16x7x128xf32>
    %153 = tpu.concatenate %151, %152 in 1 : vector<16x1x128xf32>, vector<16x7x128xf32> -> vector<16x8x128xf32>
    %154 = vector.extract_strided_slice %150 {offsets = [0, 1, 0], sizes = [16, 7, 128], strides = [1, 1, 1]} : vector<16x8x128xf32> to vector<16x7x128xf32>
    %155 = vector.extract_strided_slice %150 {offsets = [0, 7, 0], sizes = [16, 1, 128], strides = [1, 1, 1]} : vector<16x8x128xf32> to vector<16x1x128xf32>
    %156 = tpu.concatenate %154, %155 in 1 : vector<16x7x128xf32>, vector<16x1x128xf32> -> vector<16x8x128xf32>
    %cst_61 = arith.constant 7.500000e-01 : f32
    %157 = vector.broadcast %cst_61 : f32 to vector<16x8x128xf32>
    %158 = arith.mulf %157, %150 : vector<16x8x128xf32>
    %cst_62 = arith.constant 2.500000e-01 : f32
    %159 = vector.broadcast %cst_62 : f32 to vector<16x8x128xf32>
    %160 = arith.mulf %159, %153 : vector<16x8x128xf32>
    %161 = arith.addf %158, %160 : vector<16x8x128xf32>
    %cst_63 = arith.constant 7.500000e-01 : f32
    %162 = vector.broadcast %cst_63 : f32 to vector<16x8x128xf32>
    %163 = arith.mulf %162, %150 : vector<16x8x128xf32>
    %cst_64 = arith.constant 2.500000e-01 : f32
    %164 = vector.broadcast %cst_64 : f32 to vector<16x8x128xf32>
    %165 = arith.mulf %164, %156 : vector<16x8x128xf32>
    %166 = arith.addf %163, %165 : vector<16x8x128xf32>
    %167 = vector.shape_cast %161 : vector<16x8x128xf32> to vector<16x8x1x128xf32>
    %168 = vector.shape_cast %166 : vector<16x8x128xf32> to vector<16x8x1x128xf32>
    %169 = tpu.concatenate %167, %168 in 2 : vector<16x8x1x128xf32>, vector<16x8x1x128xf32> -> vector<16x8x2x128xf32>
    %170 = vector.shape_cast %169 : vector<16x8x2x128xf32> to vector<16x16x128xf32>
    %171 = arith.addf %128, %170 : vector<16x16x128xf32>
    %c0_65 = arith.constant 0 : index
    %c0_66 = arith.constant 0 : index
    %c0_67 = arith.constant 0 : index
    %172 = vector.load %arg15[%c0_65, %c0_66, %c0_67] : memref<16x16x128xf32, #tpu.memory_space<vmem>>, vector<16x16x128xf32>
    tpu.vector_store %arg15[%c0_65, %c0_66, %c0_67], %171 {strides = array<i32>} : memref<16x16x128xf32, #tpu.memory_space<vmem>>, vector<16x16x128xf32>,
    %c0_68 = arith.constant 0 : index
    %c0_69 = arith.constant 0 : index
    %c0_70 = arith.constant 0 : index
    %173 = vector.load %arg15[%c0_68, %c0_69, %c0_70] : memref<16x16x128xf32, #tpu.memory_space<vmem>>, vector<16x16x128xf32>
    %174 = arith.truncf %173 : vector<16x16x128xf32> to vector<16x16x128xbf16>
    %cst_71 = arith.constant 0.000000e+00 : bf16
    %175 = vector.broadcast %cst_71 : bf16 to vector<16x16x128xbf16>
    %176 = arith.maximumf %174, %175 : vector<16x16x128xbf16>
    %cst_72 = arith.constant 0.000000e+00 : bf16
    %177 = vector.broadcast %cst_72 : bf16 to vector<1x16x128xbf16>
    %178 = tpu.concatenate %177, %176, %177 in 0 : vector<1x16x128xbf16>, vector<16x16x128xbf16>, vector<1x16x128xbf16> -> vector<18x16x128xbf16>
    %cst_73 = arith.constant 0.000000e+00 : bf16
    %179 = vector.broadcast %cst_73 : bf16 to vector<18x16x128xbf16>
    %180 = tpu.concatenate %179, %178, %179 in 1 : vector<18x16x128xbf16>, vector<18x16x128xbf16>, vector<18x16x128xbf16> -> vector<18x48x128xbf16>
    %cst_74 = arith.constant 0.000000e+00 : f32
    %181 = vector.broadcast %cst_74 : f32 to vector<256x128xf32>
    %182 = vector.extract_strided_slice %180 {offsets = [0, 15, 0], sizes = [16, 16, 128], strides = [1, 1, 1]} : vector<18x48x128xbf16> to vector<16x16x128xbf16>
    %183 = vector.shape_cast %182 : vector<16x16x128xbf16> to vector<256x128xbf16>
    %184 = vector.extract_strided_slice %180 {offsets = [0, 16, 0], sizes = [16, 16, 128], strides = [1, 1, 1]} : vector<18x48x128xbf16> to vector<16x16x128xbf16>
    %185 = vector.shape_cast %184 : vector<16x16x128xbf16> to vector<256x128xbf16>
    %186 = vector.extract_strided_slice %180 {offsets = [0, 17, 0], sizes = [16, 16, 128], strides = [1, 1, 1]} : vector<18x48x128xbf16> to vector<16x16x128xbf16>
    %187 = vector.shape_cast %186 : vector<16x16x128xbf16> to vector<256x128xbf16>
    %188 = tpu.concatenate %183, %185, %187 in 1 : vector<256x128xbf16>, vector<256x128xbf16>, vector<256x128xbf16> -> vector<256x384xbf16>
    %c0_75 = arith.constant 0 : index
    %c0_76 = arith.constant 0 : index
    %189 = vector.load %arg9[%c0_75, %c0_76] : memref<1152x128xbf16, #tpu.memory_space<vmem>>, vector<384x128xbf16>
    %cst_77 = arith.constant dense<0.000000e+00> : vector<256x128xf32>
    %190 = tpu.matmul %188, %189, %cst_77 {dimension_numbers = #tpu.dot_dimension_numbers<[1], [0], [0], [1], [0, 0, 1, 1], [], []>} : vector<256x384xbf16>, vector<384x128xbf16>, vector<256x128xf32> -> vector<256x128xf32>
    %191 = arith.addf %181, %190 : vector<256x128xf32>
    %192 = vector.extract_strided_slice %180 {offsets = [1, 15, 0], sizes = [16, 16, 128], strides = [1, 1, 1]} : vector<18x48x128xbf16> to vector<16x16x128xbf16>
    %193 = vector.shape_cast %192 : vector<16x16x128xbf16> to vector<256x128xbf16>
    %194 = vector.extract_strided_slice %180 {offsets = [1, 16, 0], sizes = [16, 16, 128], strides = [1, 1, 1]} : vector<18x48x128xbf16> to vector<16x16x128xbf16>
    %195 = vector.shape_cast %194 : vector<16x16x128xbf16> to vector<256x128xbf16>
    %196 = vector.extract_strided_slice %180 {offsets = [1, 17, 0], sizes = [16, 16, 128], strides = [1, 1, 1]} : vector<18x48x128xbf16> to vector<16x16x128xbf16>
    %197 = vector.shape_cast %196 : vector<16x16x128xbf16> to vector<256x128xbf16>
    %198 = tpu.concatenate %193, %195, %197 in 1 : vector<256x128xbf16>, vector<256x128xbf16>, vector<256x128xbf16> -> vector<256x384xbf16>
    %c384_78 = arith.constant 384 : index
    %c0_79 = arith.constant 0 : index
    %199 = vector.load %arg9[%c384_78, %c0_79] : memref<1152x128xbf16, #tpu.memory_space<vmem>>, vector<384x128xbf16>
    %cst_80 = arith.constant dense<0.000000e+00> : vector<256x128xf32>
    %200 = tpu.matmul %198, %199, %cst_80 {dimension_numbers = #tpu.dot_dimension_numbers<[1], [0], [0], [1], [0, 0, 1, 1], [], []>} : vector<256x384xbf16>, vector<384x128xbf16>, vector<256x128xf32> -> vector<256x128xf32>
    %201 = arith.addf %191, %200 : vector<256x128xf32>
    %202 = vector.extract_strided_slice %180 {offsets = [2, 15, 0], sizes = [16, 16, 128], strides = [1, 1, 1]} : vector<18x48x128xbf16> to vector<16x16x128xbf16>
    %203 = vector.shape_cast %202 : vector<16x16x128xbf16> to vector<256x128xbf16>
    %204 = vector.extract_strided_slice %180 {offsets = [2, 16, 0], sizes = [16, 16, 128], strides = [1, 1, 1]} : vector<18x48x128xbf16> to vector<16x16x128xbf16>
    %205 = vector.shape_cast %204 : vector<16x16x128xbf16> to vector<256x128xbf16>
    %206 = vector.extract_strided_slice %180 {offsets = [2, 17, 0], sizes = [16, 16, 128], strides = [1, 1, 1]} : vector<18x48x128xbf16> to vector<16x16x128xbf16>
    %207 = vector.shape_cast %206 : vector<16x16x128xbf16> to vector<256x128xbf16>
    %208 = tpu.concatenate %203, %205, %207 in 1 : vector<256x128xbf16>, vector<256x128xbf16>, vector<256x128xbf16> -> vector<256x384xbf16>
    %c768_81 = arith.constant 768 : index
    %c0_82 = arith.constant 0 : index
    %209 = vector.load %arg9[%c768_81, %c0_82] : memref<1152x128xbf16, #tpu.memory_space<vmem>>, vector<384x128xbf16>
    %cst_83 = arith.constant dense<0.000000e+00> : vector<256x128xf32>
    %210 = tpu.matmul %208, %209, %cst_83 {dimension_numbers = #tpu.dot_dimension_numbers<[1], [0], [0], [1], [0, 0, 1, 1], [], []>} : vector<256x384xbf16>, vector<384x128xbf16>, vector<256x128xf32> -> vector<256x128xf32>
    %211 = arith.addf %201, %210 : vector<256x128xf32>
    %c0_84 = arith.constant 0 : index
    %c0_85 = arith.constant 0 : index
    %212 = vector.load %arg10[%c0_84, %c0_85] : memref<1x128xf32, #tpu.memory_space<vmem>>, vector<1x128xf32>
    %213 = vector.broadcast %212 : vector<1x128xf32> to vector<256x128xf32>
    %214 = arith.addf %211, %213 : vector<256x128xf32>
    %215 = vector.shape_cast %214 : vector<256x128xf32> to vector<16x16x128xf32>
    %216 = arith.truncf %215 : vector<16x16x128xf32> to vector<16x16x128xbf16>
    %cst_86 = arith.constant 0.000000e+00 : bf16
    %217 = vector.broadcast %cst_86 : bf16 to vector<16x16x128xbf16>
    %218 = arith.maximumf %216, %217 : vector<16x16x128xbf16>
    %cst_87 = arith.constant 0.000000e+00 : bf16
    %219 = vector.broadcast %cst_87 : bf16 to vector<1x16x128xbf16>
    %220 = tpu.concatenate %219, %218, %219 in 0 : vector<1x16x128xbf16>, vector<16x16x128xbf16>, vector<1x16x128xbf16> -> vector<18x16x128xbf16>
    %cst_88 = arith.constant 0.000000e+00 : bf16
    %221 = vector.broadcast %cst_88 : bf16 to vector<18x16x128xbf16>
    %222 = tpu.concatenate %221, %220, %221 in 1 : vector<18x16x128xbf16>, vector<18x16x128xbf16>, vector<18x16x128xbf16> -> vector<18x48x128xbf16>
    %cst_89 = arith.constant 0.000000e+00 : f32
    %223 = vector.broadcast %cst_89 : f32 to vector<256x128xf32>
    %224 = vector.extract_strided_slice %222 {offsets = [0, 15, 0], sizes = [16, 16, 128], strides = [1, 1, 1]} : vector<18x48x128xbf16> to vector<16x16x128xbf16>
    %225 = vector.shape_cast %224 : vector<16x16x128xbf16> to vector<256x128xbf16>
    %226 = vector.extract_strided_slice %222 {offsets = [0, 16, 0], sizes = [16, 16, 128], strides = [1, 1, 1]} : vector<18x48x128xbf16> to vector<16x16x128xbf16>
    %227 = vector.shape_cast %226 : vector<16x16x128xbf16> to vector<256x128xbf16>
    %228 = vector.extract_strided_slice %222 {offsets = [0, 17, 0], sizes = [16, 16, 128], strides = [1, 1, 1]} : vector<18x48x128xbf16> to vector<16x16x128xbf16>
    %229 = vector.shape_cast %228 : vector<16x16x128xbf16> to vector<256x128xbf16>
    %230 = tpu.concatenate %225, %227, %229 in 1 : vector<256x128xbf16>, vector<256x128xbf16>, vector<256x128xbf16> -> vector<256x384xbf16>
    %c0_90 = arith.constant 0 : index
    %c0_91 = arith.constant 0 : index
    %231 = vector.load %arg11[%c0_90, %c0_91] : memref<1152x128xbf16, #tpu.memory_space<vmem>>, vector<384x128xbf16>
    %cst_92 = arith.constant dense<0.000000e+00> : vector<256x128xf32>
    %232 = tpu.matmul %230, %231, %cst_92 {dimension_numbers = #tpu.dot_dimension_numbers<[1], [0], [0], [1], [0, 0, 1, 1], [], []>} : vector<256x384xbf16>, vector<384x128xbf16>, vector<256x128xf32> -> vector<256x128xf32>
    %233 = arith.addf %223, %232 : vector<256x128xf32>
    %234 = vector.extract_strided_slice %222 {offsets = [1, 15, 0], sizes = [16, 16, 128], strides = [1, 1, 1]} : vector<18x48x128xbf16> to vector<16x16x128xbf16>
    %235 = vector.shape_cast %234 : vector<16x16x128xbf16> to vector<256x128xbf16>
    %236 = vector.extract_strided_slice %222 {offsets = [1, 16, 0], sizes = [16, 16, 128], strides = [1, 1, 1]} : vector<18x48x128xbf16> to vector<16x16x128xbf16>
    %237 = vector.shape_cast %236 : vector<16x16x128xbf16> to vector<256x128xbf16>
    %238 = vector.extract_strided_slice %222 {offsets = [1, 17, 0], sizes = [16, 16, 128], strides = [1, 1, 1]} : vector<18x48x128xbf16> to vector<16x16x128xbf16>
    %239 = vector.shape_cast %238 : vector<16x16x128xbf16> to vector<256x128xbf16>
    %240 = tpu.concatenate %235, %237, %239 in 1 : vector<256x128xbf16>, vector<256x128xbf16>, vector<256x128xbf16> -> vector<256x384xbf16>
    %c384_93 = arith.constant 384 : index
    %c0_94 = arith.constant 0 : index
    %241 = vector.load %arg11[%c384_93, %c0_94] : memref<1152x128xbf16, #tpu.memory_space<vmem>>, vector<384x128xbf16>
    %cst_95 = arith.constant dense<0.000000e+00> : vector<256x128xf32>
    %242 = tpu.matmul %240, %241, %cst_95 {dimension_numbers = #tpu.dot_dimension_numbers<[1], [0], [0], [1], [0, 0, 1, 1], [], []>} : vector<256x384xbf16>, vector<384x128xbf16>, vector<256x128xf32> -> vector<256x128xf32>
    %243 = arith.addf %233, %242 : vector<256x128xf32>
    %244 = vector.extract_strided_slice %222 {offsets = [2, 15, 0], sizes = [16, 16, 128], strides = [1, 1, 1]} : vector<18x48x128xbf16> to vector<16x16x128xbf16>
    %245 = vector.shape_cast %244 : vector<16x16x128xbf16> to vector<256x128xbf16>
    %246 = vector.extract_strided_slice %222 {offsets = [2, 16, 0], sizes = [16, 16, 128], strides = [1, 1, 1]} : vector<18x48x128xbf16> to vector<16x16x128xbf16>
    %247 = vector.shape_cast %246 : vector<16x16x128xbf16> to vector<256x128xbf16>
    %248 = vector.extract_strided_slice %222 {offsets = [2, 17, 0], sizes = [16, 16, 128], strides = [1, 1, 1]} : vector<18x48x128xbf16> to vector<16x16x128xbf16>
    %249 = vector.shape_cast %248 : vector<16x16x128xbf16> to vector<256x128xbf16>
    %250 = tpu.concatenate %245, %247, %249 in 1 : vector<256x128xbf16>, vector<256x128xbf16>, vector<256x128xbf16> -> vector<256x384xbf16>
    %c768_96 = arith.constant 768 : index
    %c0_97 = arith.constant 0 : index
    %251 = vector.load %arg11[%c768_96, %c0_97] : memref<1152x128xbf16, #tpu.memory_space<vmem>>, vector<384x128xbf16>
    %cst_98 = arith.constant dense<0.000000e+00> : vector<256x128xf32>
    %252 = tpu.matmul %250, %251, %cst_98 {dimension_numbers = #tpu.dot_dimension_numbers<[1], [0], [0], [1], [0, 0, 1, 1], [], []>} : vector<256x384xbf16>, vector<384x128xbf16>, vector<256x128xf32> -> vector<256x128xf32>
    %253 = arith.addf %243, %252 : vector<256x128xf32>
    %c0_99 = arith.constant 0 : index
    %c0_100 = arith.constant 0 : index
    %254 = vector.load %arg12[%c0_99, %c0_100] : memref<1x128xf32, #tpu.memory_space<vmem>>, vector<1x128xf32>
    %255 = vector.broadcast %254 : vector<1x128xf32> to vector<256x128xf32>
    %256 = arith.addf %253, %255 : vector<256x128xf32>
    %257 = vector.shape_cast %256 : vector<256x128xf32> to vector<16x16x128xf32>
    %c0_101 = arith.constant 0 : index
    %c0_102 = arith.constant 0 : index
    %c0_103 = arith.constant 0 : index
    %258 = vector.load %arg15[%c0_101, %c0_102, %c0_103] : memref<16x16x128xf32, #tpu.memory_space<vmem>>, vector<16x16x128xf32>
    %259 = arith.addf %258, %257 : vector<16x16x128xf32>
    %c0_104 = arith.constant 0 : index
    %c0_105 = arith.constant 0 : index
    %c0_106 = arith.constant 0 : index
    %c0_107 = arith.constant 0 : index
    %260 = vector.load %arg13[%c0_104, %c0_105, %c0_106, %c0_107] : memref<1x16x16x128xf32, #tpu.memory_space<vmem>>, vector<1x16x16x128xf32>
    %261 = vector.shape_cast %260 : vector<1x16x16x128xf32> to vector<16x16x128xf32>
    %262 = vector.shape_cast %259 : vector<16x16x128xf32> to vector<1x16x16x128xf32>
    tpu.vector_store %arg13[%c0_104, %c0_105, %c0_106, %c0_107], %262 {strides = array<i32>} : memref<1x16x16x128xf32, #tpu.memory_space<vmem>>, vector<1x16x16x128xf32>,
    return
  }
  func.func @transform_0(%arg0: i32) -> (i32, i32, i32, i32) {
    %c0_i32 = arith.constant 0 : i32
    %c0_i32_0 = arith.constant 0 : i32
    %c0_i32_1 = arith.constant 0 : i32
    %c0_i32_2 = arith.constant 0 : i32
    return %arg0, %c0_i32, %c0_i32_0, %c0_i32_1 : i32, i32, i32, i32
  }
  func.func @transform_1(%arg0: i32) -> (i32, i32, i32, i32) {
    %c0_i32 = arith.constant 0 : i32
    %c0_i32_0 = arith.constant 0 : i32
    %c0_i32_1 = arith.constant 0 : i32
    %c0_i32_2 = arith.constant 0 : i32
    return %arg0, %c0_i32, %c0_i32_0, %c0_i32_1 : i32, i32, i32, i32
  }
  func.func @transform_2(%arg0: i32) -> (i32, i32) {
    %c0_i32 = arith.constant 0 : i32
    %c0_i32_0 = arith.constant 0 : i32
    %c0_i32_1 = arith.constant 0 : i32
    return %c0_i32, %c0_i32_0 : i32, i32
  }
  func.func @transform_3(%arg0: i32) -> (i32, i32) {
    %c0_i32 = arith.constant 0 : i32
    %c0_i32_0 = arith.constant 0 : i32
    %c0_i32_1 = arith.constant 0 : i32
    return %c0_i32, %c0_i32_0 : i32, i32
  }
  func.func @transform_4(%arg0: i32) -> (i32, i32) {
    %c0_i32 = arith.constant 0 : i32
    %c0_i32_0 = arith.constant 0 : i32
    %c0_i32_1 = arith.constant 0 : i32
    return %c0_i32, %c0_i32_0 : i32, i32
  }
  func.func @transform_5(%arg0: i32) -> (i32, i32) {
    %c0_i32 = arith.constant 0 : i32
    %c0_i32_0 = arith.constant 0 : i32
    %c0_i32_1 = arith.constant 0 : i32
    return %c0_i32, %c0_i32_0 : i32, i32
  }
  func.func @transform_6(%arg0: i32) -> (i32, i32) {
    %c0_i32 = arith.constant 0 : i32
    %c0_i32_0 = arith.constant 0 : i32
    %c0_i32_1 = arith.constant 0 : i32
    return %c0_i32, %c0_i32_0 : i32, i32
  }
  func.func @transform_7(%arg0: i32) -> (i32, i32) {
    %c0_i32 = arith.constant 0 : i32
    %c0_i32_0 = arith.constant 0 : i32
    %c0_i32_1 = arith.constant 0 : i32
    return %c0_i32, %c0_i32_0 : i32, i32
  }
  func.func @transform_8(%arg0: i32) -> (i32, i32) {
    %c0_i32 = arith.constant 0 : i32
    %c0_i32_0 = arith.constant 0 : i32
    %c0_i32_1 = arith.constant 0 : i32
    return %c0_i32, %c0_i32_0 : i32, i32
  }
  func.func @transform_9(%arg0: i32) -> (i32, i32) {
    %c0_i32 = arith.constant 0 : i32
    %c0_i32_0 = arith.constant 0 : i32
    %c0_i32_1 = arith.constant 0 : i32
    return %c0_i32, %c0_i32_0 : i32, i32
  }
  func.func @transform_10(%arg0: i32) -> (i32, i32) {
    %c0_i32 = arith.constant 0 : i32
    %c0_i32_0 = arith.constant 0 : i32
    %c0_i32_1 = arith.constant 0 : i32
    return %c0_i32, %c0_i32_0 : i32, i32
  }
  func.func @transform_11(%arg0: i32) -> (i32, i32) {
    %c0_i32 = arith.constant 0 : i32
    %c0_i32_0 = arith.constant 0 : i32
    %c0_i32_1 = arith.constant 0 : i32
    return %c0_i32, %c0_i32_0 : i32, i32
  }
  func.func @transform_12(%arg0: i32) -> (i32, i32, i32, i32) {
    %c0_i32 = arith.constant 0 : i32
    %c0_i32_0 = arith.constant 0 : i32
    %c0_i32_1 = arith.constant 0 : i32
    %c0_i32_2 = arith.constant 0 : i32
    return %arg0, %c0_i32, %c0_i32_0, %c0_i32_1 : i32, i32, i32, i32
  }
}

</mosaic_0001>

<llo_original>
// kernel: refine_forward.1
$region0: #{refine_forward.1}
  #allocation0 [shape = 'u32[]', space=smem, size = 0x4, offset = 0x4, fixed_abs, tag = 'smem constant byte address 0x4 - core index']
  #allocation1 [shape = 'u32[72,128]{1,0:T(1,128)}', space=vmem, size = 0x9000, scoped, tag = 'internal scratch']
  #allocation2 [shape = 'f32[16,16,128]{2,1,0:T(8,128)}', space=vmem, size = 0x20000, scoped, tag = 'scratch operand']
  #allocation3 [shape = 'f32[16,16,128]{2,1,0:T(8,128)}', space=vmem, size = 0x20000, scoped, tag = 'scratch operand']
  %s0 = inlined_call_operand.vmem [shape: bf16[2,16,16,128], index: 0, kind: input, shape index: {}]
  %s1 = inlined_call_operand.vmem [shape: f32[2,8,8,128], index: 1, kind: input, shape index: {}]
  %s2 = inlined_call_operand.vmem [shape: bf16[1152,128], index: 2, kind: input, shape index: {}]
  %s3 = inlined_call_operand.vmem [shape: f32[1,128], index: 3, kind: input, shape index: {}]
  %s4 = inlined_call_operand.vmem [shape: bf16[1152,128], index: 4, kind: input, shape index: {}]
  %s5 = inlined_call_operand.vmem [shape: f32[1,128], index: 5, kind: input, shape index: {}]
  %s6 = inlined_call_operand.vmem [shape: bf16[1152,128], index: 6, kind: input, shape index: {}]
  %s7 = inlined_call_operand.vmem [shape: f32[1,128], index: 7, kind: input, shape index: {}]
  %s8 = inlined_call_operand.vmem [shape: bf16[1152,128], index: 8, kind: input, shape index: {}]
  %s9 = inlined_call_operand.vmem [shape: f32[1,128], index: 9, kind: input, shape index: {}]
  %s10 = inlined_call_operand.vmem [shape: bf16[1152,128], index: 10, kind: input, shape index: {}]
  %s11 = inlined_call_operand.vmem [shape: f32[1,128], index: 11, kind: input, shape index: {}]
  %s12 = inlined_call_operand.hbm [shape: f32[2,16,16,128], index: 12, kind: output, shape index: {}]
  %s13 = sld [smem:[#allocation0]]
  $region81: #{refine_forward.1} parent=0
    _
  %s15 = ssub.s32 1, %s13
  %s16 = scalar_select 0, %s15, %s13
  $region1: #{refine_forward.1} parent=0
    #allocation4 [shape = 'u8[262144]{0}', space=vmem, size = 0x40000, scoped, tag = 'output window, operand 0']
    #allocation5 [shape = 's32[2]{0}', space=sflag, size = 0x8, scoped, tag = 'scoped memory for refine_forward.1']
    %17 = vsyncpa [#allocation5], 0
    %s18 = scalar_lea.sflag [#allocation5], 1
    %19 = vsyncpa %s18, 0
    loop: start=0, step=1, limit=4
    $region2: #{refine_forward.1} parent=1 // loop_pre_header
      _
    $region3: #{refine_forward.1} parent=1 // loop_header
      %s21 = sphi 0, %s25
      %p22 = scmp.ge.s32.totalorder %s21, 4
      %s31 = sphi 0, %s33
      %s34 = sphi 0, %s31
      %s35 = sphi 0, %s34
      %s51 = sphi 0, %s35
      %s57 = sphi 0, %s59
      %s60 = sphi 0, %s57
      %s61 = sphi 0, %s60
      %s77 = sphi 0, %s61
      %s81 = sphi 0, %s81
      %s83 = sphi 0, %s81
      %s84 = sphi 0, %s83
      %s98 = sphi 0, %s84
      %s102 = sphi 0, %s102
      %s104 = sphi 0, %s102
      %s105 = sphi 0, %s104
      %s119 = sphi 0, %s105
      %s123 = sphi 0, %s123
      %s125 = sphi 0, %s123
      %s126 = sphi 0, %s125
      %s140 = sphi 0, %s126
      %s144 = sphi 0, %s144
      %s146 = sphi 0, %s144
      %s147 = sphi 0, %s146
      %s161 = sphi 0, %s147
      %s165 = sphi 0, %s165
      %s167 = sphi 0, %s165
      %s168 = sphi 0, %s167
      %s182 = sphi 0, %s168
      %s186 = sphi 0, %s186
      %s188 = sphi 0, %s186
      %s189 = sphi 0, %s188
      %s203 = sphi 0, %s189
      %s207 = sphi 0, %s207
      %s209 = sphi 0, %s207
      %s210 = sphi 0, %s209
      %s224 = sphi 0, %s210
      %s228 = sphi 0, %s228
      %s230 = sphi 0, %s228
      %s231 = sphi 0, %s230
      %s245 = sphi 0, %s231
      %s249 = sphi 0, %s249
      %s251 = sphi 0, %s249
      %s252 = sphi 0, %s251
      %s266 = sphi 0, %s252
      %s270 = sphi 0, %s270
      %s272 = sphi 0, %s270
      %s273 = sphi 0, %s272
      %s287 = sphi 0, %s273
      %s293 = sphi 0, %s295
      %s296 = sphi 0, %s293
      %s297 = sphi 0, %s296
      %s313 = sphi 0, %s297
    $region4: #{refine_forward.1} parent=1 // loop_header_branch
      %24 = sbr.rel (%p22) target = $region8
    $region5: #{refine_forward.1} parent=1 // loop_body
      %s26 = ssub.s32 %s21, 1
      %s27 = ssub.s32 %s21, 2
      %s28 = sadd.s32 %s21, 1
      %s29 = ssub.s32 %s21, %s28
      %p30 = scmp.eq.s32.totalorder %s29, 0
      %s32 = sadd.s32 %s31, 1
      %s33 = scalar_select %p30, %s31, %s32
      %p36 = pneg %p30
      %p37 = scmp.eq.s32.totalorder %s21, 1
      %p38 = por %p36, %p37
      %p39 = scmp.ne.s32.totalorder %s31, %s34
      %p40 = scmp.eq.s32.totalorder %s21, 0
      %p41 = por %p39, %p40
      %p42 = scmp.ne.s32.totalorder %s31, %s34
      %p43 = scmp.eq.s32.totalorder %s26, 1
      %p44 = por %p42, %p43
      %p45 = scmp.ne.s32.totalorder %s34, %s35
      %p46 = scmp.eq.s32.totalorder %s26, 0
      %p47 = por %p45, %p46
      %p48 = scmp.ne.s32.totalorder %s34, %s35
      %p49 = scmp.eq.s32.totalorder %s27, 1
      %p50 = por %p48, %p49
      %p52 = scmp.ne.s32.totalorder %s35, %s51
      %p53 = scmp.eq.s32.totalorder %s27, 0
      %p54 = por %p52, %p53
      %s55 = ssub.s32 %s21, %s28
      %p56 = scmp.eq.s32.totalorder %s55, 0
      %s58 = sadd.s32 %s57, 1
      %s59 = scalar_select %p56, %s57, %s58
      %p62 = pneg %p56
      %p63 = scmp.eq.s32.totalorder %s21, 1
      %p64 = por %p62, %p63
      %p65 = scmp.ne.s32.totalorder %s57, %s60
      %p66 = scmp.eq.s32.totalorder %s21, 0
      %p67 = por %p65, %p66
      %p68 = scmp.ne.s32.totalorder %s57, %s60
      %p69 = scmp.eq.s32.totalorder %s26, 1
      %p70 = por %p68, %p69
      %p71 = scmp.ne.s32.totalorder %s60, %s61
      %p72 = scmp.eq.s32.totalorder %s26, 0
      %p73 = por %p71, %p72
      %p74 = scmp.ne.s32.totalorder %s60, %s61
      %p75 = scmp.eq.s32.totalorder %s27, 1
      %p76 = por %p74, %p75
      %p78 = scmp.ne.s32.totalorder %s61, %s77
      %p79 = scmp.eq.s32.totalorder %s27, 0
      %p80 = por %p78, %p79
      %s82 = sadd.s32 %s81, 1
      %p85 = scmp.eq.s32.totalorder %s21, 1
      %p86 = scmp.ne.s32.totalorder %s81, %s83
      %p87 = scmp.eq.s32.totalorder %s21, 0
      %p88 = por %p86, %p87
      %p89 = scmp.ne.s32.totalorder %s81, %s83
      %p90 = scmp.eq.s32.totalorder %s26, 1
      %p91 = por %p89, %p90
      %p92 = scmp.ne.s32.totalorder %s83, %s84
      %p93 = scmp.eq.s32.totalorder %s26, 0
      %p94 = por %p92, %p93
      %p95 = scmp.ne.s32.totalorder %s83, %s84
      %p96 = scmp.eq.s32.totalorder %s27, 1
      %p97 = por %p95, %p96
      %p99 = scmp.ne.s32.totalorder %s84, %s98
      %p100 = scmp.eq.s32.totalorder %s27, 0
      %p101 = por %p99, %p100
      %s103 = sadd.s32 %s102, 1
      %p106 = scmp.eq.s32.totalorder %s21, 1
      %p107 = scmp.ne.s32.totalorder %s102, %s104
      %p108 = scmp.eq.s32.totalorder %s21, 0
      %p109 = por %p107, %p108
      %p110 = scmp.ne.s32.totalorder %s102, %s104
      %p111 = scmp.eq.s32.totalorder %s26, 1
      %p112 = por %p110, %p111
      %p113 = scmp.ne.s32.totalorder %s104, %s105
      %p114 = scmp.eq.s32.totalorder %s26, 0
      %p115 = por %p113, %p114
      %p116 = scmp.ne.s32.totalorder %s104, %s105
      %p117 = scmp.eq.s32.totalorder %s27, 1
      %p118 = por %p116, %p117
      %p120 = scmp.ne.s32.totalorder %s105, %s119
      %p121 = scmp.eq.s32.totalorder %s27, 0
      %p122 = por %p120, %p121
      %s124 = sadd.s32 %s123, 1
      %p127 = scmp.eq.s32.totalorder %s21, 1
      %p128 = scmp.ne.s32.totalorder %s123, %s125
      %p129 = scmp.eq.s32.totalorder %s21, 0
      %p130 = por %p128, %p129
      %p131 = scmp.ne.s32.totalorder %s123, %s125
      %p132 = scmp.eq.s32.totalorder %s26, 1
      %p133 = por %p131, %p132
      %p134 = scmp.ne.s32.totalorder %s125, %s126
      %p135 = scmp.eq.s32.totalorder %s26, 0
      %p136 = por %p134, %p135
      %p137 = scmp.ne.s32.totalorder %s125, %s126
      %p138 = scmp.eq.s32.totalorder %s27, 1
      %p139 = por %p137, %p138
      %p141 = scmp.ne.s32.totalorder %s126, %s140
      %p142 = scmp.eq.s32.totalorder %s27, 0
      %p143 = por %p141, %p142
      %s145 = sadd.s32 %s144, 1
      %p148 = scmp.eq.s32.totalorder %s21, 1
      %p149 = scmp.ne.s32.totalorder %s144, %s146
      %p150 = scmp.eq.s32.totalorder %s21, 0
      %p151 = por %p149, %p150
      %p152 = scmp.ne.s32.totalorder %s144, %s146
      %p153 = scmp.eq.s32.totalorder %s26, 1
      %p154 = por %p152, %p153
      %p155 = scmp.ne.s32.totalorder %s146, %s147
      %p156 = scmp.eq.s32.totalorder %s26, 0
      %p157 = por %p155, %p156
      %p158 = scmp.ne.s32.totalorder %s146, %s147
      %p159 = scmp.eq.s32.totalorder %s27, 1
      %p160 = por %p158, %p159
      %p162 = scmp.ne.s32.totalorder %s147, %s161
      %p163 = scmp.eq.s32.totalorder %s27, 0
      %p164 = por %p162, %p163
      %s166 = sadd.s32 %s165, 1
      %p169 = scmp.eq.s32.totalorder %s21, 1
      %p170 = scmp.ne.s32.totalorder %s165, %s167
      %p171 = scmp.eq.s32.totalorder %s21, 0
      %p172 = por %p170, %p171
      %p173 = scmp.ne.s32.totalorder %s165, %s167
      %p174 = scmp.eq.s32.totalorder %s26, 1
      %p175 = por %p173, %p174
      %p176 = scmp.ne.s32.totalorder %s167, %s168
      %p177 = scmp.eq.s32.totalorder %s26, 0
      %p178 = por %p176, %p177
      %p179 = scmp.ne.s32.totalorder %s167, %s168
      %p180 = scmp.eq.s32.totalorder %s27, 1
      %p181 = por %p179, %p180
      %p183 = scmp.ne.s32.totalorder %s168, %s182
      %p184 = scmp.eq.s32.totalorder %s27, 0
      %p185 = por %p183, %p184
      %s187 = sadd.s32 %s186, 1
      %p190 = scmp.eq.s32.totalorder %s21, 1
      %p191 = scmp.ne.s32.totalorder %s186, %s188
      %p192 = scmp.eq.s32.totalorder %s21, 0
      %p193 = por %p191, %p192
      %p194 = scmp.ne.s32.totalorder %s186, %s188
      %p195 = scmp.eq.s32.totalorder %s26, 1
      %p196 = por %p194, %p195
      %p197 = scmp.ne.s32.totalorder %s188, %s189
      %p198 = scmp.eq.s32.totalorder %s26, 0
      %p199 = por %p197, %p198
      %p200 = scmp.ne.s32.totalorder %s188, %s189
      %p201 = scmp.eq.s32.totalorder %s27, 1
      %p202 = por %p200, %p201
      %p204 = scmp.ne.s32.totalorder %s189, %s203
      %p205 = scmp.eq.s32.totalorder %s27, 0
      %p206 = por %p204, %p205
      %s208 = sadd.s32 %s207, 1
      %p211 = scmp.eq.s32.totalorder %s21, 1
      %p212 = scmp.ne.s32.totalorder %s207, %s209
      %p213 = scmp.eq.s32.totalorder %s21, 0
      %p214 = por %p212, %p213
      %p215 = scmp.ne.s32.totalorder %s207, %s209
      %p216 = scmp.eq.s32.totalorder %s26, 1
      %p217 = por %p215, %p216
      %p218 = scmp.ne.s32.totalorder %s209, %s210
      %p219 = scmp.eq.s32.totalorder %s26, 0
      %p220 = por %p218, %p219
      %p221 = scmp.ne.s32.totalorder %s209, %s210
      %p222 = scmp.eq.s32.totalorder %s27, 1
      %p223 = por %p221, %p222
      %p225 = scmp.ne.s32.totalorder %s210, %s224
      %p226 = scmp.eq.s32.totalorder %s27, 0
      %p227 = por %p225, %p226
      %s229 = sadd.s32 %s228, 1
      %p232 = scmp.eq.s32.totalorder %s21, 1
      %p233 = scmp.ne.s32.totalorder %s228, %s230
      %p234 = scmp.eq.s32.totalorder %s21, 0
      %p235 = por %p233, %p234
      %p236 = scmp.ne.s32.totalorder %s228, %s230
      %p237 = scmp.eq.s32.totalorder %s26, 1
      %p238 = por %p236, %p237
      %p239 = scmp.ne.s32.totalorder %s230, %s231
      %p240 = scmp.eq.s32.totalorder %s26, 0
      %p241 = por %p239, %p240
      %p242 = scmp.ne.s32.totalorder %s230, %s231
      %p243 = scmp.eq.s32.totalorder %s27, 1
      %p244 = por %p242, %p243
      %p246 = scmp.ne.s32.totalorder %s231, %s245
      %p247 = scmp.eq.s32.totalorder %s27, 0
      %p248 = por %p246, %p247
      %s250 = sadd.s32 %s249, 1
      %p253 = scmp.eq.s32.totalorder %s21, 1
      %p254 = scmp.ne.s32.totalorder %s249, %s251
      %p255 = scmp.eq.s32.totalorder %s21, 0
      %p256 = por %p254, %p255
      %p257 = scmp.ne.s32.totalorder %s249, %s251
      %p258 = scmp.eq.s32.totalorder %s26, 1
      %p259 = por %p257, %p258
      %p260 = scmp.ne.s32.totalorder %s251, %s252
      %p261 = scmp.eq.s32.totalorder %s26, 0
      %p262 = por %p260, %p261
      %p263 = scmp.ne.s32.totalorder %s251, %s252
      %p264 = scmp.eq.s32.totalorder %s27, 1
      %p265 = por %p263, %p264
      %p267 = scmp.ne.s32.totalorder %s252, %s266
      %p268 = scmp.eq.s32.totalorder %s27, 0
      %p269 = por %p267, %p268
      %s271 = sadd.s32 %s270, 1
      %p274 = scmp.eq.s32.totalorder %s21, 1
      %p275 = scmp.ne.s32.totalorder %s270, %s272
      %p276 = scmp.eq.s32.totalorder %s21, 0
      %p277 = por %p275, %p276
      %p278 = scmp.ne.s32.totalorder %s270, %s272
      %p279 = scmp.eq.s32.totalorder %s26, 1
      %p280 = por %p278, %p279
      %p281 = scmp.ne.s32.totalorder %s272, %s273
      %p282 = scmp.eq.s32.totalorder %s26, 0
      %p283 = por %p281, %p282
      %p284 = scmp.ne.s32.totalorder %s272, %s273
      %p285 = scmp.eq.s32.totalorder %s27, 1
      %p286 = por %p284, %p285
      %p288 = scmp.ne.s32.totalorder %s273, %s287
      %p289 = scmp.eq.s32.totalorder %s27, 0
      %p290 = por %p288, %p289
      %s291 = ssub.s32 %s21, %s28
      %p292 = scmp.eq.s32.totalorder %s291, 0
      %s294 = sadd.s32 %s293, 1
      %s295 = scalar_select %p292, %s293, %s294
      %p298 = pneg %p292
      %p299 = scmp.eq.s32.totalorder %s21, 1
      %p300 = por %p298, %p299
      %p301 = scmp.ne.s32.totalorder %s293, %s296
      %p302 = scmp.eq.s32.totalorder %s21, 0
      %p303 = por %p301, %p302
      %p304 = scmp.ne.s32.totalorder %s293, %s296
      %p305 = scmp.eq.s32.totalorder %s26, 1
      %p306 = por %p304, %p305
      %p307 = scmp.ne.s32.totalorder %s296, %s297
      %p308 = scmp.eq.s32.totalorder %s26, 0
      %p309 = por %p307, %p308
      %p310 = scmp.ne.s32.totalorder %s296, %s297
      %p311 = scmp.eq.s32.totalorder %s27, 1
      %p312 = por %p310, %p311
      %p314 = scmp.ne.s32.totalorder %s297, %s313
      %p315 = scmp.eq.s32.totalorder %s27, 0
      %p316 = por %p314, %p315
      %p317 = scmp.le.s32.totalorder 1, %s21
      %p318 = scmp.lt.s32.totalorder %s21, 3
      %p319 = pnand %p317, %p318
      %p320 = pneg %p319
      // Predicated region
      $region9: #{refine_forward.1} parent=5 // pred_check
        _
      $region10: #{refine_forward.1} parent=5 // pred_check_branch
        %322 = sbr.rel (%p319) target = $region12
      $region11: #{refine_forward.1} parent=5 // pred_region
        %s323 = ssub.s32 %s21, 1
        // Predicated region
        $region13: #{refine_forward.1} parent=11 // pred_check
          %p324 = pneg %p94
        $region14: #{refine_forward.1} parent=11 // pred_check_branch
          %326 = sbr.rel (%p324) target = $region16
        $region15: #{refine_forward.1} parent=11 // pred_region
          _
        $region16: #{refine_forward.1} parent=11 // pred_fallthru
          _
        // Predicated region
        $region17: #{refine_forward.1} parent=11 // pred_check
          %p327 = pneg %p115
        $region18: #{refine_forward.1} parent=11 // pred_check_branch
          %329 = sbr.rel (%p327) target = $region20
        $region19: #{refine_forward.1} parent=11 // pred_region
          _
        $region20: #{refine_forward.1} parent=11 // pred_fallthru
          _
        // Predicated region
        $region21: #{refine_forward.1} parent=11 // pred_check
          %p330 = pneg %p136
        $region22: #{refine_forward.1} parent=11 // pred_check_branch
          %332 = sbr.rel (%p330) target = $region24
        $region23: #{refine_forward.1} parent=11 // pred_region
          _
        $region24: #{refine_forward.1} parent=11 // pred_fallthru
          _
        // Predicated region
        $region25: #{refine_forward.1} parent=11 // pred_check
          %p333 = pneg %p157
        $region26: #{refine_forward.1} parent=11 // pred_check_branch
          %335 = sbr.rel (%p333) target = $region28
        $region27: #{refine_forward.1} parent=11 // pred_region
          _
        $region28: #{refine_forward.1} parent=11 // pred_fallthru
          _
        // Predicated region
        $region29: #{refine_forward.1} parent=11 // pred_check
          %p336 = pneg %p178
        $region30: #{refine_forward.1} parent=11 // pred_check_branch
          %338 = sbr.rel (%p336) target = $region32
        $region31: #{refine_forward.1} parent=11 // pred_region
          _
        $region32: #{refine_forward.1} parent=11 // pred_fallthru
          _
        // Predicated region
        $region33: #{refine_forward.1} parent=11 // pred_check
          %p339 = pneg %p199
        $region34: #{refine_forward.1} parent=11 // pred_check_branch
          %341 = sbr.rel (%p339) target = $region36
        $region35: #{refine_forward.1} parent=11 // pred_region
          _
        $region36: #{refine_forward.1} parent=11 // pred_fallthru
          _
        // Predicated region
        $region37: #{refine_forward.1} parent=11 // pred_check
          %p342 = pneg %p220
        $region38: #{refine_forward.1} parent=11 // pred_check_branch
          %344 = sbr.rel (%p342) target = $region40
        $region39: #{refine_forward.1} parent=11 // pred_region
          _
        $region40: #{refine_forward.1} parent=11 // pred_fallthru
          _
        // Predicated region
        $region41: #{refine_forward.1} parent=11 // pred_check
          %p345 = pneg %p241
        $region42: #{refine_forward.1} parent=11 // pred_check_branch
          %347 = sbr.rel (%p345) target = $region44
        $region43: #{refine_forward.1} parent=11 // pred_region
          _
        $region44: #{refine_forward.1} parent=11 // pred_fallthru
          _
        // Predicated region
        $region45: #{refine_forward.1} parent=11 // pred_check
          %p348 = pneg %p262
        $region46: #{refine_forward.1} parent=11 // pred_check_branch
          %350 = sbr.rel (%p348) target = $region48
        $region47: #{refine_forward.1} parent=11 // pred_region
          _
        $region48: #{refine_forward.1} parent=11 // pred_fallthru
          _
        // Predicated region
        $region49: #{refine_forward.1} parent=11 // pred_check
          %p351 = pneg %p283
        $region50: #{refine_forward.1} parent=11 // pred_check_branch
          %353 = sbr.rel (%p351) target = $region52
        $region51: #{refine_forward.1} parent=11 // pred_region
          _
        $region52: #{refine_forward.1} parent=11 // pred_fallthru
          _
      $region12: #{refine_forward.1} parent=5 // pred_fallthru
        _
      %p354 = scmp.lt.s32.totalorder %s21, 2
      // Predicated region
      $region53: #{refine_forward.1} parent=5 // pred_check
        %p355 = pneg %p354
      $region54: #{refine_forward.1} parent=5 // pred_check_branch
        %357 = sbr.rel (%p355) target = $region56
      $region55: #{refine_forward.1} parent=5 // pred_region
        // Predicated region
        $region57: #{refine_forward.1} parent=55 // pred_check
          %p358 = pneg %p41
        $region58: #{refine_forward.1} parent=55 // pred_check_branch
          %360 = sbr.rel (%p358) target = $region60
        $region59: #{refine_forward.1} parent=55 // pred_region
          %p361 = scmp.lt.s32.totalorder %s21, 1
          %s362 = scalar_select %p361, %s21, 1
          %s363 = smul.addr %s362, 32
          %s364 = smul.addr %s363, 4
          %s365 = scalar_lea.vmem %s0, %s364
        $region60: #{refine_forward.1} parent=55 // pred_fallthru
          _
        // Predicated region
        $region61: #{refine_forward.1} parent=55 // pred_check
          %p366 = pneg %p67
        $region62: #{refine_forward.1} parent=55 // pred_check_branch
          %368 = sbr.rel (%p366) target = $region64
        $region63: #{refine_forward.1} parent=55 // pred_region
          %p369 = scmp.lt.s32.totalorder %s21, 1
          %s370 = scalar_select %p369, %s21, 1
          %s371 = smul.addr %s370, 8
          %s372 = smul.addr %s371, 8
          %s373 = scalar_lea.vmem %s1, %s372
        $region64: #{refine_forward.1} parent=55 // pred_fallthru
          _
      $region56: #{refine_forward.1} parent=5 // pred_fallthru
        _
      %p374 = scmp.le.s32.totalorder 1, %s21
      %p375 = scmp.lt.s32.totalorder %s21, 3
      %p376 = pnand %p374, %p375
      %p377 = pneg %p376
      // Predicated region
      $region65: #{refine_forward.1} parent=5 // pred_check
        _
      $region66: #{refine_forward.1} parent=5 // pred_check_branch
        %379 = sbr.rel (%p376) target = $region68
      $region67: #{refine_forward.1} parent=5 // pred_region
        %s380 = ssub.s32 %s21, 1
        %p381 = scmp.lt.s32.totalorder %s26, 1
        %s382 = scalar_select %p381, %s26, 1
        %s383 = smul.addr %s382, 32
        %s384 = smul.addr %s383, 4
        %s385 = scalar_lea.vmem %s0, %s384
        %p386 = pneg %p47
        %p387 = pneg %p44
        %p388 = scmp.lt.s32.totalorder %s26, 1
        %s389 = scalar_select %p388, %s26, 1
        %s390 = smul.addr %s389, 8
        %s391 = smul.addr %s390, 8
        %s392 = scalar_lea.vmem %s1, %s391
        %p393 = pneg %p73
        %p394 = pneg %p70
        %p395 = pneg %p94
        %p396 = pneg %p91
        %p397 = pneg %p115
        %p398 = pneg %p112
        %p399 = pneg %p136
        %p400 = pneg %p133
        %p401 = pneg %p157
        %p402 = pneg %p154
        %p403 = pneg %p178
        %p404 = pneg %p175
        %p405 = pneg %p199
        %p406 = pneg %p196
        %p407 = pneg %p220
        %p408 = pneg %p217
        %p409 = pneg %p241
        %p410 = pneg %p238
        %p411 = pneg %p262
        %p412 = pneg %p259
        %p413 = pneg %p283
        %p414 = pneg %p280
        %p415 = pneg %p309
        %p416 = pneg %p306
        %s417 = sand.u32 %s296, 1
        %s418 = scalar_lea.sflag [#allocation5], %s417
        %s419 = sand.u32 %s296, 1
        %s420 = smul.addr %s419, 256
        %s421 = scalar_lea.vmem [#allocation4], %s420
        %p422 = scmp.lt.s32.totalorder %s26, 1
        %s423 = scalar_select %p422, %s26, 1
        %s424 = smul.addr %s423, 32
        %s425 = smul.addr %s424, 4
        %s426 = scalar_lea.vmem %s0, %s425
        %p427 = scmp.lt.s32.totalorder %s26, 1
        %s428 = scalar_select %p427, %s26, 1
        %s429 = smul.addr %s428, 8
        %s430 = smul.addr %s429, 8
        %s431 = scalar_lea.vmem %s1, %s430
        %v433 = vld [vmem:[%s426] sm:$0xf]
        %v434 = vld [vmem:[%s426 + $0x4] sm:$0xf]
        %v435 = vld [vmem:[%s426 + $0x8] sm:$0xf]
        %v436 = vld [vmem:[%s426 + $0xc] sm:$0xf]
        %v437 = vld [vmem:[%s426 + $0x10] sm:$0xf]
        %v438 = vld [vmem:[%s426 + $0x14] sm:$0xf]
        %v439 = vld [vmem:[%s426 + $0x18] sm:$0xf]
        %v440 = vld [vmem:[%s426 + $0x1c] sm:$0xf]
        %v441 = vld [vmem:[%s426 + $0x20] sm:$0xf]
        %v442 = vld [vmem:[%s426 + $0x24] sm:$0xf]
        %v443 = vld [vmem:[%s426 + $0x28] sm:$0xf]
        %v444 = vld [vmem:[%s426 + $0x2c] sm:$0xf]
        %v445 = vld [vmem:[%s426 + $0x30] sm:$0xf]
        %v446 = vld [vmem:[%s426 + $0x34] sm:$0xf]
        %v447 = vld [vmem:[%s426 + $0x38] sm:$0xf]
        %v448 = vld [vmem:[%s426 + $0x3c] sm:$0xf]
        %v449 = vld [vmem:[%s426 + $0x40] sm:$0xf]
        %v450 = vld [vmem:[%s426 + $0x44] sm:$0xf]
        %v451 = vld [vmem:[%s426 + $0x48] sm:$0xf]
        %v452 = vld [vmem:[%s426 + $0x4c] sm:$0xf]
        %v453 = vld [vmem:[%s426 + $0x50] sm:$0xf]
        %v454 = vld [vmem:[%s426 + $0x54] sm:$0xf]
        %v455 = vld [vmem:[%s426 + $0x58] sm:$0xf]
        %v456 = vld [vmem:[%s426 + $0x5c] sm:$0xf]
        %v457 = vld [vmem:[%s426 + $0x60] sm:$0xf]
        %v458 = vld [vmem:[%s426 + $0x64] sm:$0xf]
        %v459 = vld [vmem:[%s426 + $0x68] sm:$0xf]
        %v460 = vld [vmem:[%s426 + $0x6c] sm:$0xf]
        %v461 = vld [vmem:[%s426 + $0x70] sm:$0xf]
        %v462 = vld [vmem:[%s426 + $0x74] sm:$0xf]
        %v463 = vld [vmem:[%s426 + $0x78] sm:$0xf]
        %v464 = vld [vmem:[%s426 + $0x7c] sm:$0xf]
        %v497 = vunpack.c.l.b16 %v433
        %v498 = vunpack.c.l.b16 %v434
        %v499 = vunpack.c.l.b16 %v435
        %v500 = vunpack.c.l.b16 %v436
        %v501 = vunpack.c.l.b16 %v437
        %v502 = vunpack.c.l.b16 %v438
        %v503 = vunpack.c.l.b16 %v439
        %v504 = vunpack.c.l.b16 %v440
        %v505 = vunpack.c.l.b16 %v441
        %v506 = vunpack.c.l.b16 %v442
        %v507 = vunpack.c.l.b16 %v443
        %v508 = vunpack.c.l.b16 %v444
        %v509 = vunpack.c.l.b16 %v445
        %v510 = vunpack.c.l.b16 %v446
        %v511 = vunpack.c.l.b16 %v447
        %v512 = vunpack.c.l.b16 %v448
        %v513 = vunpack.c.l.b16 %v449
        %v514 = vunpack.c.l.b16 %v450
        %v515 = vunpack.c.l.b16 %v451
        %v516 = vunpack.c.l.b16 %v452
        %v517 = vunpack.c.l.b16 %v453
        %v518 = vunpack.c.l.b16 %v454
        %v519 = vunpack.c.l.b16 %v455
        %v520 = vunpack.c.l.b16 %v456
        %v521 = vunpack.c.l.b16 %v457
        %v522 = vunpack.c.l.b16 %v458
        %v523 = vunpack.c.l.b16 %v459
        %v524 = vunpack.c.l.b16 %v460
        %v525 = vunpack.c.l.b16 %v461
        %v526 = vunpack.c.l.b16 %v462
        %v527 = vunpack.c.l.b16 %v463
        %v528 = vunpack.c.l.b16 %v464
        %v529 = vpack.c.b16 %v498, %v497
        %v530 = vpack.c.b16 %v500, %v499
        %v531 = vpack.c.b16 %v502, %v501
        %v532 = vpack.c.b16 %v504, %v503
        %v533 = vpack.c.b16 %v506, %v505
        %v534 = vpack.c.b16 %v508, %v507
        %v535 = vpack.c.b16 %v510, %v509
        %v536 = vpack.c.b16 %v512, %v511
        %v537 = vpack.c.b16 %v514, %v513
        %v538 = vpack.c.b16 %v516, %v515
        %v539 = vpack.c.b16 %v518, %v517
        %v540 = vpack.c.b16 %v520, %v519
        %v541 = vpack.c.b16 %v522, %v521
        %v542 = vpack.c.b16 %v524, %v523
        %v543 = vpack.c.b16 %v526, %v525
        %v544 = vpack.c.b16 %v528, %v527
        %vm561 = vsmask.f32 256
        %v563 = vshrl.u32 0, 16
        %v565 = vrot.slane %v563, 7
        %v566 = vshll.u32 0, 16
        %v568 = vor.u32 %v565, %v566
        %v569 = vsel %vm561, %v565, %v568
        %v571 = vshrl.u32 %v529, 16
        %v573 = vrot.slane %v571, 7
        %v574 = vshll.u32 %v529, 16
        %v576 = vor.u32 %v573, %v574
        %v577 = vsel %vm561, %v565, %v576
        %v579 = vshrl.u32 %v530, 16
        %v581 = vrot.slane %v579, 7
        %v582 = vshll.u32 %v530, 16
        %v584 = vor.u32 %v581, %v582
        %v585 = vsel %vm561, %v565, %v584
        %v587 = vshrl.u32 %v531, 16
        %v589 = vrot.slane %v587, 7
        %v590 = vshll.u32 %v531, 16
        %v592 = vor.u32 %v589, %v590
        %v593 = vsel %vm561, %v565, %v592
        %v595 = vshrl.u32 %v532, 16
        %v597 = vrot.slane %v595, 7
        %v598 = vshll.u32 %v532, 16
        %v600 = vor.u32 %v597, %v598
        %v601 = vsel %vm561, %v565, %v600
        %v603 = vshrl.u32 %v533, 16
        %v605 = vrot.slane %v603, 7
        %v606 = vshll.u32 %v533, 16
        %v608 = vor.u32 %v605, %v606
        %v609 = vsel %vm561, %v565, %v608
        %v611 = vshrl.u32 %v534, 16
        %v613 = vrot.slane %v611, 7
        %v614 = vshll.u32 %v534, 16
        %v616 = vor.u32 %v613, %v614
        %v617 = vsel %vm561, %v565, %v616
        %v619 = vshrl.u32 %v535, 16
        %v621 = vrot.slane %v619, 7
        %v622 = vshll.u32 %v535, 16
        %v624 = vor.u32 %v621, %v622
        %v625 = vsel %vm561, %v565, %v624
        %v627 = vshrl.u32 %v536, 16
        %v629 = vrot.slane %v627, 7
        %v630 = vshll.u32 %v536, 16
        %v632 = vor.u32 %v629, %v630
        %v633 = vsel %vm561, %v565, %v632
        %v635 = vshrl.u32 %v537, 16
        %v637 = vrot.slane %v635, 7
        %v638 = vshll.u32 %v537, 16
        %v640 = vor.u32 %v637, %v638
        %v641 = vsel %vm561, %v565, %v640
        %v643 = vshrl.u32 %v538, 16
        %v645 = vrot.slane %v643, 7
        %v646 = vshll.u32 %v538, 16
        %v648 = vor.u32 %v645, %v646
        %v649 = vsel %vm561, %v565, %v648
        %v651 = vshrl.u32 %v539, 16
        %v653 = vrot.slane %v651, 7
        %v654 = vshll.u32 %v539, 16
        %v656 = vor.u32 %v653, %v654
        %v657 = vsel %vm561, %v565, %v656
        %v659 = vshrl.u32 %v540, 16
        %v661 = vrot.slane %v659, 7
        %v662 = vshll.u32 %v540, 16
        %v664 = vor.u32 %v661, %v662
        %v665 = vsel %vm561, %v565, %v664
        %v667 = vshrl.u32 %v541, 16
        %v669 = vrot.slane %v667, 7
        %v670 = vshll.u32 %v541, 16
        %v672 = vor.u32 %v669, %v670
        %v673 = vsel %vm561, %v565, %v672
        %v675 = vshrl.u32 %v542, 16
        %v677 = vrot.slane %v675, 7
        %v678 = vshll.u32 %v542, 16
        %v680 = vor.u32 %v677, %v678
        %v681 = vsel %vm561, %v565, %v680
        %v683 = vshrl.u32 %v543, 16
        %v685 = vrot.slane %v683, 7
        %v686 = vshll.u32 %v543, 16
        %v688 = vor.u32 %v685, %v686
        %v689 = vsel %vm561, %v565, %v688
        %vm706 = vsmask.f32 7424
        %v707 = vrot.slane %v566, 1
        %v708 = vor.u32 %v563, %v707
        %v709 = vsel %vm706, %v708, %v707
        %v710 = vrot.slane %v574, 1
        %v711 = vor.u32 %v571, %v710
        %v712 = vsel %vm706, %v711, %v707
        %v713 = vrot.slane %v582, 1
        %v714 = vor.u32 %v579, %v713
        %v715 = vsel %vm706, %v714, %v707
        %v716 = vrot.slane %v590, 1
        %v717 = vor.u32 %v587, %v716
        %v718 = vsel %vm706, %v717, %v707
        %v719 = vrot.slane %v598, 1
        %v720 = vor.u32 %v595, %v719
        %v721 = vsel %vm706, %v720, %v707
        %v722 = vrot.slane %v606, 1
        %v723 = vor.u32 %v603, %v722
        %v724 = vsel %vm706, %v723, %v707
        %v725 = vrot.slane %v614, 1
        %v726 = vor.u32 %v611, %v725
        %v727 = vsel %vm706, %v726, %v707
        %v728 = vrot.slane %v622, 1
        %v729 = vor.u32 %v619, %v728
        %v730 = vsel %vm706, %v729, %v707
        %v731 = vrot.slane %v630, 1
        %v732 = vor.u32 %v627, %v731
        %v733 = vsel %vm706, %v732, %v707
        %v734 = vrot.slane %v638, 1
        %v735 = vor.u32 %v635, %v734
        %v736 = vsel %vm706, %v735, %v707
        %v737 = vrot.slane %v646, 1
        %v738 = vor.u32 %v643, %v737
        %v739 = vsel %vm706, %v738, %v707
        %v740 = vrot.slane %v654, 1
        %v741 = vor.u32 %v651, %v740
        %v742 = vsel %vm706, %v741, %v707
        %v743 = vrot.slane %v662, 1
        %v744 = vor.u32 %v659, %v743
        %v745 = vsel %vm706, %v744, %v707
        %v746 = vrot.slane %v670, 1
        %v747 = vor.u32 %v667, %v746
        %v748 = vsel %vm706, %v747, %v707
        %v749 = vrot.slane %v678, 1
        %v750 = vor.u32 %v675, %v749
        %v751 = vsel %vm706, %v750, %v707
        %v752 = vrot.slane %v686, 1
        %v753 = vor.u32 %v683, %v752
        %v754 = vsel %vm706, %v753, %v707
        %v771 = vld [vmem:[%s2] sm:$0xf]
        %v772 = vld [vmem:[%s2 + $0x4] sm:$0xf]
        %v773 = vld [vmem:[%s2 + $0x8] sm:$0xf]
        %v774 = vld [vmem:[%s2 + $0xc] sm:$0xf]
        %v775 = vld [vmem:[%s2 + $0x10] sm:$0xf]
        %v776 = vld [vmem:[%s2 + $0x14] sm:$0xf]
        %v777 = vld [vmem:[%s2 + $0x18] sm:$0xf]
        %v778 = vld [vmem:[%s2 + $0x1c] sm:$0xf]
        %v779 = vld [vmem:[%s2 + $0x20] sm:$0xf]
        %v780 = vld [vmem:[%s2 + $0x24] sm:$0xf]
        %v781 = vld [vmem:[%s2 + $0x28] sm:$0xf]
        %v782 = vld [vmem:[%s2 + $0x2c] sm:$0xf]
        %v783 = vld [vmem:[%s2 + $0x30] sm:$0xf]
        %v784 = vld [vmem:[%s2 + $0x34] sm:$0xf]
        %v785 = vld [vmem:[%s2 + $0x38] sm:$0xf]
        %v786 = vld [vmem:[%s2 + $0x3c] sm:$0xf]
        %v787 = vld [vmem:[%s2 + $0x40] sm:$0xf]
        %v788 = vld [vmem:[%s2 + $0x44] sm:$0xf]
        %v789 = vld [vmem:[%s2 + $0x48] sm:$0xf]
        %v790 = vld [vmem:[%s2 + $0x4c] sm:$0xf]
        %v791 = vld [vmem:[%s2 + $0x50] sm:$0xf]
        %v792 = vld [vmem:[%s2 + $0x54] sm:$0xf]
        %v793 = vld [vmem:[%s2 + $0x58] sm:$0xf]
        %v794 = vld [vmem:[%s2 + $0x5c] sm:$0xf]
        %v795 = vld [vmem:[%s2 + $0x60] sm:$0xf]
        %v796 = vld [vmem:[%s2 + $0x64] sm:$0xf]
        %v797 = vld [vmem:[%s2 + $0x68] sm:$0xf]
        %v798 = vld [vmem:[%s2 + $0x6c] sm:$0xf]
        %v799 = vld [vmem:[%s2 + $0x70] sm:$0xf]
        %v800 = vld [vmem:[%s2 + $0x74] sm:$0xf]
        %v801 = vld [vmem:[%s2 + $0x78] sm:$0xf]
        %v802 = vld [vmem:[%s2 + $0x7c] sm:$0xf]
        %v803 = vld [vmem:[%s2 + $0x80] sm:$0xf]
        %v804 = vld [vmem:[%s2 + $0x84] sm:$0xf]
        %v805 = vld [vmem:[%s2 + $0x88] sm:$0xf]
        %v806 = vld [vmem:[%s2 + $0x8c] sm:$0xf]
        %v807 = vld [vmem:[%s2 + $0x90] sm:$0xf]
        %v808 = vld [vmem:[%s2 + $0x94] sm:$0xf]
        %v809 = vld [vmem:[%s2 + $0x98] sm:$0xf]
        %v810 = vld [vmem:[%s2 + $0x9c] sm:$0xf]
        %v811 = vld [vmem:[%s2 + $0xa0] sm:$0xf]
        %v812 = vld [vmem:[%s2 + $0xa4] sm:$0xf]
        %v813 = vld [vmem:[%s2 + $0xa8] sm:$0xf]
        %v814 = vld [vmem:[%s2 + $0xac] sm:$0xf]
        %v815 = vld [vmem:[%s2 + $0xb0] sm:$0xf]
        %v816 = vld [vmem:[%s2 + $0xb4] sm:$0xf]
        %v817 = vld [vmem:[%s2 + $0xb8] sm:$0xf]
        %v818 = vld [vmem:[%s2 + $0xbc] sm:$0xf]
        %v820 = vshrl.u32 %v544, 16
        %v822 = vrot.slane %v820, 7
        %v823 = vshll.u32 %v544, 16
        %v825 = vor.u32 %v822, %v823
        %v826 = vsel %vm561, %v565, %v825
        %v828 = vrot.slane %v823, 1
        %v829 = vor.u32 %v820, %v828
        %v830 = vsel %vm706, %v829, %v707
        %v832 = vld [vmem:[%s2 + $0xc0] sm:$0xf]
        %v833 = vld [vmem:[%s2 + $0xc4] sm:$0xf]
        %v834 = vld [vmem:[%s2 + $0xc8] sm:$0xf]
        %v835 = vld [vmem:[%s2 + $0xcc] sm:$0xf]
        %v836 = vld [vmem:[%s2 + $0xd0] sm:$0xf]
        %v837 = vld [vmem:[%s2 + $0xd4] sm:$0xf]
        %v838 = vld [vmem:[%s2 + $0xd8] sm:$0xf]
        %v839 = vld [vmem:[%s2 + $0xdc] sm:$0xf]
        %v840 = vld [vmem:[%s2 + $0xe0] sm:$0xf]
        %v841 = vld [vmem:[%s2 + $0xe4] sm:$0xf]
        %v842 = vld [vmem:[%s2 + $0xe8] sm:$0xf]
        %v843 = vld [vmem:[%s2 + $0xec] sm:$0xf]
        %v844 = vld [vmem:[%s2 + $0xf0] sm:$0xf]
        %v845 = vld [vmem:[%s2 + $0xf4] sm:$0xf]
        %v846 = vld [vmem:[%s2 + $0xf8] sm:$0xf]
        %v847 = vld [vmem:[%s2 + $0xfc] sm:$0xf]
        %v848 = vld [vmem:[%s2 + $0x100] sm:$0xf]
        %v849 = vld [vmem:[%s2 + $0x104] sm:$0xf]
        %v850 = vld [vmem:[%s2 + $0x108] sm:$0xf]
        %v851 = vld [vmem:[%s2 + $0x10c] sm:$0xf]
        %v852 = vld [vmem:[%s2 + $0x110] sm:$0xf]
        %v853 = vld [vmem:[%s2 + $0x114] sm:$0xf]
        %v854 = vld [vmem:[%s2 + $0x118] sm:$0xf]
        %v855 = vld [vmem:[%s2 + $0x11c] sm:$0xf]
        %v856 = vld [vmem:[%s2 + $0x120] sm:$0xf]
        %v857 = vld [vmem:[%s2 + $0x124] sm:$0xf]
        %v858 = vld [vmem:[%s2 + $0x128] sm:$0xf]
        %v859 = vld [vmem:[%s2 + $0x12c] sm:$0xf]
        %v860 = vld [vmem:[%s2 + $0x130] sm:$0xf]
        %v861 = vld [vmem:[%s2 + $0x134] sm:$0xf]
        %v862 = vld [vmem:[%s2 + $0x138] sm:$0xf]
        %v863 = vld [vmem:[%s2 + $0x13c] sm:$0xf]
        %v864 = vld [vmem:[%s2 + $0x140] sm:$0xf]
        %v865 = vld [vmem:[%s2 + $0x144] sm:$0xf]
        %v866 = vld [vmem:[%s2 + $0x148] sm:$0xf]
        %v867 = vld [vmem:[%s2 + $0x14c] sm:$0xf]
        %v868 = vld [vmem:[%s2 + $0x150] sm:$0xf]
        %v869 = vld [vmem:[%s2 + $0x154] sm:$0xf]
        %v870 = vld [vmem:[%s2 + $0x158] sm:$0xf]
        %v871 = vld [vmem:[%s2 + $0x15c] sm:$0xf]
        %v872 = vld [vmem:[%s2 + $0x160] sm:$0xf]
        %v873 = vld [vmem:[%s2 + $0x164] sm:$0xf]
        %v874 = vld [vmem:[%s2 + $0x168] sm:$0xf]
        %v875 = vld [vmem:[%s2 + $0x16c] sm:$0xf]
        %v876 = vld [vmem:[%s2 + $0x170] sm:$0xf]
        %v877 = vld [vmem:[%s2 + $0x174] sm:$0xf]
        %v878 = vld [vmem:[%s2 + $0x178] sm:$0xf]
        %v879 = vld [vmem:[%s2 + $0x17c] sm:$0xf]
        %v928 = vunpack.c.l.b16 %v832
        %v929 = vunpack.c.l.b16 %v833
        %v930 = vunpack.c.l.b16 %v834
        %v931 = vunpack.c.l.b16 %v835
        %v932 = vunpack.c.l.b16 %v836
        %v933 = vunpack.c.l.b16 %v837
        %v934 = vunpack.c.l.b16 %v838
        %v935 = vunpack.c.l.b16 %v839
        %v936 = vunpack.c.l.b16 %v840
        %v937 = vunpack.c.l.b16 %v841
        %v938 = vunpack.c.l.b16 %v842
        %v939 = vunpack.c.l.b16 %v843
        %v940 = vunpack.c.l.b16 %v844
        %v941 = vunpack.c.l.b16 %v845
        %v942 = vunpack.c.l.b16 %v846
        %v943 = vunpack.c.l.b16 %v847
        %v944 = vunpack.c.l.b16 %v848
        %v945 = vunpack.c.l.b16 %v849
        %v946 = vunpack.c.l.b16 %v850
        %v947 = vunpack.c.l.b16 %v851
        %v948 = vunpack.c.l.b16 %v852
        %v949 = vunpack.c.l.b16 %v853
        %v950 = vunpack.c.l.b16 %v854
        %v951 = vunpack.c.l.b16 %v855
        %v952 = vunpack.c.l.b16 %v856
        %v953 = vunpack.c.l.b16 %v857
        %v954 = vunpack.c.l.b16 %v858
        %v955 = vunpack.c.l.b16 %v859
        %v956 = vunpack.c.l.b16 %v860
        %v957 = vunpack.c.l.b16 %v861
        %v958 = vunpack.c.l.b16 %v862
        %v959 = vunpack.c.l.b16 %v863
        %v960 = vunpack.c.l.b16 %v864
        %v961 = vunpack.c.l.b16 %v865
        %v962 = vunpack.c.l.b16 %v866
        %v963 = vunpack.c.l.b16 %v867
        %v964 = vunpack.c.l.b16 %v868
        %v965 = vunpack.c.l.b16 %v869
        %v966 = vunpack.c.l.b16 %v870
        %v967 = vunpack.c.l.b16 %v871
        %v968 = vunpack.c.l.b16 %v872
        %v969 = vunpack.c.l.b16 %v873
        %v970 = vunpack.c.l.b16 %v874
        %v971 = vunpack.c.l.b16 %v875
        %v972 = vunpack.c.l.b16 %v876
        %v973 = vunpack.c.l.b16 %v877
        %v974 = vunpack.c.l.b16 %v878
        %v975 = vunpack.c.l.b16 %v879
        %v976 = vpack.c.b16 %v929, %v928
        %v977 = vpack.c.b16 %v931, %v930
        %v978 = vpack.c.b16 %v933, %v932
        %v979 = vpack.c.b16 %v935, %v934
        %v980 = vpack.c.b16 %v937, %v936
        %v981 = vpack.c.b16 %v939, %v938
        %v982 = vpack.c.b16 %v941, %v940
        %v983 = vpack.c.b16 %v943, %v942
        %v984 = vpack.c.b16 %v945, %v944
        %v985 = vpack.c.b16 %v947, %v946
        %v986 = vpack.c.b16 %v949, %v948
        %v987 = vpack.c.b16 %v951, %v950
        %v988 = vpack.c.b16 %v953, %v952
        %v989 = vpack.c.b16 %v955, %v954
        %v990 = vpack.c.b16 %v957, %v956
        %v991 = vpack.c.b16 %v959, %v958
        %v992 = vpack.c.b16 %v961, %v960
        %v993 = vpack.c.b16 %v963, %v962
        %v994 = vpack.c.b16 %v965, %v964
        %v995 = vpack.c.b16 %v967, %v966
        %v996 = vpack.c.b16 %v969, %v968
        %v997 = vpack.c.b16 %v971, %v970
        %v998 = vpack.c.b16 %v973, %v972
        %v999 = vpack.c.b16 %v975, %v974
        %1024 = vmatpush.bf16.msra.mxu0 %v983
        %1025 = vmatpush.bf16.msra.mxu0 %v982
        %1026 = vmatpush.bf16.msra.mxu0 %v981
        %1027 = vmatpush.bf16.msra.mxu0 %v980
        %1028 = vmatpush.bf16.msra.mxu0 %v979
        %1029 = vmatpush.bf16.msra.mxu0 %v978
        %1030 = vmatpush.bf16.msra.mxu0 %v977
        %1031 = vmatpush.bf16.msra.mxu0 %v976
        %1032 = vmatmul.bf16.gmra.mxu0 %v577
        %v1033 = vpop.f32.mrf.mxu0
        %v1034 = vadd.f32 0.0, %v1033
        %v1035 = vpop.f32.mrf.mxu0
        %v1036 = vadd.f32 0.0, %v1035
        %1037 = vmatmul.bf16.gmra.mxu0 %v585
        %v1038 = vpop.f32.mrf.mxu0
        %v1039 = vadd.f32 0.0, %v1038
        %v1040 = vpop.f32.mrf.mxu0
        %v1041 = vadd.f32 0.0, %v1040
        %1042 = vmatmul.bf16.gmra.mxu0 %v593
        %v1043 = vpop.f32.mrf.mxu0
        %v1044 = vadd.f32 0.0, %v1043
        %v1045 = vpop.f32.mrf.mxu0
        %v1046 = vadd.f32 0.0, %v1045
        %1047 = vmatmul.bf16.gmra.mxu0 %v601
        %v1048 = vpop.f32.mrf.mxu0
        %v1049 = vadd.f32 0.0, %v1048
        %v1050 = vpop.f32.mrf.mxu0
        %v1051 = vadd.f32 0.0, %v1050
        %1052 = vmatmul.bf16.gmra.mxu0 %v609
        %v1053 = vpop.f32.mrf.mxu0
        %v1054 = vadd.f32 0.0, %v1053
        %v1055 = vpop.f32.mrf.mxu0
        %v1056 = vadd.f32 0.0, %v1055
        %1057 = vmatmul.bf16.gmra.mxu0 %v617
        %v1058 = vpop.f32.mrf.mxu0
        %v1059 = vadd.f32 0.0, %v1058
        %v1060 = vpop.f32.mrf.mxu0
        %v1061 = vadd.f32 0.0, %v1060
        %1062 = vmatmul.bf16.gmra.mxu0 %v625
        %v1063 = vpop.f32.mrf.mxu0
        %v1064 = vadd.f32 0.0, %v1063
        %v1065 = vpop.f32.mrf.mxu0
        %v1066 = vadd.f32 0.0, %v1065
        %1067 = vmatmul.bf16.gmra.mxu0 %v633
        %v1068 = vpop.f32.mrf.mxu0
        %v1069 = vadd.f32 0.0, %v1068
        %v1070 = vpop.f32.mrf.mxu0
        %v1071 = vadd.f32 0.0, %v1070
        %1072 = vmatmul.bf16.gmra.mxu0 %v641
        %v1073 = vpop.f32.mrf.mxu0
        %v1074 = vadd.f32 0.0, %v1073
        %v1075 = vpop.f32.mrf.mxu0
        %v1076 = vadd.f32 0.0, %v1075
        %1077 = vmatmul.bf16.gmra.mxu0 %v649
        %v1078 = vpop.f32.mrf.mxu0
        %v1079 = vadd.f32 0.0, %v1078
        %v1080 = vpop.f32.mrf.mxu0
        %v1081 = vadd.f32 0.0, %v1080
        %1082 = vmatmul.bf16.gmra.mxu0 %v657
        %v1083 = vpop.f32.mrf.mxu0
        %v1084 = vadd.f32 0.0, %v1083
        %v1085 = vpop.f32.mrf.mxu0
        %v1086 = vadd.f32 0.0, %v1085
        %1087 = vmatmul.bf16.gmra.mxu0 %v665
        %v1088 = vpop.f32.mrf.mxu0
        %v1089 = vadd.f32 0.0, %v1088
        %v1090 = vpop.f32.mrf.mxu0
        %v1091 = vadd.f32 0.0, %v1090
        %1092 = vmatmul.bf16.gmra.mxu0 %v673
        %v1093 = vpop.f32.mrf.mxu0
        %v1094 = vadd.f32 0.0, %v1093
        %v1095 = vpop.f32.mrf.mxu0
        %v1096 = vadd.f32 0.0, %v1095
        %1097 = vmatmul.bf16.gmra.mxu0 %v681
        %v1098 = vpop.f32.mrf.mxu0
        %v1099 = vadd.f32 0.0, %v1098
        %v1100 = vpop.f32.mrf.mxu0
        %v1101 = vadd.f32 0.0, %v1100
        %1102 = vmatmul.bf16.gmra.mxu0 %v689
        %v1103 = vpop.f32.mrf.mxu0
        %v1104 = vadd.f32 0.0, %v1103
        %v1105 = vpop.f32.mrf.mxu0
        %v1106 = vadd.f32 0.0, %v1105
        %1107 = vmatmul.bf16.gmra.mxu0 %v826
        %v1108 = vpop.f32.mrf.mxu0
        %v1109 = vadd.f32 0.0, %v1108
        %v1110 = vpop.f32.mrf.mxu0
        %v1111 = vadd.f32 0.0, %v1110
        %1112 = vdwg.mxu0
        %1113 = vmatpush.bf16.msra.mxu0 %v991
        %1114 = vmatpush.bf16.msra.mxu0 %v990
        %1115 = vmatpush.bf16.msra.mxu0 %v989
        %1116 = vmatpush.bf16.msra.mxu0 %v988
        %1117 = vmatpush.bf16.msra.mxu0 %v987
        %1118 = vmatpush.bf16.msra.mxu0 %v986
        %1119 = vmatpush.bf16.msra.mxu0 %v985
        %1120 = vmatpush.bf16.msra.mxu0 %v984
        %1121 = vmatmul.bf16.gmra.mxu0 %v529
        %v1122 = vpop.f32.mrf.mxu0
        %v1123 = vadd.f32 %v1034, %v1122
        %v1124 = vpop.f32.mrf.mxu0
        %v1125 = vadd.f32 %v1036, %v1124
        %1126 = vmatmul.bf16.gmra.mxu0 %v530
        %v1127 = vpop.f32.mrf.mxu0
        %v1128 = vadd.f32 %v1039, %v1127
        %v1129 = vpop.f32.mrf.mxu0
        %v1130 = vadd.f32 %v1041, %v1129
        %1131 = vmatmul.bf16.gmra.mxu0 %v531
        %v1132 = vpop.f32.mrf.mxu0
        %v1133 = vadd.f32 %v1044, %v1132
        %v1134 = vpop.f32.mrf.mxu0
        %v1135 = vadd.f32 %v1046, %v1134
        %1136 = vmatmul.bf16.gmra.mxu0 %v532
        %v1137 = vpop.f32.mrf.mxu0
        %v1138 = vadd.f32 %v1049, %v1137
        %v1139 = vpop.f32.mrf.mxu0
        %v1140 = vadd.f32 %v1051, %v1139
        %1141 = vmatmul.bf16.gmra.mxu0 %v533
        %v1142 = vpop.f32.mrf.mxu0
        %v1143 = vadd.f32 %v1054, %v1142
        %v1144 = vpop.f32.mrf.mxu0
        %v1145 = vadd.f32 %v1056, %v1144
        %1146 = vmatmul.bf16.gmra.mxu0 %v534
        %v1147 = vpop.f32.mrf.mxu0
        %v1148 = vadd.f32 %v1059, %v1147
        %v1149 = vpop.f32.mrf.mxu0
        %v1150 = vadd.f32 %v1061, %v1149
        %1151 = vmatmul.bf16.gmra.mxu0 %v535
        %v1152 = vpop.f32.mrf.mxu0
        %v1153 = vadd.f32 %v1064, %v1152
        %v1154 = vpop.f32.mrf.mxu0
        %v1155 = vadd.f32 %v1066, %v1154
        %1156 = vmatmul.bf16.gmra.mxu0 %v536
        %v1157 = vpop.f32.mrf.mxu0
        %v1158 = vadd.f32 %v1069, %v1157
        %v1159 = vpop.f32.mrf.mxu0
        %v1160 = vadd.f32 %v1071, %v1159
        %1161 = vmatmul.bf16.gmra.mxu0 %v537
        %v1162 = vpop.f32.mrf.mxu0
        %v1163 = vadd.f32 %v1074, %v1162
        %v1164 = vpop.f32.mrf.mxu0
        %v1165 = vadd.f32 %v1076, %v1164
        %1166 = vmatmul.bf16.gmra.mxu0 %v538
        %v1167 = vpop.f32.mrf.mxu0
        %v1168 = vadd.f32 %v1079, %v1167
        %v1169 = vpop.f32.mrf.mxu0
        %v1170 = vadd.f32 %v1081, %v1169
        %1171 = vmatmul.bf16.gmra.mxu0 %v539
        %v1172 = vpop.f32.mrf.mxu0
        %v1173 = vadd.f32 %v1084, %v1172
        %v1174 = vpop.f32.mrf.mxu0
        %v1175 = vadd.f32 %v1086, %v1174
        %1176 = vmatmul.bf16.gmra.mxu0 %v540
        %v1177 = vpop.f32.mrf.mxu0
        %v1178 = vadd.f32 %v1089, %v1177
        %v1179 = vpop.f32.mrf.mxu0
        %v1180 = vadd.f32 %v1091, %v1179
        %1181 = vmatmul.bf16.gmra.mxu0 %v541
        %v1182 = vpop.f32.mrf.mxu0
        %v1183 = vadd.f32 %v1094, %v1182
        %v1184 = vpop.f32.mrf.mxu0
        %v1185 = vadd.f32 %v1096, %v1184
        %1186 = vmatmul.bf16.gmra.mxu0 %v542
        %v1187 = vpop.f32.mrf.mxu0
        %v1188 = vadd.f32 %v1099, %v1187
        %v1189 = vpop.f32.mrf.mxu0
        %v1190 = vadd.f32 %v1101, %v1189
        %1191 = vmatmul.bf16.gmra.mxu0 %v543
        %v1192 = vpop.f32.mrf.mxu0
        %v1193 = vadd.f32 %v1104, %v1192
        %v1194 = vpop.f32.mrf.mxu0
        %v1195 = vadd.f32 %v1106, %v1194
        %1196 = vmatmul.bf16.gmra.mxu0 %v544
        %v1197 = vpop.f32.mrf.mxu0
        %v1198 = vadd.f32 %v1109, %v1197
        %v1199 = vpop.f32.mrf.mxu0
        %v1200 = vadd.f32 %v1111, %v1199
        %1201 = vdwg.mxu0
        %1202 = vmatpush.bf16.msra.mxu0 %v999
        %1203 = vmatpush.bf16.msra.mxu0 %v998
        %1204 = vmatpush.bf16.msra.mxu0 %v997
        %1205 = vmatpush.bf16.msra.mxu0 %v996
        %1206 = vmatpush.bf16.msra.mxu0 %v995
        %1207 = vmatpush.bf16.msra.mxu0 %v994
        %1208 = vmatpush.bf16.msra.mxu0 %v993
        %1209 = vmatpush.bf16.msra.mxu0 %v992
        %1210 = vmatmul.bf16.gmra.mxu0 %v712
        %v1211 = vpop.f32.mrf.mxu0
        %v1212 = vadd.f32 %v1123, %v1211
        %v1213 = vpop.f32.mrf.mxu0
        %v1214 = vadd.f32 %v1125, %v1213
        %1215 = vmatmul.bf16.gmra.mxu0 %v715
        %v1216 = vpop.f32.mrf.mxu0
        %v1217 = vadd.f32 %v1128, %v1216
        %v1218 = vpop.f32.mrf.mxu0
        %v1219 = vadd.f32 %v1130, %v1218
        %1220 = vmatmul.bf16.gmra.mxu0 %v718
        %v1221 = vpop.f32.mrf.mxu0
        %v1222 = vadd.f32 %v1133, %v1221
        %v1223 = vpop.f32.mrf.mxu0
        %v1224 = vadd.f32 %v1135, %v1223
        %1225 = vmatmul.bf16.gmra.mxu0 %v721
        %v1226 = vpop.f32.mrf.mxu0
        %v1227 = vadd.f32 %v1138, %v1226
        %v1228 = vpop.f32.mrf.mxu0
        %v1229 = vadd.f32 %v1140, %v1228
        %1230 = vmatmul.bf16.gmra.mxu0 %v724
        %v1231 = vpop.f32.mrf.mxu0
        %v1232 = vadd.f32 %v1143, %v1231
        %v1233 = vpop.f32.mrf.mxu0
        %v1234 = vadd.f32 %v1145, %v1233
        %1235 = vmatmul.bf16.gmra.mxu0 %v727
        %v1236 = vpop.f32.mrf.mxu0
        %v1237 = vadd.f32 %v1148, %v1236
        %v1238 = vpop.f32.mrf.mxu0
        %v1239 = vadd.f32 %v1150, %v1238
        %1240 = vmatmul.bf16.gmra.mxu0 %v730
        %v1241 = vpop.f32.mrf.mxu0
        %v1242 = vadd.f32 %v1153, %v1241
        %v1243 = vpop.f32.mrf.mxu0
        %v1244 = vadd.f32 %v1155, %v1243
        %1245 = vmatmul.bf16.gmra.mxu0 %v733
        %v1246 = vpop.f32.mrf.mxu0
        %v1247 = vadd.f32 %v1158, %v1246
        %v1248 = vpop.f32.mrf.mxu0
        %v1249 = vadd.f32 %v1160, %v1248
        %1250 = vmatmul.bf16.gmra.mxu0 %v736
        %v1251 = vpop.f32.mrf.mxu0
        %v1252 = vadd.f32 %v1163, %v1251
        %v1253 = vpop.f32.mrf.mxu0
        %v1254 = vadd.f32 %v1165, %v1253
        %1255 = vmatmul.bf16.gmra.mxu0 %v739
        %v1256 = vpop.f32.mrf.mxu0
        %v1257 = vadd.f32 %v1168, %v1256
        %v1258 = vpop.f32.mrf.mxu0
        %v1259 = vadd.f32 %v1170, %v1258
        %1260 = vmatmul.bf16.gmra.mxu0 %v742
        %v1261 = vpop.f32.mrf.mxu0
        %v1262 = vadd.f32 %v1173, %v1261
        %v1263 = vpop.f32.mrf.mxu0
        %v1264 = vadd.f32 %v1175, %v1263
        %1265 = vmatmul.bf16.gmra.mxu0 %v745
        %v1266 = vpop.f32.mrf.mxu0
        %v1267 = vadd.f32 %v1178, %v1266
        %v1268 = vpop.f32.mrf.mxu0
        %v1269 = vadd.f32 %v1180, %v1268
        %1270 = vmatmul.bf16.gmra.mxu0 %v748
        %v1271 = vpop.f32.mrf.mxu0
        %v1272 = vadd.f32 %v1183, %v1271
        %v1273 = vpop.f32.mrf.mxu0
        %v1274 = vadd.f32 %v1185, %v1273
        %1275 = vmatmul.bf16.gmra.mxu0 %v751
        %v1276 = vpop.f32.mrf.mxu0
        %v1277 = vadd.f32 %v1188, %v1276
        %v1278 = vpop.f32.mrf.mxu0
        %v1279 = vadd.f32 %v1190, %v1278
        %1280 = vmatmul.bf16.gmra.mxu0 %v754
        %v1281 = vpop.f32.mrf.mxu0
        %v1282 = vadd.f32 %v1193, %v1281
        %v1283 = vpop.f32.mrf.mxu0
        %v1284 = vadd.f32 %v1195, %v1283
        %1285 = vmatmul.bf16.gmra.mxu0 %v830
        %v1286 = vpop.f32.mrf.mxu0
        %v1287 = vadd.f32 %v1198, %v1286
        %v1288 = vpop.f32.mrf.mxu0
        %v1289 = vadd.f32 %v1200, %v1288
        %1290 = vdwg.mxu0
        %v1339 = vunpack.c.l.b16 %v771
        %v1340 = vunpack.c.l.b16 %v772
        %v1341 = vunpack.c.l.b16 %v773
        %v1342 = vunpack.c.l.b16 %v774
        %v1343 = vunpack.c.l.b16 %v775
        %v1344 = vunpack.c.l.b16 %v776
        %v1345 = vunpack.c.l.b16 %v777
        %v1346 = vunpack.c.l.b16 %v778
        %v1347 = vunpack.c.l.b16 %v779
        %v1348 = vunpack.c.l.b16 %v780
        %v1349 = vunpack.c.l.b16 %v781
        %v1350 = vunpack.c.l.b16 %v782
        %v1351 = vunpack.c.l.b16 %v783
        %v1352 = vunpack.c.l.b16 %v784
        %v1353 = vunpack.c.l.b16 %v785
        %v1354 = vunpack.c.l.b16 %v786
        %v1355 = vunpack.c.l.b16 %v787
        %v1356 = vunpack.c.l.b16 %v788
        %v1357 = vunpack.c.l.b16 %v789
        %v1358 = vunpack.c.l.b16 %v790
        %v1359 = vunpack.c.l.b16 %v791
        %v1360 = vunpack.c.l.b16 %v792
        %v1361 = vunpack.c.l.b16 %v793
        %v1362 = vunpack.c.l.b16 %v794
        %v1363 = vunpack.c.l.b16 %v795
        %v1364 = vunpack.c.l.b16 %v796
        %v1365 = vunpack.c.l.b16 %v797
        %v1366 = vunpack.c.l.b16 %v798
        %v1367 = vunpack.c.l.b16 %v799
        %v1368 = vunpack.c.l.b16 %v800
        %v1369 = vunpack.c.l.b16 %v801
        %v1370 = vunpack.c.l.b16 %v802
        %v1371 = vunpack.c.l.b16 %v803
        %v1372 = vunpack.c.l.b16 %v804
        %v1373 = vunpack.c.l.b16 %v805
        %v1374 = vunpack.c.l.b16 %v806
        %v1375 = vunpack.c.l.b16 %v807
        %v1376 = vunpack.c.l.b16 %v808
        %v1377 = vunpack.c.l.b16 %v809
        %v1378 = vunpack.c.l.b16 %v810
        %v1379 = vunpack.c.l.b16 %v811
        %v1380 = vunpack.c.l.b16 %v812
        %v1381 = vunpack.c.l.b16 %v813
        %v1382 = vunpack.c.l.b16 %v814
        %v1383 = vunpack.c.l.b16 %v815
        %v1384 = vunpack.c.l.b16 %v816
        %v1385 = vunpack.c.l.b16 %v817
        %v1386 = vunpack.c.l.b16 %v818
        %v1387 = vpack.c.b16 %v1340, %v1339
        %v1388 = vpack.c.b16 %v1342, %v1341
        %v1389 = vpack.c.b16 %v1344, %v1343
        %v1390 = vpack.c.b16 %v1346, %v1345
        %v1391 = vpack.c.b16 %v1348, %v1347
        %v1392 = vpack.c.b16 %v1350, %v1349
        %v1393 = vpack.c.b16 %v1352, %v1351
        %v1394 = vpack.c.b16 %v1354, %v1353
        %v1395 = vpack.c.b16 %v1356, %v1355
        %v1396 = vpack.c.b16 %v1358, %v1357
        %v1397 = vpack.c.b16 %v1360, %v1359
        %v1398 = vpack.c.b16 %v1362, %v1361
        %v1399 = vpack.c.b16 %v1364, %v1363
        %v1400 = vpack.c.b16 %v1366, %v1365
        %v1401 = vpack.c.b16 %v1368, %v1367
        %v1402 = vpack.c.b16 %v1370, %v1369
        %v1403 = vpack.c.b16 %v1372, %v1371
        %v1404 = vpack.c.b16 %v1374, %v1373
        %v1405 = vpack.c.b16 %v1376, %v1375
        %v1406 = vpack.c.b16 %v1378, %v1377
        %v1407 = vpack.c.b16 %v1380, %v1379
        %v1408 = vpack.c.b16 %v1382, %v1381
        %v1409 = vpack.c.b16 %v1384, %v1383
        %v1410 = vpack.c.b16 %v1386, %v1385
        %1435 = vmatpush.bf16.msra.mxu0 %v1394
        %1436 = vmatpush.bf16.msra.mxu0 %v1393
        %1437 = vmatpush.bf16.msra.mxu0 %v1392
        %1438 = vmatpush.bf16.msra.mxu0 %v1391
        %1439 = vmatpush.bf16.msra.mxu0 %v1390
        %1440 = vmatpush.bf16.msra.mxu0 %v1389
        %1441 = vmatpush.bf16.msra.mxu0 %v1388
        %1442 = vmatpush.bf16.msra.mxu0 %v1387
        %1443 = vmatmul.bf16.gmra.mxu0 %v569
        %v1444 = vpop.f32.mrf.mxu0
        %v1445 = vadd.f32 %v1212, %v1444
        %v1446 = vpop.f32.mrf.mxu0
        %v1447 = vadd.f32 %v1214, %v1446
        %1448 = vmatmul.bf16.gmra.mxu0 %v577
        %v1449 = vpop.f32.mrf.mxu0
        %v1450 = vadd.f32 %v1217, %v1449
        %v1451 = vpop.f32.mrf.mxu0
        %v1452 = vadd.f32 %v1219, %v1451
        %1453 = vmatmul.bf16.gmra.mxu0 %v585
        %v1454 = vpop.f32.mrf.mxu0
        %v1455 = vadd.f32 %v1222, %v1454
        %v1456 = vpop.f32.mrf.mxu0
        %v1457 = vadd.f32 %v1224, %v1456
        %1458 = vmatmul.bf16.gmra.mxu0 %v593
        %v1459 = vpop.f32.mrf.mxu0
        %v1460 = vadd.f32 %v1227, %v1459
        %v1461 = vpop.f32.mrf.mxu0
        %v1462 = vadd.f32 %v1229, %v1461
        %1463 = vmatmul.bf16.gmra.mxu0 %v601
        %v1464 = vpop.f32.mrf.mxu0
        %v1465 = vadd.f32 %v1232, %v1464
        %v1466 = vpop.f32.mrf.mxu0
        %v1467 = vadd.f32 %v1234, %v1466
        %1468 = vmatmul.bf16.gmra.mxu0 %v609
        %v1469 = vpop.f32.mrf.mxu0
        %v1470 = vadd.f32 %v1237, %v1469
        %v1471 = vpop.f32.mrf.mxu0
        %v1472 = vadd.f32 %v1239, %v1471
        %1473 = vmatmul.bf16.gmra.mxu0 %v617
        %v1474 = vpop.f32.mrf.mxu0
        %v1475 = vadd.f32 %v1242, %v1474
        %v1476 = vpop.f32.mrf.mxu0
        %v1477 = vadd.f32 %v1244, %v1476
        %1478 = vmatmul.bf16.gmra.mxu0 %v625
        %v1479 = vpop.f32.mrf.mxu0
        %v1480 = vadd.f32 %v1247, %v1479
        %v1481 = vpop.f32.mrf.mxu0
        %v1482 = vadd.f32 %v1249, %v1481
        %1483 = vmatmul.bf16.gmra.mxu0 %v633
        %v1484 = vpop.f32.mrf.mxu0
        %v1485 = vadd.f32 %v1252, %v1484
        %v1486 = vpop.f32.mrf.mxu0
        %v1487 = vadd.f32 %v1254, %v1486
        %1488 = vmatmul.bf16.gmra.mxu0 %v641
        %v1489 = vpop.f32.mrf.mxu0
        %v1490 = vadd.f32 %v1257, %v1489
        %v1491 = vpop.f32.mrf.mxu0
        %v1492 = vadd.f32 %v1259, %v1491
        %1493 = vmatmul.bf16.gmra.mxu0 %v649
        %v1494 = vpop.f32.mrf.mxu0
        %v1495 = vadd.f32 %v1262, %v1494
        %v1496 = vpop.f32.mrf.mxu0
        %v1497 = vadd.f32 %v1264, %v1496
        %1498 = vmatmul.bf16.gmra.mxu0 %v657
        %v1499 = vpop.f32.mrf.mxu0
        %v1500 = vadd.f32 %v1267, %v1499
        %v1501 = vpop.f32.mrf.mxu0
        %v1502 = vadd.f32 %v1269, %v1501
        %1503 = vmatmul.bf16.gmra.mxu0 %v665
        %v1504 = vpop.f32.mrf.mxu0
        %v1505 = vadd.f32 %v1272, %v1504
        %v1506 = vpop.f32.mrf.mxu0
        %v1507 = vadd.f32 %v1274, %v1506
        %1508 = vmatmul.bf16.gmra.mxu0 %v673
        %v1509 = vpop.f32.mrf.mxu0
        %v1510 = vadd.f32 %v1277, %v1509
        %v1511 = vpop.f32.mrf.mxu0
        %v1512 = vadd.f32 %v1279, %v1511
        %1513 = vmatmul.bf16.gmra.mxu0 %v681
        %v1514 = vpop.f32.mrf.mxu0
        %v1515 = vadd.f32 %v1282, %v1514
        %v1516 = vpop.f32.mrf.mxu0
        %v1517 = vadd.f32 %v1284, %v1516
        %1518 = vmatmul.bf16.gmra.mxu0 %v689
        %v1519 = vpop.f32.mrf.mxu0
        %v1520 = vadd.f32 %v1287, %v1519
        %v1521 = vpop.f32.mrf.mxu0
        %v1522 = vadd.f32 %v1289, %v1521
        %1523 = vdwg.mxu0
        %1524 = vmatpush.bf16.msra.mxu0 %v1402
        %1525 = vmatpush.bf16.msra.mxu0 %v1401
        %1526 = vmatpush.bf16.msra.mxu0 %v1400
        %1527 = vmatpush.bf16.msra.mxu0 %v1399
        %1528 = vmatpush.bf16.msra.mxu0 %v1398
        %1529 = vmatpush.bf16.msra.mxu0 %v1397
        %1530 = vmatpush.bf16.msra.mxu0 %v1396
        %1531 = vmatpush.bf16.msra.mxu0 %v1395
        %1532 = vmatmul.bf16.gmra.mxu0 0
        %v1533 = vpop.f32.mrf.mxu0
        %v1534 = vadd.f32 %v1445, %v1533
        %v1535 = vpop.f32.mrf.mxu0
        %v1536 = vadd.f32 %v1447, %v1535
        %1537 = vmatmul.bf16.gmra.mxu0 %v529
        %v1538 = vpop.f32.mrf.mxu0
        %v1539 = vadd.f32 %v1450, %v1538
        %v1540 = vpop.f32.mrf.mxu0
        %v1541 = vadd.f32 %v1452, %v1540
        %1542 = vmatmul.bf16.gmra.mxu0 %v530
        %v1543 = vpop.f32.mrf.mxu0
        %v1544 = vadd.f32 %v1455, %v1543
        %v1545 = vpop.f32.mrf.mxu0
        %v1546 = vadd.f32 %v1457, %v1545
        %1547 = vmatmul.bf16.gmra.mxu0 %v531
        %v1548 = vpop.f32.mrf.mxu0
        %v1549 = vadd.f32 %v1460, %v1548
        %v1550 = vpop.f32.mrf.mxu0
        %v1551 = vadd.f32 %v1462, %v1550
        %1552 = vmatmul.bf16.gmra.mxu0 %v532
        %v1553 = vpop.f32.mrf.mxu0
        %v1554 = vadd.f32 %v1465, %v1553
        %v1555 = vpop.f32.mrf.mxu0
        %v1556 = vadd.f32 %v1467, %v1555
        %1557 = vmatmul.bf16.gmra.mxu0 %v533
        %v1558 = vpop.f32.mrf.mxu0
        %v1559 = vadd.f32 %v1470, %v1558
        %v1560 = vpop.f32.mrf.mxu0
        %v1561 = vadd.f32 %v1472, %v1560
        %1562 = vmatmul.bf16.gmra.mxu0 %v534
        %v1563 = vpop.f32.mrf.mxu0
        %v1564 = vadd.f32 %v1475, %v1563
        %v1565 = vpop.f32.mrf.mxu0
        %v1566 = vadd.f32 %v1477, %v1565
        %1567 = vmatmul.bf16.gmra.mxu0 %v535
        %v1568 = vpop.f32.mrf.mxu0
        %v1569 = vadd.f32 %v1480, %v1568
        %v1570 = vpop.f32.mrf.mxu0
        %v1571 = vadd.f32 %v1482, %v1570
        %1572 = vmatmul.bf16.gmra.mxu0 %v536
        %v1573 = vpop.f32.mrf.mxu0
        %v1574 = vadd.f32 %v1485, %v1573
        %v1575 = vpop.f32.mrf.mxu0
        %v1576 = vadd.f32 %v1487, %v1575
        %1577 = vmatmul.bf16.gmra.mxu0 %v537
        %v1578 = vpop.f32.mrf.mxu0
        %v1579 = vadd.f32 %v1490, %v1578
        %v1580 = vpop.f32.mrf.mxu0
        %v1581 = vadd.f32 %v1492, %v1580
        %1582 = vmatmul.bf16.gmra.mxu0 %v538
        %v1583 = vpop.f32.mrf.mxu0
        %v1584 = vadd.f32 %v1495, %v1583
        %v1585 = vpop.f32.mrf.mxu0
        %v1586 = vadd.f32 %v1497, %v1585
        %1587 = vmatmul.bf16.gmra.mxu0 %v539
        %v1588 = vpop.f32.mrf.mxu0
        %v1589 = vadd.f32 %v1500, %v1588
        %v1590 = vpop.f32.mrf.mxu0
        %v1591 = vadd.f32 %v1502, %v1590
        %1592 = vmatmul.bf16.gmra.mxu0 %v540
        %v1593 = vpop.f32.mrf.mxu0
        %v1594 = vadd.f32 %v1505, %v1593
        %v1595 = vpop.f32.mrf.mxu0
        %v1596 = vadd.f32 %v1507, %v1595
        %1597 = vmatmul.bf16.gmra.mxu0 %v541
        %v1598 = vpop.f32.mrf.mxu0
        %v1599 = vadd.f32 %v1510, %v1598
        %v1600 = vpop.f32.mrf.mxu0
        %v1601 = vadd.f32 %v1512, %v1600
        %1602 = vmatmul.bf16.gmra.mxu0 %v542
        %v1603 = vpop.f32.mrf.mxu0
        %v1604 = vadd.f32 %v1515, %v1603
        %v1605 = vpop.f32.mrf.mxu0
        %v1606 = vadd.f32 %v1517, %v1605
        %1607 = vmatmul.bf16.gmra.mxu0 %v543
        %v1608 = vpop.f32.mrf.mxu0
        %v1609 = vadd.f32 %v1520, %v1608
        %v1610 = vpop.f32.mrf.mxu0
        %v1611 = vadd.f32 %v1522, %v1610
        %1612 = vdwg.mxu0
        %1613 = vmatpush.bf16.msra.mxu0 %v1410
        %1614 = vmatpush.bf16.msra.mxu0 %v1409
        %1615 = vmatpush.bf16.msra.mxu0 %v1408
        %1616 = vmatpush.bf16.msra.mxu0 %v1407
        %1617 = vmatpush.bf16.msra.mxu0 %v1406
        %1618 = vmatpush.bf16.msra.mxu0 %v1405
        %1619 = vmatpush.bf16.msra.mxu0 %v1404
        %1620 = vmatpush.bf16.msra.mxu0 %v1403
        %1621 = vmatmul.bf16.gmra.mxu0 %v709
        %v1622 = vpop.f32.mrf.mxu0
        %v1623 = vadd.f32 %v1534, %v1622
        %v1624 = vpop.f32.mrf.mxu0
        %v1625 = vadd.f32 %v1536, %v1624
        %1626 = vmatmul.bf16.gmra.mxu0 %v712
        %v1627 = vpop.f32.mrf.mxu0
        %v1628 = vadd.f32 %v1539, %v1627
        %v1629 = vpop.f32.mrf.mxu0
        %v1630 = vadd.f32 %v1541, %v1629
        %1631 = vmatmul.bf16.gmra.mxu0 %v715
        %v1632 = vpop.f32.mrf.mxu0
        %v1633 = vadd.f32 %v1544, %v1632
        %v1634 = vpop.f32.mrf.mxu0
        %v1635 = vadd.f32 %v1546, %v1634
        %1636 = vmatmul.bf16.gmra.mxu0 %v718
        %v1637 = vpop.f32.mrf.mxu0
        %v1638 = vadd.f32 %v1549, %v1637
        %v1639 = vpop.f32.mrf.mxu0
        %v1640 = vadd.f32 %v1551, %v1639
        %1641 = vmatmul.bf16.gmra.mxu0 %v721
        %v1642 = vpop.f32.mrf.mxu0
        %v1643 = vadd.f32 %v1554, %v1642
        %v1644 = vpop.f32.mrf.mxu0
        %v1645 = vadd.f32 %v1556, %v1644
        %1646 = vmatmul.bf16.gmra.mxu0 %v724
        %v1647 = vpop.f32.mrf.mxu0
        %v1648 = vadd.f32 %v1559, %v1647
        %v1649 = vpop.f32.mrf.mxu0
        %v1650 = vadd.f32 %v1561, %v1649
        %1651 = vmatmul.bf16.gmra.mxu0 %v727
        %v1652 = vpop.f32.mrf.mxu0
        %v1653 = vadd.f32 %v1564, %v1652
        %v1654 = vpop.f32.mrf.mxu0
        %v1655 = vadd.f32 %v1566, %v1654
        %1656 = vmatmul.bf16.gmra.mxu0 %v730
        %v1657 = vpop.f32.mrf.mxu0
        %v1658 = vadd.f32 %v1569, %v1657
        %v1659 = vpop.f32.mrf.mxu0
        %v1660 = vadd.f32 %v1571, %v1659
        %1661 = vmatmul.bf16.gmra.mxu0 %v733
        %v1662 = vpop.f32.mrf.mxu0
        %v1663 = vadd.f32 %v1574, %v1662
        %v1664 = vpop.f32.mrf.mxu0
        %v1665 = vadd.f32 %v1576, %v1664
        %1666 = vmatmul.bf16.gmra.mxu0 %v736
        %v1667 = vpop.f32.mrf.mxu0
        %v1668 = vadd.f32 %v1579, %v1667
        %v1669 = vpop.f32.mrf.mxu0
        %v1670 = vadd.f32 %v1581, %v1669
        %1671 = vmatmul.bf16.gmra.mxu0 %v739
        %v1672 = vpop.f32.mrf.mxu0
        %v1673 = vadd.f32 %v1584, %v1672
        %v1674 = vpop.f32.mrf.mxu0
        %v1675 = vadd.f32 %v1586, %v1674
        %1676 = vmatmul.bf16.gmra.mxu0 %v742
        %v1677 = vpop.f32.mrf.mxu0
        %v1678 = vadd.f32 %v1589, %v1677
        %v1679 = vpop.f32.mrf.mxu0
        %v1680 = vadd.f32 %v1591, %v1679
        %1681 = vmatmul.bf16.gmra.mxu0 %v745
        %v1682 = vpop.f32.mrf.mxu0
        %v1683 = vadd.f32 %v1594, %v1682
        %v1684 = vpop.f32.mrf.mxu0
        %v1685 = vadd.f32 %v1596, %v1684
        %1686 = vmatmul.bf16.gmra.mxu0 %v748
        %v1687 = vpop.f32.mrf.mxu0
        %v1688 = vadd.f32 %v1599, %v1687
        %v1689 = vpop.f32.mrf.mxu0
        %v1690 = vadd.f32 %v1601, %v1689
        %1691 = vmatmul.bf16.gmra.mxu0 %v751
        %v1692 = vpop.f32.mrf.mxu0
        %v1693 = vadd.f32 %v1604, %v1692
        %v1694 = vpop.f32.mrf.mxu0
        %v1695 = vadd.f32 %v1606, %v1694
        %1696 = vmatmul.bf16.gmra.mxu0 %v754
        %v1697 = vpop.f32.mrf.mxu0
        %v1698 = vadd.f32 %v1609, %v1697
        %v1699 = vpop.f32.mrf.mxu0
        %v1700 = vadd.f32 %v1611, %v1699
        %1701 = vdwg.mxu0
        %v1702 = vld [vmem:[%s2 + $0x180] sm:$0xf]
        %v1703 = vld [vmem:[%s2 + $0x184] sm:$0xf]
        %v1704 = vld [vmem:[%s2 + $0x188] sm:$0xf]
        %v1705 = vld [vmem:[%s2 + $0x18c] sm:$0xf]
        %v1706 = vld [vmem:[%s2 + $0x190] sm:$0xf]
        %v1707 = vld [vmem:[%s2 + $0x194] sm:$0xf]
        %v1708 = vld [vmem:[%s2 + $0x198] sm:$0xf]
        %v1709 = vld [vmem:[%s2 + $0x19c] sm:$0xf]
        %v1710 = vld [vmem:[%s2 + $0x1a0] sm:$0xf]
        %v1711 = vld [vmem:[%s2 + $0x1a4] sm:$0xf]
        %v1712 = vld [vmem:[%s2 + $0x1a8] sm:$0xf]
        %v1713 = vld [vmem:[%s2 + $0x1ac] sm:$0xf]
        %v1714 = vld [vmem:[%s2 + $0x1b0] sm:$0xf]
        %v1715 = vld [vmem:[%s2 + $0x1b4] sm:$0xf]
        %v1716 = vld [vmem:[%s2 + $0x1b8] sm:$0xf]
        %v1717 = vld [vmem:[%s2 + $0x1bc] sm:$0xf]
        %v1718 = vld [vmem:[%s2 + $0x1c0] sm:$0xf]
        %v1719 = vld [vmem:[%s2 + $0x1c4] sm:$0xf]
        %v1720 = vld [vmem:[%s2 + $0x1c8] sm:$0xf]
        %v1721 = vld [vmem:[%s2 + $0x1cc] sm:$0xf]
        %v1722 = vld [vmem:[%s2 + $0x1d0] sm:$0xf]
        %v1723 = vld [vmem:[%s2 + $0x1d4] sm:$0xf]
        %v1724 = vld [vmem:[%s2 + $0x1d8] sm:$0xf]
        %v1725 = vld [vmem:[%s2 + $0x1dc] sm:$0xf]
        %v1726 = vld [vmem:[%s2 + $0x1e0] sm:$0xf]
        %v1727 = vld [vmem:[%s2 + $0x1e4] sm:$0xf]
        %v1728 = vld [vmem:[%s2 + $0x1e8] sm:$0xf]
        %v1729 = vld [vmem:[%s2 + $0x1ec] sm:$0xf]
        %v1730 = vld [vmem:[%s2 + $0x1f0] sm:$0xf]
        %v1731 = vld [vmem:[%s2 + $0x1f4] sm:$0xf]
        %v1732 = vld [vmem:[%s2 + $0x1f8] sm:$0xf]
        %v1733 = vld [vmem:[%s2 + $0x1fc] sm:$0xf]
        %v1734 = vld [vmem:[%s2 + $0x200] sm:$0xf]
        %v1735 = vld [vmem:[%s2 + $0x204] sm:$0xf]
        %v1736 = vld [vmem:[%s2 + $0x208] sm:$0xf]
        %v1737 = vld [vmem:[%s2 + $0x20c] sm:$0xf]
        %v1738 = vld [vmem:[%s2 + $0x210] sm:$0xf]
        %v1739 = vld [vmem:[%s2 + $0x214] sm:$0xf]
        %v1740 = vld [vmem:[%s2 + $0x218] sm:$0xf]
        %v1741 = vld [vmem:[%s2 + $0x21c] sm:$0xf]
        %v1742 = vld [vmem:[%s2 + $0x220] sm:$0xf]
        %v1743 = vld [vmem:[%s2 + $0x224] sm:$0xf]
        %v1744 = vld [vmem:[%s2 + $0x228] sm:$0xf]
        %v1745 = vld [vmem:[%s2 + $0x22c] sm:$0xf]
        %v1746 = vld [vmem:[%s2 + $0x230] sm:$0xf]
        %v1747 = vld [vmem:[%s2 + $0x234] sm:$0xf]
        %v1748 = vld [vmem:[%s2 + $0x238] sm:$0xf]
        %v1749 = vld [vmem:[%s2 + $0x23c] sm:$0xf]
        %v1798 = vunpack.c.l.b16 %v1702
        %v1799 = vunpack.c.l.b16 %v1703
        %v1800 = vunpack.c.l.b16 %v1704
        %v1801 = vunpack.c.l.b16 %v1705
        %v1802 = vunpack.c.l.b16 %v1706
        %v1803 = vunpack.c.l.b16 %v1707
        %v1804 = vunpack.c.l.b16 %v1708
        %v1805 = vunpack.c.l.b16 %v1709
        %v1806 = vunpack.c.l.b16 %v1710
        %v1807 = vunpack.c.l.b16 %v1711
        %v1808 = vunpack.c.l.b16 %v1712
        %v1809 = vunpack.c.l.b16 %v1713
        %v1810 = vunpack.c.l.b16 %v1714
        %v1811 = vunpack.c.l.b16 %v1715
        %v1812 = vunpack.c.l.b16 %v1716
        %v1813 = vunpack.c.l.b16 %v1717
        %v1814 = vunpack.c.l.b16 %v1718
        %v1815 = vunpack.c.l.b16 %v1719
        %v1816 = vunpack.c.l.b16 %v1720
        %v1817 = vunpack.c.l.b16 %v1721
        %v1818 = vunpack.c.l.b16 %v1722
        %v1819 = vunpack.c.l.b16 %v1723
        %v1820 = vunpack.c.l.b16 %v1724
        %v1821 = vunpack.c.l.b16 %v1725
        %v1822 = vunpack.c.l.b16 %v1726
        %v1823 = vunpack.c.l.b16 %v1727
        %v1824 = vunpack.c.l.b16 %v1728
        %v1825 = vunpack.c.l.b16 %v1729
        %v1826 = vunpack.c.l.b16 %v1730
        %v1827 = vunpack.c.l.b16 %v1731
        %v1828 = vunpack.c.l.b16 %v1732
        %v1829 = vunpack.c.l.b16 %v1733
        %v1830 = vunpack.c.l.b16 %v1734
        %v1831 = vunpack.c.l.b16 %v1735
        %v1832 = vunpack.c.l.b16 %v1736
        %v1833 = vunpack.c.l.b16 %v1737
        %v1834 = vunpack.c.l.b16 %v1738
        %v1835 = vunpack.c.l.b16 %v1739
        %v1836 = vunpack.c.l.b16 %v1740
        %v1837 = vunpack.c.l.b16 %v1741
        %v1838 = vunpack.c.l.b16 %v1742
        %v1839 = vunpack.c.l.b16 %v1743
        %v1840 = vunpack.c.l.b16 %v1744
        %v1841 = vunpack.c.l.b16 %v1745
        %v1842 = vunpack.c.l.b16 %v1746
        %v1843 = vunpack.c.l.b16 %v1747
        %v1844 = vunpack.c.l.b16 %v1748
        %v1845 = vunpack.c.l.b16 %v1749
        %v1846 = vpack.c.b16 %v1799, %v1798
        %v1847 = vpack.c.b16 %v1801, %v1800
        %v1848 = vpack.c.b16 %v1803, %v1802
        %v1849 = vpack.c.b16 %v1805, %v1804
        %v1850 = vpack.c.b16 %v1807, %v1806
        %v1851 = vpack.c.b16 %v1809, %v1808
        %v1852 = vpack.c.b16 %v1811, %v1810
        %v1853 = vpack.c.b16 %v1813, %v1812
        %v1854 = vpack.c.b16 %v1815, %v1814
        %v1855 = vpack.c.b16 %v1817, %v1816
        %v1856 = vpack.c.b16 %v1819, %v1818
        %v1857 = vpack.c.b16 %v1821, %v1820
        %v1858 = vpack.c.b16 %v1823, %v1822
        %v1859 = vpack.c.b16 %v1825, %v1824
        %v1860 = vpack.c.b16 %v1827, %v1826
        %v1861 = vpack.c.b16 %v1829, %v1828
        %v1862 = vpack.c.b16 %v1831, %v1830
        %v1863 = vpack.c.b16 %v1833, %v1832
        %v1864 = vpack.c.b16 %v1835, %v1834
        %v1865 = vpack.c.b16 %v1837, %v1836
        %v1866 = vpack.c.b16 %v1839, %v1838
        %v1867 = vpack.c.b16 %v1841, %v1840
        %v1868 = vpack.c.b16 %v1843, %v1842
        %v1869 = vpack.c.b16 %v1845, %v1844
        %1894 = vmatpush.bf16.msra.mxu0 %v1853
        %1895 = vmatpush.bf16.msra.mxu0 %v1852
        %1896 = vmatpush.bf16.msra.mxu0 %v1851
        %1897 = vmatpush.bf16.msra.mxu0 %v1850
        %1898 = vmatpush.bf16.msra.mxu0 %v1849
        %1899 = vmatpush.bf16.msra.mxu0 %v1848
        %1900 = vmatpush.bf16.msra.mxu0 %v1847
        %1901 = vmatpush.bf16.msra.mxu0 %v1846
        %1902 = vmatmul.bf16.gmra.mxu0 %v585
        %v1903 = vpop.f32.mrf.mxu0
        %v1904 = vadd.f32 0.0, %v1903
        %v1905 = vpop.f32.mrf.mxu0
        %v1906 = vadd.f32 0.0, %v1905
        %1907 = vmatmul.bf16.gmra.mxu0 %v593
        %v1908 = vpop.f32.mrf.mxu0
        %v1909 = vadd.f32 0.0, %v1908
        %v1910 = vpop.f32.mrf.mxu0
        %v1911 = vadd.f32 0.0, %v1910
        %1912 = vmatmul.bf16.gmra.mxu0 %v601
        %v1913 = vpop.f32.mrf.mxu0
        %v1914 = vadd.f32 0.0, %v1913
        %v1915 = vpop.f32.mrf.mxu0
        %v1916 = vadd.f32 0.0, %v1915
        %1917 = vmatmul.bf16.gmra.mxu0 %v609
        %v1918 = vpop.f32.mrf.mxu0
        %v1919 = vadd.f32 0.0, %v1918
        %v1920 = vpop.f32.mrf.mxu0
        %v1921 = vadd.f32 0.0, %v1920
        %1922 = vmatmul.bf16.gmra.mxu0 %v617
        %v1923 = vpop.f32.mrf.mxu0
        %v1924 = vadd.f32 0.0, %v1923
        %v1925 = vpop.f32.mrf.mxu0
        %v1926 = vadd.f32 0.0, %v1925
        %1927 = vmatmul.bf16.gmra.mxu0 %v625
        %v1928 = vpop.f32.mrf.mxu0
        %v1929 = vadd.f32 0.0, %v1928
        %v1930 = vpop.f32.mrf.mxu0
        %v1931 = vadd.f32 0.0, %v1930
        %1932 = vmatmul.bf16.gmra.mxu0 %v633
        %v1933 = vpop.f32.mrf.mxu0
        %v1934 = vadd.f32 0.0, %v1933
        %v1935 = vpop.f32.mrf.mxu0
        %v1936 = vadd.f32 0.0, %v1935
        %1937 = vmatmul.bf16.gmra.mxu0 %v641
        %v1938 = vpop.f32.mrf.mxu0
        %v1939 = vadd.f32 0.0, %v1938
        %v1940 = vpop.f32.mrf.mxu0
        %v1941 = vadd.f32 0.0, %v1940
        %1942 = vmatmul.bf16.gmra.mxu0 %v649
        %v1943 = vpop.f32.mrf.mxu0
        %v1944 = vadd.f32 0.0, %v1943
        %v1945 = vpop.f32.mrf.mxu0
        %v1946 = vadd.f32 0.0, %v1945
        %1947 = vmatmul.bf16.gmra.mxu0 %v657
        %v1948 = vpop.f32.mrf.mxu0
        %v1949 = vadd.f32 0.0, %v1948
        %v1950 = vpop.f32.mrf.mxu0
        %v1951 = vadd.f32 0.0, %v1950
        %1952 = vmatmul.bf16.gmra.mxu0 %v665
        %v1953 = vpop.f32.mrf.mxu0
        %v1954 = vadd.f32 0.0, %v1953
        %v1955 = vpop.f32.mrf.mxu0
        %v1956 = vadd.f32 0.0, %v1955
        %1957 = vmatmul.bf16.gmra.mxu0 %v673
        %v1958 = vpop.f32.mrf.mxu0
        %v1959 = vadd.f32 0.0, %v1958
        %v1960 = vpop.f32.mrf.mxu0
        %v1961 = vadd.f32 0.0, %v1960
        %1962 = vmatmul.bf16.gmra.mxu0 %v681
        %v1963 = vpop.f32.mrf.mxu0
        %v1964 = vadd.f32 0.0, %v1963
        %v1965 = vpop.f32.mrf.mxu0
        %v1966 = vadd.f32 0.0, %v1965
        %1967 = vmatmul.bf16.gmra.mxu0 %v689
        %v1968 = vpop.f32.mrf.mxu0
        %v1969 = vadd.f32 0.0, %v1968
        %v1970 = vpop.f32.mrf.mxu0
        %v1971 = vadd.f32 0.0, %v1970
        %1972 = vmatmul.bf16.gmra.mxu0 %v826
        %v1973 = vpop.f32.mrf.mxu0
        %v1974 = vadd.f32 0.0, %v1973
        %v1975 = vpop.f32.mrf.mxu0
        %v1976 = vadd.f32 0.0, %v1975
        %1977 = vmatmul.bf16.gmra.mxu0 %v569
        %v1978 = vpop.f32.mrf.mxu0
        %v1979 = vadd.f32 0.0, %v1978
        %v1980 = vpop.f32.mrf.mxu0
        %v1981 = vadd.f32 0.0, %v1980
        %1982 = vdwg.mxu0
        %1983 = vmatpush.bf16.msra.mxu0 %v1861
        %1984 = vmatpush.bf16.msra.mxu0 %v1860
        %1985 = vmatpush.bf16.msra.mxu0 %v1859
        %1986 = vmatpush.bf16.msra.mxu0 %v1858
        %1987 = vmatpush.bf16.msra.mxu0 %v1857
        %1988 = vmatpush.bf16.msra.mxu0 %v1856
        %1989 = vmatpush.bf16.msra.mxu0 %v1855
        %1990 = vmatpush.bf16.msra.mxu0 %v1854
        %1991 = vmatmul.bf16.gmra.mxu0 %v530
        %v1992 = vpop.f32.mrf.mxu0
        %v1993 = vadd.f32 %v1904, %v1992
        %v1994 = vpop.f32.mrf.mxu0
        %v1995 = vadd.f32 %v1906, %v1994
        %1996 = vmatmul.bf16.gmra.mxu0 %v531
        %v1997 = vpop.f32.mrf.mxu0
        %v1998 = vadd.f32 %v1909, %v1997
        %v1999 = vpop.f32.mrf.mxu0
        %v2000 = vadd.f32 %v1911, %v1999
        %2001 = vmatmul.bf16.gmra.mxu0 %v532
        %v2002 = vpop.f32.mrf.mxu0
        %v2003 = vadd.f32 %v1914, %v2002
        %v2004 = vpop.f32.mrf.mxu0
        %v2005 = vadd.f32 %v1916, %v2004
        %2006 = vmatmul.bf16.gmra.mxu0 %v533
        %v2007 = vpop.f32.mrf.mxu0
        %v2008 = vadd.f32 %v1919, %v2007
        %v2009 = vpop.f32.mrf.mxu0
        %v2010 = vadd.f32 %v1921, %v2009
        %2011 = vmatmul.bf16.gmra.mxu0 %v534
        %v2012 = vpop.f32.mrf.mxu0
        %v2013 = vadd.f32 %v1924, %v2012
        %v2014 = vpop.f32.mrf.mxu0
        %v2015 = vadd.f32 %v1926, %v2014
        %2016 = vmatmul.bf16.gmra.mxu0 %v535
        %v2017 = vpop.f32.mrf.mxu0
        %v2018 = vadd.f32 %v1929, %v2017
        %v2019 = vpop.f32.mrf.mxu0
        %v2020 = vadd.f32 %v1931, %v2019
        %2021 = vmatmul.bf16.gmra.mxu0 %v536
        %v2022 = vpop.f32.mrf.mxu0
        %v2023 = vadd.f32 %v1934, %v2022
        %v2024 = vpop.f32.mrf.mxu0
        %v2025 = vadd.f32 %v1936, %v2024
        %2026 = vmatmul.bf16.gmra.mxu0 %v537
        %v2027 = vpop.f32.mrf.mxu0
        %v2028 = vadd.f32 %v1939, %v2027
        %v2029 = vpop.f32.mrf.mxu0
        %v2030 = vadd.f32 %v1941, %v2029
        %2031 = vmatmul.bf16.gmra.mxu0 %v538
        %v2032 = vpop.f32.mrf.mxu0
        %v2033 = vadd.f32 %v1944, %v2032
        %v2034 = vpop.f32.mrf.mxu0
        %v2035 = vadd.f32 %v1946, %v2034
        %2036 = vmatmul.bf16.gmra.mxu0 %v539
        %v2037 = vpop.f32.mrf.mxu0
        %v2038 = vadd.f32 %v1949, %v2037
        %v2039 = vpop.f32.mrf.mxu0
        %v2040 = vadd.f32 %v1951, %v2039
        %2041 = vmatmul.bf16.gmra.mxu0 %v540
        %v2042 = vpop.f32.mrf.mxu0
        %v2043 = vadd.f32 %v1954, %v2042
        %v2044 = vpop.f32.mrf.mxu0
        %v2045 = vadd.f32 %v1956, %v2044
        %2046 = vmatmul.bf16.gmra.mxu0 %v541
        %v2047 = vpop.f32.mrf.mxu0
        %v2048 = vadd.f32 %v1959, %v2047
        %v2049 = vpop.f32.mrf.mxu0
        %v2050 = vadd.f32 %v1961, %v2049
        %2051 = vmatmul.bf16.gmra.mxu0 %v542
        %v2052 = vpop.f32.mrf.mxu0
        %v2053 = vadd.f32 %v1964, %v2052
        %v2054 = vpop.f32.mrf.mxu0
        %v2055 = vadd.f32 %v1966, %v2054
        %2056 = vmatmul.bf16.gmra.mxu0 %v543
        %v2057 = vpop.f32.mrf.mxu0
        %v2058 = vadd.f32 %v1969, %v2057
        %v2059 = vpop.f32.mrf.mxu0
        %v2060 = vadd.f32 %v1971, %v2059
        %2061 = vmatmul.bf16.gmra.mxu0 %v544
        %v2062 = vpop.f32.mrf.mxu0
        %v2063 = vadd.f32 %v1974, %v2062
        %v2064 = vpop.f32.mrf.mxu0
        %v2065 = vadd.f32 %v1976, %v2064
        %2066 = vmatmul.bf16.gmra.mxu0 0
        %v2067 = vpop.f32.mrf.mxu0
        %v2068 = vadd.f32 %v1979, %v2067
        %v2069 = vpop.f32.mrf.mxu0
        %v2070 = vadd.f32 %v1981, %v2069
        %2071 = vdwg.mxu0
        %2072 = vmatpush.bf16.msra.mxu0 %v1869
        %2073 = vmatpush.bf16.msra.mxu0 %v1868
        %2074 = vmatpush.bf16.msra.mxu0 %v1867
        %2075 = vmatpush.bf16.msra.mxu0 %v1866
        %2076 = vmatpush.bf16.msra.mxu0 %v1865
        %2077 = vmatpush.bf16.msra.mxu0 %v1864
        %2078 = vmatpush.bf16.msra.mxu0 %v1863
        %2079 = vmatpush.bf16.msra.mxu0 %v1862
        %2080 = vmatmul.bf16.gmra.mxu0 %v715
        %v2081 = vpop.f32.mrf.mxu0
        %v2082 = vadd.f32 %v1993, %v2081
        %v2083 = vpop.f32.mrf.mxu0
        %v2084 = vadd.f32 %v1995, %v2083
        %2085 = vmatmul.bf16.gmra.mxu0 %v718
        %v2086 = vpop.f32.mrf.mxu0
        %v2087 = vadd.f32 %v1998, %v2086
        %v2088 = vpop.f32.mrf.mxu0
        %v2089 = vadd.f32 %v2000, %v2088
        %2090 = vmatmul.bf16.gmra.mxu0 %v721
        %v2091 = vpop.f32.mrf.mxu0
        %v2092 = vadd.f32 %v2003, %v2091
        %v2093 = vpop.f32.mrf.mxu0
        %v2094 = vadd.f32 %v2005, %v2093
        %2095 = vmatmul.bf16.gmra.mxu0 %v724
        %v2096 = vpop.f32.mrf.mxu0
        %v2097 = vadd.f32 %v2008, %v2096
        %v2098 = vpop.f32.mrf.mxu0
        %v2099 = vadd.f32 %v2010, %v2098
        %2100 = vmatmul.bf16.gmra.mxu0 %v727
        %v2101 = vpop.f32.mrf.mxu0
        %v2102 = vadd.f32 %v2013, %v2101
        %v2103 = vpop.f32.mrf.mxu0
        %v2104 = vadd.f32 %v2015, %v2103
        %2105 = vmatmul.bf16.gmra.mxu0 %v730
        %v2106 = vpop.f32.mrf.mxu0
        %v2107 = vadd.f32 %v2018, %v2106
        %v2108 = vpop.f32.mrf.mxu0
        %v2109 = vadd.f32 %v2020, %v2108
        %2110 = vmatmul.bf16.gmra.mxu0 %v733
        %v2111 = vpop.f32.mrf.mxu0
        %v2112 = vadd.f32 %v2023, %v2111
        %v2113 = vpop.f32.mrf.mxu0
        %v2114 = vadd.f32 %v2025, %v2113
        %2115 = vmatmul.bf16.gmra.mxu0 %v736
        %v2116 = vpop.f32.mrf.mxu0
        %v2117 = vadd.f32 %v2028, %v2116
        %v2118 = vpop.f32.mrf.mxu0
        %v2119 = vadd.f32 %v2030, %v2118
        %2120 = vmatmul.bf16.gmra.mxu0 %v739
        %v2121 = vpop.f32.mrf.mxu0
        %v2122 = vadd.f32 %v2033, %v2121
        %v2123 = vpop.f32.mrf.mxu0
        %v2124 = vadd.f32 %v2035, %v2123
        %2125 = vmatmul.bf16.gmra.mxu0 %v742
        %v2126 = vpop.f32.mrf.mxu0
        %v2127 = vadd.f32 %v2038, %v2126
        %v2128 = vpop.f32.mrf.mxu0
        %v2129 = vadd.f32 %v2040, %v2128
        %2130 = vmatmul.bf16.gmra.mxu0 %v745
        %v2131 = vpop.f32.mrf.mxu0
        %v2132 = vadd.f32 %v2043, %v2131
        %v2133 = vpop.f32.mrf.mxu0
        %v2134 = vadd.f32 %v2045, %v2133
        %2135 = vmatmul.bf16.gmra.mxu0 %v748
        %v2136 = vpop.f32.mrf.mxu0
        %v2137 = vadd.f32 %v2048, %v2136
        %v2138 = vpop.f32.mrf.mxu0
        %v2139 = vadd.f32 %v2050, %v2138
        %2140 = vmatmul.bf16.gmra.mxu0 %v751
        %v2141 = vpop.f32.mrf.mxu0
        %v2142 = vadd.f32 %v2053, %v2141
        %v2143 = vpop.f32.mrf.mxu0
        %v2144 = vadd.f32 %v2055, %v2143
        %2145 = vmatmul.bf16.gmra.mxu0 %v754
        %v2146 = vpop.f32.mrf.mxu0
        %v2147 = vadd.f32 %v2058, %v2146
        %v2148 = vpop.f32.mrf.mxu0
        %v2149 = vadd.f32 %v2060, %v2148
        %2150 = vmatmul.bf16.gmra.mxu0 %v830
        %v2151 = vpop.f32.mrf.mxu0
        %v2152 = vadd.f32 %v2063, %v2151
        %v2153 = vpop.f32.mrf.mxu0
        %v2154 = vadd.f32 %v2065, %v2153
        %2155 = vmatmul.bf16.gmra.mxu0 %v709
        %v2156 = vpop.f32.mrf.mxu0
        %v2157 = vadd.f32 %v2068, %v2156
        %v2158 = vpop.f32.mrf.mxu0
        %v2159 = vadd.f32 %v2070, %v2158
        %2160 = vdwg.mxu0
        %v2161 = vadd.f32 %v1623, %v2082
        %v2162 = vadd.f32 %v1625, %v2084
        %v2163 = vadd.f32 %v1628, %v2087
        %v2164 = vadd.f32 %v1630, %v2089
        %v2165 = vadd.f32 %v1633, %v2092
        %v2166 = vadd.f32 %v1635, %v2094
        %v2167 = vadd.f32 %v1638, %v2097
        %v2168 = vadd.f32 %v1640, %v2099
        %v2169 = vadd.f32 %v1643, %v2102
        %v2170 = vadd.f32 %v1645, %v2104
        %v2171 = vadd.f32 %v1648, %v2107
        %v2172 = vadd.f32 %v1650, %v2109
        %v2173 = vadd.f32 %v1653, %v2112
        %v2174 = vadd.f32 %v1655, %v2114
        %v2175 = vadd.f32 %v1658, %v2117
        %v2176 = vadd.f32 %v1660, %v2119
        %v2177 = vadd.f32 %v1663, %v2122
        %v2178 = vadd.f32 %v1665, %v2124
        %v2179 = vadd.f32 %v1668, %v2127
        %v2180 = vadd.f32 %v1670, %v2129
        %v2181 = vadd.f32 %v1673, %v2132
        %v2182 = vadd.f32 %v1675, %v2134
        %v2183 = vadd.f32 %v1678, %v2137
        %v2184 = vadd.f32 %v1680, %v2139
        %v2185 = vadd.f32 %v1683, %v2142
        %v2186 = vadd.f32 %v1685, %v2144
        %v2187 = vadd.f32 %v1688, %v2147
        %v2188 = vadd.f32 %v1690, %v2149
        %v2189 = vadd.f32 %v1693, %v2152
        %v2190 = vadd.f32 %v1695, %v2154
        %v2191 = vadd.f32 %v1698, %v2157
        %v2192 = vadd.f32 %v1700, %v2159
        %v2193 = vld [vmem:[%s3] sm:$0x1]
        %v2195 = vperm.slane %v2193, 0
        %v2197 = vadd.f32 %v2161, %v2195
        %v2198 = vadd.f32 %v2162, %v2195
        %v2199 = vadd.f32 %v2163, %v2195
        %v2200 = vadd.f32 %v2164, %v2195
        %v2201 = vadd.f32 %v2165, %v2195
        %v2202 = vadd.f32 %v2166, %v2195
        %v2203 = vadd.f32 %v2167, %v2195
        %v2204 = vadd.f32 %v2168, %v2195
        %v2205 = vadd.f32 %v2169, %v2195
        %v2206 = vadd.f32 %v2170, %v2195
        %v2207 = vadd.f32 %v2171, %v2195
        %v2208 = vadd.f32 %v2172, %v2195
        %v2209 = vadd.f32 %v2173, %v2195
        %v2210 = vadd.f32 %v2174, %v2195
        %v2211 = vadd.f32 %v2175, %v2195
        %v2212 = vadd.f32 %v2176, %v2195
        %v2213 = vadd.f32 %v2177, %v2195
        %v2214 = vadd.f32 %v2178, %v2195
        %v2215 = vadd.f32 %v2179, %v2195
        %v2216 = vadd.f32 %v2180, %v2195
        %v2217 = vadd.f32 %v2181, %v2195
        %v2218 = vadd.f32 %v2182, %v2195
        %v2219 = vadd.f32 %v2183, %v2195
        %v2220 = vadd.f32 %v2184, %v2195
        %v2221 = vadd.f32 %v2185, %v2195
        %v2222 = vadd.f32 %v2186, %v2195
        %v2223 = vadd.f32 %v2187, %v2195
        %v2224 = vadd.f32 %v2188, %v2195
        %v2225 = vadd.f32 %v2189, %v2195
        %v2226 = vadd.f32 %v2190, %v2195
        %v2227 = vadd.f32 %v2191, %v2195
        %v2228 = vadd.f32 %v2192, %v2195
        %2229 = vst [vmem:[#allocation2] sm:$0xff] %v2197
        %2230 = vst [vmem:[#allocation2 + $0x8] sm:$0xff] %v2198
        %2231 = vst [vmem:[#allocation2 + $0x10] sm:$0xff] %v2199
        %2232 = vst [vmem:[#allocation2 + $0x18] sm:$0xff] %v2200
        %2233 = vst [vmem:[#allocation2 + $0x20] sm:$0xff] %v2201
        %2234 = vst [vmem:[#allocation2 + $0x28] sm:$0xff] %v2202
        %2235 = vst [vmem:[#allocation2 + $0x30] sm:$0xff] %v2203
        %2236 = vst [vmem:[#allocation2 + $0x38] sm:$0xff] %v2204
        %2237 = vst [vmem:[#allocation2 + $0x40] sm:$0xff] %v2205
        %2238 = vst [vmem:[#allocation2 + $0x48] sm:$0xff] %v2206
        %2239 = vst [vmem:[#allocation2 + $0x50] sm:$0xff] %v2207
        %2240 = vst [vmem:[#allocation2 + $0x58] sm:$0xff] %v2208
        %2241 = vst [vmem:[#allocation2 + $0x60] sm:$0xff] %v2209
        %2242 = vst [vmem:[#allocation2 + $0x68] sm:$0xff] %v2210
        %2243 = vst [vmem:[#allocation2 + $0x70] sm:$0xff] %v2211
        %2244 = vst [vmem:[#allocation2 + $0x78] sm:$0xff] %v2212
        %2245 = vst [vmem:[#allocation2 + $0x80] sm:$0xff] %v2213
        %2246 = vst [vmem:[#allocation2 + $0x88] sm:$0xff] %v2214
        %2247 = vst [vmem:[#allocation2 + $0x90] sm:$0xff] %v2215
        %2248 = vst [vmem:[#allocation2 + $0x98] sm:$0xff] %v2216
        %2249 = vst [vmem:[#allocation2 + $0xa0] sm:$0xff] %v2217
        %2250 = vst [vmem:[#allocation2 + $0xa8] sm:$0xff] %v2218
        %2251 = vst [vmem:[#allocation2 + $0xb0] sm:$0xff] %v2219
        %2252 = vst [vmem:[#allocation2 + $0xb8] sm:$0xff] %v2220
        %2253 = vst [vmem:[#allocation2 + $0xc0] sm:$0xff] %v2221
        %2254 = vst [vmem:[#allocation2 + $0xc8] sm:$0xff] %v2222
        %2255 = vst [vmem:[#allocation2 + $0xd0] sm:$0xff] %v2223
        %2256 = vst [vmem:[#allocation2 + $0xd8] sm:$0xff] %v2224
        %2257 = vst [vmem:[#allocation2 + $0xe0] sm:$0xff] %v2225
        %2258 = vst [vmem:[#allocation2 + $0xe8] sm:$0xff] %v2226
        %2259 = vst [vmem:[#allocation2 + $0xf0] sm:$0xff] %v2227
        %2260 = vst [vmem:[#allocation2 + $0xf8] sm:$0xff] %v2228
        %v2261 = vld [vmem:[#allocation2] sm:$0xff]
        %v2262 = vld [vmem:[#allocation2 + $0x8] sm:$0xff]
        %v2263 = vld [vmem:[#allocation2 + $0x10] sm:$0xff]
        %v2264 = vld [vmem:[#allocation2 + $0x18] sm:$0xff]
        %v2265 = vld [vmem:[#allocation2 + $0x20] sm:$0xff]
        %v2266 = vld [vmem:[#allocation2 + $0x28] sm:$0xff]
        %v2267 = vld [vmem:[#allocation2 + $0x30] sm:$0xff]
        %v2268 = vld [vmem:[#allocation2 + $0x38] sm:$0xff]
        %v2269 = vld [vmem:[#allocation2 + $0x40] sm:$0xff]
        %v2270 = vld [vmem:[#allocation2 + $0x48] sm:$0xff]
        %v2271 = vld [vmem:[#allocation2 + $0x50] sm:$0xff]
        %v2272 = vld [vmem:[#allocation2 + $0x58] sm:$0xff]
        %v2273 = vld [vmem:[#allocation2 + $0x60] sm:$0xff]
        %v2274 = vld [vmem:[#allocation2 + $0x68] sm:$0xff]
        %v2275 = vld [vmem:[#allocation2 + $0x70] sm:$0xff]
        %v2276 = vld [vmem:[#allocation2 + $0x78] sm:$0xff]
        %v2277 = vld [vmem:[#allocation2 + $0x80] sm:$0xff]
        %v2278 = vld [vmem:[#allocation2 + $0x88] sm:$0xff]
        %v2279 = vld [vmem:[#allocation2 + $0x90] sm:$0xff]
        %v2280 = vld [vmem:[#allocation2 + $0x98] sm:$0xff]
        %v2281 = vld [vmem:[#allocation2 + $0xa0] sm:$0xff]
        %v2282 = vld [vmem:[#allocation2 + $0xa8] sm:$0xff]
        %v2283 = vld [vmem:[#allocation2 + $0xb0] sm:$0xff]
        %v2284 = vld [vmem:[#allocation2 + $0xb8] sm:$0xff]
        %v2285 = vld [vmem:[#allocation2 + $0xc0] sm:$0xff]
        %v2286 = vld [vmem:[#allocation2 + $0xc8] sm:$0xff]
        %v2287 = vld [vmem:[#allocation2 + $0xd0] sm:$0xff]
        %v2288 = vld [vmem:[#allocation2 + $0xd8] sm:$0xff]
        %v2289 = vld [vmem:[#allocation2 + $0xe0] sm:$0xff]
        %v2290 = vld [vmem:[#allocation2 + $0xe8] sm:$0xff]
        %v2291 = vld [vmem:[#allocation2 + $0xf0] sm:$0xff]
        %v2292 = vld [vmem:[#allocation2 + $0xf8] sm:$0xff]
        %v2293 = vpack.c.bf16 %v2261, %v2261
        %v2294 = vpack.c.bf16 %v2262, %v2262
        %v2295 = vpack.c.bf16 %v2263, %v2263
        %v2296 = vpack.c.bf16 %v2264, %v2264
        %v2297 = vpack.c.bf16 %v2265, %v2265
        %v2298 = vpack.c.bf16 %v2266, %v2266
        %v2299 = vpack.c.bf16 %v2267, %v2267
        %v2300 = vpack.c.bf16 %v2268, %v2268
        %v2301 = vpack.c.bf16 %v2269, %v2269
        %v2302 = vpack.c.bf16 %v2270, %v2270
        %v2303 = vpack.c.bf16 %v2271, %v2271
        %v2304 = vpack.c.bf16 %v2272, %v2272
        %v2305 = vpack.c.bf16 %v2273, %v2273
        %v2306 = vpack.c.bf16 %v2274, %v2274
        %v2307 = vpack.c.bf16 %v2275, %v2275
        %v2308 = vpack.c.bf16 %v2276, %v2276
        %v2309 = vpack.c.bf16 %v2277, %v2277
        %v2310 = vpack.c.bf16 %v2278, %v2278
        %v2311 = vpack.c.bf16 %v2279, %v2279
        %v2312 = vpack.c.bf16 %v2280, %v2280
        %v2313 = vpack.c.bf16 %v2281, %v2281
        %v2314 = vpack.c.bf16 %v2282, %v2282
        %v2315 = vpack.c.bf16 %v2283, %v2283
        %v2316 = vpack.c.bf16 %v2284, %v2284
        %v2317 = vpack.c.bf16 %v2285, %v2285
        %v2318 = vpack.c.bf16 %v2286, %v2286
        %v2319 = vpack.c.bf16 %v2287, %v2287
        %v2320 = vpack.c.bf16 %v2288, %v2288
        %v2321 = vpack.c.bf16 %v2289, %v2289
        %v2322 = vpack.c.bf16 %v2290, %v2290
        %v2323 = vpack.c.bf16 %v2291, %v2291
        %v2324 = vpack.c.bf16 %v2292, %v2292
        %v2325 = vunpack.c.l.bf16 %v2293
        %v2326 = vunpack.c.l.bf16 %v2294
        %v2327 = vunpack.c.l.bf16 %v2295
        %v2328 = vunpack.c.l.bf16 %v2296
        %v2329 = vunpack.c.l.bf16 %v2297
        %v2330 = vunpack.c.l.bf16 %v2298
        %v2331 = vunpack.c.l.bf16 %v2299
        %v2332 = vunpack.c.l.bf16 %v2300
        %v2333 = vunpack.c.l.bf16 %v2301
        %v2334 = vunpack.c.l.bf16 %v2302
        %v2335 = vunpack.c.l.bf16 %v2303
        %v2336 = vunpack.c.l.bf16 %v2304
        %v2337 = vunpack.c.l.bf16 %v2305
        %v2338 = vunpack.c.l.bf16 %v2306
        %v2339 = vunpack.c.l.bf16 %v2307
        %v2340 = vunpack.c.l.bf16 %v2308
        %v2341 = vunpack.c.l.bf16 %v2309
        %v2342 = vunpack.c.l.bf16 %v2310
        %v2343 = vunpack.c.l.bf16 %v2311
        %v2344 = vunpack.c.l.bf16 %v2312
        %v2345 = vunpack.c.l.bf16 %v2313
        %v2346 = vunpack.c.l.bf16 %v2314
        %v2347 = vunpack.c.l.bf16 %v2315
        %v2348 = vunpack.c.l.bf16 %v2316
        %v2349 = vunpack.c.l.bf16 %v2317
        %v2350 = vunpack.c.l.bf16 %v2318
        %v2351 = vunpack.c.l.bf16 %v2319
        %v2352 = vunpack.c.l.bf16 %v2320
        %v2353 = vunpack.c.l.bf16 %v2321
        %v2354 = vunpack.c.l.bf16 %v2322
        %v2355 = vunpack.c.l.bf16 %v2323
        %v2356 = vunpack.c.l.bf16 %v2324
        %v2357 = vmax.f32 %v2325, 0.0
        %v2358 = vmax.f32 %v2326, 0.0
        %v2359 = vmax.f32 %v2327, 0.0
        %v2360 = vmax.f32 %v2328, 0.0
        %v2361 = vmax.f32 %v2329, 0.0
        %v2362 = vmax.f32 %v2330, 0.0
        %v2363 = vmax.f32 %v2331, 0.0
        %v2364 = vmax.f32 %v2332, 0.0
        %v2365 = vmax.f32 %v2333, 0.0
        %v2366 = vmax.f32 %v2334, 0.0
        %v2367 = vmax.f32 %v2335, 0.0
        %v2368 = vmax.f32 %v2336, 0.0
        %v2369 = vmax.f32 %v2337, 0.0
        %v2370 = vmax.f32 %v2338, 0.0
        %v2371 = vmax.f32 %v2339, 0.0
        %v2372 = vmax.f32 %v2340, 0.0
        %v2373 = vmax.f32 %v2341, 0.0
        %v2374 = vmax.f32 %v2342, 0.0
        %v2375 = vmax.f32 %v2343, 0.0
        %v2376 = vmax.f32 %v2344, 0.0
        %v2377 = vmax.f32 %v2345, 0.0
        %v2378 = vmax.f32 %v2346, 0.0
        %v2379 = vmax.f32 %v2347, 0.0
        %v2380 = vmax.f32 %v2348, 0.0
        %v2381 = vmax.f32 %v2349, 0.0
        %v2382 = vmax.f32 %v2350, 0.0
        %v2383 = vmax.f32 %v2351, 0.0
        %v2384 = vmax.f32 %v2352, 0.0
        %v2385 = vmax.f32 %v2353, 0.0
        %v2386 = vmax.f32 %v2354, 0.0
        %v2387 = vmax.f32 %v2355, 0.0
        %v2388 = vmax.f32 %v2356, 0.0
        %v2389 = vpack.c.bf16 %v2357, %v2357
        %v2390 = vpack.c.bf16 %v2358, %v2358
        %v2391 = vpack.c.bf16 %v2359, %v2359
        %v2392 = vpack.c.bf16 %v2360, %v2360
        %v2393 = vpack.c.bf16 %v2361, %v2361
        %v2394 = vpack.c.bf16 %v2362, %v2362
        %v2395 = vpack.c.bf16 %v2363, %v2363
        %v2396 = vpack.c.bf16 %v2364, %v2364
        %v2397 = vpack.c.bf16 %v2365, %v2365
        %v2398 = vpack.c.bf16 %v2366, %v2366
        %v2399 = vpack.c.bf16 %v2367, %v2367
        %v2400 = vpack.c.bf16 %v2368, %v2368
        %v2401 = vpack.c.bf16 %v2369, %v2369
        %v2402 = vpack.c.bf16 %v2370, %v2370
        %v2403 = vpack.c.bf16 %v2371, %v2371
        %v2404 = vpack.c.bf16 %v2372, %v2372
        %v2405 = vpack.c.bf16 %v2373, %v2373
        %v2406 = vpack.c.bf16 %v2374, %v2374
        %v2407 = vpack.c.bf16 %v2375, %v2375
        %v2408 = vpack.c.bf16 %v2376, %v2376
        %v2409 = vpack.c.bf16 %v2377, %v2377
        %v2410 = vpack.c.bf16 %v2378, %v2378
        %v2411 = vpack.c.bf16 %v2379, %v2379
        %v2412 = vpack.c.bf16 %v2380, %v2380
        %v2413 = vpack.c.bf16 %v2381, %v2381
        %v2414 = vpack.c.bf16 %v2382, %v2382
        %v2415 = vpack.c.bf16 %v2383, %v2383
        %v2416 = vpack.c.bf16 %v2384, %v2384
        %v2417 = vpack.c.bf16 %v2385, %v2385
        %v2418 = vpack.c.bf16 %v2386, %v2386
        %v2419 = vpack.c.bf16 %v2387, %v2387
        %v2420 = vpack.c.bf16 %v2388, %v2388
        %v2453 = vunpack.c.l.b16 %v2389
        %v2454 = vunpack.c.l.b16 %v2390
        %v2455 = vunpack.c.l.b16 %v2391
        %v2456 = vunpack.c.l.b16 %v2392
        %v2457 = vunpack.c.l.b16 %v2393
        %v2458 = vunpack.c.l.b16 %v2394
        %v2459 = vunpack.c.l.b16 %v2395
        %v2460 = vunpack.c.l.b16 %v2396
        %v2461 = vunpack.c.l.b16 %v2397
        %v2462 = vunpack.c.l.b16 %v2398
        %v2463 = vunpack.c.l.b16 %v2399
        %v2464 = vunpack.c.l.b16 %v2400
        %v2465 = vunpack.c.l.b16 %v2401
        %v2466 = vunpack.c.l.b16 %v2402
        %v2467 = vunpack.c.l.b16 %v2403
        %v2468 = vunpack.c.l.b16 %v2404
        %v2469 = vunpack.c.l.b16 %v2405
        %v2470 = vunpack.c.l.b16 %v2406
        %v2471 = vunpack.c.l.b16 %v2407
        %v2472 = vunpack.c.l.b16 %v2408
        %v2473 = vunpack.c.l.b16 %v2409
        %v2474 = vunpack.c.l.b16 %v2410
        %v2475 = vunpack.c.l.b16 %v2411
        %v2476 = vunpack.c.l.b16 %v2412
        %v2477 = vunpack.c.l.b16 %v2413
        %v2478 = vunpack.c.l.b16 %v2414
        %v2479 = vunpack.c.l.b16 %v2415
        %v2480 = vunpack.c.l.b16 %v2416
        %v2481 = vunpack.c.l.b16 %v2417
        %v2482 = vunpack.c.l.b16 %v2418
        %v2483 = vunpack.c.l.b16 %v2419
        %v2484 = vunpack.c.l.b16 %v2420
        %v2485 = vpack.c.b16 %v2454, %v2453
        %v2486 = vpack.c.b16 %v2456, %v2455
        %v2487 = vpack.c.b16 %v2458, %v2457
        %v2488 = vpack.c.b16 %v2460, %v2459
        %v2489 = vpack.c.b16 %v2462, %v2461
        %v2490 = vpack.c.b16 %v2464, %v2463
        %v2491 = vpack.c.b16 %v2466, %v2465
        %v2492 = vpack.c.b16 %v2468, %v2467
        %v2493 = vpack.c.b16 %v2470, %v2469
        %v2494 = vpack.c.b16 %v2472, %v2471
        %v2495 = vpack.c.b16 %v2474, %v2473
        %v2496 = vpack.c.b16 %v2476, %v2475
        %v2497 = vpack.c.b16 %v2478, %v2477
        %v2498 = vpack.c.b16 %v2480, %v2479
        %v2499 = vpack.c.b16 %v2482, %v2481
        %v2500 = vpack.c.b16 %v2484, %v2483
        %v2518 = vshrl.u32 %v2485, 16
        %v2520 = vrot.slane %v2518, 7
        %v2521 = vshll.u32 %v2485, 16
        %v2523 = vor.u32 %v2520, %v2521
        %v2524 = vsel %vm561, %v565, %v2523
        %v2526 = vshrl.u32 %v2486, 16
        %v2528 = vrot.slane %v2526, 7
        %v2529 = vshll.u32 %v2486, 16
        %v2531 = vor.u32 %v2528, %v2529
        %v2532 = vsel %vm561, %v565, %v2531
        %v2534 = vshrl.u32 %v2487, 16
        %v2536 = vrot.slane %v2534, 7
        %v2537 = vshll.u32 %v2487, 16
        %v2539 = vor.u32 %v2536, %v2537
        %v2540 = vsel %vm561, %v565, %v2539
        %v2542 = vshrl.u32 %v2488, 16
        %v2544 = vrot.slane %v2542, 7
        %v2545 = vshll.u32 %v2488, 16
        %v2547 = vor.u32 %v2544, %v2545
        %v2548 = vsel %vm561, %v565, %v2547
        %v2550 = vshrl.u32 %v2489, 16
        %v2552 = vrot.slane %v2550, 7
        %v2553 = vshll.u32 %v2489, 16
        %v2555 = vor.u32 %v2552, %v2553
        %v2556 = vsel %vm561, %v565, %v2555
        %v2558 = vshrl.u32 %v2490, 16
        %v2560 = vrot.slane %v2558, 7
        %v2561 = vshll.u32 %v2490, 16
        %v2563 = vor.u32 %v2560, %v2561
        %v2564 = vsel %vm561, %v565, %v2563
        %v2566 = vshrl.u32 %v2491, 16
        %v2568 = vrot.slane %v2566, 7
        %v2569 = vshll.u32 %v2491, 16
        %v2571 = vor.u32 %v2568, %v2569
        %v2572 = vsel %vm561, %v565, %v2571
        %v2574 = vshrl.u32 %v2492, 16
        %v2576 = vrot.slane %v2574, 7
        %v2577 = vshll.u32 %v2492, 16
        %v2579 = vor.u32 %v2576, %v2577
        %v2580 = vsel %vm561, %v565, %v2579
        %v2582 = vshrl.u32 %v2493, 16
        %v2584 = vrot.slane %v2582, 7
        %v2585 = vshll.u32 %v2493, 16
        %v2587 = vor.u32 %v2584, %v2585
        %v2588 = vsel %vm561, %v565, %v2587
        %v2590 = vshrl.u32 %v2494, 16
        %v2592 = vrot.slane %v2590, 7
        %v2593 = vshll.u32 %v2494, 16
        %v2595 = vor.u32 %v2592, %v2593
        %v2596 = vsel %vm561, %v565, %v2595
        %v2598 = vshrl.u32 %v2495, 16
        %v2600 = vrot.slane %v2598, 7
        %v2601 = vshll.u32 %v2495, 16
        %v2603 = vor.u32 %v2600, %v2601
        %v2604 = vsel %vm561, %v565, %v2603
        %v2606 = vshrl.u32 %v2496, 16
        %v2608 = vrot.slane %v2606, 7
        %v2609 = vshll.u32 %v2496, 16
        %v2611 = vor.u32 %v2608, %v2609
        %v2612 = vsel %vm561, %v565, %v2611
        %v2614 = vshrl.u32 %v2497, 16
        %v2616 = vrot.slane %v2614, 7
        %v2617 = vshll.u32 %v2497, 16
        %v2619 = vor.u32 %v2616, %v2617
        %v2620 = vsel %vm561, %v565, %v2619
        %v2622 = vshrl.u32 %v2498, 16
        %v2624 = vrot.slane %v2622, 7
        %v2625 = vshll.u32 %v2498, 16
        %v2627 = vor.u32 %v2624, %v2625
        %v2628 = vsel %vm561, %v565, %v2627
        %v2630 = vshrl.u32 %v2499, 16
        %v2632 = vrot.slane %v2630, 7
        %v2633 = vshll.u32 %v2499, 16
        %v2635 = vor.u32 %v2632, %v2633
        %v2636 = vsel %vm561, %v565, %v2635
        %v2652 = vrot.slane %v2521, 1
        %v2653 = vor.u32 %v2518, %v2652
        %v2654 = vsel %vm706, %v2653, %v707
        %v2655 = vrot.slane %v2529, 1
        %v2656 = vor.u32 %v2526, %v2655
        %v2657 = vsel %vm706, %v2656, %v707
        %v2658 = vrot.slane %v2537, 1
        %v2659 = vor.u32 %v2534, %v2658
        %v2660 = vsel %vm706, %v2659, %v707
        %v2661 = vrot.slane %v2545, 1
        %v2662 = vor.u32 %v2542, %v2661
        %v2663 = vsel %vm706, %v2662, %v707
        %v2664 = vrot.slane %v2553, 1
        %v2665 = vor.u32 %v2550, %v2664
        %v2666 = vsel %vm706, %v2665, %v707
        %v2667 = vrot.slane %v2561, 1
        %v2668 = vor.u32 %v2558, %v2667
        %v2669 = vsel %vm706, %v2668, %v707
        %v2670 = vrot.slane %v2569, 1
        %v2671 = vor.u32 %v2566, %v2670
        %v2672 = vsel %vm706, %v2671, %v707
        %v2673 = vrot.slane %v2577, 1
        %v2674 = vor.u32 %v2574, %v2673
        %v2675 = vsel %vm706, %v2674, %v707
        %v2676 = vrot.slane %v2585, 1
        %v2677 = vor.u32 %v2582, %v2676
        %v2678 = vsel %vm706, %v2677, %v707
        %v2679 = vrot.slane %v2593, 1
        %v2680 = vor.u32 %v2590, %v2679
        %v2681 = vsel %vm706, %v2680, %v707
        %v2682 = vrot.slane %v2601, 1
        %v2683 = vor.u32 %v2598, %v2682
        %v2684 = vsel %vm706, %v2683, %v707
        %v2685 = vrot.slane %v2609, 1
        %v2686 = vor.u32 %v2606, %v2685
        %v2687 = vsel %vm706, %v2686, %v707
        %v2688 = vrot.slane %v2617, 1
        %v2689 = vor.u32 %v2614, %v2688
        %v2690 = vsel %vm706, %v2689, %v707
        %v2691 = vrot.slane %v2625, 1
        %v2692 = vor.u32 %v2622, %v2691
        %v2693 = vsel %vm706, %v2692, %v707
        %v2694 = vrot.slane %v2633, 1
        %v2695 = vor.u32 %v2630, %v2694
        %v2696 = vsel %vm706, %v2695, %v707
        %v2712 = vld [vmem:[%s4] sm:$0xf]
        %v2713 = vld [vmem:[%s4 + $0x4] sm:$0xf]
        %v2714 = vld [vmem:[%s4 + $0x8] sm:$0xf]
        %v2715 = vld [vmem:[%s4 + $0xc] sm:$0xf]
        %v2716 = vld [vmem:[%s4 + $0x10] sm:$0xf]
        %v2717 = vld [vmem:[%s4 + $0x14] sm:$0xf]
        %v2718 = vld [vmem:[%s4 + $0x18] sm:$0xf]
        %v2719 = vld [vmem:[%s4 + $0x1c] sm:$0xf]
        %v2720 = vld [vmem:[%s4 + $0x20] sm:$0xf]
        %v2721 = vld [vmem:[%s4 + $0x24] sm:$0xf]
        %v2722 = vld [vmem:[%s4 + $0x28] sm:$0xf]
        %v2723 = vld [vmem:[%s4 + $0x2c] sm:$0xf]
        %v2724 = vld [vmem:[%s4 + $0x30] sm:$0xf]
        %v2725 = vld [vmem:[%s4 + $0x34] sm:$0xf]
        %v2726 = vld [vmem:[%s4 + $0x38] sm:$0xf]
        %v2727 = vld [vmem:[%s4 + $0x3c] sm:$0xf]
        %v2728 = vld [vmem:[%s4 + $0x40] sm:$0xf]
        %v2729 = vld [vmem:[%s4 + $0x44] sm:$0xf]
        %v2730 = vld [vmem:[%s4 + $0x48] sm:$0xf]
        %v2731 = vld [vmem:[%s4 + $0x4c] sm:$0xf]
        %v2732 = vld [vmem:[%s4 + $0x50] sm:$0xf]
        %v2733 = vld [vmem:[%s4 + $0x54] sm:$0xf]
        %v2734 = vld [vmem:[%s4 + $0x58] sm:$0xf]
        %v2735 = vld [vmem:[%s4 + $0x5c] sm:$0xf]
        %v2736 = vld [vmem:[%s4 + $0x60] sm:$0xf]
        %v2737 = vld [vmem:[%s4 + $0x64] sm:$0xf]
        %v2738 = vld [vmem:[%s4 + $0x68] sm:$0xf]
        %v2739 = vld [vmem:[%s4 + $0x6c] sm:$0xf]
        %v2740 = vld [vmem:[%s4 + $0x70] sm:$0xf]
        %v2741 = vld [vmem:[%s4 + $0x74] sm:$0xf]
        %v2742 = vld [vmem:[%s4 + $0x78] sm:$0xf]
        %v2743 = vld [vmem:[%s4 + $0x7c] sm:$0xf]
        %v2744 = vld [vmem:[%s4 + $0x80] sm:$0xf]
        %v2745 = vld [vmem:[%s4 + $0x84] sm:$0xf]
        %v2746 = vld [vmem:[%s4 + $0x88] sm:$0xf]
        %v2747 = vld [vmem:[%s4 + $0x8c] sm:$0xf]
        %v2748 = vld [vmem:[%s4 + $0x90] sm:$0xf]
        %v2749 = vld [vmem:[%s4 + $0x94] sm:$0xf]
        %v2750 = vld [vmem:[%s4 + $0x98] sm:$0xf]
        %v2751 = vld [vmem:[%s4 + $0x9c] sm:$0xf]
        %v2752 = vld [vmem:[%s4 + $0xa0] sm:$0xf]
        %v2753 = vld [vmem:[%s4 + $0xa4] sm:$0xf]
        %v2754 = vld [vmem:[%s4 + $0xa8] sm:$0xf]
        %v2755 = vld [vmem:[%s4 + $0xac] sm:$0xf]
        %v2756 = vld [vmem:[%s4 + $0xb0] sm:$0xf]
        %v2757 = vld [vmem:[%s4 + $0xb4] sm:$0xf]
        %v2758 = vld [vmem:[%s4 + $0xb8] sm:$0xf]
        %v2759 = vld [vmem:[%s4 + $0xbc] sm:$0xf]
        %v2761 = vshrl.u32 %v2500, 16
        %v2763 = vrot.slane %v2761, 7
        %v2764 = vshll.u32 %v2500, 16
        %v2766 = vor.u32 %v2763, %v2764
        %v2767 = vsel %vm561, %v565, %v2766
        %v2769 = vrot.slane %v2764, 1
        %v2770 = vor.u32 %v2761, %v2769
        %v2771 = vsel %vm706, %v2770, %v707
        %v2773 = vld [vmem:[%s4 + $0xc0] sm:$0xf]
        %v2774 = vld [vmem:[%s4 + $0xc4] sm:$0xf]
        %v2775 = vld [vmem:[%s4 + $0xc8] sm:$0xf]
        %v2776 = vld [vmem:[%s4 + $0xcc] sm:$0xf]
        %v2777 = vld [vmem:[%s4 + $0xd0] sm:$0xf]
        %v2778 = vld [vmem:[%s4 + $0xd4] sm:$0xf]
        %v2779 = vld [vmem:[%s4 + $0xd8] sm:$0xf]
        %v2780 = vld [vmem:[%s4 + $0xdc] sm:$0xf]
        %v2781 = vld [vmem:[%s4 + $0xe0] sm:$0xf]
        %v2782 = vld [vmem:[%s4 + $0xe4] sm:$0xf]
        %v2783 = vld [vmem:[%s4 + $0xe8] sm:$0xf]
        %v2784 = vld [vmem:[%s4 + $0xec] sm:$0xf]
        %v2785 = vld [vmem:[%s4 + $0xf0] sm:$0xf]
        %v2786 = vld [vmem:[%s4 + $0xf4] sm:$0xf]
        %v2787 = vld [vmem:[%s4 + $0xf8] sm:$0xf]
        %v2788 = vld [vmem:[%s4 + $0xfc] sm:$0xf]
        %v2789 = vld [vmem:[%s4 + $0x100] sm:$0xf]
        %v2790 = vld [vmem:[%s4 + $0x104] sm:$0xf]
        %v2791 = vld [vmem:[%s4 + $0x108] sm:$0xf]
        %v2792 = vld [vmem:[%s4 + $0x10c] sm:$0xf]
        %v2793 = vld [vmem:[%s4 + $0x110] sm:$0xf]
        %v2794 = vld [vmem:[%s4 + $0x114] sm:$0xf]
        %v2795 = vld [vmem:[%s4 + $0x118] sm:$0xf]
        %v2796 = vld [vmem:[%s4 + $0x11c] sm:$0xf]
        %v2797 = vld [vmem:[%s4 + $0x120] sm:$0xf]
        %v2798 = vld [vmem:[%s4 + $0x124] sm:$0xf]
        %v2799 = vld [vmem:[%s4 + $0x128] sm:$0xf]
        %v2800 = vld [vmem:[%s4 + $0x12c] sm:$0xf]
        %v2801 = vld [vmem:[%s4 + $0x130] sm:$0xf]
        %v2802 = vld [vmem:[%s4 + $0x134] sm:$0xf]
        %v2803 = vld [vmem:[%s4 + $0x138] sm:$0xf]
        %v2804 = vld [vmem:[%s4 + $0x13c] sm:$0xf]
        %v2805 = vld [vmem:[%s4 + $0x140] sm:$0xf]
        %v2806 = vld [vmem:[%s4 + $0x144] sm:$0xf]
        %v2807 = vld [vmem:[%s4 + $0x148] sm:$0xf]
        %v2808 = vld [vmem:[%s4 + $0x14c] sm:$0xf]
        %v2809 = vld [vmem:[%s4 + $0x150] sm:$0xf]
        %v2810 = vld [vmem:[%s4 + $0x154] sm:$0xf]
        %v2811 = vld [vmem:[%s4 + $0x158] sm:$0xf]
        %v2812 = vld [vmem:[%s4 + $0x15c] sm:$0xf]
        %v2813 = vld [vmem:[%s4 + $0x160] sm:$0xf]
        %v2814 = vld [vmem:[%s4 + $0x164] sm:$0xf]
        %v2815 = vld [vmem:[%s4 + $0x168] sm:$0xf]
        %v2816 = vld [vmem:[%s4 + $0x16c] sm:$0xf]
        %v2817 = vld [vmem:[%s4 + $0x170] sm:$0xf]
        %v2818 = vld [vmem:[%s4 + $0x174] sm:$0xf]
        %v2819 = vld [vmem:[%s4 + $0x178] sm:$0xf]
        %v2820 = vld [vmem:[%s4 + $0x17c] sm:$0xf]
        %v2869 = vunpack.c.l.b16 %v2773
        %v2870 = vunpack.c.l.b16 %v2774
        %v2871 = vunpack.c.l.b16 %v2775
        %v2872 = vunpack.c.l.b16 %v2776
        %v2873 = vunpack.c.l.b16 %v2777
        %v2874 = vunpack.c.l.b16 %v2778
        %v2875 = vunpack.c.l.b16 %v2779
        %v2876 = vunpack.c.l.b16 %v2780
        %v2877 = vunpack.c.l.b16 %v2781
        %v2878 = vunpack.c.l.b16 %v2782
        %v2879 = vunpack.c.l.b16 %v2783
        %v2880 = vunpack.c.l.b16 %v2784
        %v2881 = vunpack.c.l.b16 %v2785
        %v2882 = vunpack.c.l.b16 %v2786
        %v2883 = vunpack.c.l.b16 %v2787
        %v2884 = vunpack.c.l.b16 %v2788
        %v2885 = vunpack.c.l.b16 %v2789
        %v2886 = vunpack.c.l.b16 %v2790
        %v2887 = vunpack.c.l.b16 %v2791
        %v2888 = vunpack.c.l.b16 %v2792
        %v2889 = vunpack.c.l.b16 %v2793
        %v2890 = vunpack.c.l.b16 %v2794
        %v2891 = vunpack.c.l.b16 %v2795
        %v2892 = vunpack.c.l.b16 %v2796
        %v2893 = vunpack.c.l.b16 %v2797
        %v2894 = vunpack.c.l.b16 %v2798
        %v2895 = vunpack.c.l.b16 %v2799
        %v2896 = vunpack.c.l.b16 %v2800
        %v2897 = vunpack.c.l.b16 %v2801
        %v2898 = vunpack.c.l.b16 %v2802
        %v2899 = vunpack.c.l.b16 %v2803
        %v2900 = vunpack.c.l.b16 %v2804
        %v2901 = vunpack.c.l.b16 %v2805
        %v2902 = vunpack.c.l.b16 %v2806
        %v2903 = vunpack.c.l.b16 %v2807
        %v2904 = vunpack.c.l.b16 %v2808
        %v2905 = vunpack.c.l.b16 %v2809
        %v2906 = vunpack.c.l.b16 %v2810
        %v2907 = vunpack.c.l.b16 %v2811
        %v2908 = vunpack.c.l.b16 %v2812
        %v2909 = vunpack.c.l.b16 %v2813
        %v2910 = vunpack.c.l.b16 %v2814
        %v2911 = vunpack.c.l.b16 %v2815
        %v2912 = vunpack.c.l.b16 %v2816
        %v2913 = vunpack.c.l.b16 %v2817
        %v2914 = vunpack.c.l.b16 %v2818
        %v2915 = vunpack.c.l.b16 %v2819
        %v2916 = vunpack.c.l.b16 %v2820
        %v2917 = vpack.c.b16 %v2870, %v2869
        %v2918 = vpack.c.b16 %v2872, %v2871
        %v2919 = vpack.c.b16 %v2874, %v2873
        %v2920 = vpack.c.b16 %v2876, %v2875
        %v2921 = vpack.c.b16 %v2878, %v2877
        %v2922 = vpack.c.b16 %v2880, %v2879
        %v2923 = vpack.c.b16 %v2882, %v2881
        %v2924 = vpack.c.b16 %v2884, %v2883
        %v2925 = vpack.c.b16 %v2886, %v2885
        %v2926 = vpack.c.b16 %v2888, %v2887
        %v2927 = vpack.c.b16 %v2890, %v2889
        %v2928 = vpack.c.b16 %v2892, %v2891
        %v2929 = vpack.c.b16 %v2894, %v2893
        %v2930 = vpack.c.b16 %v2896, %v2895
        %v2931 = vpack.c.b16 %v2898, %v2897
        %v2932 = vpack.c.b16 %v2900, %v2899
        %v2933 = vpack.c.b16 %v2902, %v2901
        %v2934 = vpack.c.b16 %v2904, %v2903
        %v2935 = vpack.c.b16 %v2906, %v2905
        %v2936 = vpack.c.b16 %v2908, %v2907
        %v2937 = vpack.c.b16 %v2910, %v2909
        %v2938 = vpack.c.b16 %v2912, %v2911
        %v2939 = vpack.c.b16 %v2914, %v2913
        %v2940 = vpack.c.b16 %v2916, %v2915
        %2965 = vmatpush.bf16.msra.mxu0 %v2924
        %2966 = vmatpush.bf16.msra.mxu0 %v2923
        %2967 = vmatpush.bf16.msra.mxu0 %v2922
        %2968 = vmatpush.bf16.msra.mxu0 %v2921
        %2969 = vmatpush.bf16.msra.mxu0 %v2920
        %2970 = vmatpush.bf16.msra.mxu0 %v2919
        %2971 = vmatpush.bf16.msra.mxu0 %v2918
        %2972 = vmatpush.bf16.msra.mxu0 %v2917
        %2973 = vmatmul.bf16.gmra.mxu0 %v2524
        %v2974 = vpop.f32.mrf.mxu0
        %v2975 = vadd.f32 0.0, %v2974
        %v2976 = vpop.f32.mrf.mxu0
        %v2977 = vadd.f32 0.0, %v2976
        %2978 = vmatmul.bf16.gmra.mxu0 %v2532
        %v2979 = vpop.f32.mrf.mxu0
        %v2980 = vadd.f32 0.0, %v2979
        %v2981 = vpop.f32.mrf.mxu0
        %v2982 = vadd.f32 0.0, %v2981
        %2983 = vmatmul.bf16.gmra.mxu0 %v2540
        %v2984 = vpop.f32.mrf.mxu0
        %v2985 = vadd.f32 0.0, %v2984
        %v2986 = vpop.f32.mrf.mxu0
        %v2987 = vadd.f32 0.0, %v2986
        %2988 = vmatmul.bf16.gmra.mxu0 %v2548
        %v2989 = vpop.f32.mrf.mxu0
        %v2990 = vadd.f32 0.0, %v2989
        %v2991 = vpop.f32.mrf.mxu0
        %v2992 = vadd.f32 0.0, %v2991
        %2993 = vmatmul.bf16.gmra.mxu0 %v2556
        %v2994 = vpop.f32.mrf.mxu0
        %v2995 = vadd.f32 0.0, %v2994
        %v2996 = vpop.f32.mrf.mxu0
        %v2997 = vadd.f32 0.0, %v2996
        %2998 = vmatmul.bf16.gmra.mxu0 %v2564
        %v2999 = vpop.f32.mrf.mxu0
        %v3000 = vadd.f32 0.0, %v2999
        %v3001 = vpop.f32.mrf.mxu0
        %v3002 = vadd.f32 0.0, %v3001
        %3003 = vmatmul.bf16.gmra.mxu0 %v2572
        %v3004 = vpop.f32.mrf.mxu0
        %v3005 = vadd.f32 0.0, %v3004
        %v3006 = vpop.f32.mrf.mxu0
        %v3007 = vadd.f32 0.0, %v3006
        %3008 = vmatmul.bf16.gmra.mxu0 %v2580
        %v3009 = vpop.f32.mrf.mxu0
        %v3010 = vadd.f32 0.0, %v3009
        %v3011 = vpop.f32.mrf.mxu0
        %v3012 = vadd.f32 0.0, %v3011
        %3013 = vmatmul.bf16.gmra.mxu0 %v2588
        %v3014 = vpop.f32.mrf.mxu0
        %v3015 = vadd.f32 0.0, %v3014
        %v3016 = vpop.f32.mrf.mxu0
        %v3017 = vadd.f32 0.0, %v3016
        %3018 = vmatmul.bf16.gmra.mxu0 %v2596
        %v3019 = vpop.f32.mrf.mxu0
        %v3020 = vadd.f32 0.0, %v3019
        %v3021 = vpop.f32.mrf.mxu0
        %v3022 = vadd.f32 0.0, %v3021
        %3023 = vmatmul.bf16.gmra.mxu0 %v2604
        %v3024 = vpop.f32.mrf.mxu0
        %v3025 = vadd.f32 0.0, %v3024
        %v3026 = vpop.f32.mrf.mxu0
        %v3027 = vadd.f32 0.0, %v3026
        %3028 = vmatmul.bf16.gmra.mxu0 %v2612
        %v3029 = vpop.f32.mrf.mxu0
        %v3030 = vadd.f32 0.0, %v3029
        %v3031 = vpop.f32.mrf.mxu0
        %v3032 = vadd.f32 0.0, %v3031
        %3033 = vmatmul.bf16.gmra.mxu0 %v2620
        %v3034 = vpop.f32.mrf.mxu0
        %v3035 = vadd.f32 0.0, %v3034
        %v3036 = vpop.f32.mrf.mxu0
        %v3037 = vadd.f32 0.0, %v3036
        %3038 = vmatmul.bf16.gmra.mxu0 %v2628
        %v3039 = vpop.f32.mrf.mxu0
        %v3040 = vadd.f32 0.0, %v3039
        %v3041 = vpop.f32.mrf.mxu0
        %v3042 = vadd.f32 0.0, %v3041
        %3043 = vmatmul.bf16.gmra.mxu0 %v2636
        %v3044 = vpop.f32.mrf.mxu0
        %v3045 = vadd.f32 0.0, %v3044
        %v3046 = vpop.f32.mrf.mxu0
        %v3047 = vadd.f32 0.0, %v3046
        %3048 = vmatmul.bf16.gmra.mxu0 %v2767
        %v3049 = vpop.f32.mrf.mxu0
        %v3050 = vadd.f32 0.0, %v3049
        %v3051 = vpop.f32.mrf.mxu0
        %v3052 = vadd.f32 0.0, %v3051
        %3053 = vdwg.mxu0
        %3054 = vmatpush.bf16.msra.mxu0 %v2932
        %3055 = vmatpush.bf16.msra.mxu0 %v2931
        %3056 = vmatpush.bf16.msra.mxu0 %v2930
        %3057 = vmatpush.bf16.msra.mxu0 %v2929
        %3058 = vmatpush.bf16.msra.mxu0 %v2928
        %3059 = vmatpush.bf16.msra.mxu0 %v2927
        %3060 = vmatpush.bf16.msra.mxu0 %v2926
        %3061 = vmatpush.bf16.msra.mxu0 %v2925
        %3062 = vmatmul.bf16.gmra.mxu0 %v2485
        %v3063 = vpop.f32.mrf.mxu0
        %v3064 = vadd.f32 %v2975, %v3063
        %v3065 = vpop.f32.mrf.mxu0
        %v3066 = vadd.f32 %v2977, %v3065
        %3067 = vmatmul.bf16.gmra.mxu0 %v2486
        %v3068 = vpop.f32.mrf.mxu0
        %v3069 = vadd.f32 %v2980, %v3068
        %v3070 = vpop.f32.mrf.mxu0
        %v3071 = vadd.f32 %v2982, %v3070
        %3072 = vmatmul.bf16.gmra.mxu0 %v2487
        %v3073 = vpop.f32.mrf.mxu0
        %v3074 = vadd.f32 %v2985, %v3073
        %v3075 = vpop.f32.mrf.mxu0
        %v3076 = vadd.f32 %v2987, %v3075
        %3077 = vmatmul.bf16.gmra.mxu0 %v2488
        %v3078 = vpop.f32.mrf.mxu0
        %v3079 = vadd.f32 %v2990, %v3078
        %v3080 = vpop.f32.mrf.mxu0
        %v3081 = vadd.f32 %v2992, %v3080
        %3082 = vmatmul.bf16.gmra.mxu0 %v2489
        %v3083 = vpop.f32.mrf.mxu0
        %v3084 = vadd.f32 %v2995, %v3083
        %v3085 = vpop.f32.mrf.mxu0
        %v3086 = vadd.f32 %v2997, %v3085
        %3087 = vmatmul.bf16.gmra.mxu0 %v2490
        %v3088 = vpop.f32.mrf.mxu0
        %v3089 = vadd.f32 %v3000, %v3088
        %v3090 = vpop.f32.mrf.mxu0
        %v3091 = vadd.f32 %v3002, %v3090
        %3092 = vmatmul.bf16.gmra.mxu0 %v2491
        %v3093 = vpop.f32.mrf.mxu0
        %v3094 = vadd.f32 %v3005, %v3093
        %v3095 = vpop.f32.mrf.mxu0
        %v3096 = vadd.f32 %v3007, %v3095
        %3097 = vmatmul.bf16.gmra.mxu0 %v2492
        %v3098 = vpop.f32.mrf.mxu0
        %v3099 = vadd.f32 %v3010, %v3098
        %v3100 = vpop.f32.mrf.mxu0
        %v3101 = vadd.f32 %v3012, %v3100
        %3102 = vmatmul.bf16.gmra.mxu0 %v2493
        %v3103 = vpop.f32.mrf.mxu0
        %v3104 = vadd.f32 %v3015, %v3103
        %v3105 = vpop.f32.mrf.mxu0
        %v3106 = vadd.f32 %v3017, %v3105
        %3107 = vmatmul.bf16.gmra.mxu0 %v2494
        %v3108 = vpop.f32.mrf.mxu0
        %v3109 = vadd.f32 %v3020, %v3108
        %v3110 = vpop.f32.mrf.mxu0
        %v3111 = vadd.f32 %v3022, %v3110
        %3112 = vmatmul.bf16.gmra.mxu0 %v2495
        %v3113 = vpop.f32.mrf.mxu0
        %v3114 = vadd.f32 %v3025, %v3113
        %v3115 = vpop.f32.mrf.mxu0
        %v3116 = vadd.f32 %v3027, %v3115
        %3117 = vmatmul.bf16.gmra.mxu0 %v2496
        %v3118 = vpop.f32.mrf.mxu0
        %v3119 = vadd.f32 %v3030, %v3118
        %v3120 = vpop.f32.mrf.mxu0
        %v3121 = vadd.f32 %v3032, %v3120
        %3122 = vmatmul.bf16.gmra.mxu0 %v2497
        %v3123 = vpop.f32.mrf.mxu0
        %v3124 = vadd.f32 %v3035, %v3123
        %v3125 = vpop.f32.mrf.mxu0
        %v3126 = vadd.f32 %v3037, %v3125
        %3127 = vmatmul.bf16.gmra.mxu0 %v2498
        %v3128 = vpop.f32.mrf.mxu0
        %v3129 = vadd.f32 %v3040, %v3128
        %v3130 = vpop.f32.mrf.mxu0
        %v3131 = vadd.f32 %v3042, %v3130
        %3132 = vmatmul.bf16.gmra.mxu0 %v2499
        %v3133 = vpop.f32.mrf.mxu0
        %v3134 = vadd.f32 %v3045, %v3133
        %v3135 = vpop.f32.mrf.mxu0
        %v3136 = vadd.f32 %v3047, %v3135
        %3137 = vmatmul.bf16.gmra.mxu0 %v2500
        %v3138 = vpop.f32.mrf.mxu0
        %v3139 = vadd.f32 %v3050, %v3138
        %v3140 = vpop.f32.mrf.mxu0
        %v3141 = vadd.f32 %v3052, %v3140
        %3142 = vdwg.mxu0
        %3143 = vmatpush.bf16.msra.mxu0 %v2940
        %3144 = vmatpush.bf16.msra.mxu0 %v2939
        %3145 = vmatpush.bf16.msra.mxu0 %v2938
        %3146 = vmatpush.bf16.msra.mxu0 %v2937
        %3147 = vmatpush.bf16.msra.mxu0 %v2936
        %3148 = vmatpush.bf16.msra.mxu0 %v2935
        %3149 = vmatpush.bf16.msra.mxu0 %v2934
        %3150 = vmatpush.bf16.msra.mxu0 %v2933
        %3151 = vmatmul.bf16.gmra.mxu0 %v2654
        %v3152 = vpop.f32.mrf.mxu0
        %v3153 = vadd.f32 %v3064, %v3152
        %v3154 = vpop.f32.mrf.mxu0
        %v3155 = vadd.f32 %v3066, %v3154
        %3156 = vmatmul.bf16.gmra.mxu0 %v2657
        %v3157 = vpop.f32.mrf.mxu0
        %v3158 = vadd.f32 %v3069, %v3157
        %v3159 = vpop.f32.mrf.mxu0
        %v3160 = vadd.f32 %v3071, %v3159
        %3161 = vmatmul.bf16.gmra.mxu0 %v2660
        %v3162 = vpop.f32.mrf.mxu0
        %v3163 = vadd.f32 %v3074, %v3162
        %v3164 = vpop.f32.mrf.mxu0
        %v3165 = vadd.f32 %v3076, %v3164
        %3166 = vmatmul.bf16.gmra.mxu0 %v2663
        %v3167 = vpop.f32.mrf.mxu0
        %v3168 = vadd.f32 %v3079, %v3167
        %v3169 = vpop.f32.mrf.mxu0
        %v3170 = vadd.f32 %v3081, %v3169
        %3171 = vmatmul.bf16.gmra.mxu0 %v2666
        %v3172 = vpop.f32.mrf.mxu0
        %v3173 = vadd.f32 %v3084, %v3172
        %v3174 = vpop.f32.mrf.mxu0
        %v3175 = vadd.f32 %v3086, %v3174
        %3176 = vmatmul.bf16.gmra.mxu0 %v2669
        %v3177 = vpop.f32.mrf.mxu0
        %v3178 = vadd.f32 %v3089, %v3177
        %v3179 = vpop.f32.mrf.mxu0
        %v3180 = vadd.f32 %v3091, %v3179
        %3181 = vmatmul.bf16.gmra.mxu0 %v2672
        %v3182 = vpop.f32.mrf.mxu0
        %v3183 = vadd.f32 %v3094, %v3182
        %v3184 = vpop.f32.mrf.mxu0
        %v3185 = vadd.f32 %v3096, %v3184
        %3186 = vmatmul.bf16.gmra.mxu0 %v2675
        %v3187 = vpop.f32.mrf.mxu0
        %v3188 = vadd.f32 %v3099, %v3187
        %v3189 = vpop.f32.mrf.mxu0
        %v3190 = vadd.f32 %v3101, %v3189
        %3191 = vmatmul.bf16.gmra.mxu0 %v2678
        %v3192 = vpop.f32.mrf.mxu0
        %v3193 = vadd.f32 %v3104, %v3192
        %v3194 = vpop.f32.mrf.mxu0
        %v3195 = vadd.f32 %v3106, %v3194
        %3196 = vmatmul.bf16.gmra.mxu0 %v2681
        %v3197 = vpop.f32.mrf.mxu0
        %v3198 = vadd.f32 %v3109, %v3197
        %v3199 = vpop.f32.mrf.mxu0
        %v3200 = vadd.f32 %v3111, %v3199
        %3201 = vmatmul.bf16.gmra.mxu0 %v2684
        %v3202 = vpop.f32.mrf.mxu0
        %v3203 = vadd.f32 %v3114, %v3202
        %v3204 = vpop.f32.mrf.mxu0
        %v3205 = vadd.f32 %v3116, %v3204
        %3206 = vmatmul.bf16.gmra.mxu0 %v2687
        %v3207 = vpop.f32.mrf.mxu0
        %v3208 = vadd.f32 %v3119, %v3207
        %v3209 = vpop.f32.mrf.mxu0
        %v3210 = vadd.f32 %v3121, %v3209
        %3211 = vmatmul.bf16.gmra.mxu0 %v2690
        %v3212 = vpop.f32.mrf.mxu0
        %v3213 = vadd.f32 %v3124, %v3212
        %v3214 = vpop.f32.mrf.mxu0
        %v3215 = vadd.f32 %v3126, %v3214
        %3216 = vmatmul.bf16.gmra.mxu0 %v2693
        %v3217 = vpop.f32.mrf.mxu0
        %v3218 = vadd.f32 %v3129, %v3217
        %v3219 = vpop.f32.mrf.mxu0
        %v3220 = vadd.f32 %v3131, %v3219
        %3221 = vmatmul.bf16.gmra.mxu0 %v2696
        %v3222 = vpop.f32.mrf.mxu0
        %v3223 = vadd.f32 %v3134, %v3222
        %v3224 = vpop.f32.mrf.mxu0
        %v3225 = vadd.f32 %v3136, %v3224
        %3226 = vmatmul.bf16.gmra.mxu0 %v2771
        %v3227 = vpop.f32.mrf.mxu0
        %v3228 = vadd.f32 %v3139, %v3227
        %v3229 = vpop.f32.mrf.mxu0
        %v3230 = vadd.f32 %v3141, %v3229
        %3231 = vdwg.mxu0
        %v3280 = vunpack.c.l.b16 %v2712
        %v3281 = vunpack.c.l.b16 %v2713
        %v3282 = vunpack.c.l.b16 %v2714
        %v3283 = vunpack.c.l.b16 %v2715
        %v3284 = vunpack.c.l.b16 %v2716
        %v3285 = vunpack.c.l.b16 %v2717
        %v3286 = vunpack.c.l.b16 %v2718
        %v3287 = vunpack.c.l.b16 %v2719
        %v3288 = vunpack.c.l.b16 %v2720
        %v3289 = vunpack.c.l.b16 %v2721
        %v3290 = vunpack.c.l.b16 %v2722
        %v3291 = vunpack.c.l.b16 %v2723
        %v3292 = vunpack.c.l.b16 %v2724
        %v3293 = vunpack.c.l.b16 %v2725
        %v3294 = vunpack.c.l.b16 %v2726
        %v3295 = vunpack.c.l.b16 %v2727
        %v3296 = vunpack.c.l.b16 %v2728
        %v3297 = vunpack.c.l.b16 %v2729
        %v3298 = vunpack.c.l.b16 %v2730
        %v3299 = vunpack.c.l.b16 %v2731
        %v3300 = vunpack.c.l.b16 %v2732
        %v3301 = vunpack.c.l.b16 %v2733
        %v3302 = vunpack.c.l.b16 %v2734
        %v3303 = vunpack.c.l.b16 %v2735
        %v3304 = vunpack.c.l.b16 %v2736
        %v3305 = vunpack.c.l.b16 %v2737
        %v3306 = vunpack.c.l.b16 %v2738
        %v3307 = vunpack.c.l.b16 %v2739
        %v3308 = vunpack.c.l.b16 %v2740
        %v3309 = vunpack.c.l.b16 %v2741
        %v3310 = vunpack.c.l.b16 %v2742
        %v3311 = vunpack.c.l.b16 %v2743
        %v3312 = vunpack.c.l.b16 %v2744
        %v3313 = vunpack.c.l.b16 %v2745
        %v3314 = vunpack.c.l.b16 %v2746
        %v3315 = vunpack.c.l.b16 %v2747
        %v3316 = vunpack.c.l.b16 %v2748
        %v3317 = vunpack.c.l.b16 %v2749
        %v3318 = vunpack.c.l.b16 %v2750
        %v3319 = vunpack.c.l.b16 %v2751
        %v3320 = vunpack.c.l.b16 %v2752
        %v3321 = vunpack.c.l.b16 %v2753
        %v3322 = vunpack.c.l.b16 %v2754
        %v3323 = vunpack.c.l.b16 %v2755
        %v3324 = vunpack.c.l.b16 %v2756
        %v3325 = vunpack.c.l.b16 %v2757
        %v3326 = vunpack.c.l.b16 %v2758
        %v3327 = vunpack.c.l.b16 %v2759
        %v3328 = vpack.c.b16 %v3281, %v3280
        %v3329 = vpack.c.b16 %v3283, %v3282
        %v3330 = vpack.c.b16 %v3285, %v3284
        %v3331 = vpack.c.b16 %v3287, %v3286
        %v3332 = vpack.c.b16 %v3289, %v3288
        %v3333 = vpack.c.b16 %v3291, %v3290
        %v3334 = vpack.c.b16 %v3293, %v3292
        %v3335 = vpack.c.b16 %v3295, %v3294
        %v3336 = vpack.c.b16 %v3297, %v3296
        %v3337 = vpack.c.b16 %v3299, %v3298
        %v3338 = vpack.c.b16 %v3301, %v3300
        %v3339 = vpack.c.b16 %v3303, %v3302
        %v3340 = vpack.c.b16 %v3305, %v3304
        %v3341 = vpack.c.b16 %v3307, %v3306
        %v3342 = vpack.c.b16 %v3309, %v3308
        %v3343 = vpack.c.b16 %v3311, %v3310
        %v3344 = vpack.c.b16 %v3313, %v3312
        %v3345 = vpack.c.b16 %v3315, %v3314
        %v3346 = vpack.c.b16 %v3317, %v3316
        %v3347 = vpack.c.b16 %v3319, %v3318
        %v3348 = vpack.c.b16 %v3321, %v3320
        %v3349 = vpack.c.b16 %v3323, %v3322
        %v3350 = vpack.c.b16 %v3325, %v3324
        %v3351 = vpack.c.b16 %v3327, %v3326
        %3376 = vmatpush.bf16.msra.mxu0 %v3335
        %3377 = vmatpush.bf16.msra.mxu0 %v3334
        %3378 = vmatpush.bf16.msra.mxu0 %v3333
        %3379 = vmatpush.bf16.msra.mxu0 %v3332
        %3380 = vmatpush.bf16.msra.mxu0 %v3331
        %3381 = vmatpush.bf16.msra.mxu0 %v3330
        %3382 = vmatpush.bf16.msra.mxu0 %v3329
        %3383 = vmatpush.bf16.msra.mxu0 %v3328
        %3384 = vmatmul.bf16.gmra.mxu0 %v569
        %v3385 = vpop.f32.mrf.mxu0
        %v3386 = vadd.f32 %v3153, %v3385
        %v3387 = vpop.f32.mrf.mxu0
        %v3388 = vadd.f32 %v3155, %v3387
        %3389 = vmatmul.bf16.gmra.mxu0 %v2524
        %v3390 = vpop.f32.mrf.mxu0
        %v3391 = vadd.f32 %v3158, %v3390
        %v3392 = vpop.f32.mrf.mxu0
        %v3393 = vadd.f32 %v3160, %v3392
        %3394 = vmatmul.bf16.gmra.mxu0 %v2532
        %v3395 = vpop.f32.mrf.mxu0
        %v3396 = vadd.f32 %v3163, %v3395
        %v3397 = vpop.f32.mrf.mxu0
        %v3398 = vadd.f32 %v3165, %v3397
        %3399 = vmatmul.bf16.gmra.mxu0 %v2540
        %v3400 = vpop.f32.mrf.mxu0
        %v3401 = vadd.f32 %v3168, %v3400
        %v3402 = vpop.f32.mrf.mxu0
        %v3403 = vadd.f32 %v3170, %v3402
        %3404 = vmatmul.bf16.gmra.mxu0 %v2548
        %v3405 = vpop.f32.mrf.mxu0
        %v3406 = vadd.f32 %v3173, %v3405
        %v3407 = vpop.f32.mrf.mxu0
        %v3408 = vadd.f32 %v3175, %v3407
        %3409 = vmatmul.bf16.gmra.mxu0 %v2556
        %v3410 = vpop.f32.mrf.mxu0
        %v3411 = vadd.f32 %v3178, %v3410
        %v3412 = vpop.f32.mrf.mxu0
        %v3413 = vadd.f32 %v3180, %v3412
        %3414 = vmatmul.bf16.gmra.mxu0 %v2564
        %v3415 = vpop.f32.mrf.mxu0
        %v3416 = vadd.f32 %v3183, %v3415
        %v3417 = vpop.f32.mrf.mxu0
        %v3418 = vadd.f32 %v3185, %v3417
        %3419 = vmatmul.bf16.gmra.mxu0 %v2572
        %v3420 = vpop.f32.mrf.mxu0
        %v3421 = vadd.f32 %v3188, %v3420
        %v3422 = vpop.f32.mrf.mxu0
        %v3423 = vadd.f32 %v3190, %v3422
        %3424 = vmatmul.bf16.gmra.mxu0 %v2580
        %v3425 = vpop.f32.mrf.mxu0
        %v3426 = vadd.f32 %v3193, %v3425
        %v3427 = vpop.f32.mrf.mxu0
        %v3428 = vadd.f32 %v3195, %v3427
        %3429 = vmatmul.bf16.gmra.mxu0 %v2588
        %v3430 = vpop.f32.mrf.mxu0
        %v3431 = vadd.f32 %v3198, %v3430
        %v3432 = vpop.f32.mrf.mxu0
        %v3433 = vadd.f32 %v3200, %v3432
        %3434 = vmatmul.bf16.gmra.mxu0 %v2596
        %v3435 = vpop.f32.mrf.mxu0
        %v3436 = vadd.f32 %v3203, %v3435
        %v3437 = vpop.f32.mrf.mxu0
        %v3438 = vadd.f32 %v3205, %v3437
        %3439 = vmatmul.bf16.gmra.mxu0 %v2604
        %v3440 = vpop.f32.mrf.mxu0
        %v3441 = vadd.f32 %v3208, %v3440
        %v3442 = vpop.f32.mrf.mxu0
        %v3443 = vadd.f32 %v3210, %v3442
        %3444 = vmatmul.bf16.gmra.mxu0 %v2612
        %v3445 = vpop.f32.mrf.mxu0
        %v3446 = vadd.f32 %v3213, %v3445
        %v3447 = vpop.f32.mrf.mxu0
        %v3448 = vadd.f32 %v3215, %v3447
        %3449 = vmatmul.bf16.gmra.mxu0 %v2620
        %v3450 = vpop.f32.mrf.mxu0
        %v3451 = vadd.f32 %v3218, %v3450
        %v3452 = vpop.f32.mrf.mxu0
        %v3453 = vadd.f32 %v3220, %v3452
        %3454 = vmatmul.bf16.gmra.mxu0 %v2628
        %v3455 = vpop.f32.mrf.mxu0
        %v3456 = vadd.f32 %v3223, %v3455
        %v3457 = vpop.f32.mrf.mxu0
        %v3458 = vadd.f32 %v3225, %v3457
        %3459 = vmatmul.bf16.gmra.mxu0 %v2636
        %v3460 = vpop.f32.mrf.mxu0
        %v3461 = vadd.f32 %v3228, %v3460
        %v3462 = vpop.f32.mrf.mxu0
        %v3463 = vadd.f32 %v3230, %v3462
        %3464 = vdwg.mxu0
        %3465 = vmatpush.bf16.msra.mxu0 %v3343
        %3466 = vmatpush.bf16.msra.mxu0 %v3342
        %3467 = vmatpush.bf16.msra.mxu0 %v3341
        %3468 = vmatpush.bf16.msra.mxu0 %v3340
        %3469 = vmatpush.bf16.msra.mxu0 %v3339
        %3470 = vmatpush.bf16.msra.mxu0 %v3338
        %3471 = vmatpush.bf16.msra.mxu0 %v3337
        %3472 = vmatpush.bf16.msra.mxu0 %v3336
        %3473 = vmatmul.bf16.gmra.mxu0 0
        %v3474 = vpop.f32.mrf.mxu0
        %v3475 = vadd.f32 %v3386, %v3474
        %v3476 = vpop.f32.mrf.mxu0
        %v3477 = vadd.f32 %v3388, %v3476
        %3478 = vmatmul.bf16.gmra.mxu0 %v2485
        %v3479 = vpop.f32.mrf.mxu0
        %v3480 = vadd.f32 %v3391, %v3479
        %v3481 = vpop.f32.mrf.mxu0
        %v3482 = vadd.f32 %v3393, %v3481
        %3483 = vmatmul.bf16.gmra.mxu0 %v2486
        %v3484 = vpop.f32.mrf.mxu0
        %v3485 = vadd.f32 %v3396, %v3484
        %v3486 = vpop.f32.mrf.mxu0
        %v3487 = vadd.f32 %v3398, %v3486
        %3488 = vmatmul.bf16.gmra.mxu0 %v2487
        %v3489 = vpop.f32.mrf.mxu0
        %v3490 = vadd.f32 %v3401, %v3489
        %v3491 = vpop.f32.mrf.mxu0
        %v3492 = vadd.f32 %v3403, %v3491
        %3493 = vmatmul.bf16.gmra.mxu0 %v2488
        %v3494 = vpop.f32.mrf.mxu0
        %v3495 = vadd.f32 %v3406, %v3494
        %v3496 = vpop.f32.mrf.mxu0
        %v3497 = vadd.f32 %v3408, %v3496
        %3498 = vmatmul.bf16.gmra.mxu0 %v2489
        %v3499 = vpop.f32.mrf.mxu0
        %v3500 = vadd.f32 %v3411, %v3499
        %v3501 = vpop.f32.mrf.mxu0
        %v3502 = vadd.f32 %v3413, %v3501
        %3503 = vmatmul.bf16.gmra.mxu0 %v2490
        %v3504 = vpop.f32.mrf.mxu0
        %v3505 = vadd.f32 %v3416, %v3504
        %v3506 = vpop.f32.mrf.mxu0
        %v3507 = vadd.f32 %v3418, %v3506
        %3508 = vmatmul.bf16.gmra.mxu0 %v2491
        %v3509 = vpop.f32.mrf.mxu0
        %v3510 = vadd.f32 %v3421, %v3509
        %v3511 = vpop.f32.mrf.mxu0
        %v3512 = vadd.f32 %v3423, %v3511
        %3513 = vmatmul.bf16.gmra.mxu0 %v2492
        %v3514 = vpop.f32.mrf.mxu0
        %v3515 = vadd.f32 %v3426, %v3514
        %v3516 = vpop.f32.mrf.mxu0
        %v3517 = vadd.f32 %v3428, %v3516
        %3518 = vmatmul.bf16.gmra.mxu0 %v2493
        %v3519 = vpop.f32.mrf.mxu0
        %v3520 = vadd.f32 %v3431, %v3519
        %v3521 = vpop.f32.mrf.mxu0
        %v3522 = vadd.f32 %v3433, %v3521
        %3523 = vmatmul.bf16.gmra.mxu0 %v2494
        %v3524 = vpop.f32.mrf.mxu0
        %v3525 = vadd.f32 %v3436, %v3524
        %v3526 = vpop.f32.mrf.mxu0
        %v3527 = vadd.f32 %v3438, %v3526
        %3528 = vmatmul.bf16.gmra.mxu0 %v2495
        %v3529 = vpop.f32.mrf.mxu0
        %v3530 = vadd.f32 %v3441, %v3529
        %v3531 = vpop.f32.mrf.mxu0
        %v3532 = vadd.f32 %v3443, %v3531
        %3533 = vmatmul.bf16.gmra.mxu0 %v2496
        %v3534 = vpop.f32.mrf.mxu0
        %v3535 = vadd.f32 %v3446, %v3534
        %v3536 = vpop.f32.mrf.mxu0
        %v3537 = vadd.f32 %v3448, %v3536
        %3538 = vmatmul.bf16.gmra.mxu0 %v2497
        %v3539 = vpop.f32.mrf.mxu0
        %v3540 = vadd.f32 %v3451, %v3539
        %v3541 = vpop.f32.mrf.mxu0
        %v3542 = vadd.f32 %v3453, %v3541
        %3543 = vmatmul.bf16.gmra.mxu0 %v2498
        %v3544 = vpop.f32.mrf.mxu0
        %v3545 = vadd.f32 %v3456, %v3544
        %v3546 = vpop.f32.mrf.mxu0
        %v3547 = vadd.f32 %v3458, %v3546
        %3548 = vmatmul.bf16.gmra.mxu0 %v2499
        %v3549 = vpop.f32.mrf.mxu0
        %v3550 = vadd.f32 %v3461, %v3549
        %v3551 = vpop.f32.mrf.mxu0
        %v3552 = vadd.f32 %v3463, %v3551
        %3553 = vdwg.mxu0
        %3554 = vmatpush.bf16.msra.mxu0 %v3351
        %3555 = vmatpush.bf16.msra.mxu0 %v3350
        %3556 = vmatpush.bf16.msra.mxu0 %v3349
        %3557 = vmatpush.bf16.msra.mxu0 %v3348
        %3558 = vmatpush.bf16.msra.mxu0 %v3347
        %3559 = vmatpush.bf16.msra.mxu0 %v3346
        %3560 = vmatpush.bf16.msra.mxu0 %v3345
        %3561 = vmatpush.bf16.msra.mxu0 %v3344
        %3562 = vmatmul.bf16.gmra.mxu0 %v709
        %v3563 = vpop.f32.mrf.mxu0
        %v3564 = vadd.f32 %v3475, %v3563
        %v3565 = vpop.f32.mrf.mxu0
        %v3566 = vadd.f32 %v3477, %v3565
        %3567 = vmatmul.bf16.gmra.mxu0 %v2654
        %v3568 = vpop.f32.mrf.mxu0
        %v3569 = vadd.f32 %v3480, %v3568
        %v3570 = vpop.f32.mrf.mxu0
        %v3571 = vadd.f32 %v3482, %v3570
        %3572 = vmatmul.bf16.gmra.mxu0 %v2657
        %v3573 = vpop.f32.mrf.mxu0
        %v3574 = vadd.f32 %v3485, %v3573
        %v3575 = vpop.f32.mrf.mxu0
        %v3576 = vadd.f32 %v3487, %v3575
        %3577 = vmatmul.bf16.gmra.mxu0 %v2660
        %v3578 = vpop.f32.mrf.mxu0
        %v3579 = vadd.f32 %v3490, %v3578
        %v3580 = vpop.f32.mrf.mxu0
        %v3581 = vadd.f32 %v3492, %v3580
        %3582 = vmatmul.bf16.gmra.mxu0 %v2663
        %v3583 = vpop.f32.mrf.mxu0
        %v3584 = vadd.f32 %v3495, %v3583
        %v3585 = vpop.f32.mrf.mxu0
        %v3586 = vadd.f32 %v3497, %v3585
        %3587 = vmatmul.bf16.gmra.mxu0 %v2666
        %v3588 = vpop.f32.mrf.mxu0
        %v3589 = vadd.f32 %v3500, %v3588
        %v3590 = vpop.f32.mrf.mxu0
        %v3591 = vadd.f32 %v3502, %v3590
        %3592 = vmatmul.bf16.gmra.mxu0 %v2669
        %v3593 = vpop.f32.mrf.mxu0
        %v3594 = vadd.f32 %v3505, %v3593
        %v3595 = vpop.f32.mrf.mxu0
        %v3596 = vadd.f32 %v3507, %v3595
        %3597 = vmatmul.bf16.gmra.mxu0 %v2672
        %v3598 = vpop.f32.mrf.mxu0
        %v3599 = vadd.f32 %v3510, %v3598
        %v3600 = vpop.f32.mrf.mxu0
        %v3601 = vadd.f32 %v3512, %v3600
        %3602 = vmatmul.bf16.gmra.mxu0 %v2675
        %v3603 = vpop.f32.mrf.mxu0
        %v3604 = vadd.f32 %v3515, %v3603
        %v3605 = vpop.f32.mrf.mxu0
        %v3606 = vadd.f32 %v3517, %v3605
        %3607 = vmatmul.bf16.gmra.mxu0 %v2678
        %v3608 = vpop.f32.mrf.mxu0
        %v3609 = vadd.f32 %v3520, %v3608
        %v3610 = vpop.f32.mrf.mxu0
        %v3611 = vadd.f32 %v3522, %v3610
        %3612 = vmatmul.bf16.gmra.mxu0 %v2681
        %v3613 = vpop.f32.mrf.mxu0
        %v3614 = vadd.f32 %v3525, %v3613
        %v3615 = vpop.f32.mrf.mxu0
        %v3616 = vadd.f32 %v3527, %v3615
        %3617 = vmatmul.bf16.gmra.mxu0 %v2684
        %v3618 = vpop.f32.mrf.mxu0
        %v3619 = vadd.f32 %v3530, %v3618
        %v3620 = vpop.f32.mrf.mxu0
        %v3621 = vadd.f32 %v3532, %v3620
        %3622 = vmatmul.bf16.gmra.mxu0 %v2687
        %v3623 = vpop.f32.mrf.mxu0
        %v3624 = vadd.f32 %v3535, %v3623
        %v3625 = vpop.f32.mrf.mxu0
        %v3626 = vadd.f32 %v3537, %v3625
        %3627 = vmatmul.bf16.gmra.mxu0 %v2690
        %v3628 = vpop.f32.mrf.mxu0
        %v3629 = vadd.f32 %v3540, %v3628
        %v3630 = vpop.f32.mrf.mxu0
        %v3631 = vadd.f32 %v3542, %v3630
        %3632 = vmatmul.bf16.gmra.mxu0 %v2693
        %v3633 = vpop.f32.mrf.mxu0
        %v3634 = vadd.f32 %v3545, %v3633
        %v3635 = vpop.f32.mrf.mxu0
        %v3636 = vadd.f32 %v3547, %v3635
        %3637 = vmatmul.bf16.gmra.mxu0 %v2696
        %v3638 = vpop.f32.mrf.mxu0
        %v3639 = vadd.f32 %v3550, %v3638
        %v3640 = vpop.f32.mrf.mxu0
        %v3641 = vadd.f32 %v3552, %v3640
        %3642 = vdwg.mxu0
        %v3643 = vld [vmem:[%s4 + $0x180] sm:$0xf]
        %v3644 = vld [vmem:[%s4 + $0x184] sm:$0xf]
        %v3645 = vld [vmem:[%s4 + $0x188] sm:$0xf]
        %v3646 = vld [vmem:[%s4 + $0x18c] sm:$0xf]
        %v3647 = vld [vmem:[%s4 + $0x190] sm:$0xf]
        %v3648 = vld [vmem:[%s4 + $0x194] sm:$0xf]
        %v3649 = vld [vmem:[%s4 + $0x198] sm:$0xf]
        %v3650 = vld [vmem:[%s4 + $0x19c] sm:$0xf]
        %v3651 = vld [vmem:[%s4 + $0x1a0] sm:$0xf]
        %v3652 = vld [vmem:[%s4 + $0x1a4] sm:$0xf]
        %v3653 = vld [vmem:[%s4 + $0x1a8] sm:$0xf]
        %v3654 = vld [vmem:[%s4 + $0x1ac] sm:$0xf]
        %v3655 = vld [vmem:[%s4 + $0x1b0] sm:$0xf]
        %v3656 = vld [vmem:[%s4 + $0x1b4] sm:$0xf]
        %v3657 = vld [vmem:[%s4 + $0x1b8] sm:$0xf]
        %v3658 = vld [vmem:[%s4 + $0x1bc] sm:$0xf]
        %v3659 = vld [vmem:[%s4 + $0x1c0] sm:$0xf]
        %v3660 = vld [vmem:[%s4 + $0x1c4] sm:$0xf]
        %v3661 = vld [vmem:[%s4 + $0x1c8] sm:$0xf]
        %v3662 = vld [vmem:[%s4 + $0x1cc] sm:$0xf]
        %v3663 = vld [vmem:[%s4 + $0x1d0] sm:$0xf]
        %v3664 = vld [vmem:[%s4 + $0x1d4] sm:$0xf]
        %v3665 = vld [vmem:[%s4 + $0x1d8] sm:$0xf]
        %v3666 = vld [vmem:[%s4 + $0x1dc] sm:$0xf]
        %v3667 = vld [vmem:[%s4 + $0x1e0] sm:$0xf]
        %v3668 = vld [vmem:[%s4 + $0x1e4] sm:$0xf]
        %v3669 = vld [vmem:[%s4 + $0x1e8] sm:$0xf]
        %v3670 = vld [vmem:[%s4 + $0x1ec] sm:$0xf]
        %v3671 = vld [vmem:[%s4 + $0x1f0] sm:$0xf]
        %v3672 = vld [vmem:[%s4 + $0x1f4] sm:$0xf]
        %v3673 = vld [vmem:[%s4 + $0x1f8] sm:$0xf]
        %v3674 = vld [vmem:[%s4 + $0x1fc] sm:$0xf]
        %v3675 = vld [vmem:[%s4 + $0x200] sm:$0xf]
        %v3676 = vld [vmem:[%s4 + $0x204] sm:$0xf]
        %v3677 = vld [vmem:[%s4 + $0x208] sm:$0xf]
        %v3678 = vld [vmem:[%s4 + $0x20c] sm:$0xf]
        %v3679 = vld [vmem:[%s4 + $0x210] sm:$0xf]
        %v3680 = vld [vmem:[%s4 + $0x214] sm:$0xf]
        %v3681 = vld [vmem:[%s4 + $0x218] sm:$0xf]
        %v3682 = vld [vmem:[%s4 + $0x21c] sm:$0xf]
        %v3683 = vld [vmem:[%s4 + $0x220] sm:$0xf]
        %v3684 = vld [vmem:[%s4 + $0x224] sm:$0xf]
        %v3685 = vld [vmem:[%s4 + $0x228] sm:$0xf]
        %v3686 = vld [vmem:[%s4 + $0x22c] sm:$0xf]
        %v3687 = vld [vmem:[%s4 + $0x230] sm:$0xf]
        %v3688 = vld [vmem:[%s4 + $0x234] sm:$0xf]
        %v3689 = vld [vmem:[%s4 + $0x238] sm:$0xf]
        %v3690 = vld [vmem:[%s4 + $0x23c] sm:$0xf]
        %v3739 = vunpack.c.l.b16 %v3643
        %v3740 = vunpack.c.l.b16 %v3644
        %v3741 = vunpack.c.l.b16 %v3645
        %v3742 = vunpack.c.l.b16 %v3646
        %v3743 = vunpack.c.l.b16 %v3647
        %v3744 = vunpack.c.l.b16 %v3648
        %v3745 = vunpack.c.l.b16 %v3649
        %v3746 = vunpack.c.l.b16 %v3650
        %v3747 = vunpack.c.l.b16 %v3651
        %v3748 = vunpack.c.l.b16 %v3652
        %v3749 = vunpack.c.l.b16 %v3653
        %v3750 = vunpack.c.l.b16 %v3654
        %v3751 = vunpack.c.l.b16 %v3655
        %v3752 = vunpack.c.l.b16 %v3656
        %v3753 = vunpack.c.l.b16 %v3657
        %v3754 = vunpack.c.l.b16 %v3658
        %v3755 = vunpack.c.l.b16 %v3659
        %v3756 = vunpack.c.l.b16 %v3660
        %v3757 = vunpack.c.l.b16 %v3661
        %v3758 = vunpack.c.l.b16 %v3662
        %v3759 = vunpack.c.l.b16 %v3663
        %v3760 = vunpack.c.l.b16 %v3664
        %v3761 = vunpack.c.l.b16 %v3665
        %v3762 = vunpack.c.l.b16 %v3666
        %v3763 = vunpack.c.l.b16 %v3667
        %v3764 = vunpack.c.l.b16 %v3668
        %v3765 = vunpack.c.l.b16 %v3669
        %v3766 = vunpack.c.l.b16 %v3670
        %v3767 = vunpack.c.l.b16 %v3671
        %v3768 = vunpack.c.l.b16 %v3672
        %v3769 = vunpack.c.l.b16 %v3673
        %v3770 = vunpack.c.l.b16 %v3674
        %v3771 = vunpack.c.l.b16 %v3675
        %v3772 = vunpack.c.l.b16 %v3676
        %v3773 = vunpack.c.l.b16 %v3677
        %v3774 = vunpack.c.l.b16 %v3678
        %v3775 = vunpack.c.l.b16 %v3679
        %v3776 = vunpack.c.l.b16 %v3680
        %v3777 = vunpack.c.l.b16 %v3681
        %v3778 = vunpack.c.l.b16 %v3682
        %v3779 = vunpack.c.l.b16 %v3683
        %v3780 = vunpack.c.l.b16 %v3684
        %v3781 = vunpack.c.l.b16 %v3685
        %v3782 = vunpack.c.l.b16 %v3686
        %v3783 = vunpack.c.l.b16 %v3687
        %v3784 = vunpack.c.l.b16 %v3688
        %v3785 = vunpack.c.l.b16 %v3689
        %v3786 = vunpack.c.l.b16 %v3690
        %v3787 = vpack.c.b16 %v3740, %v3739
        %v3788 = vpack.c.b16 %v3742, %v3741
        %v3789 = vpack.c.b16 %v3744, %v3743
        %v3790 = vpack.c.b16 %v3746, %v3745
        %v3791 = vpack.c.b16 %v3748, %v3747
        %v3792 = vpack.c.b16 %v3750, %v3749
        %v3793 = vpack.c.b16 %v3752, %v3751
        %v3794 = vpack.c.b16 %v3754, %v3753
        %v3795 = vpack.c.b16 %v3756, %v3755
        %v3796 = vpack.c.b16 %v3758, %v3757
        %v3797 = vpack.c.b16 %v3760, %v3759
        %v3798 = vpack.c.b16 %v3762, %v3761
        %v3799 = vpack.c.b16 %v3764, %v3763
        %v3800 = vpack.c.b16 %v3766, %v3765
        %v3801 = vpack.c.b16 %v3768, %v3767
        %v3802 = vpack.c.b16 %v3770, %v3769
        %v3803 = vpack.c.b16 %v3772, %v3771
        %v3804 = vpack.c.b16 %v3774, %v3773
        %v3805 = vpack.c.b16 %v3776, %v3775
        %v3806 = vpack.c.b16 %v3778, %v3777
        %v3807 = vpack.c.b16 %v3780, %v3779
        %v3808 = vpack.c.b16 %v3782, %v3781
        %v3809 = vpack.c.b16 %v3784, %v3783
        %v3810 = vpack.c.b16 %v3786, %v3785
        %3835 = vmatpush.bf16.msra.mxu0 %v3794
        %3836 = vmatpush.bf16.msra.mxu0 %v3793
        %3837 = vmatpush.bf16.msra.mxu0 %v3792
        %3838 = vmatpush.bf16.msra.mxu0 %v3791
        %3839 = vmatpush.bf16.msra.mxu0 %v3790
        %3840 = vmatpush.bf16.msra.mxu0 %v3789
        %3841 = vmatpush.bf16.msra.mxu0 %v3788
        %3842 = vmatpush.bf16.msra.mxu0 %v3787
        %3843 = vmatmul.bf16.gmra.mxu0 %v2532
        %v3844 = vpop.f32.mrf.mxu0
        %v3845 = vadd.f32 0.0, %v3844
        %v3846 = vpop.f32.mrf.mxu0
        %v3847 = vadd.f32 0.0, %v3846
        %3848 = vmatmul.bf16.gmra.mxu0 %v2540
        %v3849 = vpop.f32.mrf.mxu0
        %v3850 = vadd.f32 0.0, %v3849
        %v3851 = vpop.f32.mrf.mxu0
        %v3852 = vadd.f32 0.0, %v3851
        %3853 = vmatmul.bf16.gmra.mxu0 %v2548
        %v3854 = vpop.f32.mrf.mxu0
        %v3855 = vadd.f32 0.0, %v3854
        %v3856 = vpop.f32.mrf.mxu0
        %v3857 = vadd.f32 0.0, %v3856
        %3858 = vmatmul.bf16.gmra.mxu0 %v2556
        %v3859 = vpop.f32.mrf.mxu0
        %v3860 = vadd.f32 0.0, %v3859
        %v3861 = vpop.f32.mrf.mxu0
        %v3862 = vadd.f32 0.0, %v3861
        %3863 = vmatmul.bf16.gmra.mxu0 %v2564
        %v3864 = vpop.f32.mrf.mxu0
        %v3865 = vadd.f32 0.0, %v3864
        %v3866 = vpop.f32.mrf.mxu0
        %v3867 = vadd.f32 0.0, %v3866
        %3868 = vmatmul.bf16.gmra.mxu0 %v2572
        %v3869 = vpop.f32.mrf.mxu0
        %v3870 = vadd.f32 0.0, %v3869
        %v3871 = vpop.f32.mrf.mxu0
        %v3872 = vadd.f32 0.0, %v3871
        %3873 = vmatmul.bf16.gmra.mxu0 %v2580
        %v3874 = vpop.f32.mrf.mxu0
        %v3875 = vadd.f32 0.0, %v3874
        %v3876 = vpop.f32.mrf.mxu0
        %v3877 = vadd.f32 0.0, %v3876
        %3878 = vmatmul.bf16.gmra.mxu0 %v2588
        %v3879 = vpop.f32.mrf.mxu0
        %v3880 = vadd.f32 0.0, %v3879
        %v3881 = vpop.f32.mrf.mxu0
        %v3882 = vadd.f32 0.0, %v3881
        %3883 = vmatmul.bf16.gmra.mxu0 %v2596
        %v3884 = vpop.f32.mrf.mxu0
        %v3885 = vadd.f32 0.0, %v3884
        %v3886 = vpop.f32.mrf.mxu0
        %v3887 = vadd.f32 0.0, %v3886
        %3888 = vmatmul.bf16.gmra.mxu0 %v2604
        %v3889 = vpop.f32.mrf.mxu0
        %v3890 = vadd.f32 0.0, %v3889
        %v3891 = vpop.f32.mrf.mxu0
        %v3892 = vadd.f32 0.0, %v3891
        %3893 = vmatmul.bf16.gmra.mxu0 %v2612
        %v3894 = vpop.f32.mrf.mxu0
        %v3895 = vadd.f32 0.0, %v3894
        %v3896 = vpop.f32.mrf.mxu0
        %v3897 = vadd.f32 0.0, %v3896
        %3898 = vmatmul.bf16.gmra.mxu0 %v2620
        %v3899 = vpop.f32.mrf.mxu0
        %v3900 = vadd.f32 0.0, %v3899
        %v3901 = vpop.f32.mrf.mxu0
        %v3902 = vadd.f32 0.0, %v3901
        %3903 = vmatmul.bf16.gmra.mxu0 %v2628
        %v3904 = vpop.f32.mrf.mxu0
        %v3905 = vadd.f32 0.0, %v3904
        %v3906 = vpop.f32.mrf.mxu0
        %v3907 = vadd.f32 0.0, %v3906
        %3908 = vmatmul.bf16.gmra.mxu0 %v2636
        %v3909 = vpop.f32.mrf.mxu0
        %v3910 = vadd.f32 0.0, %v3909
        %v3911 = vpop.f32.mrf.mxu0
        %v3912 = vadd.f32 0.0, %v3911
        %3913 = vmatmul.bf16.gmra.mxu0 %v2767
        %v3914 = vpop.f32.mrf.mxu0
        %v3915 = vadd.f32 0.0, %v3914
        %v3916 = vpop.f32.mrf.mxu0
        %v3917 = vadd.f32 0.0, %v3916
        %3918 = vmatmul.bf16.gmra.mxu0 %v569
        %v3919 = vpop.f32.mrf.mxu0
        %v3920 = vadd.f32 0.0, %v3919
        %v3921 = vpop.f32.mrf.mxu0
        %v3922 = vadd.f32 0.0, %v3921
        %3923 = vdwg.mxu0
        %3924 = vmatpush.bf16.msra.mxu0 %v3802
        %3925 = vmatpush.bf16.msra.mxu0 %v3801
        %3926 = vmatpush.bf16.msra.mxu0 %v3800
        %3927 = vmatpush.bf16.msra.mxu0 %v3799
        %3928 = vmatpush.bf16.msra.mxu0 %v3798
        %3929 = vmatpush.bf16.msra.mxu0 %v3797
        %3930 = vmatpush.bf16.msra.mxu0 %v3796
        %3931 = vmatpush.bf16.msra.mxu0 %v3795
        %3932 = vmatmul.bf16.gmra.mxu0 %v2486
        %v3933 = vpop.f32.mrf.mxu0
        %v3934 = vadd.f32 %v3845, %v3933
        %v3935 = vpop.f32.mrf.mxu0
        %v3936 = vadd.f32 %v3847, %v3935
        %3937 = vmatmul.bf16.gmra.mxu0 %v2487
        %v3938 = vpop.f32.mrf.mxu0
        %v3939 = vadd.f32 %v3850, %v3938
        %v3940 = vpop.f32.mrf.mxu0
        %v3941 = vadd.f32 %v3852, %v3940
        %3942 = vmatmul.bf16.gmra.mxu0 %v2488
        %v3943 = vpop.f32.mrf.mxu0
        %v3944 = vadd.f32 %v3855, %v3943
        %v3945 = vpop.f32.mrf.mxu0
        %v3946 = vadd.f32 %v3857, %v3945
        %3947 = vmatmul.bf16.gmra.mxu0 %v2489
        %v3948 = vpop.f32.mrf.mxu0
        %v3949 = vadd.f32 %v3860, %v3948
        %v3950 = vpop.f32.mrf.mxu0
        %v3951 = vadd.f32 %v3862, %v3950
        %3952 = vmatmul.bf16.gmra.mxu0 %v2490
        %v3953 = vpop.f32.mrf.mxu0
        %v3954 = vadd.f32 %v3865, %v3953
        %v3955 = vpop.f32.mrf.mxu0
        %v3956 = vadd.f32 %v3867, %v3955
        %3957 = vmatmul.bf16.gmra.mxu0 %v2491
        %v3958 = vpop.f32.mrf.mxu0
        %v3959 = vadd.f32 %v3870, %v3958
        %v3960 = vpop.f32.mrf.mxu0
        %v3961 = vadd.f32 %v3872, %v3960
        %3962 = vmatmul.bf16.gmra.mxu0 %v2492
        %v3963 = vpop.f32.mrf.mxu0
        %v3964 = vadd.f32 %v3875, %v3963
        %v3965 = vpop.f32.mrf.mxu0
        %v3966 = vadd.f32 %v3877, %v3965
        %3967 = vmatmul.bf16.gmra.mxu0 %v2493
        %v3968 = vpop.f32.mrf.mxu0
        %v3969 = vadd.f32 %v3880, %v3968
        %v3970 = vpop.f32.mrf.mxu0
        %v3971 = vadd.f32 %v3882, %v3970
        %3972 = vmatmul.bf16.gmra.mxu0 %v2494
        %v3973 = vpop.f32.mrf.mxu0
        %v3974 = vadd.f32 %v3885, %v3973
        %v3975 = vpop.f32.mrf.mxu0
        %v3976 = vadd.f32 %v3887, %v3975
        %3977 = vmatmul.bf16.gmra.mxu0 %v2495
        %v3978 = vpop.f32.mrf.mxu0
        %v3979 = vadd.f32 %v3890, %v3978
        %v3980 = vpop.f32.mrf.mxu0
        %v3981 = vadd.f32 %v3892, %v3980
        %3982 = vmatmul.bf16.gmra.mxu0 %v2496
        %v3983 = vpop.f32.mrf.mxu0
        %v3984 = vadd.f32 %v3895, %v3983
        %v3985 = vpop.f32.mrf.mxu0
        %v3986 = vadd.f32 %v3897, %v3985
        %3987 = vmatmul.bf16.gmra.mxu0 %v2497
        %v3988 = vpop.f32.mrf.mxu0
        %v3989 = vadd.f32 %v3900, %v3988
        %v3990 = vpop.f32.mrf.mxu0
        %v3991 = vadd.f32 %v3902, %v3990
        %3992 = vmatmul.bf16.gmra.mxu0 %v2498
        %v3993 = vpop.f32.mrf.mxu0
        %v3994 = vadd.f32 %v3905, %v3993
        %v3995 = vpop.f32.mrf.mxu0
        %v3996 = vadd.f32 %v3907, %v3995
        %3997 = vmatmul.bf16.gmra.mxu0 %v2499
        %v3998 = vpop.f32.mrf.mxu0
        %v3999 = vadd.f32 %v3910, %v3998
        %v4000 = vpop.f32.mrf.mxu0
        %v4001 = vadd.f32 %v3912, %v4000
        %4002 = vmatmul.bf16.gmra.mxu0 %v2500
        %v4003 = vpop.f32.mrf.mxu0
        %v4004 = vadd.f32 %v3915, %v4003
        %v4005 = vpop.f32.mrf.mxu0
        %v4006 = vadd.f32 %v3917, %v4005
        %4007 = vmatmul.bf16.gmra.mxu0 0
        %v4008 = vpop.f32.mrf.mxu0
        %v4009 = vadd.f32 %v3920, %v4008
        %v4010 = vpop.f32.mrf.mxu0
        %v4011 = vadd.f32 %v3922, %v4010
        %4012 = vdwg.mxu0
        %4013 = vmatpush.bf16.msra.mxu0 %v3810
        %4014 = vmatpush.bf16.msra.mxu0 %v3809
        %4015 = vmatpush.bf16.msra.mxu0 %v3808
        %4016 = vmatpush.bf16.msra.mxu0 %v3807
        %4017 = vmatpush.bf16.msra.mxu0 %v3806
        %4018 = vmatpush.bf16.msra.mxu0 %v3805
        %4019 = vmatpush.bf16.msra.mxu0 %v3804
        %4020 = vmatpush.bf16.msra.mxu0 %v3803
        %4021 = vmatmul.bf16.gmra.mxu0 %v2657
        %v4022 = vpop.f32.mrf.mxu0
        %v4023 = vadd.f32 %v3934, %v4022
        %v4024 = vpop.f32.mrf.mxu0
        %v4025 = vadd.f32 %v3936, %v4024
        %4026 = vmatmul.bf16.gmra.mxu0 %v2660
        %v4027 = vpop.f32.mrf.mxu0
        %v4028 = vadd.f32 %v3939, %v4027
        %v4029 = vpop.f32.mrf.mxu0
        %v4030 = vadd.f32 %v3941, %v4029
        %4031 = vmatmul.bf16.gmra.mxu0 %v2663
        %v4032 = vpop.f32.mrf.mxu0
        %v4033 = vadd.f32 %v3944, %v4032
        %v4034 = vpop.f32.mrf.mxu0
        %v4035 = vadd.f32 %v3946, %v4034
        %4036 = vmatmul.bf16.gmra.mxu0 %v2666
        %v4037 = vpop.f32.mrf.mxu0
        %v4038 = vadd.f32 %v3949, %v4037
        %v4039 = vpop.f32.mrf.mxu0
        %v4040 = vadd.f32 %v3951, %v4039
        %4041 = vmatmul.bf16.gmra.mxu0 %v2669
        %v4042 = vpop.f32.mrf.mxu0
        %v4043 = vadd.f32 %v3954, %v4042
        %v4044 = vpop.f32.mrf.mxu0
        %v4045 = vadd.f32 %v3956, %v4044
        %4046 = vmatmul.bf16.gmra.mxu0 %v2672
        %v4047 = vpop.f32.mrf.mxu0
        %v4048 = vadd.f32 %v3959, %v4047
        %v4049 = vpop.f32.mrf.mxu0
        %v4050 = vadd.f32 %v3961, %v4049
        %4051 = vmatmul.bf16.gmra.mxu0 %v2675
        %v4052 = vpop.f32.mrf.mxu0
        %v4053 = vadd.f32 %v3964, %v4052
        %v4054 = vpop.f32.mrf.mxu0
        %v4055 = vadd.f32 %v3966, %v4054
        %4056 = vmatmul.bf16.gmra.mxu0 %v2678
        %v4057 = vpop.f32.mrf.mxu0
        %v4058 = vadd.f32 %v3969, %v4057
        %v4059 = vpop.f32.mrf.mxu0
        %v4060 = vadd.f32 %v3971, %v4059
        %4061 = vmatmul.bf16.gmra.mxu0 %v2681
        %v4062 = vpop.f32.mrf.mxu0
        %v4063 = vadd.f32 %v3974, %v4062
        %v4064 = vpop.f32.mrf.mxu0
        %v4065 = vadd.f32 %v3976, %v4064
        %4066 = vmatmul.bf16.gmra.mxu0 %v2684
        %v4067 = vpop.f32.mrf.mxu0
        %v4068 = vadd.f32 %v3979, %v4067
        %v4069 = vpop.f32.mrf.mxu0
        %v4070 = vadd.f32 %v3981, %v4069
        %4071 = vmatmul.bf16.gmra.mxu0 %v2687
        %v4072 = vpop.f32.mrf.mxu0
        %v4073 = vadd.f32 %v3984, %v4072
        %v4074 = vpop.f32.mrf.mxu0
        %v4075 = vadd.f32 %v3986, %v4074
        %4076 = vmatmul.bf16.gmra.mxu0 %v2690
        %v4077 = vpop.f32.mrf.mxu0
        %v4078 = vadd.f32 %v3989, %v4077
        %v4079 = vpop.f32.mrf.mxu0
        %v4080 = vadd.f32 %v3991, %v4079
        %4081 = vmatmul.bf16.gmra.mxu0 %v2693
        %v4082 = vpop.f32.mrf.mxu0
        %v4083 = vadd.f32 %v3994, %v4082
        %v4084 = vpop.f32.mrf.mxu0
        %v4085 = vadd.f32 %v3996, %v4084
        %4086 = vmatmul.bf16.gmra.mxu0 %v2696
        %v4087 = vpop.f32.mrf.mxu0
        %v4088 = vadd.f32 %v3999, %v4087
        %v4089 = vpop.f32.mrf.mxu0
        %v4090 = vadd.f32 %v4001, %v4089
        %4091 = vmatmul.bf16.gmra.mxu0 %v2771
        %v4092 = vpop.f32.mrf.mxu0
        %v4093 = vadd.f32 %v4004, %v4092
        %v4094 = vpop.f32.mrf.mxu0
        %v4095 = vadd.f32 %v4006, %v4094
        %4096 = vmatmul.bf16.gmra.mxu0 %v709
        %v4097 = vpop.f32.mrf.mxu0
        %v4098 = vadd.f32 %v4009, %v4097
        %v4099 = vpop.f32.mrf.mxu0
        %v4100 = vadd.f32 %v4011, %v4099
        %4101 = vdwg.mxu0
        %v4102 = vadd.f32 %v3564, %v4023
        %v4103 = vadd.f32 %v3566, %v4025
        %v4104 = vadd.f32 %v3569, %v4028
        %v4105 = vadd.f32 %v3571, %v4030
        %v4106 = vadd.f32 %v3574, %v4033
        %v4107 = vadd.f32 %v3576, %v4035
        %v4108 = vadd.f32 %v3579, %v4038
        %v4109 = vadd.f32 %v3581, %v4040
        %v4110 = vadd.f32 %v3584, %v4043
        %v4111 = vadd.f32 %v3586, %v4045
        %v4112 = vadd.f32 %v3589, %v4048
        %v4113 = vadd.f32 %v3591, %v4050
        %v4114 = vadd.f32 %v3594, %v4053
        %v4115 = vadd.f32 %v3596, %v4055
        %v4116 = vadd.f32 %v3599, %v4058
        %v4117 = vadd.f32 %v3601, %v4060
        %v4118 = vadd.f32 %v3604, %v4063
        %v4119 = vadd.f32 %v3606, %v4065
        %v4120 = vadd.f32 %v3609, %v4068
        %v4121 = vadd.f32 %v3611, %v4070
        %v4122 = vadd.f32 %v3614, %v4073
        %v4123 = vadd.f32 %v3616, %v4075
        %v4124 = vadd.f32 %v3619, %v4078
        %v4125 = vadd.f32 %v3621, %v4080
        %v4126 = vadd.f32 %v3624, %v4083
        %v4127 = vadd.f32 %v3626, %v4085
        %v4128 = vadd.f32 %v3629, %v4088
        %v4129 = vadd.f32 %v3631, %v4090
        %v4130 = vadd.f32 %v3634, %v4093
        %v4131 = vadd.f32 %v3636, %v4095
        %v4132 = vadd.f32 %v3639, %v4098
        %v4133 = vadd.f32 %v3641, %v4100
        %v4134 = vld [vmem:[%s5] sm:$0x1]
        %v4136 = vperm.slane %v4134, 0
        %v4138 = vadd.f32 %v4102, %v4136
        %v4139 = vadd.f32 %v4103, %v4136
        %v4140 = vadd.f32 %v4104, %v4136
        %v4141 = vadd.f32 %v4105, %v4136
        %v4142 = vadd.f32 %v4106, %v4136
        %v4143 = vadd.f32 %v4107, %v4136
        %v4144 = vadd.f32 %v4108, %v4136
        %v4145 = vadd.f32 %v4109, %v4136
        %v4146 = vadd.f32 %v4110, %v4136
        %v4147 = vadd.f32 %v4111, %v4136
        %v4148 = vadd.f32 %v4112, %v4136
        %v4149 = vadd.f32 %v4113, %v4136
        %v4150 = vadd.f32 %v4114, %v4136
        %v4151 = vadd.f32 %v4115, %v4136
        %v4152 = vadd.f32 %v4116, %v4136
        %v4153 = vadd.f32 %v4117, %v4136
        %v4154 = vadd.f32 %v4118, %v4136
        %v4155 = vadd.f32 %v4119, %v4136
        %v4156 = vadd.f32 %v4120, %v4136
        %v4157 = vadd.f32 %v4121, %v4136
        %v4158 = vadd.f32 %v4122, %v4136
        %v4159 = vadd.f32 %v4123, %v4136
        %v4160 = vadd.f32 %v4124, %v4136
        %v4161 = vadd.f32 %v4125, %v4136
        %v4162 = vadd.f32 %v4126, %v4136
        %v4163 = vadd.f32 %v4127, %v4136
        %v4164 = vadd.f32 %v4128, %v4136
        %v4165 = vadd.f32 %v4129, %v4136
        %v4166 = vadd.f32 %v4130, %v4136
        %v4167 = vadd.f32 %v4131, %v4136
        %v4168 = vadd.f32 %v4132, %v4136
        %v4169 = vadd.f32 %v4133, %v4136
        %v4170 = vpack.c.bf16 %v4138, %v4138
        %v4171 = vpack.c.bf16 %v4139, %v4139
        %v4172 = vpack.c.bf16 %v4140, %v4140
        %v4173 = vpack.c.bf16 %v4141, %v4141
        %v4174 = vpack.c.bf16 %v4142, %v4142
        %v4175 = vpack.c.bf16 %v4143, %v4143
        %v4176 = vpack.c.bf16 %v4144, %v4144
        %v4177 = vpack.c.bf16 %v4145, %v4145
        %v4178 = vpack.c.bf16 %v4146, %v4146
        %v4179 = vpack.c.bf16 %v4147, %v4147
        %v4180 = vpack.c.bf16 %v4148, %v4148
        %v4181 = vpack.c.bf16 %v4149, %v4149
        %v4182 = vpack.c.bf16 %v4150, %v4150
        %v4183 = vpack.c.bf16 %v4151, %v4151
        %v4184 = vpack.c.bf16 %v4152, %v4152
        %v4185 = vpack.c.bf16 %v4153, %v4153
        %v4186 = vpack.c.bf16 %v4154, %v4154
        %v4187 = vpack.c.bf16 %v4155, %v4155
        %v4188 = vpack.c.bf16 %v4156, %v4156
        %v4189 = vpack.c.bf16 %v4157, %v4157
        %v4190 = vpack.c.bf16 %v4158, %v4158
        %v4191 = vpack.c.bf16 %v4159, %v4159
        %v4192 = vpack.c.bf16 %v4160, %v4160
        %v4193 = vpack.c.bf16 %v4161, %v4161
        %v4194 = vpack.c.bf16 %v4162, %v4162
        %v4195 = vpack.c.bf16 %v4163, %v4163
        %v4196 = vpack.c.bf16 %v4164, %v4164
        %v4197 = vpack.c.bf16 %v4165, %v4165
        %v4198 = vpack.c.bf16 %v4166, %v4166
        %v4199 = vpack.c.bf16 %v4167, %v4167
        %v4200 = vpack.c.bf16 %v4168, %v4168
        %v4201 = vpack.c.bf16 %v4169, %v4169
        %v4202 = vunpack.c.l.bf16 %v4170
        %v4203 = vunpack.c.l.bf16 %v4171
        %v4204 = vunpack.c.l.bf16 %v4172
        %v4205 = vunpack.c.l.bf16 %v4173
        %v4206 = vunpack.c.l.bf16 %v4174
        %v4207 = vunpack.c.l.bf16 %v4175
        %v4208 = vunpack.c.l.bf16 %v4176
        %v4209 = vunpack.c.l.bf16 %v4177
        %v4210 = vunpack.c.l.bf16 %v4178
        %v4211 = vunpack.c.l.bf16 %v4179
        %v4212 = vunpack.c.l.bf16 %v4180
        %v4213 = vunpack.c.l.bf16 %v4181
        %v4214 = vunpack.c.l.bf16 %v4182
        %v4215 = vunpack.c.l.bf16 %v4183
        %v4216 = vunpack.c.l.bf16 %v4184
        %v4217 = vunpack.c.l.bf16 %v4185
        %v4218 = vunpack.c.l.bf16 %v4186
        %v4219 = vunpack.c.l.bf16 %v4187
        %v4220 = vunpack.c.l.bf16 %v4188
        %v4221 = vunpack.c.l.bf16 %v4189
        %v4222 = vunpack.c.l.bf16 %v4190
        %v4223 = vunpack.c.l.bf16 %v4191
        %v4224 = vunpack.c.l.bf16 %v4192
        %v4225 = vunpack.c.l.bf16 %v4193
        %v4226 = vunpack.c.l.bf16 %v4194
        %v4227 = vunpack.c.l.bf16 %v4195
        %v4228 = vunpack.c.l.bf16 %v4196
        %v4229 = vunpack.c.l.bf16 %v4197
        %v4230 = vunpack.c.l.bf16 %v4198
        %v4231 = vunpack.c.l.bf16 %v4199
        %v4232 = vunpack.c.l.bf16 %v4200
        %v4233 = vunpack.c.l.bf16 %v4201
        %v4234 = vmax.f32 %v4202, 0.0
        %v4235 = vmax.f32 %v4203, 0.0
        %v4236 = vmax.f32 %v4204, 0.0
        %v4237 = vmax.f32 %v4205, 0.0
        %v4238 = vmax.f32 %v4206, 0.0
        %v4239 = vmax.f32 %v4207, 0.0
        %v4240 = vmax.f32 %v4208, 0.0
        %v4241 = vmax.f32 %v4209, 0.0
        %v4242 = vmax.f32 %v4210, 0.0
        %v4243 = vmax.f32 %v4211, 0.0
        %v4244 = vmax.f32 %v4212, 0.0
        %v4245 = vmax.f32 %v4213, 0.0
        %v4246 = vmax.f32 %v4214, 0.0
        %v4247 = vmax.f32 %v4215, 0.0
        %v4248 = vmax.f32 %v4216, 0.0
        %v4249 = vmax.f32 %v4217, 0.0
        %v4250 = vmax.f32 %v4218, 0.0
        %v4251 = vmax.f32 %v4219, 0.0
        %v4252 = vmax.f32 %v4220, 0.0
        %v4253 = vmax.f32 %v4221, 0.0
        %v4254 = vmax.f32 %v4222, 0.0
        %v4255 = vmax.f32 %v4223, 0.0
        %v4256 = vmax.f32 %v4224, 0.0
        %v4257 = vmax.f32 %v4225, 0.0
        %v4258 = vmax.f32 %v4226, 0.0
        %v4259 = vmax.f32 %v4227, 0.0
        %v4260 = vmax.f32 %v4228, 0.0
        %v4261 = vmax.f32 %v4229, 0.0
        %v4262 = vmax.f32 %v4230, 0.0
        %v4263 = vmax.f32 %v4231, 0.0
        %v4264 = vmax.f32 %v4232, 0.0
        %v4265 = vmax.f32 %v4233, 0.0
        %v4266 = vpack.c.bf16 %v4234, %v4234
        %v4267 = vpack.c.bf16 %v4235, %v4235
        %v4268 = vpack.c.bf16 %v4236, %v4236
        %v4269 = vpack.c.bf16 %v4237, %v4237
        %v4270 = vpack.c.bf16 %v4238, %v4238
        %v4271 = vpack.c.bf16 %v4239, %v4239
        %v4272 = vpack.c.bf16 %v4240, %v4240
        %v4273 = vpack.c.bf16 %v4241, %v4241
        %v4274 = vpack.c.bf16 %v4242, %v4242
        %v4275 = vpack.c.bf16 %v4243, %v4243
        %v4276 = vpack.c.bf16 %v4244, %v4244
        %v4277 = vpack.c.bf16 %v4245, %v4245
        %v4278 = vpack.c.bf16 %v4246, %v4246
        %v4279 = vpack.c.bf16 %v4247, %v4247
        %v4280 = vpack.c.bf16 %v4248, %v4248
        %v4281 = vpack.c.bf16 %v4249, %v4249
        %v4282 = vpack.c.bf16 %v4250, %v4250
        %v4283 = vpack.c.bf16 %v4251, %v4251
        %v4284 = vpack.c.bf16 %v4252, %v4252
        %v4285 = vpack.c.bf16 %v4253, %v4253
        %v4286 = vpack.c.bf16 %v4254, %v4254
        %v4287 = vpack.c.bf16 %v4255, %v4255
        %v4288 = vpack.c.bf16 %v4256, %v4256
        %v4289 = vpack.c.bf16 %v4257, %v4257
        %v4290 = vpack.c.bf16 %v4258, %v4258
        %v4291 = vpack.c.bf16 %v4259, %v4259
        %v4292 = vpack.c.bf16 %v4260, %v4260
        %v4293 = vpack.c.bf16 %v4261, %v4261
        %v4294 = vpack.c.bf16 %v4262, %v4262
        %v4295 = vpack.c.bf16 %v4263, %v4263
        %v4296 = vpack.c.bf16 %v4264, %v4264
        %v4297 = vpack.c.bf16 %v4265, %v4265
        %v4330 = vunpack.c.l.b16 %v4266
        %v4331 = vunpack.c.l.b16 %v4267
        %v4332 = vunpack.c.l.b16 %v4268
        %v4333 = vunpack.c.l.b16 %v4269
        %v4334 = vunpack.c.l.b16 %v4270
        %v4335 = vunpack.c.l.b16 %v4271
        %v4336 = vunpack.c.l.b16 %v4272
        %v4337 = vunpack.c.l.b16 %v4273
        %v4338 = vunpack.c.l.b16 %v4274
        %v4339 = vunpack.c.l.b16 %v4275
        %v4340 = vunpack.c.l.b16 %v4276
        %v4341 = vunpack.c.l.b16 %v4277
        %v4342 = vunpack.c.l.b16 %v4278
        %v4343 = vunpack.c.l.b16 %v4279
        %v4344 = vunpack.c.l.b16 %v4280
        %v4345 = vunpack.c.l.b16 %v4281
        %v4346 = vunpack.c.l.b16 %v4282
        %v4347 = vunpack.c.l.b16 %v4283
        %v4348 = vunpack.c.l.b16 %v4284
        %v4349 = vunpack.c.l.b16 %v4285
        %v4350 = vunpack.c.l.b16 %v4286
        %v4351 = vunpack.c.l.b16 %v4287
        %v4352 = vunpack.c.l.b16 %v4288
        %v4353 = vunpack.c.l.b16 %v4289
        %v4354 = vunpack.c.l.b16 %v4290
        %v4355 = vunpack.c.l.b16 %v4291
        %v4356 = vunpack.c.l.b16 %v4292
        %v4357 = vunpack.c.l.b16 %v4293
        %v4358 = vunpack.c.l.b16 %v4294
        %v4359 = vunpack.c.l.b16 %v4295
        %v4360 = vunpack.c.l.b16 %v4296
        %v4361 = vunpack.c.l.b16 %v4297
        %v4362 = vpack.c.b16 %v4331, %v4330
        %v4363 = vpack.c.b16 %v4333, %v4332
        %v4364 = vpack.c.b16 %v4335, %v4334
        %v4365 = vpack.c.b16 %v4337, %v4336
        %v4366 = vpack.c.b16 %v4339, %v4338
        %v4367 = vpack.c.b16 %v4341, %v4340
        %v4368 = vpack.c.b16 %v4343, %v4342
        %v4369 = vpack.c.b16 %v4345, %v4344
        %v4370 = vpack.c.b16 %v4347, %v4346
        %v4371 = vpack.c.b16 %v4349, %v4348
        %v4372 = vpack.c.b16 %v4351, %v4350
        %v4373 = vpack.c.b16 %v4353, %v4352
        %v4374 = vpack.c.b16 %v4355, %v4354
        %v4375 = vpack.c.b16 %v4357, %v4356
        %v4376 = vpack.c.b16 %v4359, %v4358
        %v4377 = vpack.c.b16 %v4361, %v4360
        %v4395 = vshrl.u32 %v4362, 16
        %v4397 = vrot.slane %v4395, 7
        %v4398 = vshll.u32 %v4362, 16
        %v4400 = vor.u32 %v4397, %v4398
        %v4401 = vsel %vm561, %v565, %v4400
        %v4403 = vshrl.u32 %v4363, 16
        %v4405 = vrot.slane %v4403, 7
        %v4406 = vshll.u32 %v4363, 16
        %v4408 = vor.u32 %v4405, %v4406
        %v4409 = vsel %vm561, %v565, %v4408
        %v4411 = vshrl.u32 %v4364, 16
        %v4413 = vrot.slane %v4411, 7
        %v4414 = vshll.u32 %v4364, 16
        %v4416 = vor.u32 %v4413, %v4414
        %v4417 = vsel %vm561, %v565, %v4416
        %v4419 = vshrl.u32 %v4365, 16
        %v4421 = vrot.slane %v4419, 7
        %v4422 = vshll.u32 %v4365, 16
        %v4424 = vor.u32 %v4421, %v4422
        %v4425 = vsel %vm561, %v565, %v4424
        %v4427 = vshrl.u32 %v4366, 16
        %v4429 = vrot.slane %v4427, 7
        %v4430 = vshll.u32 %v4366, 16
        %v4432 = vor.u32 %v4429, %v4430
        %v4433 = vsel %vm561, %v565, %v4432
        %v4435 = vshrl.u32 %v4367, 16
        %v4437 = vrot.slane %v4435, 7
        %v4438 = vshll.u32 %v4367, 16
        %v4440 = vor.u32 %v4437, %v4438
        %v4441 = vsel %vm561, %v565, %v4440
        %v4443 = vshrl.u32 %v4368, 16
        %v4445 = vrot.slane %v4443, 7
        %v4446 = vshll.u32 %v4368, 16
        %v4448 = vor.u32 %v4445, %v4446
        %v4449 = vsel %vm561, %v565, %v4448
        %v4451 = vshrl.u32 %v4369, 16
        %v4453 = vrot.slane %v4451, 7
        %v4454 = vshll.u32 %v4369, 16
        %v4456 = vor.u32 %v4453, %v4454
        %v4457 = vsel %vm561, %v565, %v4456
        %v4459 = vshrl.u32 %v4370, 16
        %v4461 = vrot.slane %v4459, 7
        %v4462 = vshll.u32 %v4370, 16
        %v4464 = vor.u32 %v4461, %v4462
        %v4465 = vsel %vm561, %v565, %v4464
        %v4467 = vshrl.u32 %v4371, 16
        %v4469 = vrot.slane %v4467, 7
        %v4470 = vshll.u32 %v4371, 16
        %v4472 = vor.u32 %v4469, %v4470
        %v4473 = vsel %vm561, %v565, %v4472
        %v4475 = vshrl.u32 %v4372, 16
        %v4477 = vrot.slane %v4475, 7
        %v4478 = vshll.u32 %v4372, 16
        %v4480 = vor.u32 %v4477, %v4478
        %v4481 = vsel %vm561, %v565, %v4480
        %v4483 = vshrl.u32 %v4373, 16
        %v4485 = vrot.slane %v4483, 7
        %v4486 = vshll.u32 %v4373, 16
        %v4488 = vor.u32 %v4485, %v4486
        %v4489 = vsel %vm561, %v565, %v4488
        %v4491 = vshrl.u32 %v4374, 16
        %v4493 = vrot.slane %v4491, 7
        %v4494 = vshll.u32 %v4374, 16
        %v4496 = vor.u32 %v4493, %v4494
        %v4497 = vsel %vm561, %v565, %v4496
        %v4499 = vshrl.u32 %v4375, 16
        %v4501 = vrot.slane %v4499, 7
        %v4502 = vshll.u32 %v4375, 16
        %v4504 = vor.u32 %v4501, %v4502
        %v4505 = vsel %vm561, %v565, %v4504
        %v4507 = vshrl.u32 %v4376, 16
        %v4509 = vrot.slane %v4507, 7
        %v4510 = vshll.u32 %v4376, 16
        %v4512 = vor.u32 %v4509, %v4510
        %v4513 = vsel %vm561, %v565, %v4512
        %v4529 = vrot.slane %v4398, 1
        %v4530 = vor.u32 %v4395, %v4529
        %v4531 = vsel %vm706, %v4530, %v707
        %v4532 = vrot.slane %v4406, 1
        %v4533 = vor.u32 %v4403, %v4532
        %v4534 = vsel %vm706, %v4533, %v707
        %v4535 = vrot.slane %v4414, 1
        %v4536 = vor.u32 %v4411, %v4535
        %v4537 = vsel %vm706, %v4536, %v707
        %v4538 = vrot.slane %v4422, 1
        %v4539 = vor.u32 %v4419, %v4538
        %v4540 = vsel %vm706, %v4539, %v707
        %v4541 = vrot.slane %v4430, 1
        %v4542 = vor.u32 %v4427, %v4541
        %v4543 = vsel %vm706, %v4542, %v707
        %v4544 = vrot.slane %v4438, 1
        %v4545 = vor.u32 %v4435, %v4544
        %v4546 = vsel %vm706, %v4545, %v707
        %v4547 = vrot.slane %v4446, 1
        %v4548 = vor.u32 %v4443, %v4547
        %v4549 = vsel %vm706, %v4548, %v707
        %v4550 = vrot.slane %v4454, 1
        %v4551 = vor.u32 %v4451, %v4550
        %v4552 = vsel %vm706, %v4551, %v707
        %v4553 = vrot.slane %v4462, 1
        %v4554 = vor.u32 %v4459, %v4553
        %v4555 = vsel %vm706, %v4554, %v707
        %v4556 = vrot.slane %v4470, 1
        %v4557 = vor.u32 %v4467, %v4556
        %v4558 = vsel %vm706, %v4557, %v707
        %v4559 = vrot.slane %v4478, 1
        %v4560 = vor.u32 %v4475, %v4559
        %v4561 = vsel %vm706, %v4560, %v707
        %v4562 = vrot.slane %v4486, 1
        %v4563 = vor.u32 %v4483, %v4562
        %v4564 = vsel %vm706, %v4563, %v707
        %v4565 = vrot.slane %v4494, 1
        %v4566 = vor.u32 %v4491, %v4565
        %v4567 = vsel %vm706, %v4566, %v707
        %v4568 = vrot.slane %v4502, 1
        %v4569 = vor.u32 %v4499, %v4568
        %v4570 = vsel %vm706, %v4569, %v707
        %v4571 = vrot.slane %v4510, 1
        %v4572 = vor.u32 %v4507, %v4571
        %v4573 = vsel %vm706, %v4572, %v707
        %v4589 = vld [vmem:[%s6] sm:$0xf]
        %v4590 = vld [vmem:[%s6 + $0x4] sm:$0xf]
        %v4591 = vld [vmem:[%s6 + $0x8] sm:$0xf]
        %v4592 = vld [vmem:[%s6 + $0xc] sm:$0xf]
        %v4593 = vld [vmem:[%s6 + $0x10] sm:$0xf]
        %v4594 = vld [vmem:[%s6 + $0x14] sm:$0xf]
        %v4595 = vld [vmem:[%s6 + $0x18] sm:$0xf]
        %v4596 = vld [vmem:[%s6 + $0x1c] sm:$0xf]
        %v4597 = vld [vmem:[%s6 + $0x20] sm:$0xf]
        %v4598 = vld [vmem:[%s6 + $0x24] sm:$0xf]
        %v4599 = vld [vmem:[%s6 + $0x28] sm:$0xf]
        %v4600 = vld [vmem:[%s6 + $0x2c] sm:$0xf]
        %v4601 = vld [vmem:[%s6 + $0x30] sm:$0xf]
        %v4602 = vld [vmem:[%s6 + $0x34] sm:$0xf]
        %v4603 = vld [vmem:[%s6 + $0x38] sm:$0xf]
        %v4604 = vld [vmem:[%s6 + $0x3c] sm:$0xf]
        %v4605 = vld [vmem:[%s6 + $0x40] sm:$0xf]
        %v4606 = vld [vmem:[%s6 + $0x44] sm:$0xf]
        %v4607 = vld [vmem:[%s6 + $0x48] sm:$0xf]
        %v4608 = vld [vmem:[%s6 + $0x4c] sm:$0xf]
        %v4609 = vld [vmem:[%s6 + $0x50] sm:$0xf]
        %v4610 = vld [vmem:[%s6 + $0x54] sm:$0xf]
        %v4611 = vld [vmem:[%s6 + $0x58] sm:$0xf]
        %v4612 = vld [vmem:[%s6 + $0x5c] sm:$0xf]
        %v4613 = vld [vmem:[%s6 + $0x60] sm:$0xf]
        %v4614 = vld [vmem:[%s6 + $0x64] sm:$0xf]
        %v4615 = vld [vmem:[%s6 + $0x68] sm:$0xf]
        %v4616 = vld [vmem:[%s6 + $0x6c] sm:$0xf]
        %v4617 = vld [vmem:[%s6 + $0x70] sm:$0xf]
        %v4618 = vld [vmem:[%s6 + $0x74] sm:$0xf]
        %v4619 = vld [vmem:[%s6 + $0x78] sm:$0xf]
        %v4620 = vld [vmem:[%s6 + $0x7c] sm:$0xf]
        %v4621 = vld [vmem:[%s6 + $0x80] sm:$0xf]
        %v4622 = vld [vmem:[%s6 + $0x84] sm:$0xf]
        %v4623 = vld [vmem:[%s6 + $0x88] sm:$0xf]
        %v4624 = vld [vmem:[%s6 + $0x8c] sm:$0xf]
        %v4625 = vld [vmem:[%s6 + $0x90] sm:$0xf]
        %v4626 = vld [vmem:[%s6 + $0x94] sm:$0xf]
        %v4627 = vld [vmem:[%s6 + $0x98] sm:$0xf]
        %v4628 = vld [vmem:[%s6 + $0x9c] sm:$0xf]
        %v4629 = vld [vmem:[%s6 + $0xa0] sm:$0xf]
        %v4630 = vld [vmem:[%s6 + $0xa4] sm:$0xf]
        %v4631 = vld [vmem:[%s6 + $0xa8] sm:$0xf]
        %v4632 = vld [vmem:[%s6 + $0xac] sm:$0xf]
        %v4633 = vld [vmem:[%s6 + $0xb0] sm:$0xf]
        %v4634 = vld [vmem:[%s6 + $0xb4] sm:$0xf]
        %v4635 = vld [vmem:[%s6 + $0xb8] sm:$0xf]
        %v4636 = vld [vmem:[%s6 + $0xbc] sm:$0xf]
        %v4638 = vshrl.u32 %v4377, 16
        %v4640 = vrot.slane %v4638, 7
        %v4641 = vshll.u32 %v4377, 16
        %v4643 = vor.u32 %v4640, %v4641
        %v4644 = vsel %vm561, %v565, %v4643
        %v4646 = vrot.slane %v4641, 1
        %v4647 = vor.u32 %v4638, %v4646
        %v4648 = vsel %vm706, %v4647, %v707
        %v4650 = vld [vmem:[%s6 + $0xc0] sm:$0xf]
        %v4651 = vld [vmem:[%s6 + $0xc4] sm:$0xf]
        %v4652 = vld [vmem:[%s6 + $0xc8] sm:$0xf]
        %v4653 = vld [vmem:[%s6 + $0xcc] sm:$0xf]
        %v4654 = vld [vmem:[%s6 + $0xd0] sm:$0xf]
        %v4655 = vld [vmem:[%s6 + $0xd4] sm:$0xf]
        %v4656 = vld [vmem:[%s6 + $0xd8] sm:$0xf]
        %v4657 = vld [vmem:[%s6 + $0xdc] sm:$0xf]
        %v4658 = vld [vmem:[%s6 + $0xe0] sm:$0xf]
        %v4659 = vld [vmem:[%s6 + $0xe4] sm:$0xf]
        %v4660 = vld [vmem:[%s6 + $0xe8] sm:$0xf]
        %v4661 = vld [vmem:[%s6 + $0xec] sm:$0xf]
        %v4662 = vld [vmem:[%s6 + $0xf0] sm:$0xf]
        %v4663 = vld [vmem:[%s6 + $0xf4] sm:$0xf]
        %v4664 = vld [vmem:[%s6 + $0xf8] sm:$0xf]
        %v4665 = vld [vmem:[%s6 + $0xfc] sm:$0xf]
        %v4666 = vld [vmem:[%s6 + $0x100] sm:$0xf]
        %v4667 = vld [vmem:[%s6 + $0x104] sm:$0xf]
        %v4668 = vld [vmem:[%s6 + $0x108] sm:$0xf]
        %v4669 = vld [vmem:[%s6 + $0x10c] sm:$0xf]
        %v4670 = vld [vmem:[%s6 + $0x110] sm:$0xf]
        %v4671 = vld [vmem:[%s6 + $0x114] sm:$0xf]
        %v4672 = vld [vmem:[%s6 + $0x118] sm:$0xf]
        %v4673 = vld [vmem:[%s6 + $0x11c] sm:$0xf]
        %v4674 = vld [vmem:[%s6 + $0x120] sm:$0xf]
        %v4675 = vld [vmem:[%s6 + $0x124] sm:$0xf]
        %v4676 = vld [vmem:[%s6 + $0x128] sm:$0xf]
        %v4677 = vld [vmem:[%s6 + $0x12c] sm:$0xf]
        %v4678 = vld [vmem:[%s6 + $0x130] sm:$0xf]
        %v4679 = vld [vmem:[%s6 + $0x134] sm:$0xf]
        %v4680 = vld [vmem:[%s6 + $0x138] sm:$0xf]
        %v4681 = vld [vmem:[%s6 + $0x13c] sm:$0xf]
        %v4682 = vld [vmem:[%s6 + $0x140] sm:$0xf]
        %v4683 = vld [vmem:[%s6 + $0x144] sm:$0xf]
        %v4684 = vld [vmem:[%s6 + $0x148] sm:$0xf]
        %v4685 = vld [vmem:[%s6 + $0x14c] sm:$0xf]
        %v4686 = vld [vmem:[%s6 + $0x150] sm:$0xf]
        %v4687 = vld [vmem:[%s6 + $0x154] sm:$0xf]
        %v4688 = vld [vmem:[%s6 + $0x158] sm:$0xf]
        %v4689 = vld [vmem:[%s6 + $0x15c] sm:$0xf]
        %v4690 = vld [vmem:[%s6 + $0x160] sm:$0xf]
        %v4691 = vld [vmem:[%s6 + $0x164] sm:$0xf]
        %v4692 = vld [vmem:[%s6 + $0x168] sm:$0xf]
        %v4693 = vld [vmem:[%s6 + $0x16c] sm:$0xf]
        %v4694 = vld [vmem:[%s6 + $0x170] sm:$0xf]
        %v4695 = vld [vmem:[%s6 + $0x174] sm:$0xf]
        %v4696 = vld [vmem:[%s6 + $0x178] sm:$0xf]
        %v4697 = vld [vmem:[%s6 + $0x17c] sm:$0xf]
        %v4746 = vunpack.c.l.b16 %v4650
        %v4747 = vunpack.c.l.b16 %v4651
        %v4748 = vunpack.c.l.b16 %v4652
        %v4749 = vunpack.c.l.b16 %v4653
        %v4750 = vunpack.c.l.b16 %v4654
        %v4751 = vunpack.c.l.b16 %v4655
        %v4752 = vunpack.c.l.b16 %v4656
        %v4753 = vunpack.c.l.b16 %v4657
        %v4754 = vunpack.c.l.b16 %v4658
        %v4755 = vunpack.c.l.b16 %v4659
        %v4756 = vunpack.c.l.b16 %v4660
        %v4757 = vunpack.c.l.b16 %v4661
        %v4758 = vunpack.c.l.b16 %v4662
        %v4759 = vunpack.c.l.b16 %v4663
        %v4760 = vunpack.c.l.b16 %v4664
        %v4761 = vunpack.c.l.b16 %v4665
        %v4762 = vunpack.c.l.b16 %v4666
        %v4763 = vunpack.c.l.b16 %v4667
        %v4764 = vunpack.c.l.b16 %v4668
        %v4765 = vunpack.c.l.b16 %v4669
        %v4766 = vunpack.c.l.b16 %v4670
        %v4767 = vunpack.c.l.b16 %v4671
        %v4768 = vunpack.c.l.b16 %v4672
        %v4769 = vunpack.c.l.b16 %v4673
        %v4770 = vunpack.c.l.b16 %v4674
        %v4771 = vunpack.c.l.b16 %v4675
        %v4772 = vunpack.c.l.b16 %v4676
        %v4773 = vunpack.c.l.b16 %v4677
        %v4774 = vunpack.c.l.b16 %v4678
        %v4775 = vunpack.c.l.b16 %v4679
        %v4776 = vunpack.c.l.b16 %v4680
        %v4777 = vunpack.c.l.b16 %v4681
        %v4778 = vunpack.c.l.b16 %v4682
        %v4779 = vunpack.c.l.b16 %v4683
        %v4780 = vunpack.c.l.b16 %v4684
        %v4781 = vunpack.c.l.b16 %v4685
        %v4782 = vunpack.c.l.b16 %v4686
        %v4783 = vunpack.c.l.b16 %v4687
        %v4784 = vunpack.c.l.b16 %v4688
        %v4785 = vunpack.c.l.b16 %v4689
        %v4786 = vunpack.c.l.b16 %v4690
        %v4787 = vunpack.c.l.b16 %v4691
        %v4788 = vunpack.c.l.b16 %v4692
        %v4789 = vunpack.c.l.b16 %v4693
        %v4790 = vunpack.c.l.b16 %v4694
        %v4791 = vunpack.c.l.b16 %v4695
        %v4792 = vunpack.c.l.b16 %v4696
        %v4793 = vunpack.c.l.b16 %v4697
        %v4794 = vpack.c.b16 %v4747, %v4746
        %v4795 = vpack.c.b16 %v4749, %v4748
        %v4796 = vpack.c.b16 %v4751, %v4750
        %v4797 = vpack.c.b16 %v4753, %v4752
        %v4798 = vpack.c.b16 %v4755, %v4754
        %v4799 = vpack.c.b16 %v4757, %v4756
        %v4800 = vpack.c.b16 %v4759, %v4758
        %v4801 = vpack.c.b16 %v4761, %v4760
        %v4802 = vpack.c.b16 %v4763, %v4762
        %v4803 = vpack.c.b16 %v4765, %v4764
        %v4804 = vpack.c.b16 %v4767, %v4766
        %v4805 = vpack.c.b16 %v4769, %v4768
        %v4806 = vpack.c.b16 %v4771, %v4770
        %v4807 = vpack.c.b16 %v4773, %v4772
        %v4808 = vpack.c.b16 %v4775, %v4774
        %v4809 = vpack.c.b16 %v4777, %v4776
        %v4810 = vpack.c.b16 %v4779, %v4778
        %v4811 = vpack.c.b16 %v4781, %v4780
        %v4812 = vpack.c.b16 %v4783, %v4782
        %v4813 = vpack.c.b16 %v4785, %v4784
        %v4814 = vpack.c.b16 %v4787, %v4786
        %v4815 = vpack.c.b16 %v4789, %v4788
        %v4816 = vpack.c.b16 %v4791, %v4790
        %v4817 = vpack.c.b16 %v4793, %v4792
        %4842 = vmatpush.bf16.msra.mxu0 %v4801
        %4843 = vmatpush.bf16.msra.mxu0 %v4800
        %4844 = vmatpush.bf16.msra.mxu0 %v4799
        %4845 = vmatpush.bf16.msra.mxu0 %v4798
        %4846 = vmatpush.bf16.msra.mxu0 %v4797
        %4847 = vmatpush.bf16.msra.mxu0 %v4796
        %4848 = vmatpush.bf16.msra.mxu0 %v4795
        %4849 = vmatpush.bf16.msra.mxu0 %v4794
        %4850 = vmatmul.bf16.gmra.mxu0 %v4401
        %v4851 = vpop.f32.mrf.mxu0
        %v4852 = vadd.f32 0.0, %v4851
        %v4853 = vpop.f32.mrf.mxu0
        %v4854 = vadd.f32 0.0, %v4853
        %4855 = vmatmul.bf16.gmra.mxu0 %v4409
        %v4856 = vpop.f32.mrf.mxu0
        %v4857 = vadd.f32 0.0, %v4856
        %v4858 = vpop.f32.mrf.mxu0
        %v4859 = vadd.f32 0.0, %v4858
        %4860 = vmatmul.bf16.gmra.mxu0 %v4417
        %v4861 = vpop.f32.mrf.mxu0
        %v4862 = vadd.f32 0.0, %v4861
        %v4863 = vpop.f32.mrf.mxu0
        %v4864 = vadd.f32 0.0, %v4863
        %4865 = vmatmul.bf16.gmra.mxu0 %v4425
        %v4866 = vpop.f32.mrf.mxu0
        %v4867 = vadd.f32 0.0, %v4866
        %v4868 = vpop.f32.mrf.mxu0
        %v4869 = vadd.f32 0.0, %v4868
        %4870 = vmatmul.bf16.gmra.mxu0 %v4433
        %v4871 = vpop.f32.mrf.mxu0
        %v4872 = vadd.f32 0.0, %v4871
        %v4873 = vpop.f32.mrf.mxu0
        %v4874 = vadd.f32 0.0, %v4873
        %4875 = vmatmul.bf16.gmra.mxu0 %v4441
        %v4876 = vpop.f32.mrf.mxu0
        %v4877 = vadd.f32 0.0, %v4876
        %v4878 = vpop.f32.mrf.mxu0
        %v4879 = vadd.f32 0.0, %v4878
        %4880 = vmatmul.bf16.gmra.mxu0 %v4449
        %v4881 = vpop.f32.mrf.mxu0
        %v4882 = vadd.f32 0.0, %v4881
        %v4883 = vpop.f32.mrf.mxu0
        %v4884 = vadd.f32 0.0, %v4883
        %4885 = vmatmul.bf16.gmra.mxu0 %v4457
        %v4886 = vpop.f32.mrf.mxu0
        %v4887 = vadd.f32 0.0, %v4886
        %v4888 = vpop.f32.mrf.mxu0
        %v4889 = vadd.f32 0.0, %v4888
        %4890 = vmatmul.bf16.gmra.mxu0 %v4465
        %v4891 = vpop.f32.mrf.mxu0
        %v4892 = vadd.f32 0.0, %v4891
        %v4893 = vpop.f32.mrf.mxu0
        %v4894 = vadd.f32 0.0, %v4893
        %4895 = vmatmul.bf16.gmra.mxu0 %v4473
        %v4896 = vpop.f32.mrf.mxu0
        %v4897 = vadd.f32 0.0, %v4896
        %v4898 = vpop.f32.mrf.mxu0
        %v4899 = vadd.f32 0.0, %v4898
        %4900 = vmatmul.bf16.gmra.mxu0 %v4481
        %v4901 = vpop.f32.mrf.mxu0
        %v4902 = vadd.f32 0.0, %v4901
        %v4903 = vpop.f32.mrf.mxu0
        %v4904 = vadd.f32 0.0, %v4903
        %4905 = vmatmul.bf16.gmra.mxu0 %v4489
        %v4906 = vpop.f32.mrf.mxu0
        %v4907 = vadd.f32 0.0, %v4906
        %v4908 = vpop.f32.mrf.mxu0
        %v4909 = vadd.f32 0.0, %v4908
        %4910 = vmatmul.bf16.gmra.mxu0 %v4497
        %v4911 = vpop.f32.mrf.mxu0
        %v4912 = vadd.f32 0.0, %v4911
        %v4913 = vpop.f32.mrf.mxu0
        %v4914 = vadd.f32 0.0, %v4913
        %4915 = vmatmul.bf16.gmra.mxu0 %v4505
        %v4916 = vpop.f32.mrf.mxu0
        %v4917 = vadd.f32 0.0, %v4916
        %v4918 = vpop.f32.mrf.mxu0
        %v4919 = vadd.f32 0.0, %v4918
        %4920 = vmatmul.bf16.gmra.mxu0 %v4513
        %v4921 = vpop.f32.mrf.mxu0
        %v4922 = vadd.f32 0.0, %v4921
        %v4923 = vpop.f32.mrf.mxu0
        %v4924 = vadd.f32 0.0, %v4923
        %4925 = vmatmul.bf16.gmra.mxu0 %v4644
        %v4926 = vpop.f32.mrf.mxu0
        %v4927 = vadd.f32 0.0, %v4926
        %v4928 = vpop.f32.mrf.mxu0
        %v4929 = vadd.f32 0.0, %v4928
        %4930 = vdwg.mxu0
        %4931 = vmatpush.bf16.msra.mxu0 %v4809
        %4932 = vmatpush.bf16.msra.mxu0 %v4808
        %4933 = vmatpush.bf16.msra.mxu0 %v4807
        %4934 = vmatpush.bf16.msra.mxu0 %v4806
        %4935 = vmatpush.bf16.msra.mxu0 %v4805
        %4936 = vmatpush.bf16.msra.mxu0 %v4804
        %4937 = vmatpush.bf16.msra.mxu0 %v4803
        %4938 = vmatpush.bf16.msra.mxu0 %v4802
        %4939 = vmatmul.bf16.gmra.mxu0 %v4362
        %v4940 = vpop.f32.mrf.mxu0
        %v4941 = vadd.f32 %v4852, %v4940
        %v4942 = vpop.f32.mrf.mxu0
        %v4943 = vadd.f32 %v4854, %v4942
        %4944 = vmatmul.bf16.gmra.mxu0 %v4363
        %v4945 = vpop.f32.mrf.mxu0
        %v4946 = vadd.f32 %v4857, %v4945
        %v4947 = vpop.f32.mrf.mxu0
        %v4948 = vadd.f32 %v4859, %v4947
        %4949 = vmatmul.bf16.gmra.mxu0 %v4364
        %v4950 = vpop.f32.mrf.mxu0
        %v4951 = vadd.f32 %v4862, %v4950
        %v4952 = vpop.f32.mrf.mxu0
        %v4953 = vadd.f32 %v4864, %v4952
        %4954 = vmatmul.bf16.gmra.mxu0 %v4365
        %v4955 = vpop.f32.mrf.mxu0
        %v4956 = vadd.f32 %v4867, %v4955
        %v4957 = vpop.f32.mrf.mxu0
        %v4958 = vadd.f32 %v4869, %v4957
        %4959 = vmatmul.bf16.gmra.mxu0 %v4366
        %v4960 = vpop.f32.mrf.mxu0
        %v4961 = vadd.f32 %v4872, %v4960
        %v4962 = vpop.f32.mrf.mxu0
        %v4963 = vadd.f32 %v4874, %v4962
        %4964 = vmatmul.bf16.gmra.mxu0 %v4367
        %v4965 = vpop.f32.mrf.mxu0
        %v4966 = vadd.f32 %v4877, %v4965
        %v4967 = vpop.f32.mrf.mxu0
        %v4968 = vadd.f32 %v4879, %v4967
        %4969 = vmatmul.bf16.gmra.mxu0 %v4368
        %v4970 = vpop.f32.mrf.mxu0
        %v4971 = vadd.f32 %v4882, %v4970
        %v4972 = vpop.f32.mrf.mxu0
        %v4973 = vadd.f32 %v4884, %v4972
        %4974 = vmatmul.bf16.gmra.mxu0 %v4369
        %v4975 = vpop.f32.mrf.mxu0
        %v4976 = vadd.f32 %v4887, %v4975
        %v4977 = vpop.f32.mrf.mxu0
        %v4978 = vadd.f32 %v4889, %v4977
        %4979 = vmatmul.bf16.gmra.mxu0 %v4370
        %v4980 = vpop.f32.mrf.mxu0
        %v4981 = vadd.f32 %v4892, %v4980
        %v4982 = vpop.f32.mrf.mxu0
        %v4983 = vadd.f32 %v4894, %v4982
        %4984 = vmatmul.bf16.gmra.mxu0 %v4371
        %v4985 = vpop.f32.mrf.mxu0
        %v4986 = vadd.f32 %v4897, %v4985
        %v4987 = vpop.f32.mrf.mxu0
        %v4988 = vadd.f32 %v4899, %v4987
        %4989 = vmatmul.bf16.gmra.mxu0 %v4372
        %v4990 = vpop.f32.mrf.mxu0
        %v4991 = vadd.f32 %v4902, %v4990
        %v4992 = vpop.f32.mrf.mxu0
        %v4993 = vadd.f32 %v4904, %v4992
        %4994 = vmatmul.bf16.gmra.mxu0 %v4373
        %v4995 = vpop.f32.mrf.mxu0
        %v4996 = vadd.f32 %v4907, %v4995
        %v4997 = vpop.f32.mrf.mxu0
        %v4998 = vadd.f32 %v4909, %v4997
        %4999 = vmatmul.bf16.gmra.mxu0 %v4374
        %v5000 = vpop.f32.mrf.mxu0
        %v5001 = vadd.f32 %v4912, %v5000
        %v5002 = vpop.f32.mrf.mxu0
        %v5003 = vadd.f32 %v4914, %v5002
        %5004 = vmatmul.bf16.gmra.mxu0 %v4375
        %v5005 = vpop.f32.mrf.mxu0
        %v5006 = vadd.f32 %v4917, %v5005
        %v5007 = vpop.f32.mrf.mxu0
        %v5008 = vadd.f32 %v4919, %v5007
        %5009 = vmatmul.bf16.gmra.mxu0 %v4376
        %v5010 = vpop.f32.mrf.mxu0
        %v5011 = vadd.f32 %v4922, %v5010
        %v5012 = vpop.f32.mrf.mxu0
        %v5013 = vadd.f32 %v4924, %v5012
        %5014 = vmatmul.bf16.gmra.mxu0 %v4377
        %v5015 = vpop.f32.mrf.mxu0
        %v5016 = vadd.f32 %v4927, %v5015
        %v5017 = vpop.f32.mrf.mxu0
        %v5018 = vadd.f32 %v4929, %v5017
        %5019 = vdwg.mxu0
        %5020 = vmatpush.bf16.msra.mxu0 %v4817
        %5021 = vmatpush.bf16.msra.mxu0 %v4816
        %5022 = vmatpush.bf16.msra.mxu0 %v4815
        %5023 = vmatpush.bf16.msra.mxu0 %v4814
        %5024 = vmatpush.bf16.msra.mxu0 %v4813
        %5025 = vmatpush.bf16.msra.mxu0 %v4812
        %5026 = vmatpush.bf16.msra.mxu0 %v4811
        %5027 = vmatpush.bf16.msra.mxu0 %v4810
        %5028 = vmatmul.bf16.gmra.mxu0 %v4531
        %v5029 = vpop.f32.mrf.mxu0
        %v5030 = vadd.f32 %v4941, %v5029
        %v5031 = vpop.f32.mrf.mxu0
        %v5032 = vadd.f32 %v4943, %v5031
        %5033 = vmatmul.bf16.gmra.mxu0 %v4534
        %v5034 = vpop.f32.mrf.mxu0
        %v5035 = vadd.f32 %v4946, %v5034
        %v5036 = vpop.f32.mrf.mxu0
        %v5037 = vadd.f32 %v4948, %v5036
        %5038 = vmatmul.bf16.gmra.mxu0 %v4537
        %v5039 = vpop.f32.mrf.mxu0
        %v5040 = vadd.f32 %v4951, %v5039
        %v5041 = vpop.f32.mrf.mxu0
        %v5042 = vadd.f32 %v4953, %v5041
        %5043 = vmatmul.bf16.gmra.mxu0 %v4540
        %v5044 = vpop.f32.mrf.mxu0
        %v5045 = vadd.f32 %v4956, %v5044
        %v5046 = vpop.f32.mrf.mxu0
        %v5047 = vadd.f32 %v4958, %v5046
        %5048 = vmatmul.bf16.gmra.mxu0 %v4543
        %v5049 = vpop.f32.mrf.mxu0
        %v5050 = vadd.f32 %v4961, %v5049
        %v5051 = vpop.f32.mrf.mxu0
        %v5052 = vadd.f32 %v4963, %v5051
        %5053 = vmatmul.bf16.gmra.mxu0 %v4546
        %v5054 = vpop.f32.mrf.mxu0
        %v5055 = vadd.f32 %v4966, %v5054
        %v5056 = vpop.f32.mrf.mxu0
        %v5057 = vadd.f32 %v4968, %v5056
        %5058 = vmatmul.bf16.gmra.mxu0 %v4549
        %v5059 = vpop.f32.mrf.mxu0
        %v5060 = vadd.f32 %v4971, %v5059
        %v5061 = vpop.f32.mrf.mxu0
        %v5062 = vadd.f32 %v4973, %v5061
        %5063 = vmatmul.bf16.gmra.mxu0 %v4552
        %v5064 = vpop.f32.mrf.mxu0
        %v5065 = vadd.f32 %v4976, %v5064
        %v5066 = vpop.f32.mrf.mxu0
        %v5067 = vadd.f32 %v4978, %v5066
        %5068 = vmatmul.bf16.gmra.mxu0 %v4555
        %v5069 = vpop.f32.mrf.mxu0
        %v5070 = vadd.f32 %v4981, %v5069
        %v5071 = vpop.f32.mrf.mxu0
        %v5072 = vadd.f32 %v4983, %v5071
        %5073 = vmatmul.bf16.gmra.mxu0 %v4558
        %v5074 = vpop.f32.mrf.mxu0
        %v5075 = vadd.f32 %v4986, %v5074
        %v5076 = vpop.f32.mrf.mxu0
        %v5077 = vadd.f32 %v4988, %v5076
        %5078 = vmatmul.bf16.gmra.mxu0 %v4561
        %v5079 = vpop.f32.mrf.mxu0
        %v5080 = vadd.f32 %v4991, %v5079
        %v5081 = vpop.f32.mrf.mxu0
        %v5082 = vadd.f32 %v4993, %v5081
        %5083 = vmatmul.bf16.gmra.mxu0 %v4564
        %v5084 = vpop.f32.mrf.mxu0
        %v5085 = vadd.f32 %v4996, %v5084
        %v5086 = vpop.f32.mrf.mxu0
        %v5087 = vadd.f32 %v4998, %v5086
        %5088 = vmatmul.bf16.gmra.mxu0 %v4567
        %v5089 = vpop.f32.mrf.mxu0
        %v5090 = vadd.f32 %v5001, %v5089
        %v5091 = vpop.f32.mrf.mxu0
        %v5092 = vadd.f32 %v5003, %v5091
        %5093 = vmatmul.bf16.gmra.mxu0 %v4570
        %v5094 = vpop.f32.mrf.mxu0
        %v5095 = vadd.f32 %v5006, %v5094
        %v5096 = vpop.f32.mrf.mxu0
        %v5097 = vadd.f32 %v5008, %v5096
        %5098 = vmatmul.bf16.gmra.mxu0 %v4573
        %v5099 = vpop.f32.mrf.mxu0
        %v5100 = vadd.f32 %v5011, %v5099
        %v5101 = vpop.f32.mrf.mxu0
        %v5102 = vadd.f32 %v5013, %v5101
        %5103 = vmatmul.bf16.gmra.mxu0 %v4648
        %v5104 = vpop.f32.mrf.mxu0
        %v5105 = vadd.f32 %v5016, %v5104
        %v5106 = vpop.f32.mrf.mxu0
        %v5107 = vadd.f32 %v5018, %v5106
        %5108 = vdwg.mxu0
        %v5157 = vunpack.c.l.b16 %v4589
        %v5158 = vunpack.c.l.b16 %v4590
        %v5159 = vunpack.c.l.b16 %v4591
        %v5160 = vunpack.c.l.b16 %v4592
        %v5161 = vunpack.c.l.b16 %v4593
        %v5162 = vunpack.c.l.b16 %v4594
        %v5163 = vunpack.c.l.b16 %v4595
        %v5164 = vunpack.c.l.b16 %v4596
        %v5165 = vunpack.c.l.b16 %v4597
        %v5166 = vunpack.c.l.b16 %v4598
        %v5167 = vunpack.c.l.b16 %v4599
        %v5168 = vunpack.c.l.b16 %v4600
        %v5169 = vunpack.c.l.b16 %v4601
        %v5170 = vunpack.c.l.b16 %v4602
        %v5171 = vunpack.c.l.b16 %v4603
        %v5172 = vunpack.c.l.b16 %v4604
        %v5173 = vunpack.c.l.b16 %v4605
        %v5174 = vunpack.c.l.b16 %v4606
        %v5175 = vunpack.c.l.b16 %v4607
        %v5176 = vunpack.c.l.b16 %v4608
        %v5177 = vunpack.c.l.b16 %v4609
        %v5178 = vunpack.c.l.b16 %v4610
        %v5179 = vunpack.c.l.b16 %v4611
        %v5180 = vunpack.c.l.b16 %v4612
        %v5181 = vunpack.c.l.b16 %v4613
        %v5182 = vunpack.c.l.b16 %v4614
        %v5183 = vunpack.c.l.b16 %v4615
        %v5184 = vunpack.c.l.b16 %v4616
        %v5185 = vunpack.c.l.b16 %v4617
        %v5186 = vunpack.c.l.b16 %v4618
        %v5187 = vunpack.c.l.b16 %v4619
        %v5188 = vunpack.c.l.b16 %v4620
        %v5189 = vunpack.c.l.b16 %v4621
        %v5190 = vunpack.c.l.b16 %v4622
        %v5191 = vunpack.c.l.b16 %v4623
        %v5192 = vunpack.c.l.b16 %v4624
        %v5193 = vunpack.c.l.b16 %v4625
        %v5194 = vunpack.c.l.b16 %v4626
        %v5195 = vunpack.c.l.b16 %v4627
        %v5196 = vunpack.c.l.b16 %v4628
        %v5197 = vunpack.c.l.b16 %v4629
        %v5198 = vunpack.c.l.b16 %v4630
        %v5199 = vunpack.c.l.b16 %v4631
        %v5200 = vunpack.c.l.b16 %v4632
        %v5201 = vunpack.c.l.b16 %v4633
        %v5202 = vunpack.c.l.b16 %v4634
        %v5203 = vunpack.c.l.b16 %v4635
        %v5204 = vunpack.c.l.b16 %v4636
        %v5205 = vpack.c.b16 %v5158, %v5157
        %v5206 = vpack.c.b16 %v5160, %v5159
        %v5207 = vpack.c.b16 %v5162, %v5161
        %v5208 = vpack.c.b16 %v5164, %v5163
        %v5209 = vpack.c.b16 %v5166, %v5165
        %v5210 = vpack.c.b16 %v5168, %v5167
        %v5211 = vpack.c.b16 %v5170, %v5169
        %v5212 = vpack.c.b16 %v5172, %v5171
        %v5213 = vpack.c.b16 %v5174, %v5173
        %v5214 = vpack.c.b16 %v5176, %v5175
        %v5215 = vpack.c.b16 %v5178, %v5177
        %v5216 = vpack.c.b16 %v5180, %v5179
        %v5217 = vpack.c.b16 %v5182, %v5181
        %v5218 = vpack.c.b16 %v5184, %v5183
        %v5219 = vpack.c.b16 %v5186, %v5185
        %v5220 = vpack.c.b16 %v5188, %v5187
        %v5221 = vpack.c.b16 %v5190, %v5189
        %v5222 = vpack.c.b16 %v5192, %v5191
        %v5223 = vpack.c.b16 %v5194, %v5193
        %v5224 = vpack.c.b16 %v5196, %v5195
        %v5225 = vpack.c.b16 %v5198, %v5197
        %v5226 = vpack.c.b16 %v5200, %v5199
        %v5227 = vpack.c.b16 %v5202, %v5201
        %v5228 = vpack.c.b16 %v5204, %v5203
        %5253 = vmatpush.bf16.msra.mxu0 %v5212
        %5254 = vmatpush.bf16.msra.mxu0 %v5211
        %5255 = vmatpush.bf16.msra.mxu0 %v5210
        %5256 = vmatpush.bf16.msra.mxu0 %v5209
        %5257 = vmatpush.bf16.msra.mxu0 %v5208
        %5258 = vmatpush.bf16.msra.mxu0 %v5207
        %5259 = vmatpush.bf16.msra.mxu0 %v5206
        %5260 = vmatpush.bf16.msra.mxu0 %v5205
        %5261 = vmatmul.bf16.gmra.mxu0 %v569
        %v5262 = vpop.f32.mrf.mxu0
        %v5263 = vadd.f32 %v5030, %v5262
        %v5264 = vpop.f32.mrf.mxu0
        %v5265 = vadd.f32 %v5032, %v5264
        %5266 = vmatmul.bf16.gmra.mxu0 %v4401
        %v5267 = vpop.f32.mrf.mxu0
        %v5268 = vadd.f32 %v5035, %v5267
        %v5269 = vpop.f32.mrf.mxu0
        %v5270 = vadd.f32 %v5037, %v5269
        %5271 = vmatmul.bf16.gmra.mxu0 %v4409
        %v5272 = vpop.f32.mrf.mxu0
        %v5273 = vadd.f32 %v5040, %v5272
        %v5274 = vpop.f32.mrf.mxu0
        %v5275 = vadd.f32 %v5042, %v5274
        %5276 = vmatmul.bf16.gmra.mxu0 %v4417
        %v5277 = vpop.f32.mrf.mxu0
        %v5278 = vadd.f32 %v5045, %v5277
        %v5279 = vpop.f32.mrf.mxu0
        %v5280 = vadd.f32 %v5047, %v5279
        %5281 = vmatmul.bf16.gmra.mxu0 %v4425
        %v5282 = vpop.f32.mrf.mxu0
        %v5283 = vadd.f32 %v5050, %v5282
        %v5284 = vpop.f32.mrf.mxu0
        %v5285 = vadd.f32 %v5052, %v5284
        %5286 = vmatmul.bf16.gmra.mxu0 %v4433
        %v5287 = vpop.f32.mrf.mxu0
        %v5288 = vadd.f32 %v5055, %v5287
        %v5289 = vpop.f32.mrf.mxu0
        %v5290 = vadd.f32 %v5057, %v5289
        %5291 = vmatmul.bf16.gmra.mxu0 %v4441
        %v5292 = vpop.f32.mrf.mxu0
        %v5293 = vadd.f32 %v5060, %v5292
        %v5294 = vpop.f32.mrf.mxu0
        %v5295 = vadd.f32 %v5062, %v5294
        %5296 = vmatmul.bf16.gmra.mxu0 %v4449
        %v5297 = vpop.f32.mrf.mxu0
        %v5298 = vadd.f32 %v5065, %v5297
        %v5299 = vpop.f32.mrf.mxu0
        %v5300 = vadd.f32 %v5067, %v5299
        %5301 = vmatmul.bf16.gmra.mxu0 %v4457
        %v5302 = vpop.f32.mrf.mxu0
        %v5303 = vadd.f32 %v5070, %v5302
        %v5304 = vpop.f32.mrf.mxu0
        %v5305 = vadd.f32 %v5072, %v5304
        %5306 = vmatmul.bf16.gmra.mxu0 %v4465
        %v5307 = vpop.f32.mrf.mxu0
        %v5308 = vadd.f32 %v5075, %v5307
        %v5309 = vpop.f32.mrf.mxu0
        %v5310 = vadd.f32 %v5077, %v5309
        %5311 = vmatmul.bf16.gmra.mxu0 %v4473
        %v5312 = vpop.f32.mrf.mxu0
        %v5313 = vadd.f32 %v5080, %v5312
        %v5314 = vpop.f32.mrf.mxu0
        %v5315 = vadd.f32 %v5082, %v5314
        %5316 = vmatmul.bf16.gmra.mxu0 %v4481
        %v5317 = vpop.f32.mrf.mxu0
        %v5318 = vadd.f32 %v5085, %v5317
        %v5319 = vpop.f32.mrf.mxu0
        %v5320 = vadd.f32 %v5087, %v5319
        %5321 = vmatmul.bf16.gmra.mxu0 %v4489
        %v5322 = vpop.f32.mrf.mxu0
        %v5323 = vadd.f32 %v5090, %v5322
        %v5324 = vpop.f32.mrf.mxu0
        %v5325 = vadd.f32 %v5092, %v5324
        %5326 = vmatmul.bf16.gmra.mxu0 %v4497
        %v5327 = vpop.f32.mrf.mxu0
        %v5328 = vadd.f32 %v5095, %v5327
        %v5329 = vpop.f32.mrf.mxu0
        %v5330 = vadd.f32 %v5097, %v5329
        %5331 = vmatmul.bf16.gmra.mxu0 %v4505
        %v5332 = vpop.f32.mrf.mxu0
        %v5333 = vadd.f32 %v5100, %v5332
        %v5334 = vpop.f32.mrf.mxu0
        %v5335 = vadd.f32 %v5102, %v5334
        %5336 = vmatmul.bf16.gmra.mxu0 %v4513
        %v5337 = vpop.f32.mrf.mxu0
        %v5338 = vadd.f32 %v5105, %v5337
        %v5339 = vpop.f32.mrf.mxu0
        %v5340 = vadd.f32 %v5107, %v5339
        %5341 = vdwg.mxu0
        %5342 = vmatpush.bf16.msra.mxu0 %v5220
        %5343 = vmatpush.bf16.msra.mxu0 %v5219
        %5344 = vmatpush.bf16.msra.mxu0 %v5218
        %5345 = vmatpush.bf16.msra.mxu0 %v5217
        %5346 = vmatpush.bf16.msra.mxu0 %v5216
        %5347 = vmatpush.bf16.msra.mxu0 %v5215
        %5348 = vmatpush.bf16.msra.mxu0 %v5214
        %5349 = vmatpush.bf16.msra.mxu0 %v5213
        %5350 = vmatmul.bf16.gmra.mxu0 0
        %v5351 = vpop.f32.mrf.mxu0
        %v5352 = vadd.f32 %v5263, %v5351
        %v5353 = vpop.f32.mrf.mxu0
        %v5354 = vadd.f32 %v5265, %v5353
        %5355 = vmatmul.bf16.gmra.mxu0 %v4362
        %v5356 = vpop.f32.mrf.mxu0
        %v5357 = vadd.f32 %v5268, %v5356
        %v5358 = vpop.f32.mrf.mxu0
        %v5359 = vadd.f32 %v5270, %v5358
        %5360 = vmatmul.bf16.gmra.mxu0 %v4363
        %v5361 = vpop.f32.mrf.mxu0
        %v5362 = vadd.f32 %v5273, %v5361
        %v5363 = vpop.f32.mrf.mxu0
        %v5364 = vadd.f32 %v5275, %v5363
        %5365 = vmatmul.bf16.gmra.mxu0 %v4364
        %v5366 = vpop.f32.mrf.mxu0
        %v5367 = vadd.f32 %v5278, %v5366
        %v5368 = vpop.f32.mrf.mxu0
        %v5369 = vadd.f32 %v5280, %v5368
        %5370 = vmatmul.bf16.gmra.mxu0 %v4365
        %v5371 = vpop.f32.mrf.mxu0
        %v5372 = vadd.f32 %v5283, %v5371
        %v5373 = vpop.f32.mrf.mxu0
        %v5374 = vadd.f32 %v5285, %v5373
        %5375 = vmatmul.bf16.gmra.mxu0 %v4366
        %v5376 = vpop.f32.mrf.mxu0
        %v5377 = vadd.f32 %v5288, %v5376
        %v5378 = vpop.f32.mrf.mxu0
        %v5379 = vadd.f32 %v5290, %v5378
        %5380 = vmatmul.bf16.gmra.mxu0 %v4367
        %v5381 = vpop.f32.mrf.mxu0
        %v5382 = vadd.f32 %v5293, %v5381
        %v5383 = vpop.f32.mrf.mxu0
        %v5384 = vadd.f32 %v5295, %v5383
        %5385 = vmatmul.bf16.gmra.mxu0 %v4368
        %v5386 = vpop.f32.mrf.mxu0
        %v5387 = vadd.f32 %v5298, %v5386
        %v5388 = vpop.f32.mrf.mxu0
        %v5389 = vadd.f32 %v5300, %v5388
        %5390 = vmatmul.bf16.gmra.mxu0 %v4369
        %v5391 = vpop.f32.mrf.mxu0
        %v5392 = vadd.f32 %v5303, %v5391
        %v5393 = vpop.f32.mrf.mxu0
        %v5394 = vadd.f32 %v5305, %v5393
        %5395 = vmatmul.bf16.gmra.mxu0 %v4370
        %v5396 = vpop.f32.mrf.mxu0
        %v5397 = vadd.f32 %v5308, %v5396
        %v5398 = vpop.f32.mrf.mxu0
        %v5399 = vadd.f32 %v5310, %v5398
        %5400 = vmatmul.bf16.gmra.mxu0 %v4371
        %v5401 = vpop.f32.mrf.mxu0
        %v5402 = vadd.f32 %v5313, %v5401
        %v5403 = vpop.f32.mrf.mxu0
        %v5404 = vadd.f32 %v5315, %v5403
        %5405 = vmatmul.bf16.gmra.mxu0 %v4372
        %v5406 = vpop.f32.mrf.mxu0
        %v5407 = vadd.f32 %v5318, %v5406
        %v5408 = vpop.f32.mrf.mxu0
        %v5409 = vadd.f32 %v5320, %v5408
        %5410 = vmatmul.bf16.gmra.mxu0 %v4373
        %v5411 = vpop.f32.mrf.mxu0
        %v5412 = vadd.f32 %v5323, %v5411
        %v5413 = vpop.f32.mrf.mxu0
        %v5414 = vadd.f32 %v5325, %v5413
        %5415 = vmatmul.bf16.gmra.mxu0 %v4374
        %v5416 = vpop.f32.mrf.mxu0
        %v5417 = vadd.f32 %v5328, %v5416
        %v5418 = vpop.f32.mrf.mxu0
        %v5419 = vadd.f32 %v5330, %v5418
        %5420 = vmatmul.bf16.gmra.mxu0 %v4375
        %v5421 = vpop.f32.mrf.mxu0
        %v5422 = vadd.f32 %v5333, %v5421
        %v5423 = vpop.f32.mrf.mxu0
        %v5424 = vadd.f32 %v5335, %v5423
        %5425 = vmatmul.bf16.gmra.mxu0 %v4376
        %v5426 = vpop.f32.mrf.mxu0
        %v5427 = vadd.f32 %v5338, %v5426
        %v5428 = vpop.f32.mrf.mxu0
        %v5429 = vadd.f32 %v5340, %v5428
        %5430 = vdwg.mxu0
        %5431 = vmatpush.bf16.msra.mxu0 %v5228
        %5432 = vmatpush.bf16.msra.mxu0 %v5227
        %5433 = vmatpush.bf16.msra.mxu0 %v5226
        %5434 = vmatpush.bf16.msra.mxu0 %v5225
        %5435 = vmatpush.bf16.msra.mxu0 %v5224
        %5436 = vmatpush.bf16.msra.mxu0 %v5223
        %5437 = vmatpush.bf16.msra.mxu0 %v5222
        %5438 = vmatpush.bf16.msra.mxu0 %v5221
        %5439 = vmatmul.bf16.gmra.mxu0 %v709
        %v5440 = vpop.f32.mrf.mxu0
        %v5441 = vadd.f32 %v5352, %v5440
        %v5442 = vpop.f32.mrf.mxu0
        %v5443 = vadd.f32 %v5354, %v5442
        %5444 = vmatmul.bf16.gmra.mxu0 %v4531
        %v5445 = vpop.f32.mrf.mxu0
        %v5446 = vadd.f32 %v5357, %v5445
        %v5447 = vpop.f32.mrf.mxu0
        %v5448 = vadd.f32 %v5359, %v5447
        %5449 = vmatmul.bf16.gmra.mxu0 %v4534
        %v5450 = vpop.f32.mrf.mxu0
        %v5451 = vadd.f32 %v5362, %v5450
        %v5452 = vpop.f32.mrf.mxu0
        %v5453 = vadd.f32 %v5364, %v5452
        %5454 = vmatmul.bf16.gmra.mxu0 %v4537
        %v5455 = vpop.f32.mrf.mxu0
        %v5456 = vadd.f32 %v5367, %v5455
        %v5457 = vpop.f32.mrf.mxu0
        %v5458 = vadd.f32 %v5369, %v5457
        %5459 = vmatmul.bf16.gmra.mxu0 %v4540
        %v5460 = vpop.f32.mrf.mxu0
        %v5461 = vadd.f32 %v5372, %v5460
        %v5462 = vpop.f32.mrf.mxu0
        %v5463 = vadd.f32 %v5374, %v5462
        %5464 = vmatmul.bf16.gmra.mxu0 %v4543
        %v5465 = vpop.f32.mrf.mxu0
        %v5466 = vadd.f32 %v5377, %v5465
        %v5467 = vpop.f32.mrf.mxu0
        %v5468 = vadd.f32 %v5379, %v5467
        %5469 = vmatmul.bf16.gmra.mxu0 %v4546
        %v5470 = vpop.f32.mrf.mxu0
        %v5471 = vadd.f32 %v5382, %v5470
        %v5472 = vpop.f32.mrf.mxu0
        %v5473 = vadd.f32 %v5384, %v5472
        %5474 = vmatmul.bf16.gmra.mxu0 %v4549
        %v5475 = vpop.f32.mrf.mxu0
        %v5476 = vadd.f32 %v5387, %v5475
        %v5477 = vpop.f32.mrf.mxu0
        %v5478 = vadd.f32 %v5389, %v5477
        %5479 = vmatmul.bf16.gmra.mxu0 %v4552
        %v5480 = vpop.f32.mrf.mxu0
        %v5481 = vadd.f32 %v5392, %v5480
        %v5482 = vpop.f32.mrf.mxu0
        %v5483 = vadd.f32 %v5394, %v5482
        %5484 = vmatmul.bf16.gmra.mxu0 %v4555
        %v5485 = vpop.f32.mrf.mxu0
        %v5486 = vadd.f32 %v5397, %v5485
        %v5487 = vpop.f32.mrf.mxu0
        %v5488 = vadd.f32 %v5399, %v5487
        %5489 = vmatmul.bf16.gmra.mxu0 %v4558
        %v5490 = vpop.f32.mrf.mxu0
        %v5491 = vadd.f32 %v5402, %v5490
        %v5492 = vpop.f32.mrf.mxu0
        %v5493 = vadd.f32 %v5404, %v5492
        %5494 = vmatmul.bf16.gmra.mxu0 %v4561
        %v5495 = vpop.f32.mrf.mxu0
        %v5496 = vadd.f32 %v5407, %v5495
        %v5497 = vpop.f32.mrf.mxu0
        %v5498 = vadd.f32 %v5409, %v5497
        %5499 = vmatmul.bf16.gmra.mxu0 %v4564
        %v5500 = vpop.f32.mrf.mxu0
        %v5501 = vadd.f32 %v5412, %v5500
        %v5502 = vpop.f32.mrf.mxu0
        %v5503 = vadd.f32 %v5414, %v5502
        %5504 = vmatmul.bf16.gmra.mxu0 %v4567
        %v5505 = vpop.f32.mrf.mxu0
        %v5506 = vadd.f32 %v5417, %v5505
        %v5507 = vpop.f32.mrf.mxu0
        %v5508 = vadd.f32 %v5419, %v5507
        %5509 = vmatmul.bf16.gmra.mxu0 %v4570
        %v5510 = vpop.f32.mrf.mxu0
        %v5511 = vadd.f32 %v5422, %v5510
        %v5512 = vpop.f32.mrf.mxu0
        %v5513 = vadd.f32 %v5424, %v5512
        %5514 = vmatmul.bf16.gmra.mxu0 %v4573
        %v5515 = vpop.f32.mrf.mxu0
        %v5516 = vadd.f32 %v5427, %v5515
        %v5517 = vpop.f32.mrf.mxu0
        %v5518 = vadd.f32 %v5429, %v5517
        %5519 = vdwg.mxu0
        %v5520 = vld [vmem:[%s6 + $0x180] sm:$0xf]
        %v5521 = vld [vmem:[%s6 + $0x184] sm:$0xf]
        %v5522 = vld [vmem:[%s6 + $0x188] sm:$0xf]
        %v5523 = vld [vmem:[%s6 + $0x18c] sm:$0xf]
        %v5524 = vld [vmem:[%s6 + $0x190] sm:$0xf]
        %v5525 = vld [vmem:[%s6 + $0x194] sm:$0xf]
        %v5526 = vld [vmem:[%s6 + $0x198] sm:$0xf]
        %v5527 = vld [vmem:[%s6 + $0x19c] sm:$0xf]
        %v5528 = vld [vmem:[%s6 + $0x1a0] sm:$0xf]
        %v5529 = vld [vmem:[%s6 + $0x1a4] sm:$0xf]
        %v5530 = vld [vmem:[%s6 + $0x1a8] sm:$0xf]
        %v5531 = vld [vmem:[%s6 + $0x1ac] sm:$0xf]
        %v5532 = vld [vmem:[%s6 + $0x1b0] sm:$0xf]
        %v5533 = vld [vmem:[%s6 + $0x1b4] sm:$0xf]
        %v5534 = vld [vmem:[%s6 + $0x1b8] sm:$0xf]
        %v5535 = vld [vmem:[%s6 + $0x1bc] sm:$0xf]
        %v5536 = vld [vmem:[%s6 + $0x1c0] sm:$0xf]
        %v5537 = vld [vmem:[%s6 + $0x1c4] sm:$0xf]
        %v5538 = vld [vmem:[%s6 + $0x1c8] sm:$0xf]
        %v5539 = vld [vmem:[%s6 + $0x1cc] sm:$0xf]
        %v5540 = vld [vmem:[%s6 + $0x1d0] sm:$0xf]
        %v5541 = vld [vmem:[%s6 + $0x1d4] sm:$0xf]
        %v5542 = vld [vmem:[%s6 + $0x1d8] sm:$0xf]
        %v5543 = vld [vmem:[%s6 + $0x1dc] sm:$0xf]
        %v5544 = vld [vmem:[%s6 + $0x1e0] sm:$0xf]
        %v5545 = vld [vmem:[%s6 + $0x1e4] sm:$0xf]
        %v5546 = vld [vmem:[%s6 + $0x1e8] sm:$0xf]
        %v5547 = vld [vmem:[%s6 + $0x1ec] sm:$0xf]
        %v5548 = vld [vmem:[%s6 + $0x1f0] sm:$0xf]
        %v5549 = vld [vmem:[%s6 + $0x1f4] sm:$0xf]
        %v5550 = vld [vmem:[%s6 + $0x1f8] sm:$0xf]
        %v5551 = vld [vmem:[%s6 + $0x1fc] sm:$0xf]
        %v5552 = vld [vmem:[%s6 + $0x200] sm:$0xf]
        %v5553 = vld [vmem:[%s6 + $0x204] sm:$0xf]
        %v5554 = vld [vmem:[%s6 + $0x208] sm:$0xf]
        %v5555 = vld [vmem:[%s6 + $0x20c] sm:$0xf]
        %v5556 = vld [vmem:[%s6 + $0x210] sm:$0xf]
        %v5557 = vld [vmem:[%s6 + $0x214] sm:$0xf]
        %v5558 = vld [vmem:[%s6 + $0x218] sm:$0xf]
        %v5559 = vld [vmem:[%s6 + $0x21c] sm:$0xf]
        %v5560 = vld [vmem:[%s6 + $0x220] sm:$0xf]
        %v5561 = vld [vmem:[%s6 + $0x224] sm:$0xf]
        %v5562 = vld [vmem:[%s6 + $0x228] sm:$0xf]
        %v5563 = vld [vmem:[%s6 + $0x22c] sm:$0xf]
        %v5564 = vld [vmem:[%s6 + $0x230] sm:$0xf]
        %v5565 = vld [vmem:[%s6 + $0x234] sm:$0xf]
        %v5566 = vld [vmem:[%s6 + $0x238] sm:$0xf]
        %v5567 = vld [vmem:[%s6 + $0x23c] sm:$0xf]
        %v5616 = vunpack.c.l.b16 %v5520
        %v5617 = vunpack.c.l.b16 %v5521
        %v5618 = vunpack.c.l.b16 %v5522
        %v5619 = vunpack.c.l.b16 %v5523
        %v5620 = vunpack.c.l.b16 %v5524
        %v5621 = vunpack.c.l.b16 %v5525
        %v5622 = vunpack.c.l.b16 %v5526
        %v5623 = vunpack.c.l.b16 %v5527
        %v5624 = vunpack.c.l.b16 %v5528
        %v5625 = vunpack.c.l.b16 %v5529
        %v5626 = vunpack.c.l.b16 %v5530
        %v5627 = vunpack.c.l.b16 %v5531
        %v5628 = vunpack.c.l.b16 %v5532
        %v5629 = vunpack.c.l.b16 %v5533
        %v5630 = vunpack.c.l.b16 %v5534
        %v5631 = vunpack.c.l.b16 %v5535
        %v5632 = vunpack.c.l.b16 %v5536
        %v5633 = vunpack.c.l.b16 %v5537
        %v5634 = vunpack.c.l.b16 %v5538
        %v5635 = vunpack.c.l.b16 %v5539
        %v5636 = vunpack.c.l.b16 %v5540
        %v5637 = vunpack.c.l.b16 %v5541
        %v5638 = vunpack.c.l.b16 %v5542
        %v5639 = vunpack.c.l.b16 %v5543
        %v5640 = vunpack.c.l.b16 %v5544
        %v5641 = vunpack.c.l.b16 %v5545
        %v5642 = vunpack.c.l.b16 %v5546
        %v5643 = vunpack.c.l.b16 %v5547
        %v5644 = vunpack.c.l.b16 %v5548
        %v5645 = vunpack.c.l.b16 %v5549
        %v5646 = vunpack.c.l.b16 %v5550
        %v5647 = vunpack.c.l.b16 %v5551
        %v5648 = vunpack.c.l.b16 %v5552
        %v5649 = vunpack.c.l.b16 %v5553
        %v5650 = vunpack.c.l.b16 %v5554
        %v5651 = vunpack.c.l.b16 %v5555
        %v5652 = vunpack.c.l.b16 %v5556
        %v5653 = vunpack.c.l.b16 %v5557
        %v5654 = vunpack.c.l.b16 %v5558
        %v5655 = vunpack.c.l.b16 %v5559
        %v5656 = vunpack.c.l.b16 %v5560
        %v5657 = vunpack.c.l.b16 %v5561
        %v5658 = vunpack.c.l.b16 %v5562
        %v5659 = vunpack.c.l.b16 %v5563
        %v5660 = vunpack.c.l.b16 %v5564
        %v5661 = vunpack.c.l.b16 %v5565
        %v5662 = vunpack.c.l.b16 %v5566
        %v5663 = vunpack.c.l.b16 %v5567
        %v5664 = vpack.c.b16 %v5617, %v5616
        %v5665 = vpack.c.b16 %v5619, %v5618
        %v5666 = vpack.c.b16 %v5621, %v5620
        %v5667 = vpack.c.b16 %v5623, %v5622
        %v5668 = vpack.c.b16 %v5625, %v5624
        %v5669 = vpack.c.b16 %v5627, %v5626
        %v5670 = vpack.c.b16 %v5629, %v5628
        %v5671 = vpack.c.b16 %v5631, %v5630
        %v5672 = vpack.c.b16 %v5633, %v5632
        %v5673 = vpack.c.b16 %v5635, %v5634
        %v5674 = vpack.c.b16 %v5637, %v5636
        %v5675 = vpack.c.b16 %v5639, %v5638
        %v5676 = vpack.c.b16 %v5641, %v5640
        %v5677 = vpack.c.b16 %v5643, %v5642
        %v5678 = vpack.c.b16 %v5645, %v5644
        %v5679 = vpack.c.b16 %v5647, %v5646
        %v5680 = vpack.c.b16 %v5649, %v5648
        %v5681 = vpack.c.b16 %v5651, %v5650
        %v5682 = vpack.c.b16 %v5653, %v5652
        %v5683 = vpack.c.b16 %v5655, %v5654
        %v5684 = vpack.c.b16 %v5657, %v5656
        %v5685 = vpack.c.b16 %v5659, %v5658
        %v5686 = vpack.c.b16 %v5661, %v5660
        %v5687 = vpack.c.b16 %v5663, %v5662
        %5712 = vmatpush.bf16.msra.mxu0 %v5671
        %5713 = vmatpush.bf16.msra.mxu0 %v5670
        %5714 = vmatpush.bf16.msra.mxu0 %v5669
        %5715 = vmatpush.bf16.msra.mxu0 %v5668
        %5716 = vmatpush.bf16.msra.mxu0 %v5667
        %5717 = vmatpush.bf16.msra.mxu0 %v5666
        %5718 = vmatpush.bf16.msra.mxu0 %v5665
        %5719 = vmatpush.bf16.msra.mxu0 %v5664
        %5720 = vmatmul.bf16.gmra.mxu0 %v4409
        %v5721 = vpop.f32.mrf.mxu0
        %v5722 = vadd.f32 0.0, %v5721
        %v5723 = vpop.f32.mrf.mxu0
        %v5724 = vadd.f32 0.0, %v5723
        %5725 = vmatmul.bf16.gmra.mxu0 %v4417
        %v5726 = vpop.f32.mrf.mxu0
        %v5727 = vadd.f32 0.0, %v5726
        %v5728 = vpop.f32.mrf.mxu0
        %v5729 = vadd.f32 0.0, %v5728
        %5730 = vmatmul.bf16.gmra.mxu0 %v4425
        %v5731 = vpop.f32.mrf.mxu0
        %v5732 = vadd.f32 0.0, %v5731
        %v5733 = vpop.f32.mrf.mxu0
        %v5734 = vadd.f32 0.0, %v5733
        %5735 = vmatmul.bf16.gmra.mxu0 %v4433
        %v5736 = vpop.f32.mrf.mxu0
        %v5737 = vadd.f32 0.0, %v5736
        %v5738 = vpop.f32.mrf.mxu0
        %v5739 = vadd.f32 0.0, %v5738
        %5740 = vmatmul.bf16.gmra.mxu0 %v4441
        %v5741 = vpop.f32.mrf.mxu0
        %v5742 = vadd.f32 0.0, %v5741
        %v5743 = vpop.f32.mrf.mxu0
        %v5744 = vadd.f32 0.0, %v5743
        %5745 = vmatmul.bf16.gmra.mxu0 %v4449
        %v5746 = vpop.f32.mrf.mxu0
        %v5747 = vadd.f32 0.0, %v5746
        %v5748 = vpop.f32.mrf.mxu0
        %v5749 = vadd.f32 0.0, %v5748
        %5750 = vmatmul.bf16.gmra.mxu0 %v4457
        %v5751 = vpop.f32.mrf.mxu0
        %v5752 = vadd.f32 0.0, %v5751
        %v5753 = vpop.f32.mrf.mxu0
        %v5754 = vadd.f32 0.0, %v5753
        %5755 = vmatmul.bf16.gmra.mxu0 %v4465
        %v5756 = vpop.f32.mrf.mxu0
        %v5757 = vadd.f32 0.0, %v5756
        %v5758 = vpop.f32.mrf.mxu0
        %v5759 = vadd.f32 0.0, %v5758
        %5760 = vmatmul.bf16.gmra.mxu0 %v4473
        %v5761 = vpop.f32.mrf.mxu0
        %v5762 = vadd.f32 0.0, %v5761
        %v5763 = vpop.f32.mrf.mxu0
        %v5764 = vadd.f32 0.0, %v5763
        %5765 = vmatmul.bf16.gmra.mxu0 %v4481
        %v5766 = vpop.f32.mrf.mxu0
        %v5767 = vadd.f32 0.0, %v5766
        %v5768 = vpop.f32.mrf.mxu0
        %v5769 = vadd.f32 0.0, %v5768
        %5770 = vmatmul.bf16.gmra.mxu0 %v4489
        %v5771 = vpop.f32.mrf.mxu0
        %v5772 = vadd.f32 0.0, %v5771
        %v5773 = vpop.f32.mrf.mxu0
        %v5774 = vadd.f32 0.0, %v5773
        %5775 = vmatmul.bf16.gmra.mxu0 %v4497
        %v5776 = vpop.f32.mrf.mxu0
        %v5777 = vadd.f32 0.0, %v5776
        %v5778 = vpop.f32.mrf.mxu0
        %v5779 = vadd.f32 0.0, %v5778
        %5780 = vmatmul.bf16.gmra.mxu0 %v4505
        %v5781 = vpop.f32.mrf.mxu0
        %v5782 = vadd.f32 0.0, %v5781
        %v5783 = vpop.f32.mrf.mxu0
        %v5784 = vadd.f32 0.0, %v5783
        %5785 = vmatmul.bf16.gmra.mxu0 %v4513
        %v5786 = vpop.f32.mrf.mxu0
        %v5787 = vadd.f32 0.0, %v5786
        %v5788 = vpop.f32.mrf.mxu0
        %v5789 = vadd.f32 0.0, %v5788
        %5790 = vmatmul.bf16.gmra.mxu0 %v4644
        %v5791 = vpop.f32.mrf.mxu0
        %v5792 = vadd.f32 0.0, %v5791
        %v5793 = vpop.f32.mrf.mxu0
        %v5794 = vadd.f32 0.0, %v5793
        %5795 = vmatmul.bf16.gmra.mxu0 %v569
        %v5796 = vpop.f32.mrf.mxu0
        %v5797 = vadd.f32 0.0, %v5796
        %v5798 = vpop.f32.mrf.mxu0
        %v5799 = vadd.f32 0.0, %v5798
        %5800 = vdwg.mxu0
        %5801 = vmatpush.bf16.msra.mxu0 %v5679
        %5802 = vmatpush.bf16.msra.mxu0 %v5678
        %5803 = vmatpush.bf16.msra.mxu0 %v5677
        %5804 = vmatpush.bf16.msra.mxu0 %v5676
        %5805 = vmatpush.bf16.msra.mxu0 %v5675
        %5806 = vmatpush.bf16.msra.mxu0 %v5674
        %5807 = vmatpush.bf16.msra.mxu0 %v5673
        %5808 = vmatpush.bf16.msra.mxu0 %v5672
        %5809 = vmatmul.bf16.gmra.mxu0 %v4363
        %v5810 = vpop.f32.mrf.mxu0
        %v5811 = vadd.f32 %v5722, %v5810
        %v5812 = vpop.f32.mrf.mxu0
        %v5813 = vadd.f32 %v5724, %v5812
        %5814 = vmatmul.bf16.gmra.mxu0 %v4364
        %v5815 = vpop.f32.mrf.mxu0
        %v5816 = vadd.f32 %v5727, %v5815
        %v5817 = vpop.f32.mrf.mxu0
        %v5818 = vadd.f32 %v5729, %v5817
        %5819 = vmatmul.bf16.gmra.mxu0 %v4365
        %v5820 = vpop.f32.mrf.mxu0
        %v5821 = vadd.f32 %v5732, %v5820
        %v5822 = vpop.f32.mrf.mxu0
        %v5823 = vadd.f32 %v5734, %v5822
        %5824 = vmatmul.bf16.gmra.mxu0 %v4366
        %v5825 = vpop.f32.mrf.mxu0
        %v5826 = vadd.f32 %v5737, %v5825
        %v5827 = vpop.f32.mrf.mxu0
        %v5828 = vadd.f32 %v5739, %v5827
        %5829 = vmatmul.bf16.gmra.mxu0 %v4367
        %v5830 = vpop.f32.mrf.mxu0
        %v5831 = vadd.f32 %v5742, %v5830
        %v5832 = vpop.f32.mrf.mxu0
        %v5833 = vadd.f32 %v5744, %v5832
        %5834 = vmatmul.bf16.gmra.mxu0 %v4368
        %v5835 = vpop.f32.mrf.mxu0
        %v5836 = vadd.f32 %v5747, %v5835
        %v5837 = vpop.f32.mrf.mxu0
        %v5838 = vadd.f32 %v5749, %v5837
        %5839 = vmatmul.bf16.gmra.mxu0 %v4369
        %v5840 = vpop.f32.mrf.mxu0
        %v5841 = vadd.f32 %v5752, %v5840
        %v5842 = vpop.f32.mrf.mxu0
        %v5843 = vadd.f32 %v5754, %v5842
        %5844 = vmatmul.bf16.gmra.mxu0 %v4370
        %v5845 = vpop.f32.mrf.mxu0
        %v5846 = vadd.f32 %v5757, %v5845
        %v5847 = vpop.f32.mrf.mxu0
        %v5848 = vadd.f32 %v5759, %v5847
        %5849 = vmatmul.bf16.gmra.mxu0 %v4371
        %v5850 = vpop.f32.mrf.mxu0
        %v5851 = vadd.f32 %v5762, %v5850
        %v5852 = vpop.f32.mrf.mxu0
        %v5853 = vadd.f32 %v5764, %v5852
        %5854 = vmatmul.bf16.gmra.mxu0 %v4372
        %v5855 = vpop.f32.mrf.mxu0
        %v5856 = vadd.f32 %v5767, %v5855
        %v5857 = vpop.f32.mrf.mxu0
        %v5858 = vadd.f32 %v5769, %v5857
        %5859 = vmatmul.bf16.gmra.mxu0 %v4373
        %v5860 = vpop.f32.mrf.mxu0
        %v5861 = vadd.f32 %v5772, %v5860
        %v5862 = vpop.f32.mrf.mxu0
        %v5863 = vadd.f32 %v5774, %v5862
        %5864 = vmatmul.bf16.gmra.mxu0 %v4374
        %v5865 = vpop.f32.mrf.mxu0
        %v5866 = vadd.f32 %v5777, %v5865
        %v5867 = vpop.f32.mrf.mxu0
        %v5868 = vadd.f32 %v5779, %v5867
        %5869 = vmatmul.bf16.gmra.mxu0 %v4375
        %v5870 = vpop.f32.mrf.mxu0
        %v5871 = vadd.f32 %v5782, %v5870
        %v5872 = vpop.f32.mrf.mxu0
        %v5873 = vadd.f32 %v5784, %v5872
        %5874 = vmatmul.bf16.gmra.mxu0 %v4376
        %v5875 = vpop.f32.mrf.mxu0
        %v5876 = vadd.f32 %v5787, %v5875
        %v5877 = vpop.f32.mrf.mxu0
        %v5878 = vadd.f32 %v5789, %v5877
        %5879 = vmatmul.bf16.gmra.mxu0 %v4377
        %v5880 = vpop.f32.mrf.mxu0
        %v5881 = vadd.f32 %v5792, %v5880
        %v5882 = vpop.f32.mrf.mxu0
        %v5883 = vadd.f32 %v5794, %v5882
        %5884 = vmatmul.bf16.gmra.mxu0 0
        %v5885 = vpop.f32.mrf.mxu0
        %v5886 = vadd.f32 %v5797, %v5885
        %v5887 = vpop.f32.mrf.mxu0
        %v5888 = vadd.f32 %v5799, %v5887
        %5889 = vdwg.mxu0
        %5890 = vmatpush.bf16.msra.mxu0 %v5687
        %5891 = vmatpush.bf16.msra.mxu0 %v5686
        %5892 = vmatpush.bf16.msra.mxu0 %v5685
        %5893 = vmatpush.bf16.msra.mxu0 %v5684
        %5894 = vmatpush.bf16.msra.mxu0 %v5683
        %5895 = vmatpush.bf16.msra.mxu0 %v5682
        %5896 = vmatpush.bf16.msra.mxu0 %v5681
        %5897 = vmatpush.bf16.msra.mxu0 %v5680
        %5898 = vmatmul.bf16.gmra.mxu0 %v4534
        %v5899 = vpop.f32.mrf.mxu0
        %v5900 = vadd.f32 %v5811, %v5899
        %v5901 = vpop.f32.mrf.mxu0
        %v5902 = vadd.f32 %v5813, %v5901
        %5903 = vmatmul.bf16.gmra.mxu0 %v4537
        %v5904 = vpop.f32.mrf.mxu0
        %v5905 = vadd.f32 %v5816, %v5904
        %v5906 = vpop.f32.mrf.mxu0
        %v5907 = vadd.f32 %v5818, %v5906
        %5908 = vmatmul.bf16.gmra.mxu0 %v4540
        %v5909 = vpop.f32.mrf.mxu0
        %v5910 = vadd.f32 %v5821, %v5909
        %v5911 = vpop.f32.mrf.mxu0
        %v5912 = vadd.f32 %v5823, %v5911
        %5913 = vmatmul.bf16.gmra.mxu0 %v4543
        %v5914 = vpop.f32.mrf.mxu0
        %v5915 = vadd.f32 %v5826, %v5914
        %v5916 = vpop.f32.mrf.mxu0
        %v5917 = vadd.f32 %v5828, %v5916
        %5918 = vmatmul.bf16.gmra.mxu0 %v4546
        %v5919 = vpop.f32.mrf.mxu0
        %v5920 = vadd.f32 %v5831, %v5919
        %v5921 = vpop.f32.mrf.mxu0
        %v5922 = vadd.f32 %v5833, %v5921
        %5923 = vmatmul.bf16.gmra.mxu0 %v4549
        %v5924 = vpop.f32.mrf.mxu0
        %v5925 = vadd.f32 %v5836, %v5924
        %v5926 = vpop.f32.mrf.mxu0
        %v5927 = vadd.f32 %v5838, %v5926
        %5928 = vmatmul.bf16.gmra.mxu0 %v4552
        %v5929 = vpop.f32.mrf.mxu0
        %v5930 = vadd.f32 %v5841, %v5929
        %v5931 = vpop.f32.mrf.mxu0
        %v5932 = vadd.f32 %v5843, %v5931
        %5933 = vmatmul.bf16.gmra.mxu0 %v4555
        %v5934 = vpop.f32.mrf.mxu0
        %v5935 = vadd.f32 %v5846, %v5934
        %v5936 = vpop.f32.mrf.mxu0
        %v5937 = vadd.f32 %v5848, %v5936
        %5938 = vmatmul.bf16.gmra.mxu0 %v4558
        %v5939 = vpop.f32.mrf.mxu0
        %v5940 = vadd.f32 %v5851, %v5939
        %v5941 = vpop.f32.mrf.mxu0
        %v5942 = vadd.f32 %v5853, %v5941
        %5943 = vmatmul.bf16.gmra.mxu0 %v4561
        %v5944 = vpop.f32.mrf.mxu0
        %v5945 = vadd.f32 %v5856, %v5944
        %v5946 = vpop.f32.mrf.mxu0
        %v5947 = vadd.f32 %v5858, %v5946
        %5948 = vmatmul.bf16.gmra.mxu0 %v4564
        %v5949 = vpop.f32.mrf.mxu0
        %v5950 = vadd.f32 %v5861, %v5949
        %v5951 = vpop.f32.mrf.mxu0
        %v5952 = vadd.f32 %v5863, %v5951
        %5953 = vmatmul.bf16.gmra.mxu0 %v4567
        %v5954 = vpop.f32.mrf.mxu0
        %v5955 = vadd.f32 %v5866, %v5954
        %v5956 = vpop.f32.mrf.mxu0
        %v5957 = vadd.f32 %v5868, %v5956
        %5958 = vmatmul.bf16.gmra.mxu0 %v4570
        %v5959 = vpop.f32.mrf.mxu0
        %v5960 = vadd.f32 %v5871, %v5959
        %v5961 = vpop.f32.mrf.mxu0
        %v5962 = vadd.f32 %v5873, %v5961
        %5963 = vmatmul.bf16.gmra.mxu0 %v4573
        %v5964 = vpop.f32.mrf.mxu0
        %v5965 = vadd.f32 %v5876, %v5964
        %v5966 = vpop.f32.mrf.mxu0
        %v5967 = vadd.f32 %v5878, %v5966
        %5968 = vmatmul.bf16.gmra.mxu0 %v4648
        %v5969 = vpop.f32.mrf.mxu0
        %v5970 = vadd.f32 %v5881, %v5969
        %v5971 = vpop.f32.mrf.mxu0
        %v5972 = vadd.f32 %v5883, %v5971
        %5973 = vmatmul.bf16.gmra.mxu0 %v709
        %v5974 = vpop.f32.mrf.mxu0
        %v5975 = vadd.f32 %v5886, %v5974
        %v5976 = vpop.f32.mrf.mxu0
        %v5977 = vadd.f32 %v5888, %v5976
        %5978 = vdwg.mxu0
        %v5979 = vadd.f32 %v5441, %v5900
        %v5980 = vadd.f32 %v5443, %v5902
        %v5981 = vadd.f32 %v5446, %v5905
        %v5982 = vadd.f32 %v5448, %v5907
        %v5983 = vadd.f32 %v5451, %v5910
        %v5984 = vadd.f32 %v5453, %v5912
        %v5985 = vadd.f32 %v5456, %v5915
        %v5986 = vadd.f32 %v5458, %v5917
        %v5987 = vadd.f32 %v5461, %v5920
        %v5988 = vadd.f32 %v5463, %v5922
        %v5989 = vadd.f32 %v5466, %v5925
        %v5990 = vadd.f32 %v5468, %v5927
        %v5991 = vadd.f32 %v5471, %v5930
        %v5992 = vadd.f32 %v5473, %v5932
        %v5993 = vadd.f32 %v5476, %v5935
        %v5994 = vadd.f32 %v5478, %v5937
        %v5995 = vadd.f32 %v5481, %v5940
        %v5996 = vadd.f32 %v5483, %v5942
        %v5997 = vadd.f32 %v5486, %v5945
        %v5998 = vadd.f32 %v5488, %v5947
        %v5999 = vadd.f32 %v5491, %v5950
        %v6000 = vadd.f32 %v5493, %v5952
        %v6001 = vadd.f32 %v5496, %v5955
        %v6002 = vadd.f32 %v5498, %v5957
        %v6003 = vadd.f32 %v5501, %v5960
        %v6004 = vadd.f32 %v5503, %v5962
        %v6005 = vadd.f32 %v5506, %v5965
        %v6006 = vadd.f32 %v5508, %v5967
        %v6007 = vadd.f32 %v5511, %v5970
        %v6008 = vadd.f32 %v5513, %v5972
        %v6009 = vadd.f32 %v5516, %v5975
        %v6010 = vadd.f32 %v5518, %v5977
        %v6011 = vld [vmem:[%s7] sm:$0x1]
        %v6013 = vperm.slane %v6011, 0
        %v6015 = vadd.f32 %v5979, %v6013
        %v6016 = vadd.f32 %v5980, %v6013
        %v6017 = vadd.f32 %v5981, %v6013
        %v6018 = vadd.f32 %v5982, %v6013
        %v6019 = vadd.f32 %v5983, %v6013
        %v6020 = vadd.f32 %v5984, %v6013
        %v6021 = vadd.f32 %v5985, %v6013
        %v6022 = vadd.f32 %v5986, %v6013
        %v6023 = vadd.f32 %v5987, %v6013
        %v6024 = vadd.f32 %v5988, %v6013
        %v6025 = vadd.f32 %v5989, %v6013
        %v6026 = vadd.f32 %v5990, %v6013
        %v6027 = vadd.f32 %v5991, %v6013
        %v6028 = vadd.f32 %v5992, %v6013
        %v6029 = vadd.f32 %v5993, %v6013
        %v6030 = vadd.f32 %v5994, %v6013
        %v6031 = vadd.f32 %v5995, %v6013
        %v6032 = vadd.f32 %v5996, %v6013
        %v6033 = vadd.f32 %v5997, %v6013
        %v6034 = vadd.f32 %v5998, %v6013
        %v6035 = vadd.f32 %v5999, %v6013
        %v6036 = vadd.f32 %v6000, %v6013
        %v6037 = vadd.f32 %v6001, %v6013
        %v6038 = vadd.f32 %v6002, %v6013
        %v6039 = vadd.f32 %v6003, %v6013
        %v6040 = vadd.f32 %v6004, %v6013
        %v6041 = vadd.f32 %v6005, %v6013
        %v6042 = vadd.f32 %v6006, %v6013
        %v6043 = vadd.f32 %v6007, %v6013
        %v6044 = vadd.f32 %v6008, %v6013
        %v6045 = vadd.f32 %v6009, %v6013
        %v6046 = vadd.f32 %v6010, %v6013
        %v6047 = vadd.f32 %v2261, %v6015
        %v6048 = vadd.f32 %v2262, %v6016
        %v6049 = vadd.f32 %v2263, %v6017
        %v6050 = vadd.f32 %v2264, %v6018
        %v6051 = vadd.f32 %v2265, %v6019
        %v6052 = vadd.f32 %v2266, %v6020
        %v6053 = vadd.f32 %v2267, %v6021
        %v6054 = vadd.f32 %v2268, %v6022
        %v6055 = vadd.f32 %v2269, %v6023
        %v6056 = vadd.f32 %v2270, %v6024
        %v6057 = vadd.f32 %v2271, %v6025
        %v6058 = vadd.f32 %v2272, %v6026
        %v6059 = vadd.f32 %v2273, %v6027
        %v6060 = vadd.f32 %v2274, %v6028
        %v6061 = vadd.f32 %v2275, %v6029
        %v6062 = vadd.f32 %v2276, %v6030
        %v6063 = vadd.f32 %v2277, %v6031
        %v6064 = vadd.f32 %v2278, %v6032
        %v6065 = vadd.f32 %v2279, %v6033
        %v6066 = vadd.f32 %v2280, %v6034
        %v6067 = vadd.f32 %v2281, %v6035
        %v6068 = vadd.f32 %v2282, %v6036
        %v6069 = vadd.f32 %v2283, %v6037
        %v6070 = vadd.f32 %v2284, %v6038
        %v6071 = vadd.f32 %v2285, %v6039
        %v6072 = vadd.f32 %v2286, %v6040
        %v6073 = vadd.f32 %v2287, %v6041
        %v6074 = vadd.f32 %v2288, %v6042
        %v6075 = vadd.f32 %v2289, %v6043
        %v6076 = vadd.f32 %v2290, %v6044
        %v6077 = vadd.f32 %v2291, %v6045
        %v6078 = vadd.f32 %v2292, %v6046
        %v6079 = vld [vmem:[%s431] sm:$0xff]
        %v6080 = vld [vmem:[%s431 + $0x8] sm:$0xff]
        %v6081 = vld [vmem:[%s431 + $0x10] sm:$0xff]
        %v6082 = vld [vmem:[%s431 + $0x18] sm:$0xff]
        %v6083 = vld [vmem:[%s431 + $0x20] sm:$0xff]
        %v6084 = vld [vmem:[%s431 + $0x28] sm:$0xff]
        %v6085 = vld [vmem:[%s431 + $0x30] sm:$0xff]
        %v6086 = vld [vmem:[%s431 + $0x38] sm:$0xff]
        %v6087 = vmul.f32 %v6079, 0.75
        %v6088 = vmul.f32 %v6080, 0.75
        %v6089 = vmul.f32 %v6081, 0.75
        %v6090 = vmul.f32 %v6082, 0.75
        %v6091 = vmul.f32 %v6083, 0.75
        %v6092 = vmul.f32 %v6084, 0.75
        %v6093 = vmul.f32 %v6085, 0.75
        %v6094 = vmul.f32 %v6086, 0.75
        %v6095 = vmul.f32 %v6079, 0.25
        %v6096 = vmul.f32 %v6080, 0.25
        %v6097 = vmul.f32 %v6081, 0.25
        %v6098 = vmul.f32 %v6082, 0.25
        %v6099 = vmul.f32 %v6083, 0.25
        %v6100 = vmul.f32 %v6084, 0.25
        %v6101 = vmul.f32 %v6085, 0.25
        %v6102 = vadd.f32 %v6087, %v6095
        %v6103 = vadd.f32 %v6088, %v6095
        %v6104 = vadd.f32 %v6089, %v6096
        %v6105 = vadd.f32 %v6090, %v6097
        %v6106 = vadd.f32 %v6091, %v6098
        %v6107 = vadd.f32 %v6092, %v6099
        %v6108 = vadd.f32 %v6093, %v6100
        %v6109 = vadd.f32 %v6094, %v6101
        %v6110 = vmul.f32 %v6086, 0.25
        %v6111 = vadd.f32 %v6087, %v6096
        %v6112 = vadd.f32 %v6088, %v6097
        %v6113 = vadd.f32 %v6089, %v6098
        %v6114 = vadd.f32 %v6090, %v6099
        %v6115 = vadd.f32 %v6091, %v6100
        %v6116 = vadd.f32 %v6092, %v6101
        %v6117 = vadd.f32 %v6093, %v6110
        %v6118 = vadd.f32 %v6094, %v6110
        %v6135 = vrot.slane %v6102, 7
        %v6136 = vrot.slane %v6111, 7
        %v6137 = vrot.slane %v6103, 7
        %v6138 = vrot.slane %v6112, 7
        %v6139 = vrot.slane %v6104, 7
        %v6140 = vrot.slane %v6113, 7
        %v6141 = vrot.slane %v6105, 7
        %v6142 = vrot.slane %v6114, 7
        %v6143 = vrot.slane %v6106, 7
        %v6144 = vrot.slane %v6115, 7
        %v6145 = vrot.slane %v6107, 7
        %v6146 = vrot.slane %v6116, 7
        %v6147 = vrot.slane %v6108, 7
        %v6148 = vrot.slane %v6117, 7
        %v6149 = vrot.slane %v6109, 7
        %v6150 = vrot.slane %v6118, 7
        %vm6167 = vcmask 1040384
        %v6168 = vsel %vm6167, %v6102, %v6135
        %v6169 = vsel %vm6167, %v6111, %v6136
        %v6170 = vsel %vm6167, %v6103, %v6137
        %v6171 = vsel %vm6167, %v6112, %v6138
        %v6172 = vsel %vm6167, %v6104, %v6139
        %v6173 = vsel %vm6167, %v6113, %v6140
        %v6174 = vsel %vm6167, %v6105, %v6141
        %v6175 = vsel %vm6167, %v6114, %v6142
        %v6176 = vsel %vm6167, %v6106, %v6143
        %v6177 = vsel %vm6167, %v6115, %v6144
        %v6178 = vsel %vm6167, %v6107, %v6145
        %v6179 = vsel %vm6167, %v6116, %v6146
        %v6180 = vsel %vm6167, %v6108, %v6147
        %v6181 = vsel %vm6167, %v6117, %v6148
        %v6182 = vsel %vm6167, %v6109, %v6149
        %v6183 = vsel %vm6167, %v6118, %v6150
        %v6184 = vrot.slane %v6102, 1
        %v6185 = vrot.slane %v6111, 1
        %v6186 = vrot.slane %v6103, 1
        %v6187 = vrot.slane %v6112, 1
        %v6188 = vrot.slane %v6104, 1
        %v6189 = vrot.slane %v6113, 1
        %v6190 = vrot.slane %v6105, 1
        %v6191 = vrot.slane %v6114, 1
        %v6192 = vrot.slane %v6106, 1
        %v6193 = vrot.slane %v6115, 1
        %v6194 = vrot.slane %v6107, 1
        %v6195 = vrot.slane %v6116, 1
        %v6196 = vrot.slane %v6108, 1
        %v6197 = vrot.slane %v6117, 1
        %v6198 = vrot.slane %v6109, 1
        %v6199 = vrot.slane %v6118, 1
        %vm6216 = vcmask 1046528
        %v6217 = vsel %vm6216, %v6184, %v6102
        %v6218 = vsel %vm6216, %v6185, %v6111
        %v6219 = vsel %vm6216, %v6186, %v6103
        %v6220 = vsel %vm6216, %v6187, %v6112
        %v6221 = vsel %vm6216, %v6188, %v6104
        %v6222 = vsel %vm6216, %v6189, %v6113
        %v6223 = vsel %vm6216, %v6190, %v6105
        %v6224 = vsel %vm6216, %v6191, %v6114
        %v6225 = vsel %vm6216, %v6192, %v6106
        %v6226 = vsel %vm6216, %v6193, %v6115
        %v6227 = vsel %vm6216, %v6194, %v6107
        %v6228 = vsel %vm6216, %v6195, %v6116
        %v6229 = vsel %vm6216, %v6196, %v6108
        %v6230 = vsel %vm6216, %v6197, %v6117
        %v6231 = vsel %vm6216, %v6198, %v6109
        %v6232 = vsel %vm6216, %v6199, %v6118
        %v6233 = vmul.f32 %v6102, 0.75
        %v6234 = vmul.f32 %v6111, 0.75
        %v6235 = vmul.f32 %v6103, 0.75
        %v6236 = vmul.f32 %v6112, 0.75
        %v6237 = vmul.f32 %v6104, 0.75
        %v6238 = vmul.f32 %v6113, 0.75
        %v6239 = vmul.f32 %v6105, 0.75
        %v6240 = vmul.f32 %v6114, 0.75
        %v6241 = vmul.f32 %v6106, 0.75
        %v6242 = vmul.f32 %v6115, 0.75
        %v6243 = vmul.f32 %v6107, 0.75
        %v6244 = vmul.f32 %v6116, 0.75
        %v6245 = vmul.f32 %v6108, 0.75
        %v6246 = vmul.f32 %v6117, 0.75
        %v6247 = vmul.f32 %v6109, 0.75
        %v6248 = vmul.f32 %v6118, 0.75
        %v6249 = vmul.f32 %v6168, 0.25
        %v6250 = vmul.f32 %v6169, 0.25
        %v6251 = vmul.f32 %v6170, 0.25
        %v6252 = vmul.f32 %v6171, 0.25
        %v6253 = vmul.f32 %v6172, 0.25
        %v6254 = vmul.f32 %v6173, 0.25
        %v6255 = vmul.f32 %v6174, 0.25
        %v6256 = vmul.f32 %v6175, 0.25
        %v6257 = vmul.f32 %v6176, 0.25
        %v6258 = vmul.f32 %v6177, 0.25
        %v6259 = vmul.f32 %v6178, 0.25
        %v6260 = vmul.f32 %v6179, 0.25
        %v6261 = vmul.f32 %v6180, 0.25
        %v6262 = vmul.f32 %v6181, 0.25
        %v6263 = vmul.f32 %v6182, 0.25
        %v6264 = vmul.f32 %v6183, 0.25
        %v6265 = vadd.f32 %v6233, %v6249
        %v6266 = vadd.f32 %v6234, %v6250
        %v6267 = vadd.f32 %v6235, %v6251
        %v6268 = vadd.f32 %v6236, %v6252
        %v6269 = vadd.f32 %v6237, %v6253
        %v6270 = vadd.f32 %v6238, %v6254
        %v6271 = vadd.f32 %v6239, %v6255
        %v6272 = vadd.f32 %v6240, %v6256
        %v6273 = vadd.f32 %v6241, %v6257
        %v6274 = vadd.f32 %v6242, %v6258
        %v6275 = vadd.f32 %v6243, %v6259
        %v6276 = vadd.f32 %v6244, %v6260
        %v6277 = vadd.f32 %v6245, %v6261
        %v6278 = vadd.f32 %v6246, %v6262
        %v6279 = vadd.f32 %v6247, %v6263
        %v6280 = vadd.f32 %v6248, %v6264
        %v6281 = vmul.f32 %v6217, 0.25
        %v6282 = vmul.f32 %v6218, 0.25
        %v6283 = vmul.f32 %v6219, 0.25
        %v6284 = vmul.f32 %v6220, 0.25
        %v6285 = vmul.f32 %v6221, 0.25
        %v6286 = vmul.f32 %v6222, 0.25
        %v6287 = vmul.f32 %v6223, 0.25
        %v6288 = vmul.f32 %v6224, 0.25
        %v6289 = vmul.f32 %v6225, 0.25
        %v6290 = vmul.f32 %v6226, 0.25
        %v6291 = vmul.f32 %v6227, 0.25
        %v6292 = vmul.f32 %v6228, 0.25
        %v6293 = vmul.f32 %v6229, 0.25
        %v6294 = vmul.f32 %v6230, 0.25
        %v6295 = vmul.f32 %v6231, 0.25
        %v6296 = vmul.f32 %v6232, 0.25
        %v6297 = vadd.f32 %v6233, %v6281
        %v6298 = vadd.f32 %v6234, %v6282
        %v6299 = vadd.f32 %v6235, %v6283
        %v6300 = vadd.f32 %v6236, %v6284
        %v6301 = vadd.f32 %v6237, %v6285
        %v6302 = vadd.f32 %v6238, %v6286
        %v6303 = vadd.f32 %v6239, %v6287
        %v6304 = vadd.f32 %v6240, %v6288
        %v6305 = vadd.f32 %v6241, %v6289
        %v6306 = vadd.f32 %v6242, %v6290
        %v6307 = vadd.f32 %v6243, %v6291
        %v6308 = vadd.f32 %v6244, %v6292
        %v6309 = vadd.f32 %v6245, %v6293
        %v6310 = vadd.f32 %v6246, %v6294
        %v6311 = vadd.f32 %v6247, %v6295
        %v6312 = vadd.f32 %v6248, %v6296
        %v6329 = vrot.slane %v6265, 1
        %v6330 = vrot.slane %v6265, 2
        %v6331 = vrot.slane %v6265, 3
        %v6332 = vrot.slane %v6265, 4
        %v6333 = vrot.slane %v6265, 5
        %v6334 = vrot.slane %v6265, 6
        %v6335 = vrot.slane %v6265, 7
        %v6336 = vrot.slane %v6266, 1
        %v6337 = vrot.slane %v6266, 2
        %v6338 = vrot.slane %v6266, 3
        %v6339 = vrot.slane %v6266, 4
        %v6340 = vrot.slane %v6266, 5
        %v6341 = vrot.slane %v6266, 6
        %v6342 = vrot.slane %v6266, 7
        %v6343 = vrot.slane %v6267, 1
        %v6344 = vrot.slane %v6267, 2
        %v6345 = vrot.slane %v6267, 3
        %v6346 = vrot.slane %v6267, 4
        %v6347 = vrot.slane %v6267, 5
        %v6348 = vrot.slane %v6267, 6
        %v6349 = vrot.slane %v6267, 7
        %v6350 = vrot.slane %v6268, 1
        %v6351 = vrot.slane %v6268, 2
        %v6352 = vrot.slane %v6268, 3
        %v6353 = vrot.slane %v6268, 4
        %v6354 = vrot.slane %v6268, 5
        %v6355 = vrot.slane %v6268, 6
        %v6356 = vrot.slane %v6268, 7
        %v6357 = vrot.slane %v6269, 1
        %v6358 = vrot.slane %v6269, 2
        %v6359 = vrot.slane %v6269, 3
        %v6360 = vrot.slane %v6269, 4
        %v6361 = vrot.slane %v6269, 5
        %v6362 = vrot.slane %v6269, 6
        %v6363 = vrot.slane %v6269, 7
        %v6364 = vrot.slane %v6270, 1
        %v6365 = vrot.slane %v6270, 2
        %v6366 = vrot.slane %v6270, 3
        %v6367 = vrot.slane %v6270, 4
        %v6368 = vrot.slane %v6270, 5
        %v6369 = vrot.slane %v6270, 6
        %v6370 = vrot.slane %v6270, 7
        %v6371 = vrot.slane %v6271, 1
        %v6372 = vrot.slane %v6271, 2
        %v6373 = vrot.slane %v6271, 3
        %v6374 = vrot.slane %v6271, 4
        %v6375 = vrot.slane %v6271, 5
        %v6376 = vrot.slane %v6271, 6
        %v6377 = vrot.slane %v6271, 7
        %v6378 = vrot.slane %v6272, 1
        %v6379 = vrot.slane %v6272, 2
        %v6380 = vrot.slane %v6272, 3
        %v6381 = vrot.slane %v6272, 4
        %v6382 = vrot.slane %v6272, 5
        %v6383 = vrot.slane %v6272, 6
        %v6384 = vrot.slane %v6272, 7
        %v6385 = vrot.slane %v6273, 1
        %v6386 = vrot.slane %v6273, 2
        %v6387 = vrot.slane %v6273, 3
        %v6388 = vrot.slane %v6273, 4
        %v6389 = vrot.slane %v6273, 5
        %v6390 = vrot.slane %v6273, 6
        %v6391 = vrot.slane %v6273, 7
        %v6392 = vrot.slane %v6274, 1
        %v6393 = vrot.slane %v6274, 2
        %v6394 = vrot.slane %v6274, 3
        %v6395 = vrot.slane %v6274, 4
        %v6396 = vrot.slane %v6274, 5
        %v6397 = vrot.slane %v6274, 6
        %v6398 = vrot.slane %v6274, 7
        %v6399 = vrot.slane %v6275, 1
        %v6400 = vrot.slane %v6275, 2
        %v6401 = vrot.slane %v6275, 3
        %v6402 = vrot.slane %v6275, 4
        %v6403 = vrot.slane %v6275, 5
        %v6404 = vrot.slane %v6275, 6
        %v6405 = vrot.slane %v6275, 7
        %v6406 = vrot.slane %v6276, 1
        %v6407 = vrot.slane %v6276, 2
        %v6408 = vrot.slane %v6276, 3
        %v6409 = vrot.slane %v6276, 4
        %v6410 = vrot.slane %v6276, 5
        %v6411 = vrot.slane %v6276, 6
        %v6412 = vrot.slane %v6276, 7
        %v6413 = vrot.slane %v6277, 1
        %v6414 = vrot.slane %v6277, 2
        %v6415 = vrot.slane %v6277, 3
        %v6416 = vrot.slane %v6277, 4
        %v6417 = vrot.slane %v6277, 5
        %v6418 = vrot.slane %v6277, 6
        %v6419 = vrot.slane %v6277, 7
        %v6420 = vrot.slane %v6278, 1
        %v6421 = vrot.slane %v6278, 2
        %v6422 = vrot.slane %v6278, 3
        %v6423 = vrot.slane %v6278, 4
        %v6424 = vrot.slane %v6278, 5
        %v6425 = vrot.slane %v6278, 6
        %v6426 = vrot.slane %v6278, 7
        %v6427 = vrot.slane %v6279, 1
        %v6428 = vrot.slane %v6279, 2
        %v6429 = vrot.slane %v6279, 3
        %v6430 = vrot.slane %v6279, 4
        %v6431 = vrot.slane %v6279, 5
        %v6432 = vrot.slane %v6279, 6
        %v6433 = vrot.slane %v6279, 7
        %v6434 = vrot.slane %v6280, 1
        %v6435 = vrot.slane %v6280, 2
        %v6436 = vrot.slane %v6280, 3
        %v6437 = vrot.slane %v6280, 4
        %v6438 = vrot.slane %v6280, 5
        %v6439 = vrot.slane %v6280, 6
        %v6440 = vrot.slane %v6280, 7
        %v6569 = vrot.slane %v6297, 1
        %v6570 = vrot.slane %v6297, 2
        %v6571 = vrot.slane %v6297, 3
        %v6572 = vrot.slane %v6297, 4
        %v6573 = vrot.slane %v6297, 5
        %v6574 = vrot.slane %v6297, 6
        %v6575 = vrot.slane %v6297, 7
        %v6576 = vrot.slane %v6298, 1
        %v6577 = vrot.slane %v6298, 2
        %v6578 = vrot.slane %v6298, 3
        %v6579 = vrot.slane %v6298, 4
        %v6580 = vrot.slane %v6298, 5
        %v6581 = vrot.slane %v6298, 6
        %v6582 = vrot.slane %v6298, 7
        %v6583 = vrot.slane %v6299, 1
        %v6584 = vrot.slane %v6299, 2
        %v6585 = vrot.slane %v6299, 3
        %v6586 = vrot.slane %v6299, 4
        %v6587 = vrot.slane %v6299, 5
        %v6588 = vrot.slane %v6299, 6
        %v6589 = vrot.slane %v6299, 7
        %v6590 = vrot.slane %v6300, 1
        %v6591 = vrot.slane %v6300, 2
        %v6592 = vrot.slane %v6300, 3
        %v6593 = vrot.slane %v6300, 4
        %v6594 = vrot.slane %v6300, 5
        %v6595 = vrot.slane %v6300, 6
        %v6596 = vrot.slane %v6300, 7
        %v6597 = vrot.slane %v6301, 1
        %v6598 = vrot.slane %v6301, 2
        %v6599 = vrot.slane %v6301, 3
        %v6600 = vrot.slane %v6301, 4
        %v6601 = vrot.slane %v6301, 5
        %v6602 = vrot.slane %v6301, 6
        %v6603 = vrot.slane %v6301, 7
        %v6604 = vrot.slane %v6302, 1
        %v6605 = vrot.slane %v6302, 2
        %v6606 = vrot.slane %v6302, 3
        %v6607 = vrot.slane %v6302, 4
        %v6608 = vrot.slane %v6302, 5
        %v6609 = vrot.slane %v6302, 6
        %v6610 = vrot.slane %v6302, 7
        %v6611 = vrot.slane %v6303, 1
        %v6612 = vrot.slane %v6303, 2
        %v6613 = vrot.slane %v6303, 3
        %v6614 = vrot.slane %v6303, 4
        %v6615 = vrot.slane %v6303, 5
        %v6616 = vrot.slane %v6303, 6
        %v6617 = vrot.slane %v6303, 7
        %v6618 = vrot.slane %v6304, 1
        %v6619 = vrot.slane %v6304, 2
        %v6620 = vrot.slane %v6304, 3
        %v6621 = vrot.slane %v6304, 4
        %v6622 = vrot.slane %v6304, 5
        %v6623 = vrot.slane %v6304, 6
        %v6624 = vrot.slane %v6304, 7
        %v6625 = vrot.slane %v6305, 1
        %v6626 = vrot.slane %v6305, 2
        %v6627 = vrot.slane %v6305, 3
        %v6628 = vrot.slane %v6305, 4
        %v6629 = vrot.slane %v6305, 5
        %v6630 = vrot.slane %v6305, 6
        %v6631 = vrot.slane %v6305, 7
        %v6632 = vrot.slane %v6306, 1
        %v6633 = vrot.slane %v6306, 2
        %v6634 = vrot.slane %v6306, 3
        %v6635 = vrot.slane %v6306, 4
        %v6636 = vrot.slane %v6306, 5
        %v6637 = vrot.slane %v6306, 6
        %v6638 = vrot.slane %v6306, 7
        %v6639 = vrot.slane %v6307, 1
        %v6640 = vrot.slane %v6307, 2
        %v6641 = vrot.slane %v6307, 3
        %v6642 = vrot.slane %v6307, 4
        %v6643 = vrot.slane %v6307, 5
        %v6644 = vrot.slane %v6307, 6
        %v6645 = vrot.slane %v6307, 7
        %v6646 = vrot.slane %v6308, 1
        %v6647 = vrot.slane %v6308, 2
        %v6648 = vrot.slane %v6308, 3
        %v6649 = vrot.slane %v6308, 4
        %v6650 = vrot.slane %v6308, 5
        %v6651 = vrot.slane %v6308, 6
        %v6652 = vrot.slane %v6308, 7
        %v6653 = vrot.slane %v6309, 1
        %v6654 = vrot.slane %v6309, 2
        %v6655 = vrot.slane %v6309, 3
        %v6656 = vrot.slane %v6309, 4
        %v6657 = vrot.slane %v6309, 5
        %v6658 = vrot.slane %v6309, 6
        %v6659 = vrot.slane %v6309, 7
        %v6660 = vrot.slane %v6310, 1
        %v6661 = vrot.slane %v6310, 2
        %v6662 = vrot.slane %v6310, 3
        %v6663 = vrot.slane %v6310, 4
        %v6664 = vrot.slane %v6310, 5
        %v6665 = vrot.slane %v6310, 6
        %v6666 = vrot.slane %v6310, 7
        %v6667 = vrot.slane %v6311, 1
        %v6668 = vrot.slane %v6311, 2
        %v6669 = vrot.slane %v6311, 3
        %v6670 = vrot.slane %v6311, 4
        %v6671 = vrot.slane %v6311, 5
        %v6672 = vrot.slane %v6311, 6
        %v6673 = vrot.slane %v6311, 7
        %v6674 = vrot.slane %v6312, 1
        %v6675 = vrot.slane %v6312, 2
        %v6676 = vrot.slane %v6312, 3
        %v6677 = vrot.slane %v6312, 4
        %v6678 = vrot.slane %v6312, 5
        %v6679 = vrot.slane %v6312, 6
        %v6680 = vrot.slane %v6312, 7
        %v6681 = vperm.slane %v6297, 0
        %v6682 = vperm.slane %v6569, 0
        %v6683 = vperm.slane %v6570, 0
        %v6684 = vperm.slane %v6571, 0
        %v6685 = vperm.slane %v6572, 0
        %v6686 = vperm.slane %v6573, 0
        %v6687 = vperm.slane %v6574, 0
        %v6688 = vperm.slane %v6575, 0
        %v6689 = vperm.slane %v6298, 0
        %v6690 = vperm.slane %v6576, 0
        %v6691 = vperm.slane %v6577, 0
        %v6692 = vperm.slane %v6578, 0
        %v6693 = vperm.slane %v6579, 0
        %v6694 = vperm.slane %v6580, 0
        %v6695 = vperm.slane %v6581, 0
        %v6696 = vperm.slane %v6582, 0
        %v6697 = vperm.slane %v6299, 0
        %v6698 = vperm.slane %v6583, 0
        %v6699 = vperm.slane %v6584, 0
        %v6700 = vperm.slane %v6585, 0
        %v6701 = vperm.slane %v6586, 0
        %v6702 = vperm.slane %v6587, 0
        %v6703 = vperm.slane %v6588, 0
        %v6704 = vperm.slane %v6589, 0
        %v6705 = vperm.slane %v6300, 0
        %v6706 = vperm.slane %v6590, 0
        %v6707 = vperm.slane %v6591, 0
        %v6708 = vperm.slane %v6592, 0
        %v6709 = vperm.slane %v6593, 0
        %v6710 = vperm.slane %v6594, 0
        %v6711 = vperm.slane %v6595, 0
        %v6712 = vperm.slane %v6596, 0
        %v6713 = vperm.slane %v6301, 0
        %v6714 = vperm.slane %v6597, 0
        %v6715 = vperm.slane %v6598, 0
        %v6716 = vperm.slane %v6599, 0
        %v6717 = vperm.slane %v6600, 0
        %v6718 = vperm.slane %v6601, 0
        %v6719 = vperm.slane %v6602, 0
        %v6720 = vperm.slane %v6603, 0
        %v6721 = vperm.slane %v6302, 0
        %v6722 = vperm.slane %v6604, 0
        %v6723 = vperm.slane %v6605, 0
        %v6724 = vperm.slane %v6606, 0
        %v6725 = vperm.slane %v6607, 0
        %v6726 = vperm.slane %v6608, 0
        %v6727 = vperm.slane %v6609, 0
        %v6728 = vperm.slane %v6610, 0
        %v6729 = vperm.slane %v6303, 0
        %v6730 = vperm.slane %v6611, 0
        %v6731 = vperm.slane %v6612, 0
        %v6732 = vperm.slane %v6613, 0
        %v6733 = vperm.slane %v6614, 0
        %v6734 = vperm.slane %v6615, 0
        %v6735 = vperm.slane %v6616, 0
        %v6736 = vperm.slane %v6617, 0
        %v6737 = vperm.slane %v6304, 0
        %v6738 = vperm.slane %v6618, 0
        %v6739 = vperm.slane %v6619, 0
        %v6740 = vperm.slane %v6620, 0
        %v6741 = vperm.slane %v6621, 0
        %v6742 = vperm.slane %v6622, 0
        %v6743 = vperm.slane %v6623, 0
        %v6744 = vperm.slane %v6624, 0
        %v6745 = vperm.slane %v6305, 0
        %v6746 = vperm.slane %v6625, 0
        %v6747 = vperm.slane %v6626, 0
        %v6748 = vperm.slane %v6627, 0
        %v6749 = vperm.slane %v6628, 0
        %v6750 = vperm.slane %v6629, 0
        %v6751 = vperm.slane %v6630, 0
        %v6752 = vperm.slane %v6631, 0
        %v6753 = vperm.slane %v6306, 0
        %v6754 = vperm.slane %v6632, 0
        %v6755 = vperm.slane %v6633, 0
        %v6756 = vperm.slane %v6634, 0
        %v6757 = vperm.slane %v6635, 0
        %v6758 = vperm.slane %v6636, 0
        %v6759 = vperm.slane %v6637, 0
        %v6760 = vperm.slane %v6638, 0
        %v6761 = vperm.slane %v6307, 0
        %v6762 = vperm.slane %v6639, 0
        %v6763 = vperm.slane %v6640, 0
        %v6764 = vperm.slane %v6641, 0
        %v6765 = vperm.slane %v6642, 0
        %v6766 = vperm.slane %v6643, 0
        %v6767 = vperm.slane %v6644, 0
        %v6768 = vperm.slane %v6645, 0
        %v6769 = vperm.slane %v6308, 0
        %v6770 = vperm.slane %v6646, 0
        %v6771 = vperm.slane %v6647, 0
        %v6772 = vperm.slane %v6648, 0
        %v6773 = vperm.slane %v6649, 0
        %v6774 = vperm.slane %v6650, 0
        %v6775 = vperm.slane %v6651, 0
        %v6776 = vperm.slane %v6652, 0
        %v6777 = vperm.slane %v6309, 0
        %v6778 = vperm.slane %v6653, 0
        %v6779 = vperm.slane %v6654, 0
        %v6780 = vperm.slane %v6655, 0
        %v6781 = vperm.slane %v6656, 0
        %v6782 = vperm.slane %v6657, 0
        %v6783 = vperm.slane %v6658, 0
        %v6784 = vperm.slane %v6659, 0
        %v6785 = vperm.slane %v6310, 0
        %v6786 = vperm.slane %v6660, 0
        %v6787 = vperm.slane %v6661, 0
        %v6788 = vperm.slane %v6662, 0
        %v6789 = vperm.slane %v6663, 0
        %v6790 = vperm.slane %v6664, 0
        %v6791 = vperm.slane %v6665, 0
        %v6792 = vperm.slane %v6666, 0
        %v6793 = vperm.slane %v6311, 0
        %v6794 = vperm.slane %v6667, 0
        %v6795 = vperm.slane %v6668, 0
        %v6796 = vperm.slane %v6669, 0
        %v6797 = vperm.slane %v6670, 0
        %v6798 = vperm.slane %v6671, 0
        %v6799 = vperm.slane %v6672, 0
        %v6800 = vperm.slane %v6673, 0
        %v6801 = vperm.slane %v6312, 0
        %v6802 = vperm.slane %v6674, 0
        %v6803 = vperm.slane %v6675, 0
        %v6804 = vperm.slane %v6676, 0
        %v6805 = vperm.slane %v6677, 0
        %v6806 = vperm.slane %v6678, 0
        %v6807 = vperm.slane %v6679, 0
        %v6808 = vperm.slane %v6680, 0
        %v6937 = vsel %vm6167, %v6265, %v6681
        %v6938 = vsel %vm6167, %v6329, %v6682
        %v6939 = vsel %vm6167, %v6330, %v6683
        %v6940 = vsel %vm6167, %v6331, %v6684
        %v6941 = vsel %vm6167, %v6332, %v6685
        %v6942 = vsel %vm6167, %v6333, %v6686
        %v6943 = vsel %vm6167, %v6334, %v6687
        %v6944 = vsel %vm6167, %v6335, %v6688
        %v6945 = vsel %vm6167, %v6266, %v6689
        %v6946 = vsel %vm6167, %v6336, %v6690
        %v6947 = vsel %vm6167, %v6337, %v6691
        %v6948 = vsel %vm6167, %v6338, %v6692
        %v6949 = vsel %vm6167, %v6339, %v6693
        %v6950 = vsel %vm6167, %v6340, %v6694
        %v6951 = vsel %vm6167, %v6341, %v6695
        %v6952 = vsel %vm6167, %v6342, %v6696
        %v6953 = vsel %vm6167, %v6267, %v6697
        %v6954 = vsel %vm6167, %v6343, %v6698
        %v6955 = vsel %vm6167, %v6344, %v6699
        %v6956 = vsel %vm6167, %v6345, %v6700
        %v6957 = vsel %vm6167, %v6346, %v6701
        %v6958 = vsel %vm6167, %v6347, %v6702
        %v6959 = vsel %vm6167, %v6348, %v6703
        %v6960 = vsel %vm6167, %v6349, %v6704
        %v6961 = vsel %vm6167, %v6268, %v6705
        %v6962 = vsel %vm6167, %v6350, %v6706
        %v6963 = vsel %vm6167, %v6351, %v6707
        %v6964 = vsel %vm6167, %v6352, %v6708
        %v6965 = vsel %vm6167, %v6353, %v6709
        %v6966 = vsel %vm6167, %v6354, %v6710
        %v6967 = vsel %vm6167, %v6355, %v6711
        %v6968 = vsel %vm6167, %v6356, %v6712
        %v6969 = vsel %vm6167, %v6269, %v6713
        %v6970 = vsel %vm6167, %v6357, %v6714
        %v6971 = vsel %vm6167, %v6358, %v6715
        %v6972 = vsel %vm6167, %v6359, %v6716
        %v6973 = vsel %vm6167, %v6360, %v6717
        %v6974 = vsel %vm6167, %v6361, %v6718
        %v6975 = vsel %vm6167, %v6362, %v6719
        %v6976 = vsel %vm6167, %v6363, %v6720
        %v6977 = vsel %vm6167, %v6270, %v6721
        %v6978 = vsel %vm6167, %v6364, %v6722
        %v6979 = vsel %vm6167, %v6365, %v6723
        %v6980 = vsel %vm6167, %v6366, %v6724
        %v6981 = vsel %vm6167, %v6367, %v6725
        %v6982 = vsel %vm6167, %v6368, %v6726
        %v6983 = vsel %vm6167, %v6369, %v6727
        %v6984 = vsel %vm6167, %v6370, %v6728
        %v6985 = vsel %vm6167, %v6271, %v6729
        %v6986 = vsel %vm6167, %v6371, %v6730
        %v6987 = vsel %vm6167, %v6372, %v6731
        %v6988 = vsel %vm6167, %v6373, %v6732
        %v6989 = vsel %vm6167, %v6374, %v6733
        %v6990 = vsel %vm6167, %v6375, %v6734
        %v6991 = vsel %vm6167, %v6376, %v6735
        %v6992 = vsel %vm6167, %v6377, %v6736
        %v6993 = vsel %vm6167, %v6272, %v6737
        %v6994 = vsel %vm6167, %v6378, %v6738
        %v6995 = vsel %vm6167, %v6379, %v6739
        %v6996 = vsel %vm6167, %v6380, %v6740
        %v6997 = vsel %vm6167, %v6381, %v6741
        %v6998 = vsel %vm6167, %v6382, %v6742
        %v6999 = vsel %vm6167, %v6383, %v6743
        %v7000 = vsel %vm6167, %v6384, %v6744
        %v7001 = vsel %vm6167, %v6273, %v6745
        %v7002 = vsel %vm6167, %v6385, %v6746
        %v7003 = vsel %vm6167, %v6386, %v6747
        %v7004 = vsel %vm6167, %v6387, %v6748
        %v7005 = vsel %vm6167, %v6388, %v6749
        %v7006 = vsel %vm6167, %v6389, %v6750
        %v7007 = vsel %vm6167, %v6390, %v6751
        %v7008 = vsel %vm6167, %v6391, %v6752
        %v7009 = vsel %vm6167, %v6274, %v6753
        %v7010 = vsel %vm6167, %v6392, %v6754
        %v7011 = vsel %vm6167, %v6393, %v6755
        %v7012 = vsel %vm6167, %v6394, %v6756
        %v7013 = vsel %vm6167, %v6395, %v6757
        %v7014 = vsel %vm6167, %v6396, %v6758
        %v7015 = vsel %vm6167, %v6397, %v6759
        %v7016 = vsel %vm6167, %v6398, %v6760
        %v7017 = vsel %vm6167, %v6275, %v6761
        %v7018 = vsel %vm6167, %v6399, %v6762
        %v7019 = vsel %vm6167, %v6400, %v6763
        %v7020 = vsel %vm6167, %v6401, %v6764
        %v7021 = vsel %vm6167, %v6402, %v6765
        %v7022 = vsel %vm6167, %v6403, %v6766
        %v7023 = vsel %vm6167, %v6404, %v6767
        %v7024 = vsel %vm6167, %v6405, %v6768
        %v7025 = vsel %vm6167, %v6276, %v6769
        %v7026 = vsel %vm6167, %v6406, %v6770
        %v7027 = vsel %vm6167, %v6407, %v6771
        %v7028 = vsel %vm6167, %v6408, %v6772
        %v7029 = vsel %vm6167, %v6409, %v6773
        %v7030 = vsel %vm6167, %v6410, %v6774
        %v7031 = vsel %vm6167, %v6411, %v6775
        %v7032 = vsel %vm6167, %v6412, %v6776
        %v7033 = vsel %vm6167, %v6277, %v6777
        %v7034 = vsel %vm6167, %v6413, %v6778
        %v7035 = vsel %vm6167, %v6414, %v6779
        %v7036 = vsel %vm6167, %v6415, %v6780
        %v7037 = vsel %vm6167, %v6416, %v6781
        %v7038 = vsel %vm6167, %v6417, %v6782
        %v7039 = vsel %vm6167, %v6418, %v6783
        %v7040 = vsel %vm6167, %v6419, %v6784
        %v7041 = vsel %vm6167, %v6278, %v6785
        %v7042 = vsel %vm6167, %v6420, %v6786
        %v7043 = vsel %vm6167, %v6421, %v6787
        %v7044 = vsel %vm6167, %v6422, %v6788
        %v7045 = vsel %vm6167, %v6423, %v6789
        %v7046 = vsel %vm6167, %v6424, %v6790
        %v7047 = vsel %vm6167, %v6425, %v6791
        %v7048 = vsel %vm6167, %v6426, %v6792
        %v7049 = vsel %vm6167, %v6279, %v6793
        %v7050 = vsel %vm6167, %v6427, %v6794
        %v7051 = vsel %vm6167, %v6428, %v6795
        %v7052 = vsel %vm6167, %v6429, %v6796
        %v7053 = vsel %vm6167, %v6430, %v6797
        %v7054 = vsel %vm6167, %v6431, %v6798
        %v7055 = vsel %vm6167, %v6432, %v6799
        %v7056 = vsel %vm6167, %v6433, %v6800
        %v7057 = vsel %vm6167, %v6280, %v6801
        %v7058 = vsel %vm6167, %v6434, %v6802
        %v7059 = vsel %vm6167, %v6435, %v6803
        %v7060 = vsel %vm6167, %v6436, %v6804
        %v7061 = vsel %vm6167, %v6437, %v6805
        %v7062 = vsel %vm6167, %v6438, %v6806
        %v7063 = vsel %vm6167, %v6439, %v6807
        %v7064 = vsel %vm6167, %v6440, %v6808
        %7193 = vst [vmem:[#allocation1] ss:$4 sm:$0xff] %v6937
        %s7194 = scalar_lea.vmem [#allocation1], 1
        %7195 = vst [vmem:[%s7194] ss:$4 sm:$0xff] %v6938
        %s7196 = scalar_lea.vmem [#allocation1], 2
        %7197 = vst [vmem:[%s7196] ss:$4 sm:$0xff] %v6939
        %s7198 = scalar_lea.vmem [#allocation1], 3
        %7199 = vst [vmem:[%s7198] ss:$4 sm:$0xff] %v6940
        %s7200 = scalar_lea.vmem [#allocation1], 32
        %7201 = vst [vmem:[%s7200] ss:$4 sm:$0xff] %v6941
        %s7202 = scalar_lea.vmem [#allocation1], 33
        %7203 = vst [vmem:[%s7202] ss:$4 sm:$0xff] %v6942
        %s7204 = scalar_lea.vmem [#allocation1], 34
        %7205 = vst [vmem:[%s7204] ss:$4 sm:$0xff] %v6943
        %s7206 = scalar_lea.vmem [#allocation1], 35
        %7207 = vst [vmem:[%s7206] ss:$4 sm:$0xff] %v6944
        %v7208 = vld.sshfl [vmem:[#allocation1] sm:$0xff pattern:$0x73625140]
        %v7209 = vld.sshfl [vmem:[#allocation1 + $0x20] sm:$0xff pattern:$0x73625140]
        %7210 = vst [vmem:[#allocation1] ss:$4 sm:$0xff] %v6945
        %7211 = vst [vmem:[%s7194] ss:$4 sm:$0xff] %v6946
        %7212 = vst [vmem:[%s7196] ss:$4 sm:$0xff] %v6947
        %7213 = vst [vmem:[%s7198] ss:$4 sm:$0xff] %v6948
        %7214 = vst [vmem:[%s7200] ss:$4 sm:$0xff] %v6949
        %7215 = vst [vmem:[%s7202] ss:$4 sm:$0xff] %v6950
        %7216 = vst [vmem:[%s7204] ss:$4 sm:$0xff] %v6951
        %7217 = vst [vmem:[%s7206] ss:$4 sm:$0xff] %v6952
        %v7218 = vld.sshfl [vmem:[#allocation1] sm:$0xff pattern:$0x73625140]
        %v7219 = vld.sshfl [vmem:[#allocation1 + $0x20] sm:$0xff pattern:$0x73625140]
        %7220 = vst [vmem:[#allocation1] ss:$4 sm:$0xff] %v6953
        %7221 = vst [vmem:[%s7194] ss:$4 sm:$0xff] %v6954
        %7222 = vst [vmem:[%s7196] ss:$4 sm:$0xff] %v6955
        %7223 = vst [vmem:[%s7198] ss:$4 sm:$0xff] %v6956
        %7224 = vst [vmem:[%s7200] ss:$4 sm:$0xff] %v6957
        %7225 = vst [vmem:[%s7202] ss:$4 sm:$0xff] %v6958
        %7226 = vst [vmem:[%s7204] ss:$4 sm:$0xff] %v6959
        %7227 = vst [vmem:[%s7206] ss:$4 sm:$0xff] %v6960
        %v7228 = vld.sshfl [vmem:[#allocation1] sm:$0xff pattern:$0x73625140]
        %v7229 = vld.sshfl [vmem:[#allocation1 + $0x20] sm:$0xff pattern:$0x73625140]
        %7230 = vst [vmem:[#allocation1] ss:$4 sm:$0xff] %v6961
        %7231 = vst [vmem:[%s7194] ss:$4 sm:$0xff] %v6962
        %7232 = vst [vmem:[%s7196] ss:$4 sm:$0xff] %v6963
        %7233 = vst [vmem:[%s7198] ss:$4 sm:$0xff] %v6964
        %7234 = vst [vmem:[%s7200] ss:$4 sm:$0xff] %v6965
        %7235 = vst [vmem:[%s7202] ss:$4 sm:$0xff] %v6966
        %7236 = vst [vmem:[%s7204] ss:$4 sm:$0xff] %v6967
        %7237 = vst [vmem:[%s7206] ss:$4 sm:$0xff] %v6968
        %v7238 = vld.sshfl [vmem:[#allocation1] sm:$0xff pattern:$0x73625140]
        %v7239 = vld.sshfl [vmem:[#allocation1 + $0x20] sm:$0xff pattern:$0x73625140]
        %7240 = vst [vmem:[#allocation1] ss:$4 sm:$0xff] %v6969
        %7241 = vst [vmem:[%s7194] ss:$4 sm:$0xff] %v6970
        %7242 = vst [vmem:[%s7196] ss:$4 sm:$0xff] %v6971
        %7243 = vst [vmem:[%s7198] ss:$4 sm:$0xff] %v6972
        %7244 = vst [vmem:[%s7200] ss:$4 sm:$0xff] %v6973
        %7245 = vst [vmem:[%s7202] ss:$4 sm:$0xff] %v6974
        %7246 = vst [vmem:[%s7204] ss:$4 sm:$0xff] %v6975
        %7247 = vst [vmem:[%s7206] ss:$4 sm:$0xff] %v6976
        %v7248 = vld.sshfl [vmem:[#allocation1] sm:$0xff pattern:$0x73625140]
        %v7249 = vld.sshfl [vmem:[#allocation1 + $0x20] sm:$0xff pattern:$0x73625140]
        %7250 = vst [vmem:[#allocation1] ss:$4 sm:$0xff] %v6977
        %7251 = vst [vmem:[%s7194] ss:$4 sm:$0xff] %v6978
        %7252 = vst [vmem:[%s7196] ss:$4 sm:$0xff] %v6979
        %7253 = vst [vmem:[%s7198] ss:$4 sm:$0xff] %v6980
        %7254 = vst [vmem:[%s7200] ss:$4 sm:$0xff] %v6981
        %7255 = vst [vmem:[%s7202] ss:$4 sm:$0xff] %v6982
        %7256 = vst [vmem:[%s7204] ss:$4 sm:$0xff] %v6983
        %7257 = vst [vmem:[%s7206] ss:$4 sm:$0xff] %v6984
        %v7258 = vld.sshfl [vmem:[#allocation1] sm:$0xff pattern:$0x73625140]
        %v7259 = vld.sshfl [vmem:[#allocation1 + $0x20] sm:$0xff pattern:$0x73625140]
        %7260 = vst [vmem:[#allocation1] ss:$4 sm:$0xff] %v6985
        %7261 = vst [vmem:[%s7194] ss:$4 sm:$0xff] %v6986
        %7262 = vst [vmem:[%s7196] ss:$4 sm:$0xff] %v6987
        %7263 = vst [vmem:[%s7198] ss:$4 sm:$0xff] %v6988
        %7264 = vst [vmem:[%s7200] ss:$4 sm:$0xff] %v6989
        %7265 = vst [vmem:[%s7202] ss:$4 sm:$0xff] %v6990
        %7266 = vst [vmem:[%s7204] ss:$4 sm:$0xff] %v6991
        %7267 = vst [vmem:[%s7206] ss:$4 sm:$0xff] %v6992
        %v7268 = vld.sshfl [vmem:[#allocation1] sm:$0xff pattern:$0x73625140]
        %v7269 = vld.sshfl [vmem:[#allocation1 + $0x20] sm:$0xff pattern:$0x73625140]
        %7270 = vst [vmem:[#allocation1] ss:$4 sm:$0xff] %v6993
        %7271 = vst [vmem:[%s7194] ss:$4 sm:$0xff] %v6994
        %7272 = vst [vmem:[%s7196] ss:$4 sm:$0xff] %v6995
        %7273 = vst [vmem:[%s7198] ss:$4 sm:$0xff] %v6996
        %7274 = vst [vmem:[%s7200] ss:$4 sm:$0xff] %v6997
        %7275 = vst [vmem:[%s7202] ss:$4 sm:$0xff] %v6998
        %7276 = vst [vmem:[%s7204] ss:$4 sm:$0xff] %v6999
        %7277 = vst [vmem:[%s7206] ss:$4 sm:$0xff] %v7000
        %v7278 = vld.sshfl [vmem:[#allocation1] sm:$0xff pattern:$0x73625140]
        %v7279 = vld.sshfl [vmem:[#allocation1 + $0x20] sm:$0xff pattern:$0x73625140]
        %7280 = vst [vmem:[#allocation1] ss:$4 sm:$0xff] %v7001
        %7281 = vst [vmem:[%s7194] ss:$4 sm:$0xff] %v7002
        %7282 = vst [vmem:[%s7196] ss:$4 sm:$0xff] %v7003
        %7283 = vst [vmem:[%s7198] ss:$4 sm:$0xff] %v7004
        %7284 = vst [vmem:[%s7200] ss:$4 sm:$0xff] %v7005
        %7285 = vst [vmem:[%s7202] ss:$4 sm:$0xff] %v7006
        %7286 = vst [vmem:[%s7204] ss:$4 sm:$0xff] %v7007
        %7287 = vst [vmem:[%s7206] ss:$4 sm:$0xff] %v7008
        %v7288 = vld.sshfl [vmem:[#allocation1] sm:$0xff pattern:$0x73625140]
        %v7289 = vld.sshfl [vmem:[#allocation1 + $0x20] sm:$0xff pattern:$0x73625140]
        %7290 = vst [vmem:[#allocation1] ss:$4 sm:$0xff] %v7009
        %7291 = vst [vmem:[%s7194] ss:$4 sm:$0xff] %v7010
        %7292 = vst [vmem:[%s7196] ss:$4 sm:$0xff] %v7011
        %7293 = vst [vmem:[%s7198] ss:$4 sm:$0xff] %v7012
        %7294 = vst [vmem:[%s7200] ss:$4 sm:$0xff] %v7013
        %7295 = vst [vmem:[%s7202] ss:$4 sm:$0xff] %v7014
        %7296 = vst [vmem:[%s7204] ss:$4 sm:$0xff] %v7015
        %7297 = vst [vmem:[%s7206] ss:$4 sm:$0xff] %v7016
        %v7298 = vld.sshfl [vmem:[#allocation1] sm:$0xff pattern:$0x73625140]
        %v7299 = vld.sshfl [vmem:[#allocation1 + $0x20] sm:$0xff pattern:$0x73625140]
        %7300 = vst [vmem:[#allocation1] ss:$4 sm:$0xff] %v7017
        %7301 = vst [vmem:[%s7194] ss:$4 sm:$0xff] %v7018
        %7302 = vst [vmem:[%s7196] ss:$4 sm:$0xff] %v7019
        %7303 = vst [vmem:[%s7198] ss:$4 sm:$0xff] %v7020
        %7304 = vst [vmem:[%s7200] ss:$4 sm:$0xff] %v7021
        %7305 = vst [vmem:[%s7202] ss:$4 sm:$0xff] %v7022
        %7306 = vst [vmem:[%s7204] ss:$4 sm:$0xff] %v7023
        %7307 = vst [vmem:[%s7206] ss:$4 sm:$0xff] %v7024
        %v7308 = vld.sshfl [vmem:[#allocation1] sm:$0xff pattern:$0x73625140]
        %v7309 = vld.sshfl [vmem:[#allocation1 + $0x20] sm:$0xff pattern:$0x73625140]
        %7310 = vst [vmem:[#allocation1] ss:$4 sm:$0xff] %v7025
        %7311 = vst [vmem:[%s7194] ss:$4 sm:$0xff] %v7026
        %7312 = vst [vmem:[%s7196] ss:$4 sm:$0xff] %v7027
        %7313 = vst [vmem:[%s7198] ss:$4 sm:$0xff] %v7028
        %7314 = vst [vmem:[%s7200] ss:$4 sm:$0xff] %v7029
        %7315 = vst [vmem:[%s7202] ss:$4 sm:$0xff] %v7030
        %7316 = vst [vmem:[%s7204] ss:$4 sm:$0xff] %v7031
        %7317 = vst [vmem:[%s7206] ss:$4 sm:$0xff] %v7032
        %v7318 = vld.sshfl [vmem:[#allocation1] sm:$0xff pattern:$0x73625140]
        %v7319 = vld.sshfl [vmem:[#allocation1 + $0x20] sm:$0xff pattern:$0x73625140]
        %7320 = vst [vmem:[#allocation1] ss:$4 sm:$0xff] %v7033
        %7321 = vst [vmem:[%s7194] ss:$4 sm:$0xff] %v7034
        %7322 = vst [vmem:[%s7196] ss:$4 sm:$0xff] %v7035
        %7323 = vst [vmem:[%s7198] ss:$4 sm:$0xff] %v7036
        %7324 = vst [vmem:[%s7200] ss:$4 sm:$0xff] %v7037
        %7325 = vst [vmem:[%s7202] ss:$4 sm:$0xff] %v7038
        %7326 = vst [vmem:[%s7204] ss:$4 sm:$0xff] %v7039
        %7327 = vst [vmem:[%s7206] ss:$4 sm:$0xff] %v7040
        %v7328 = vld.sshfl [vmem:[#allocation1] sm:$0xff pattern:$0x73625140]
        %v7329 = vld.sshfl [vmem:[#allocation1 + $0x20] sm:$0xff pattern:$0x73625140]
        %7330 = vst [vmem:[#allocation1] ss:$4 sm:$0xff] %v7041
        %7331 = vst [vmem:[%s7194] ss:$4 sm:$0xff] %v7042
        %7332 = vst [vmem:[%s7196] ss:$4 sm:$0xff] %v7043
        %7333 = vst [vmem:[%s7198] ss:$4 sm:$0xff] %v7044
        %7334 = vst [vmem:[%s7200] ss:$4 sm:$0xff] %v7045
        %7335 = vst [vmem:[%s7202] ss:$4 sm:$0xff] %v7046
        %7336 = vst [vmem:[%s7204] ss:$4 sm:$0xff] %v7047
        %7337 = vst [vmem:[%s7206] ss:$4 sm:$0xff] %v7048
        %v7338 = vld.sshfl [vmem:[#allocation1] sm:$0xff pattern:$0x73625140]
        %v7339 = vld.sshfl [vmem:[#allocation1 + $0x20] sm:$0xff pattern:$0x73625140]
        %7340 = vst [vmem:[#allocation1] ss:$4 sm:$0xff] %v7049
        %7341 = vst [vmem:[%s7194] ss:$4 sm:$0xff] %v7050
        %7342 = vst [vmem:[%s7196] ss:$4 sm:$0xff] %v7051
        %7343 = vst [vmem:[%s7198] ss:$4 sm:$0xff] %v7052
        %7344 = vst [vmem:[%s7200] ss:$4 sm:$0xff] %v7053
        %7345 = vst [vmem:[%s7202] ss:$4 sm:$0xff] %v7054
        %7346 = vst [vmem:[%s7204] ss:$4 sm:$0xff] %v7055
        %7347 = vst [vmem:[%s7206] ss:$4 sm:$0xff] %v7056
        %v7348 = vld.sshfl [vmem:[#allocation1] sm:$0xff pattern:$0x73625140]
        %v7349 = vld.sshfl [vmem:[#allocation1 + $0x20] sm:$0xff pattern:$0x73625140]
        %7350 = vst [vmem:[#allocation1] ss:$4 sm:$0xff] %v7057
        %7351 = vst [vmem:[%s7194] ss:$4 sm:$0xff] %v7058
        %7352 = vst [vmem:[%s7196] ss:$4 sm:$0xff] %v7059
        %7353 = vst [vmem:[%s7198] ss:$4 sm:$0xff] %v7060
        %7354 = vst [vmem:[%s7200] ss:$4 sm:$0xff] %v7061
        %7355 = vst [vmem:[%s7202] ss:$4 sm:$0xff] %v7062
        %7356 = vst [vmem:[%s7204] ss:$4 sm:$0xff] %v7063
        %7357 = vst [vmem:[%s7206] ss:$4 sm:$0xff] %v7064
        %v7358 = vld.sshfl [vmem:[#allocation1] sm:$0xff pattern:$0x73625140]
        %v7359 = vld.sshfl [vmem:[#allocation1 + $0x20] sm:$0xff pattern:$0x73625140]
        %v7392 = vadd.f32 %v6047, %v7208
        %v7393 = vadd.f32 %v6048, %v7209
        %v7394 = vadd.f32 %v6049, %v7218
        %v7395 = vadd.f32 %v6050, %v7219
        %v7396 = vadd.f32 %v6051, %v7228
        %v7397 = vadd.f32 %v6052, %v7229
        %v7398 = vadd.f32 %v6053, %v7238
        %v7399 = vadd.f32 %v6054, %v7239
        %v7400 = vadd.f32 %v6055, %v7248
        %v7401 = vadd.f32 %v6056, %v7249
        %v7402 = vadd.f32 %v6057, %v7258
        %v7403 = vadd.f32 %v6058, %v7259
        %v7404 = vadd.f32 %v6059, %v7268
        %v7405 = vadd.f32 %v6060, %v7269
        %v7406 = vadd.f32 %v6061, %v7278
        %v7407 = vadd.f32 %v6062, %v7279
        %v7408 = vadd.f32 %v6063, %v7288
        %v7409 = vadd.f32 %v6064, %v7289
        %v7410 = vadd.f32 %v6065, %v7298
        %v7411 = vadd.f32 %v6066, %v7299
        %v7412 = vadd.f32 %v6067, %v7308
        %v7413 = vadd.f32 %v6068, %v7309
        %v7414 = vadd.f32 %v6069, %v7318
        %v7415 = vadd.f32 %v6070, %v7319
        %v7416 = vadd.f32 %v6071, %v7328
        %v7417 = vadd.f32 %v6072, %v7329
        %v7418 = vadd.f32 %v6073, %v7338
        %v7419 = vadd.f32 %v6074, %v7339
        %v7420 = vadd.f32 %v6075, %v7348
        %v7421 = vadd.f32 %v6076, %v7349
        %v7422 = vadd.f32 %v6077, %v7358
        %v7423 = vadd.f32 %v6078, %v7359
        %7424 = vst [vmem:[#allocation3] sm:$0xff] %v7392
        %7425 = vst [vmem:[#allocation3 + $0x8] sm:$0xff] %v7393
        %7426 = vst [vmem:[#allocation3 + $0x10] sm:$0xff] %v7394
        %7427 = vst [vmem:[#allocation3 + $0x18] sm:$0xff] %v7395
        %7428 = vst [vmem:[#allocation3 + $0x20] sm:$0xff] %v7396
        %7429 = vst [vmem:[#allocation3 + $0x28] sm:$0xff] %v7397
        %7430 = vst [vmem:[#allocation3 + $0x30] sm:$0xff] %v7398
        %7431 = vst [vmem:[#allocation3 + $0x38] sm:$0xff] %v7399
        %7432 = vst [vmem:[#allocation3 + $0x40] sm:$0xff] %v7400
        %7433 = vst [vmem:[#allocation3 + $0x48] sm:$0xff] %v7401
        %7434 = vst [vmem:[#allocation3 + $0x50] sm:$0xff] %v7402
        %7435 = vst [vmem:[#allocation3 + $0x58] sm:$0xff] %v7403
        %7436 = vst [vmem:[#allocation3 + $0x60] sm:$0xff] %v7404
        %7437 = vst [vmem:[#allocation3 + $0x68] sm:$0xff] %v7405
        %7438 = vst [vmem:[#allocation3 + $0x70] sm:$0xff] %v7406
        %7439 = vst [vmem:[#allocation3 + $0x78] sm:$0xff] %v7407
        %7440 = vst [vmem:[#allocation3 + $0x80] sm:$0xff] %v7408
        %7441 = vst [vmem:[#allocation3 + $0x88] sm:$0xff] %v7409
        %7442 = vst [vmem:[#allocation3 + $0x90] sm:$0xff] %v7410
        %7443 = vst [vmem:[#allocation3 + $0x98] sm:$0xff] %v7411
        %7444 = vst [vmem:[#allocation3 + $0xa0] sm:$0xff] %v7412
        %7445 = vst [vmem:[#allocation3 + $0xa8] sm:$0xff] %v7413
        %7446 = vst [vmem:[#allocation3 + $0xb0] sm:$0xff] %v7414
        %7447 = vst [vmem:[#allocation3 + $0xb8] sm:$0xff] %v7415
        %7448 = vst [vmem:[#allocation3 + $0xc0] sm:$0xff] %v7416
        %7449 = vst [vmem:[#allocation3 + $0xc8] sm:$0xff] %v7417
        %7450 = vst [vmem:[#allocation3 + $0xd0] sm:$0xff] %v7418
        %7451 = vst [vmem:[#allocation3 + $0xd8] sm:$0xff] %v7419
        %7452 = vst [vmem:[#allocation3 + $0xe0] sm:$0xff] %v7420
        %7453 = vst [vmem:[#allocation3 + $0xe8] sm:$0xff] %v7421
        %7454 = vst [vmem:[#allocation3 + $0xf0] sm:$0xff] %v7422
        %7455 = vst [vmem:[#allocation3 + $0xf8] sm:$0xff] %v7423
        %v7456 = vld [vmem:[#allocation3] sm:$0xff]
        %v7457 = vld [vmem:[#allocation3 + $0x8] sm:$0xff]
        %v7458 = vld [vmem:[#allocation3 + $0x10] sm:$0xff]
        %v7459 = vld [vmem:[#allocation3 + $0x18] sm:$0xff]
        %v7460 = vld [vmem:[#allocation3 + $0x20] sm:$0xff]
        %v7461 = vld [vmem:[#allocation3 + $0x28] sm:$0xff]
        %v7462 = vld [vmem:[#allocation3 + $0x30] sm:$0xff]
        %v7463 = vld [vmem:[#allocation3 + $0x38] sm:$0xff]
        %v7464 = vld [vmem:[#allocation3 + $0x40] sm:$0xff]
        %v7465 = vld [vmem:[#allocation3 + $0x48] sm:$0xff]
        %v7466 = vld [vmem:[#allocation3 + $0x50] sm:$0xff]
        %v7467 = vld [vmem:[#allocation3 + $0x58] sm:$0xff]
        %v7468 = vld [vmem:[#allocation3 + $0x60] sm:$0xff]
        %v7469 = vld [vmem:[#allocation3 + $0x68] sm:$0xff]
        %v7470 = vld [vmem:[#allocation3 + $0x70] sm:$0xff]
        %v7471 = vld [vmem:[#allocation3 + $0x78] sm:$0xff]
        %v7472 = vld [vmem:[#allocation3 + $0x80] sm:$0xff]
        %v7473 = vld [vmem:[#allocation3 + $0x88] sm:$0xff]
        %v7474 = vld [vmem:[#allocation3 + $0x90] sm:$0xff]
        %v7475 = vld [vmem:[#allocation3 + $0x98] sm:$0xff]
        %v7476 = vld [vmem:[#allocation3 + $0xa0] sm:$0xff]
        %v7477 = vld [vmem:[#allocation3 + $0xa8] sm:$0xff]
        %v7478 = vld [vmem:[#allocation3 + $0xb0] sm:$0xff]
        %v7479 = vld [vmem:[#allocation3 + $0xb8] sm:$0xff]
        %v7480 = vld [vmem:[#allocation3 + $0xc0] sm:$0xff]
        %v7481 = vld [vmem:[#allocation3 + $0xc8] sm:$0xff]
        %v7482 = vld [vmem:[#allocation3 + $0xd0] sm:$0xff]
        %v7483 = vld [vmem:[#allocation3 + $0xd8] sm:$0xff]
        %v7484 = vld [vmem:[#allocation3 + $0xe0] sm:$0xff]
        %v7485 = vld [vmem:[#allocation3 + $0xe8] sm:$0xff]
        %v7486 = vld [vmem:[#allocation3 + $0xf0] sm:$0xff]
        %v7487 = vld [vmem:[#allocation3 + $0xf8] sm:$0xff]
        %v7488 = vpack.c.bf16 %v7456, %v7456
        %v7489 = vpack.c.bf16 %v7457, %v7457
        %v7490 = vpack.c.bf16 %v7458, %v7458
        %v7491 = vpack.c.bf16 %v7459, %v7459
        %v7492 = vpack.c.bf16 %v7460, %v7460
        %v7493 = vpack.c.bf16 %v7461, %v7461
        %v7494 = vpack.c.bf16 %v7462, %v7462
        %v7495 = vpack.c.bf16 %v7463, %v7463
        %v7496 = vpack.c.bf16 %v7464, %v7464
        %v7497 = vpack.c.bf16 %v7465, %v7465
        %v7498 = vpack.c.bf16 %v7466, %v7466
        %v7499 = vpack.c.bf16 %v7467, %v7467
        %v7500 = vpack.c.bf16 %v7468, %v7468
        %v7501 = vpack.c.bf16 %v7469, %v7469
        %v7502 = vpack.c.bf16 %v7470, %v7470
        %v7503 = vpack.c.bf16 %v7471, %v7471
        %v7504 = vpack.c.bf16 %v7472, %v7472
        %v7505 = vpack.c.bf16 %v7473, %v7473
        %v7506 = vpack.c.bf16 %v7474, %v7474
        %v7507 = vpack.c.bf16 %v7475, %v7475
        %v7508 = vpack.c.bf16 %v7476, %v7476
        %v7509 = vpack.c.bf16 %v7477, %v7477
        %v7510 = vpack.c.bf16 %v7478, %v7478
        %v7511 = vpack.c.bf16 %v7479, %v7479
        %v7512 = vpack.c.bf16 %v7480, %v7480
        %v7513 = vpack.c.bf16 %v7481, %v7481
        %v7514 = vpack.c.bf16 %v7482, %v7482
        %v7515 = vpack.c.bf16 %v7483, %v7483
        %v7516 = vpack.c.bf16 %v7484, %v7484
        %v7517 = vpack.c.bf16 %v7485, %v7485
        %v7518 = vpack.c.bf16 %v7486, %v7486
        %v7519 = vpack.c.bf16 %v7487, %v7487
        %v7520 = vunpack.c.l.bf16 %v7488
        %v7521 = vunpack.c.l.bf16 %v7489
        %v7522 = vunpack.c.l.bf16 %v7490
        %v7523 = vunpack.c.l.bf16 %v7491
        %v7524 = vunpack.c.l.bf16 %v7492
        %v7525 = vunpack.c.l.bf16 %v7493
        %v7526 = vunpack.c.l.bf16 %v7494
        %v7527 = vunpack.c.l.bf16 %v7495
        %v7528 = vunpack.c.l.bf16 %v7496
        %v7529 = vunpack.c.l.bf16 %v7497
        %v7530 = vunpack.c.l.bf16 %v7498
        %v7531 = vunpack.c.l.bf16 %v7499
        %v7532 = vunpack.c.l.bf16 %v7500
        %v7533 = vunpack.c.l.bf16 %v7501
        %v7534 = vunpack.c.l.bf16 %v7502
        %v7535 = vunpack.c.l.bf16 %v7503
        %v7536 = vunpack.c.l.bf16 %v7504
        %v7537 = vunpack.c.l.bf16 %v7505
        %v7538 = vunpack.c.l.bf16 %v7506
        %v7539 = vunpack.c.l.bf16 %v7507
        %v7540 = vunpack.c.l.bf16 %v7508
        %v7541 = vunpack.c.l.bf16 %v7509
        %v7542 = vunpack.c.l.bf16 %v7510
        %v7543 = vunpack.c.l.bf16 %v7511
        %v7544 = vunpack.c.l.bf16 %v7512
        %v7545 = vunpack.c.l.bf16 %v7513
        %v7546 = vunpack.c.l.bf16 %v7514
        %v7547 = vunpack.c.l.bf16 %v7515
        %v7548 = vunpack.c.l.bf16 %v7516
        %v7549 = vunpack.c.l.bf16 %v7517
        %v7550 = vunpack.c.l.bf16 %v7518
        %v7551 = vunpack.c.l.bf16 %v7519
        %v7552 = vmax.f32 %v7520, 0.0
        %v7553 = vmax.f32 %v7521, 0.0
        %v7554 = vmax.f32 %v7522, 0.0
        %v7555 = vmax.f32 %v7523, 0.0
        %v7556 = vmax.f32 %v7524, 0.0
        %v7557 = vmax.f32 %v7525, 0.0
        %v7558 = vmax.f32 %v7526, 0.0
        %v7559 = vmax.f32 %v7527, 0.0
        %v7560 = vmax.f32 %v7528, 0.0
        %v7561 = vmax.f32 %v7529, 0.0
        %v7562 = vmax.f32 %v7530, 0.0
        %v7563 = vmax.f32 %v7531, 0.0
        %v7564 = vmax.f32 %v7532, 0.0
        %v7565 = vmax.f32 %v7533, 0.0
        %v7566 = vmax.f32 %v7534, 0.0
        %v7567 = vmax.f32 %v7535, 0.0
        %v7568 = vmax.f32 %v7536, 0.0
        %v7569 = vmax.f32 %v7537, 0.0
        %v7570 = vmax.f32 %v7538, 0.0
        %v7571 = vmax.f32 %v7539, 0.0
        %v7572 = vmax.f32 %v7540, 0.0
        %v7573 = vmax.f32 %v7541, 0.0
        %v7574 = vmax.f32 %v7542, 0.0
        %v7575 = vmax.f32 %v7543, 0.0
        %v7576 = vmax.f32 %v7544, 0.0
        %v7577 = vmax.f32 %v7545, 0.0
        %v7578 = vmax.f32 %v7546, 0.0
        %v7579 = vmax.f32 %v7547, 0.0
        %v7580 = vmax.f32 %v7548, 0.0
        %v7581 = vmax.f32 %v7549, 0.0
        %v7582 = vmax.f32 %v7550, 0.0
        %v7583 = vmax.f32 %v7551, 0.0
        %v7584 = vpack.c.bf16 %v7552, %v7552
        %v7585 = vpack.c.bf16 %v7553, %v7553
        %v7586 = vpack.c.bf16 %v7554, %v7554
        %v7587 = vpack.c.bf16 %v7555, %v7555
        %v7588 = vpack.c.bf16 %v7556, %v7556
        %v7589 = vpack.c.bf16 %v7557, %v7557
        %v7590 = vpack.c.bf16 %v7558, %v7558
        %v7591 = vpack.c.bf16 %v7559, %v7559
        %v7592 = vpack.c.bf16 %v7560, %v7560
        %v7593 = vpack.c.bf16 %v7561, %v7561
        %v7594 = vpack.c.bf16 %v7562, %v7562
        %v7595 = vpack.c.bf16 %v7563, %v7563
        %v7596 = vpack.c.bf16 %v7564, %v7564
        %v7597 = vpack.c.bf16 %v7565, %v7565
        %v7598 = vpack.c.bf16 %v7566, %v7566
        %v7599 = vpack.c.bf16 %v7567, %v7567
        %v7600 = vpack.c.bf16 %v7568, %v7568
        %v7601 = vpack.c.bf16 %v7569, %v7569
        %v7602 = vpack.c.bf16 %v7570, %v7570
        %v7603 = vpack.c.bf16 %v7571, %v7571
        %v7604 = vpack.c.bf16 %v7572, %v7572
        %v7605 = vpack.c.bf16 %v7573, %v7573
        %v7606 = vpack.c.bf16 %v7574, %v7574
        %v7607 = vpack.c.bf16 %v7575, %v7575
        %v7608 = vpack.c.bf16 %v7576, %v7576
        %v7609 = vpack.c.bf16 %v7577, %v7577
        %v7610 = vpack.c.bf16 %v7578, %v7578
        %v7611 = vpack.c.bf16 %v7579, %v7579
        %v7612 = vpack.c.bf16 %v7580, %v7580
        %v7613 = vpack.c.bf16 %v7581, %v7581
        %v7614 = vpack.c.bf16 %v7582, %v7582
        %v7615 = vpack.c.bf16 %v7583, %v7583
        %v7648 = vunpack.c.l.b16 %v7584
        %v7649 = vunpack.c.l.b16 %v7585
        %v7650 = vunpack.c.l.b16 %v7586
        %v7651 = vunpack.c.l.b16 %v7587
        %v7652 = vunpack.c.l.b16 %v7588
        %v7653 = vunpack.c.l.b16 %v7589
        %v7654 = vunpack.c.l.b16 %v7590
        %v7655 = vunpack.c.l.b16 %v7591
        %v7656 = vunpack.c.l.b16 %v7592
        %v7657 = vunpack.c.l.b16 %v7593
        %v7658 = vunpack.c.l.b16 %v7594
        %v7659 = vunpack.c.l.b16 %v7595
        %v7660 = vunpack.c.l.b16 %v7596
        %v7661 = vunpack.c.l.b16 %v7597
        %v7662 = vunpack.c.l.b16 %v7598
        %v7663 = vunpack.c.l.b16 %v7599
        %v7664 = vunpack.c.l.b16 %v7600
        %v7665 = vunpack.c.l.b16 %v7601
        %v7666 = vunpack.c.l.b16 %v7602
        %v7667 = vunpack.c.l.b16 %v7603
        %v7668 = vunpack.c.l.b16 %v7604
        %v7669 = vunpack.c.l.b16 %v7605
        %v7670 = vunpack.c.l.b16 %v7606
        %v7671 = vunpack.c.l.b16 %v7607
        %v7672 = vunpack.c.l.b16 %v7608
        %v7673 = vunpack.c.l.b16 %v7609
        %v7674 = vunpack.c.l.b16 %v7610
        %v7675 = vunpack.c.l.b16 %v7611
        %v7676 = vunpack.c.l.b16 %v7612
        %v7677 = vunpack.c.l.b16 %v7613
        %v7678 = vunpack.c.l.b16 %v7614
        %v7679 = vunpack.c.l.b16 %v7615
        %v7680 = vpack.c.b16 %v7649, %v7648
        %v7681 = vpack.c.b16 %v7651, %v7650
        %v7682 = vpack.c.b16 %v7653, %v7652
        %v7683 = vpack.c.b16 %v7655, %v7654
        %v7684 = vpack.c.b16 %v7657, %v7656
        %v7685 = vpack.c.b16 %v7659, %v7658
        %v7686 = vpack.c.b16 %v7661, %v7660
        %v7687 = vpack.c.b16 %v7663, %v7662
        %v7688 = vpack.c.b16 %v7665, %v7664
        %v7689 = vpack.c.b16 %v7667, %v7666
        %v7690 = vpack.c.b16 %v7669, %v7668
        %v7691 = vpack.c.b16 %v7671, %v7670
        %v7692 = vpack.c.b16 %v7673, %v7672
        %v7693 = vpack.c.b16 %v7675, %v7674
        %v7694 = vpack.c.b16 %v7677, %v7676
        %v7695 = vpack.c.b16 %v7679, %v7678
        %v7713 = vshrl.u32 %v7680, 16
        %v7715 = vrot.slane %v7713, 7
        %v7716 = vshll.u32 %v7680, 16
        %v7718 = vor.u32 %v7715, %v7716
        %v7719 = vsel %vm561, %v565, %v7718
        %v7721 = vshrl.u32 %v7681, 16
        %v7723 = vrot.slane %v7721, 7
        %v7724 = vshll.u32 %v7681, 16
        %v7726 = vor.u32 %v7723, %v7724
        %v7727 = vsel %vm561, %v565, %v7726
        %v7729 = vshrl.u32 %v7682, 16
        %v7731 = vrot.slane %v7729, 7
        %v7732 = vshll.u32 %v7682, 16
        %v7734 = vor.u32 %v7731, %v7732
        %v7735 = vsel %vm561, %v565, %v7734
        %v7737 = vshrl.u32 %v7683, 16
        %v7739 = vrot.slane %v7737, 7
        %v7740 = vshll.u32 %v7683, 16
        %v7742 = vor.u32 %v7739, %v7740
        %v7743 = vsel %vm561, %v565, %v7742
        %v7745 = vshrl.u32 %v7684, 16
        %v7747 = vrot.slane %v7745, 7
        %v7748 = vshll.u32 %v7684, 16
        %v7750 = vor.u32 %v7747, %v7748
        %v7751 = vsel %vm561, %v565, %v7750
        %v7753 = vshrl.u32 %v7685, 16
        %v7755 = vrot.slane %v7753, 7
        %v7756 = vshll.u32 %v7685, 16
        %v7758 = vor.u32 %v7755, %v7756
        %v7759 = vsel %vm561, %v565, %v7758
        %v7761 = vshrl.u32 %v7686, 16
        %v7763 = vrot.slane %v7761, 7
        %v7764 = vshll.u32 %v7686, 16
        %v7766 = vor.u32 %v7763, %v7764
        %v7767 = vsel %vm561, %v565, %v7766
        %v7769 = vshrl.u32 %v7687, 16
        %v7771 = vrot.slane %v7769, 7
        %v7772 = vshll.u32 %v7687, 16
        %v7774 = vor.u32 %v7771, %v7772
        %v7775 = vsel %vm561, %v565, %v7774
        %v7777 = vshrl.u32 %v7688, 16
        %v7779 = vrot.slane %v7777, 7
        %v7780 = vshll.u32 %v7688, 16
        %v7782 = vor.u32 %v7779, %v7780
        %v7783 = vsel %vm561, %v565, %v7782
        %v7785 = vshrl.u32 %v7689, 16
        %v7787 = vrot.slane %v7785, 7
        %v7788 = vshll.u32 %v7689, 16
        %v7790 = vor.u32 %v7787, %v7788
        %v7791 = vsel %vm561, %v565, %v7790
        %v7793 = vshrl.u32 %v7690, 16
        %v7795 = vrot.slane %v7793, 7
        %v7796 = vshll.u32 %v7690, 16
        %v7798 = vor.u32 %v7795, %v7796
        %v7799 = vsel %vm561, %v565, %v7798
        %v7801 = vshrl.u32 %v7691, 16
        %v7803 = vrot.slane %v7801, 7
        %v7804 = vshll.u32 %v7691, 16
        %v7806 = vor.u32 %v7803, %v7804
        %v7807 = vsel %vm561, %v565, %v7806
        %v7809 = vshrl.u32 %v7692, 16
        %v7811 = vrot.slane %v7809, 7
        %v7812 = vshll.u32 %v7692, 16
        %v7814 = vor.u32 %v7811, %v7812
        %v7815 = vsel %vm561, %v565, %v7814
        %v7817 = vshrl.u32 %v7693, 16
        %v7819 = vrot.slane %v7817, 7
        %v7820 = vshll.u32 %v7693, 16
        %v7822 = vor.u32 %v7819, %v7820
        %v7823 = vsel %vm561, %v565, %v7822
        %v7825 = vshrl.u32 %v7694, 16
        %v7827 = vrot.slane %v7825, 7
        %v7828 = vshll.u32 %v7694, 16
        %v7830 = vor.u32 %v7827, %v7828
        %v7831 = vsel %vm561, %v565, %v7830
        %v7847 = vrot.slane %v7716, 1
        %v7848 = vor.u32 %v7713, %v7847
        %v7849 = vsel %vm706, %v7848, %v707
        %v7850 = vrot.slane %v7724, 1
        %v7851 = vor.u32 %v7721, %v7850
        %v7852 = vsel %vm706, %v7851, %v707
        %v7853 = vrot.slane %v7732, 1
        %v7854 = vor.u32 %v7729, %v7853
        %v7855 = vsel %vm706, %v7854, %v707
        %v7856 = vrot.slane %v7740, 1
        %v7857 = vor.u32 %v7737, %v7856
        %v7858 = vsel %vm706, %v7857, %v707
        %v7859 = vrot.slane %v7748, 1
        %v7860 = vor.u32 %v7745, %v7859
        %v7861 = vsel %vm706, %v7860, %v707
        %v7862 = vrot.slane %v7756, 1
        %v7863 = vor.u32 %v7753, %v7862
        %v7864 = vsel %vm706, %v7863, %v707
        %v7865 = vrot.slane %v7764, 1
        %v7866 = vor.u32 %v7761, %v7865
        %v7867 = vsel %vm706, %v7866, %v707
        %v7868 = vrot.slane %v7772, 1
        %v7869 = vor.u32 %v7769, %v7868
        %v7870 = vsel %vm706, %v7869, %v707
        %v7871 = vrot.slane %v7780, 1
        %v7872 = vor.u32 %v7777, %v7871
        %v7873 = vsel %vm706, %v7872, %v707
        %v7874 = vrot.slane %v7788, 1
        %v7875 = vor.u32 %v7785, %v7874
        %v7876 = vsel %vm706, %v7875, %v707
        %v7877 = vrot.slane %v7796, 1
        %v7878 = vor.u32 %v7793, %v7877
        %v7879 = vsel %vm706, %v7878, %v707
        %v7880 = vrot.slane %v7804, 1
        %v7881 = vor.u32 %v7801, %v7880
        %v7882 = vsel %vm706, %v7881, %v707
        %v7883 = vrot.slane %v7812, 1
        %v7884 = vor.u32 %v7809, %v7883
        %v7885 = vsel %vm706, %v7884, %v707
        %v7886 = vrot.slane %v7820, 1
        %v7887 = vor.u32 %v7817, %v7886
        %v7888 = vsel %vm706, %v7887, %v707
        %v7889 = vrot.slane %v7828, 1
        %v7890 = vor.u32 %v7825, %v7889
        %v7891 = vsel %vm706, %v7890, %v707
        %v7907 = vld [vmem:[%s8] sm:$0xf]
        %v7908 = vld [vmem:[%s8 + $0x4] sm:$0xf]
        %v7909 = vld [vmem:[%s8 + $0x8] sm:$0xf]
        %v7910 = vld [vmem:[%s8 + $0xc] sm:$0xf]
        %v7911 = vld [vmem:[%s8 + $0x10] sm:$0xf]
        %v7912 = vld [vmem:[%s8 + $0x14] sm:$0xf]
        %v7913 = vld [vmem:[%s8 + $0x18] sm:$0xf]
        %v7914 = vld [vmem:[%s8 + $0x1c] sm:$0xf]
        %v7915 = vld [vmem:[%s8 + $0x20] sm:$0xf]
        %v7916 = vld [vmem:[%s8 + $0x24] sm:$0xf]
        %v7917 = vld [vmem:[%s8 + $0x28] sm:$0xf]
        %v7918 = vld [vmem:[%s8 + $0x2c] sm:$0xf]
        %v7919 = vld [vmem:[%s8 + $0x30] sm:$0xf]
        %v7920 = vld [vmem:[%s8 + $0x34] sm:$0xf]
        %v7921 = vld [vmem:[%s8 + $0x38] sm:$0xf]
        %v7922 = vld [vmem:[%s8 + $0x3c] sm:$0xf]
        %v7923 = vld [vmem:[%s8 + $0x40] sm:$0xf]
        %v7924 = vld [vmem:[%s8 + $0x44] sm:$0xf]
        %v7925 = vld [vmem:[%s8 + $0x48] sm:$0xf]
        %v7926 = vld [vmem:[%s8 + $0x4c] sm:$0xf]
        %v7927 = vld [vmem:[%s8 + $0x50] sm:$0xf]
        %v7928 = vld [vmem:[%s8 + $0x54] sm:$0xf]
        %v7929 = vld [vmem:[%s8 + $0x58] sm:$0xf]
        %v7930 = vld [vmem:[%s8 + $0x5c] sm:$0xf]
        %v7931 = vld [vmem:[%s8 + $0x60] sm:$0xf]
        %v7932 = vld [vmem:[%s8 + $0x64] sm:$0xf]
        %v7933 = vld [vmem:[%s8 + $0x68] sm:$0xf]
        %v7934 = vld [vmem:[%s8 + $0x6c] sm:$0xf]
        %v7935 = vld [vmem:[%s8 + $0x70] sm:$0xf]
        %v7936 = vld [vmem:[%s8 + $0x74] sm:$0xf]
        %v7937 = vld [vmem:[%s8 + $0x78] sm:$0xf]
        %v7938 = vld [vmem:[%s8 + $0x7c] sm:$0xf]
        %v7939 = vld [vmem:[%s8 + $0x80] sm:$0xf]
        %v7940 = vld [vmem:[%s8 + $0x84] sm:$0xf]
        %v7941 = vld [vmem:[%s8 + $0x88] sm:$0xf]
        %v7942 = vld [vmem:[%s8 + $0x8c] sm:$0xf]
        %v7943 = vld [vmem:[%s8 + $0x90] sm:$0xf]
        %v7944 = vld [vmem:[%s8 + $0x94] sm:$0xf]
        %v7945 = vld [vmem:[%s8 + $0x98] sm:$0xf]
        %v7946 = vld [vmem:[%s8 + $0x9c] sm:$0xf]
        %v7947 = vld [vmem:[%s8 + $0xa0] sm:$0xf]
        %v7948 = vld [vmem:[%s8 + $0xa4] sm:$0xf]
        %v7949 = vld [vmem:[%s8 + $0xa8] sm:$0xf]
        %v7950 = vld [vmem:[%s8 + $0xac] sm:$0xf]
        %v7951 = vld [vmem:[%s8 + $0xb0] sm:$0xf]
        %v7952 = vld [vmem:[%s8 + $0xb4] sm:$0xf]
        %v7953 = vld [vmem:[%s8 + $0xb8] sm:$0xf]
        %v7954 = vld [vmem:[%s8 + $0xbc] sm:$0xf]
        %v7956 = vshrl.u32 %v7695, 16
        %v7958 = vrot.slane %v7956, 7
        %v7959 = vshll.u32 %v7695, 16
        %v7961 = vor.u32 %v7958, %v7959
        %v7962 = vsel %vm561, %v565, %v7961
        %v7964 = vrot.slane %v7959, 1
        %v7965 = vor.u32 %v7956, %v7964
        %v7966 = vsel %vm706, %v7965, %v707
        %v7968 = vld [vmem:[%s8 + $0xc0] sm:$0xf]
        %v7969 = vld [vmem:[%s8 + $0xc4] sm:$0xf]
        %v7970 = vld [vmem:[%s8 + $0xc8] sm:$0xf]
        %v7971 = vld [vmem:[%s8 + $0xcc] sm:$0xf]
        %v7972 = vld [vmem:[%s8 + $0xd0] sm:$0xf]
        %v7973 = vld [vmem:[%s8 + $0xd4] sm:$0xf]
        %v7974 = vld [vmem:[%s8 + $0xd8] sm:$0xf]
        %v7975 = vld [vmem:[%s8 + $0xdc] sm:$0xf]
        %v7976 = vld [vmem:[%s8 + $0xe0] sm:$0xf]
        %v7977 = vld [vmem:[%s8 + $0xe4] sm:$0xf]
        %v7978 = vld [vmem:[%s8 + $0xe8] sm:$0xf]
        %v7979 = vld [vmem:[%s8 + $0xec] sm:$0xf]
        %v7980 = vld [vmem:[%s8 + $0xf0] sm:$0xf]
        %v7981 = vld [vmem:[%s8 + $0xf4] sm:$0xf]
        %v7982 = vld [vmem:[%s8 + $0xf8] sm:$0xf]
        %v7983 = vld [vmem:[%s8 + $0xfc] sm:$0xf]
        %v7984 = vld [vmem:[%s8 + $0x100] sm:$0xf]
        %v7985 = vld [vmem:[%s8 + $0x104] sm:$0xf]
        %v7986 = vld [vmem:[%s8 + $0x108] sm:$0xf]
        %v7987 = vld [vmem:[%s8 + $0x10c] sm:$0xf]
        %v7988 = vld [vmem:[%s8 + $0x110] sm:$0xf]
        %v7989 = vld [vmem:[%s8 + $0x114] sm:$0xf]
        %v7990 = vld [vmem:[%s8 + $0x118] sm:$0xf]
        %v7991 = vld [vmem:[%s8 + $0x11c] sm:$0xf]
        %v7992 = vld [vmem:[%s8 + $0x120] sm:$0xf]
        %v7993 = vld [vmem:[%s8 + $0x124] sm:$0xf]
        %v7994 = vld [vmem:[%s8 + $0x128] sm:$0xf]
        %v7995 = vld [vmem:[%s8 + $0x12c] sm:$0xf]
        %v7996 = vld [vmem:[%s8 + $0x130] sm:$0xf]
        %v7997 = vld [vmem:[%s8 + $0x134] sm:$0xf]
        %v7998 = vld [vmem:[%s8 + $0x138] sm:$0xf]
        %v7999 = vld [vmem:[%s8 + $0x13c] sm:$0xf]
        %v8000 = vld [vmem:[%s8 + $0x140] sm:$0xf]
        %v8001 = vld [vmem:[%s8 + $0x144] sm:$0xf]
        %v8002 = vld [vmem:[%s8 + $0x148] sm:$0xf]
        %v8003 = vld [vmem:[%s8 + $0x14c] sm:$0xf]
        %v8004 = vld [vmem:[%s8 + $0x150] sm:$0xf]
        %v8005 = vld [vmem:[%s8 + $0x154] sm:$0xf]
        %v8006 = vld [vmem:[%s8 + $0x158] sm:$0xf]
        %v8007 = vld [vmem:[%s8 + $0x15c] sm:$0xf]
        %v8008 = vld [vmem:[%s8 + $0x160] sm:$0xf]
        %v8009 = vld [vmem:[%s8 + $0x164] sm:$0xf]
        %v8010 = vld [vmem:[%s8 + $0x168] sm:$0xf]
        %v8011 = vld [vmem:[%s8 + $0x16c] sm:$0xf]
        %v8012 = vld [vmem:[%s8 + $0x170] sm:$0xf]
        %v8013 = vld [vmem:[%s8 + $0x174] sm:$0xf]
        %v8014 = vld [vmem:[%s8 + $0x178] sm:$0xf]
        %v8015 = vld [vmem:[%s8 + $0x17c] sm:$0xf]
        %v8064 = vunpack.c.l.b16 %v7968
        %v8065 = vunpack.c.l.b16 %v7969
        %v8066 = vunpack.c.l.b16 %v7970
        %v8067 = vunpack.c.l.b16 %v7971
        %v8068 = vunpack.c.l.b16 %v7972
        %v8069 = vunpack.c.l.b16 %v7973
        %v8070 = vunpack.c.l.b16 %v7974
        %v8071 = vunpack.c.l.b16 %v7975
        %v8072 = vunpack.c.l.b16 %v7976
        %v8073 = vunpack.c.l.b16 %v7977
        %v8074 = vunpack.c.l.b16 %v7978
        %v8075 = vunpack.c.l.b16 %v7979
        %v8076 = vunpack.c.l.b16 %v7980
        %v8077 = vunpack.c.l.b16 %v7981
        %v8078 = vunpack.c.l.b16 %v7982
        %v8079 = vunpack.c.l.b16 %v7983
        %v8080 = vunpack.c.l.b16 %v7984
        %v8081 = vunpack.c.l.b16 %v7985
        %v8082 = vunpack.c.l.b16 %v7986
        %v8083 = vunpack.c.l.b16 %v7987
        %v8084 = vunpack.c.l.b16 %v7988
        %v8085 = vunpack.c.l.b16 %v7989
        %v8086 = vunpack.c.l.b16 %v7990
        %v8087 = vunpack.c.l.b16 %v7991
        %v8088 = vunpack.c.l.b16 %v7992
        %v8089 = vunpack.c.l.b16 %v7993
        %v8090 = vunpack.c.l.b16 %v7994
        %v8091 = vunpack.c.l.b16 %v7995
        %v8092 = vunpack.c.l.b16 %v7996
        %v8093 = vunpack.c.l.b16 %v7997
        %v8094 = vunpack.c.l.b16 %v7998
        %v8095 = vunpack.c.l.b16 %v7999
        %v8096 = vunpack.c.l.b16 %v8000
        %v8097 = vunpack.c.l.b16 %v8001
        %v8098 = vunpack.c.l.b16 %v8002
        %v8099 = vunpack.c.l.b16 %v8003
        %v8100 = vunpack.c.l.b16 %v8004
        %v8101 = vunpack.c.l.b16 %v8005
        %v8102 = vunpack.c.l.b16 %v8006
        %v8103 = vunpack.c.l.b16 %v8007
        %v8104 = vunpack.c.l.b16 %v8008
        %v8105 = vunpack.c.l.b16 %v8009
        %v8106 = vunpack.c.l.b16 %v8010
        %v8107 = vunpack.c.l.b16 %v8011
        %v8108 = vunpack.c.l.b16 %v8012
        %v8109 = vunpack.c.l.b16 %v8013
        %v8110 = vunpack.c.l.b16 %v8014
        %v8111 = vunpack.c.l.b16 %v8015
        %v8112 = vpack.c.b16 %v8065, %v8064
        %v8113 = vpack.c.b16 %v8067, %v8066
        %v8114 = vpack.c.b16 %v8069, %v8068
        %v8115 = vpack.c.b16 %v8071, %v8070
        %v8116 = vpack.c.b16 %v8073, %v8072
        %v8117 = vpack.c.b16 %v8075, %v8074
        %v8118 = vpack.c.b16 %v8077, %v8076
        %v8119 = vpack.c.b16 %v8079, %v8078
        %v8120 = vpack.c.b16 %v8081, %v8080
        %v8121 = vpack.c.b16 %v8083, %v8082
        %v8122 = vpack.c.b16 %v8085, %v8084
        %v8123 = vpack.c.b16 %v8087, %v8086
        %v8124 = vpack.c.b16 %v8089, %v8088
        %v8125 = vpack.c.b16 %v8091, %v8090
        %v8126 = vpack.c.b16 %v8093, %v8092
        %v8127 = vpack.c.b16 %v8095, %v8094
        %v8128 = vpack.c.b16 %v8097, %v8096
        %v8129 = vpack.c.b16 %v8099, %v8098
        %v8130 = vpack.c.b16 %v8101, %v8100
        %v8131 = vpack.c.b16 %v8103, %v8102
        %v8132 = vpack.c.b16 %v8105, %v8104
        %v8133 = vpack.c.b16 %v8107, %v8106
        %v8134 = vpack.c.b16 %v8109, %v8108
        %v8135 = vpack.c.b16 %v8111, %v8110
        %8160 = vmatpush.bf16.msra.mxu0 %v8119
        %8161 = vmatpush.bf16.msra.mxu0 %v8118
        %8162 = vmatpush.bf16.msra.mxu0 %v8117
        %8163 = vmatpush.bf16.msra.mxu0 %v8116
        %8164 = vmatpush.bf16.msra.mxu0 %v8115
        %8165 = vmatpush.bf16.msra.mxu0 %v8114
        %8166 = vmatpush.bf16.msra.mxu0 %v8113
        %8167 = vmatpush.bf16.msra.mxu0 %v8112
        %8168 = vmatmul.bf16.gmra.mxu0 %v7719
        %v8169 = vpop.f32.mrf.mxu0
        %v8170 = vadd.f32 0.0, %v8169
        %v8171 = vpop.f32.mrf.mxu0
        %v8172 = vadd.f32 0.0, %v8171
        %8173 = vmatmul.bf16.gmra.mxu0 %v7727
        %v8174 = vpop.f32.mrf.mxu0
        %v8175 = vadd.f32 0.0, %v8174
        %v8176 = vpop.f32.mrf.mxu0
        %v8177 = vadd.f32 0.0, %v8176
        %8178 = vmatmul.bf16.gmra.mxu0 %v7735
        %v8179 = vpop.f32.mrf.mxu0
        %v8180 = vadd.f32 0.0, %v8179
        %v8181 = vpop.f32.mrf.mxu0
        %v8182 = vadd.f32 0.0, %v8181
        %8183 = vmatmul.bf16.gmra.mxu0 %v7743
        %v8184 = vpop.f32.mrf.mxu0
        %v8185 = vadd.f32 0.0, %v8184
        %v8186 = vpop.f32.mrf.mxu0
        %v8187 = vadd.f32 0.0, %v8186
        %8188 = vmatmul.bf16.gmra.mxu0 %v7751
        %v8189 = vpop.f32.mrf.mxu0
        %v8190 = vadd.f32 0.0, %v8189
        %v8191 = vpop.f32.mrf.mxu0
        %v8192 = vadd.f32 0.0, %v8191
        %8193 = vmatmul.bf16.gmra.mxu0 %v7759
        %v8194 = vpop.f32.mrf.mxu0
        %v8195 = vadd.f32 0.0, %v8194
        %v8196 = vpop.f32.mrf.mxu0
        %v8197 = vadd.f32 0.0, %v8196
        %8198 = vmatmul.bf16.gmra.mxu0 %v7767
        %v8199 = vpop.f32.mrf.mxu0
        %v8200 = vadd.f32 0.0, %v8199
        %v8201 = vpop.f32.mrf.mxu0
        %v8202 = vadd.f32 0.0, %v8201
        %8203 = vmatmul.bf16.gmra.mxu0 %v7775
        %v8204 = vpop.f32.mrf.mxu0
        %v8205 = vadd.f32 0.0, %v8204
        %v8206 = vpop.f32.mrf.mxu0
        %v8207 = vadd.f32 0.0, %v8206
        %8208 = vmatmul.bf16.gmra.mxu0 %v7783
        %v8209 = vpop.f32.mrf.mxu0
        %v8210 = vadd.f32 0.0, %v8209
        %v8211 = vpop.f32.mrf.mxu0
        %v8212 = vadd.f32 0.0, %v8211
        %8213 = vmatmul.bf16.gmra.mxu0 %v7791
        %v8214 = vpop.f32.mrf.mxu0
        %v8215 = vadd.f32 0.0, %v8214
        %v8216 = vpop.f32.mrf.mxu0
        %v8217 = vadd.f32 0.0, %v8216
        %8218 = vmatmul.bf16.gmra.mxu0 %v7799
        %v8219 = vpop.f32.mrf.mxu0
        %v8220 = vadd.f32 0.0, %v8219
        %v8221 = vpop.f32.mrf.mxu0
        %v8222 = vadd.f32 0.0, %v8221
        %8223 = vmatmul.bf16.gmra.mxu0 %v7807
        %v8224 = vpop.f32.mrf.mxu0
        %v8225 = vadd.f32 0.0, %v8224
        %v8226 = vpop.f32.mrf.mxu0
        %v8227 = vadd.f32 0.0, %v8226
        %8228 = vmatmul.bf16.gmra.mxu0 %v7815
        %v8229 = vpop.f32.mrf.mxu0
        %v8230 = vadd.f32 0.0, %v8229
        %v8231 = vpop.f32.mrf.mxu0
        %v8232 = vadd.f32 0.0, %v8231
        %8233 = vmatmul.bf16.gmra.mxu0 %v7823
        %v8234 = vpop.f32.mrf.mxu0
        %v8235 = vadd.f32 0.0, %v8234
        %v8236 = vpop.f32.mrf.mxu0
        %v8237 = vadd.f32 0.0, %v8236
        %8238 = vmatmul.bf16.gmra.mxu0 %v7831
        %v8239 = vpop.f32.mrf.mxu0
        %v8240 = vadd.f32 0.0, %v8239
        %v8241 = vpop.f32.mrf.mxu0
        %v8242 = vadd.f32 0.0, %v8241
        %8243 = vmatmul.bf16.gmra.mxu0 %v7962
        %v8244 = vpop.f32.mrf.mxu0
        %v8245 = vadd.f32 0.0, %v8244
        %v8246 = vpop.f32.mrf.mxu0
        %v8247 = vadd.f32 0.0, %v8246
        %8248 = vdwg.mxu0
        %8249 = vmatpush.bf16.msra.mxu0 %v8127
        %8250 = vmatpush.bf16.msra.mxu0 %v8126
        %8251 = vmatpush.bf16.msra.mxu0 %v8125
        %8252 = vmatpush.bf16.msra.mxu0 %v8124
        %8253 = vmatpush.bf16.msra.mxu0 %v8123
        %8254 = vmatpush.bf16.msra.mxu0 %v8122
        %8255 = vmatpush.bf16.msra.mxu0 %v8121
        %8256 = vmatpush.bf16.msra.mxu0 %v8120
        %8257 = vmatmul.bf16.gmra.mxu0 %v7680
        %v8258 = vpop.f32.mrf.mxu0
        %v8259 = vadd.f32 %v8170, %v8258
        %v8260 = vpop.f32.mrf.mxu0
        %v8261 = vadd.f32 %v8172, %v8260
        %8262 = vmatmul.bf16.gmra.mxu0 %v7681
        %v8263 = vpop.f32.mrf.mxu0
        %v8264 = vadd.f32 %v8175, %v8263
        %v8265 = vpop.f32.mrf.mxu0
        %v8266 = vadd.f32 %v8177, %v8265
        %8267 = vmatmul.bf16.gmra.mxu0 %v7682
        %v8268 = vpop.f32.mrf.mxu0
        %v8269 = vadd.f32 %v8180, %v8268
        %v8270 = vpop.f32.mrf.mxu0
        %v8271 = vadd.f32 %v8182, %v8270
        %8272 = vmatmul.bf16.gmra.mxu0 %v7683
        %v8273 = vpop.f32.mrf.mxu0
        %v8274 = vadd.f32 %v8185, %v8273
        %v8275 = vpop.f32.mrf.mxu0
        %v8276 = vadd.f32 %v8187, %v8275
        %8277 = vmatmul.bf16.gmra.mxu0 %v7684
        %v8278 = vpop.f32.mrf.mxu0
        %v8279 = vadd.f32 %v8190, %v8278
        %v8280 = vpop.f32.mrf.mxu0
        %v8281 = vadd.f32 %v8192, %v8280
        %8282 = vmatmul.bf16.gmra.mxu0 %v7685
        %v8283 = vpop.f32.mrf.mxu0
        %v8284 = vadd.f32 %v8195, %v8283
        %v8285 = vpop.f32.mrf.mxu0
        %v8286 = vadd.f32 %v8197, %v8285
        %8287 = vmatmul.bf16.gmra.mxu0 %v7686
        %v8288 = vpop.f32.mrf.mxu0
        %v8289 = vadd.f32 %v8200, %v8288
        %v8290 = vpop.f32.mrf.mxu0
        %v8291 = vadd.f32 %v8202, %v8290
        %8292 = vmatmul.bf16.gmra.mxu0 %v7687
        %v8293 = vpop.f32.mrf.mxu0
        %v8294 = vadd.f32 %v8205, %v8293
        %v8295 = vpop.f32.mrf.mxu0
        %v8296 = vadd.f32 %v8207, %v8295
        %8297 = vmatmul.bf16.gmra.mxu0 %v7688
        %v8298 = vpop.f32.mrf.mxu0
        %v8299 = vadd.f32 %v8210, %v8298
        %v8300 = vpop.f32.mrf.mxu0
        %v8301 = vadd.f32 %v8212, %v8300
        %8302 = vmatmul.bf16.gmra.mxu0 %v7689
        %v8303 = vpop.f32.mrf.mxu0
        %v8304 = vadd.f32 %v8215, %v8303
        %v8305 = vpop.f32.mrf.mxu0
        %v8306 = vadd.f32 %v8217, %v8305
        %8307 = vmatmul.bf16.gmra.mxu0 %v7690
        %v8308 = vpop.f32.mrf.mxu0
        %v8309 = vadd.f32 %v8220, %v8308
        %v8310 = vpop.f32.mrf.mxu0
        %v8311 = vadd.f32 %v8222, %v8310
        %8312 = vmatmul.bf16.gmra.mxu0 %v7691
        %v8313 = vpop.f32.mrf.mxu0
        %v8314 = vadd.f32 %v8225, %v8313
        %v8315 = vpop.f32.mrf.mxu0
        %v8316 = vadd.f32 %v8227, %v8315
        %8317 = vmatmul.bf16.gmra.mxu0 %v7692
        %v8318 = vpop.f32.mrf.mxu0
        %v8319 = vadd.f32 %v8230, %v8318
        %v8320 = vpop.f32.mrf.mxu0
        %v8321 = vadd.f32 %v8232, %v8320
        %8322 = vmatmul.bf16.gmra.mxu0 %v7693
        %v8323 = vpop.f32.mrf.mxu0
        %v8324 = vadd.f32 %v8235, %v8323
        %v8325 = vpop.f32.mrf.mxu0
        %v8326 = vadd.f32 %v8237, %v8325
        %8327 = vmatmul.bf16.gmra.mxu0 %v7694
        %v8328 = vpop.f32.mrf.mxu0
        %v8329 = vadd.f32 %v8240, %v8328
        %v8330 = vpop.f32.mrf.mxu0
        %v8331 = vadd.f32 %v8242, %v8330
        %8332 = vmatmul.bf16.gmra.mxu0 %v7695
        %v8333 = vpop.f32.mrf.mxu0
        %v8334 = vadd.f32 %v8245, %v8333
        %v8335 = vpop.f32.mrf.mxu0
        %v8336 = vadd.f32 %v8247, %v8335
        %8337 = vdwg.mxu0
        %8338 = vmatpush.bf16.msra.mxu0 %v8135
        %8339 = vmatpush.bf16.msra.mxu0 %v8134
        %8340 = vmatpush.bf16.msra.mxu0 %v8133
        %8341 = vmatpush.bf16.msra.mxu0 %v8132
        %8342 = vmatpush.bf16.msra.mxu0 %v8131
        %8343 = vmatpush.bf16.msra.mxu0 %v8130
        %8344 = vmatpush.bf16.msra.mxu0 %v8129
        %8345 = vmatpush.bf16.msra.mxu0 %v8128
        %8346 = vmatmul.bf16.gmra.mxu0 %v7849
        %v8347 = vpop.f32.mrf.mxu0
        %v8348 = vadd.f32 %v8259, %v8347
        %v8349 = vpop.f32.mrf.mxu0
        %v8350 = vadd.f32 %v8261, %v8349
        %8351 = vmatmul.bf16.gmra.mxu0 %v7852
        %v8352 = vpop.f32.mrf.mxu0
        %v8353 = vadd.f32 %v8264, %v8352
        %v8354 = vpop.f32.mrf.mxu0
        %v8355 = vadd.f32 %v8266, %v8354
        %8356 = vmatmul.bf16.gmra.mxu0 %v7855
        %v8357 = vpop.f32.mrf.mxu0
        %v8358 = vadd.f32 %v8269, %v8357
        %v8359 = vpop.f32.mrf.mxu0
        %v8360 = vadd.f32 %v8271, %v8359
        %8361 = vmatmul.bf16.gmra.mxu0 %v7858
        %v8362 = vpop.f32.mrf.mxu0
        %v8363 = vadd.f32 %v8274, %v8362
        %v8364 = vpop.f32.mrf.mxu0
        %v8365 = vadd.f32 %v8276, %v8364
        %8366 = vmatmul.bf16.gmra.mxu0 %v7861
        %v8367 = vpop.f32.mrf.mxu0
        %v8368 = vadd.f32 %v8279, %v8367
        %v8369 = vpop.f32.mrf.mxu0
        %v8370 = vadd.f32 %v8281, %v8369
        %8371 = vmatmul.bf16.gmra.mxu0 %v7864
        %v8372 = vpop.f32.mrf.mxu0
        %v8373 = vadd.f32 %v8284, %v8372
        %v8374 = vpop.f32.mrf.mxu0
        %v8375 = vadd.f32 %v8286, %v8374
        %8376 = vmatmul.bf16.gmra.mxu0 %v7867
        %v8377 = vpop.f32.mrf.mxu0
        %v8378 = vadd.f32 %v8289, %v8377
        %v8379 = vpop.f32.mrf.mxu0
        %v8380 = vadd.f32 %v8291, %v8379
        %8381 = vmatmul.bf16.gmra.mxu0 %v7870
        %v8382 = vpop.f32.mrf.mxu0
        %v8383 = vadd.f32 %v8294, %v8382
        %v8384 = vpop.f32.mrf.mxu0
        %v8385 = vadd.f32 %v8296, %v8384
        %8386 = vmatmul.bf16.gmra.mxu0 %v7873
        %v8387 = vpop.f32.mrf.mxu0
        %v8388 = vadd.f32 %v8299, %v8387
        %v8389 = vpop.f32.mrf.mxu0
        %v8390 = vadd.f32 %v8301, %v8389
        %8391 = vmatmul.bf16.gmra.mxu0 %v7876
        %v8392 = vpop.f32.mrf.mxu0
        %v8393 = vadd.f32 %v8304, %v8392
        %v8394 = vpop.f32.mrf.mxu0
        %v8395 = vadd.f32 %v8306, %v8394
        %8396 = vmatmul.bf16.gmra.mxu0 %v7879
        %v8397 = vpop.f32.mrf.mxu0
        %v8398 = vadd.f32 %v8309, %v8397
        %v8399 = vpop.f32.mrf.mxu0
        %v8400 = vadd.f32 %v8311, %v8399
        %8401 = vmatmul.bf16.gmra.mxu0 %v7882
        %v8402 = vpop.f32.mrf.mxu0
        %v8403 = vadd.f32 %v8314, %v8402
        %v8404 = vpop.f32.mrf.mxu0
        %v8405 = vadd.f32 %v8316, %v8404
        %8406 = vmatmul.bf16.gmra.mxu0 %v7885
        %v8407 = vpop.f32.mrf.mxu0
        %v8408 = vadd.f32 %v8319, %v8407
        %v8409 = vpop.f32.mrf.mxu0
        %v8410 = vadd.f32 %v8321, %v8409
        %8411 = vmatmul.bf16.gmra.mxu0 %v7888
        %v8412 = vpop.f32.mrf.mxu0
        %v8413 = vadd.f32 %v8324, %v8412
        %v8414 = vpop.f32.mrf.mxu0
        %v8415 = vadd.f32 %v8326, %v8414
        %8416 = vmatmul.bf16.gmra.mxu0 %v7891
        %v8417 = vpop.f32.mrf.mxu0
        %v8418 = vadd.f32 %v8329, %v8417
        %v8419 = vpop.f32.mrf.mxu0
        %v8420 = vadd.f32 %v8331, %v8419
        %8421 = vmatmul.bf16.gmra.mxu0 %v7966
        %v8422 = vpop.f32.mrf.mxu0
        %v8423 = vadd.f32 %v8334, %v8422
        %v8424 = vpop.f32.mrf.mxu0
        %v8425 = vadd.f32 %v8336, %v8424
        %8426 = vdwg.mxu0
        %v8475 = vunpack.c.l.b16 %v7907
        %v8476 = vunpack.c.l.b16 %v7908
        %v8477 = vunpack.c.l.b16 %v7909
        %v8478 = vunpack.c.l.b16 %v7910
        %v8479 = vunpack.c.l.b16 %v7911
        %v8480 = vunpack.c.l.b16 %v7912
        %v8481 = vunpack.c.l.b16 %v7913
        %v8482 = vunpack.c.l.b16 %v7914
        %v8483 = vunpack.c.l.b16 %v7915
        %v8484 = vunpack.c.l.b16 %v7916
        %v8485 = vunpack.c.l.b16 %v7917
        %v8486 = vunpack.c.l.b16 %v7918
        %v8487 = vunpack.c.l.b16 %v7919
        %v8488 = vunpack.c.l.b16 %v7920
        %v8489 = vunpack.c.l.b16 %v7921
        %v8490 = vunpack.c.l.b16 %v7922
        %v8491 = vunpack.c.l.b16 %v7923
        %v8492 = vunpack.c.l.b16 %v7924
        %v8493 = vunpack.c.l.b16 %v7925
        %v8494 = vunpack.c.l.b16 %v7926
        %v8495 = vunpack.c.l.b16 %v7927
        %v8496 = vunpack.c.l.b16 %v7928
        %v8497 = vunpack.c.l.b16 %v7929
        %v8498 = vunpack.c.l.b16 %v7930
        %v8499 = vunpack.c.l.b16 %v7931
        %v8500 = vunpack.c.l.b16 %v7932
        %v8501 = vunpack.c.l.b16 %v7933
        %v8502 = vunpack.c.l.b16 %v7934
        %v8503 = vunpack.c.l.b16 %v7935
        %v8504 = vunpack.c.l.b16 %v7936
        %v8505 = vunpack.c.l.b16 %v7937
        %v8506 = vunpack.c.l.b16 %v7938
        %v8507 = vunpack.c.l.b16 %v7939
        %v8508 = vunpack.c.l.b16 %v7940
        %v8509 = vunpack.c.l.b16 %v7941
        %v8510 = vunpack.c.l.b16 %v7942
        %v8511 = vunpack.c.l.b16 %v7943
        %v8512 = vunpack.c.l.b16 %v7944
        %v8513 = vunpack.c.l.b16 %v7945
        %v8514 = vunpack.c.l.b16 %v7946
        %v8515 = vunpack.c.l.b16 %v7947
        %v8516 = vunpack.c.l.b16 %v7948
        %v8517 = vunpack.c.l.b16 %v7949
        %v8518 = vunpack.c.l.b16 %v7950
        %v8519 = vunpack.c.l.b16 %v7951
        %v8520 = vunpack.c.l.b16 %v7952
        %v8521 = vunpack.c.l.b16 %v7953
        %v8522 = vunpack.c.l.b16 %v7954
        %v8523 = vpack.c.b16 %v8476, %v8475
        %v8524 = vpack.c.b16 %v8478, %v8477
        %v8525 = vpack.c.b16 %v8480, %v8479
        %v8526 = vpack.c.b16 %v8482, %v8481
        %v8527 = vpack.c.b16 %v8484, %v8483
        %v8528 = vpack.c.b16 %v8486, %v8485
        %v8529 = vpack.c.b16 %v8488, %v8487
        %v8530 = vpack.c.b16 %v8490, %v8489
        %v8531 = vpack.c.b16 %v8492, %v8491
        %v8532 = vpack.c.b16 %v8494, %v8493
        %v8533 = vpack.c.b16 %v8496, %v8495
        %v8534 = vpack.c.b16 %v8498, %v8497
        %v8535 = vpack.c.b16 %v8500, %v8499
        %v8536 = vpack.c.b16 %v8502, %v8501
        %v8537 = vpack.c.b16 %v8504, %v8503
        %v8538 = vpack.c.b16 %v8506, %v8505
        %v8539 = vpack.c.b16 %v8508, %v8507
        %v8540 = vpack.c.b16 %v8510, %v8509
        %v8541 = vpack.c.b16 %v8512, %v8511
        %v8542 = vpack.c.b16 %v8514, %v8513
        %v8543 = vpack.c.b16 %v8516, %v8515
        %v8544 = vpack.c.b16 %v8518, %v8517
        %v8545 = vpack.c.b16 %v8520, %v8519
        %v8546 = vpack.c.b16 %v8522, %v8521
        %8571 = vmatpush.bf16.msra.mxu0 %v8530
        %8572 = vmatpush.bf16.msra.mxu0 %v8529
        %8573 = vmatpush.bf16.msra.mxu0 %v8528
        %8574 = vmatpush.bf16.msra.mxu0 %v8527
        %8575 = vmatpush.bf16.msra.mxu0 %v8526
        %8576 = vmatpush.bf16.msra.mxu0 %v8525
        %8577 = vmatpush.bf16.msra.mxu0 %v8524
        %8578 = vmatpush.bf16.msra.mxu0 %v8523
        %8579 = vmatmul.bf16.gmra.mxu0 %v569
        %v8580 = vpop.f32.mrf.mxu0
        %v8581 = vadd.f32 %v8348, %v8580
        %v8582 = vpop.f32.mrf.mxu0
        %v8583 = vadd.f32 %v8350, %v8582
        %8584 = vmatmul.bf16.gmra.mxu0 %v7719
        %v8585 = vpop.f32.mrf.mxu0
        %v8586 = vadd.f32 %v8353, %v8585
        %v8587 = vpop.f32.mrf.mxu0
        %v8588 = vadd.f32 %v8355, %v8587
        %8589 = vmatmul.bf16.gmra.mxu0 %v7727
        %v8590 = vpop.f32.mrf.mxu0
        %v8591 = vadd.f32 %v8358, %v8590
        %v8592 = vpop.f32.mrf.mxu0
        %v8593 = vadd.f32 %v8360, %v8592
        %8594 = vmatmul.bf16.gmra.mxu0 %v7735
        %v8595 = vpop.f32.mrf.mxu0
        %v8596 = vadd.f32 %v8363, %v8595
        %v8597 = vpop.f32.mrf.mxu0
        %v8598 = vadd.f32 %v8365, %v8597
        %8599 = vmatmul.bf16.gmra.mxu0 %v7743
        %v8600 = vpop.f32.mrf.mxu0
        %v8601 = vadd.f32 %v8368, %v8600
        %v8602 = vpop.f32.mrf.mxu0
        %v8603 = vadd.f32 %v8370, %v8602
        %8604 = vmatmul.bf16.gmra.mxu0 %v7751
        %v8605 = vpop.f32.mrf.mxu0
        %v8606 = vadd.f32 %v8373, %v8605
        %v8607 = vpop.f32.mrf.mxu0
        %v8608 = vadd.f32 %v8375, %v8607
        %8609 = vmatmul.bf16.gmra.mxu0 %v7759
        %v8610 = vpop.f32.mrf.mxu0
        %v8611 = vadd.f32 %v8378, %v8610
        %v8612 = vpop.f32.mrf.mxu0
        %v8613 = vadd.f32 %v8380, %v8612
        %8614 = vmatmul.bf16.gmra.mxu0 %v7767
        %v8615 = vpop.f32.mrf.mxu0
        %v8616 = vadd.f32 %v8383, %v8615
        %v8617 = vpop.f32.mrf.mxu0
        %v8618 = vadd.f32 %v8385, %v8617
        %8619 = vmatmul.bf16.gmra.mxu0 %v7775
        %v8620 = vpop.f32.mrf.mxu0
        %v8621 = vadd.f32 %v8388, %v8620
        %v8622 = vpop.f32.mrf.mxu0
        %v8623 = vadd.f32 %v8390, %v8622
        %8624 = vmatmul.bf16.gmra.mxu0 %v7783
        %v8625 = vpop.f32.mrf.mxu0
        %v8626 = vadd.f32 %v8393, %v8625
        %v8627 = vpop.f32.mrf.mxu0
        %v8628 = vadd.f32 %v8395, %v8627
        %8629 = vmatmul.bf16.gmra.mxu0 %v7791
        %v8630 = vpop.f32.mrf.mxu0
        %v8631 = vadd.f32 %v8398, %v8630
        %v8632 = vpop.f32.mrf.mxu0
        %v8633 = vadd.f32 %v8400, %v8632
        %8634 = vmatmul.bf16.gmra.mxu0 %v7799
        %v8635 = vpop.f32.mrf.mxu0
        %v8636 = vadd.f32 %v8403, %v8635
        %v8637 = vpop.f32.mrf.mxu0
        %v8638 = vadd.f32 %v8405, %v8637
        %8639 = vmatmul.bf16.gmra.mxu0 %v7807
        %v8640 = vpop.f32.mrf.mxu0
        %v8641 = vadd.f32 %v8408, %v8640
        %v8642 = vpop.f32.mrf.mxu0
        %v8643 = vadd.f32 %v8410, %v8642
        %8644 = vmatmul.bf16.gmra.mxu0 %v7815
        %v8645 = vpop.f32.mrf.mxu0
        %v8646 = vadd.f32 %v8413, %v8645
        %v8647 = vpop.f32.mrf.mxu0
        %v8648 = vadd.f32 %v8415, %v8647
        %8649 = vmatmul.bf16.gmra.mxu0 %v7823
        %v8650 = vpop.f32.mrf.mxu0
        %v8651 = vadd.f32 %v8418, %v8650
        %v8652 = vpop.f32.mrf.mxu0
        %v8653 = vadd.f32 %v8420, %v8652
        %8654 = vmatmul.bf16.gmra.mxu0 %v7831
        %v8655 = vpop.f32.mrf.mxu0
        %v8656 = vadd.f32 %v8423, %v8655
        %v8657 = vpop.f32.mrf.mxu0
        %v8658 = vadd.f32 %v8425, %v8657
        %8659 = vdwg.mxu0
        %8660 = vmatpush.bf16.msra.mxu0 %v8538
        %8661 = vmatpush.bf16.msra.mxu0 %v8537
        %8662 = vmatpush.bf16.msra.mxu0 %v8536
        %8663 = vmatpush.bf16.msra.mxu0 %v8535
        %8664 = vmatpush.bf16.msra.mxu0 %v8534
        %8665 = vmatpush.bf16.msra.mxu0 %v8533
        %8666 = vmatpush.bf16.msra.mxu0 %v8532
        %8667 = vmatpush.bf16.msra.mxu0 %v8531
        %8668 = vmatmul.bf16.gmra.mxu0 0
        %v8669 = vpop.f32.mrf.mxu0
        %v8670 = vadd.f32 %v8581, %v8669
        %v8671 = vpop.f32.mrf.mxu0
        %v8672 = vadd.f32 %v8583, %v8671
        %8673 = vmatmul.bf16.gmra.mxu0 %v7680
        %v8674 = vpop.f32.mrf.mxu0
        %v8675 = vadd.f32 %v8586, %v8674
        %v8676 = vpop.f32.mrf.mxu0
        %v8677 = vadd.f32 %v8588, %v8676
        %8678 = vmatmul.bf16.gmra.mxu0 %v7681
        %v8679 = vpop.f32.mrf.mxu0
        %v8680 = vadd.f32 %v8591, %v8679
        %v8681 = vpop.f32.mrf.mxu0
        %v8682 = vadd.f32 %v8593, %v8681
        %8683 = vmatmul.bf16.gmra.mxu0 %v7682
        %v8684 = vpop.f32.mrf.mxu0
        %v8685 = vadd.f32 %v8596, %v8684
        %v8686 = vpop.f32.mrf.mxu0
        %v8687 = vadd.f32 %v8598, %v8686
        %8688 = vmatmul.bf16.gmra.mxu0 %v7683
        %v8689 = vpop.f32.mrf.mxu0
        %v8690 = vadd.f32 %v8601, %v8689
        %v8691 = vpop.f32.mrf.mxu0
        %v8692 = vadd.f32 %v8603, %v8691
        %8693 = vmatmul.bf16.gmra.mxu0 %v7684
        %v8694 = vpop.f32.mrf.mxu0
        %v8695 = vadd.f32 %v8606, %v8694
        %v8696 = vpop.f32.mrf.mxu0
        %v8697 = vadd.f32 %v8608, %v8696
        %8698 = vmatmul.bf16.gmra.mxu0 %v7685
        %v8699 = vpop.f32.mrf.mxu0
        %v8700 = vadd.f32 %v8611, %v8699
        %v8701 = vpop.f32.mrf.mxu0
        %v8702 = vadd.f32 %v8613, %v8701
        %8703 = vmatmul.bf16.gmra.mxu0 %v7686
        %v8704 = vpop.f32.mrf.mxu0
        %v8705 = vadd.f32 %v8616, %v8704
        %v8706 = vpop.f32.mrf.mxu0
        %v8707 = vadd.f32 %v8618, %v8706
        %8708 = vmatmul.bf16.gmra.mxu0 %v7687
        %v8709 = vpop.f32.mrf.mxu0
        %v8710 = vadd.f32 %v8621, %v8709
        %v8711 = vpop.f32.mrf.mxu0
        %v8712 = vadd.f32 %v8623, %v8711
        %8713 = vmatmul.bf16.gmra.mxu0 %v7688
        %v8714 = vpop.f32.mrf.mxu0
        %v8715 = vadd.f32 %v8626, %v8714
        %v8716 = vpop.f32.mrf.mxu0
        %v8717 = vadd.f32 %v8628, %v8716
        %8718 = vmatmul.bf16.gmra.mxu0 %v7689
        %v8719 = vpop.f32.mrf.mxu0
        %v8720 = vadd.f32 %v8631, %v8719
        %v8721 = vpop.f32.mrf.mxu0
        %v8722 = vadd.f32 %v8633, %v8721
        %8723 = vmatmul.bf16.gmra.mxu0 %v7690
        %v8724 = vpop.f32.mrf.mxu0
        %v8725 = vadd.f32 %v8636, %v8724
        %v8726 = vpop.f32.mrf.mxu0
        %v8727 = vadd.f32 %v8638, %v8726
        %8728 = vmatmul.bf16.gmra.mxu0 %v7691
        %v8729 = vpop.f32.mrf.mxu0
        %v8730 = vadd.f32 %v8641, %v8729
        %v8731 = vpop.f32.mrf.mxu0
        %v8732 = vadd.f32 %v8643, %v8731
        %8733 = vmatmul.bf16.gmra.mxu0 %v7692
        %v8734 = vpop.f32.mrf.mxu0
        %v8735 = vadd.f32 %v8646, %v8734
        %v8736 = vpop.f32.mrf.mxu0
        %v8737 = vadd.f32 %v8648, %v8736
        %8738 = vmatmul.bf16.gmra.mxu0 %v7693
        %v8739 = vpop.f32.mrf.mxu0
        %v8740 = vadd.f32 %v8651, %v8739
        %v8741 = vpop.f32.mrf.mxu0
        %v8742 = vadd.f32 %v8653, %v8741
        %8743 = vmatmul.bf16.gmra.mxu0 %v7694
        %v8744 = vpop.f32.mrf.mxu0
        %v8745 = vadd.f32 %v8656, %v8744
        %v8746 = vpop.f32.mrf.mxu0
        %v8747 = vadd.f32 %v8658, %v8746
        %8748 = vdwg.mxu0
        %8749 = vmatpush.bf16.msra.mxu0 %v8546
        %8750 = vmatpush.bf16.msra.mxu0 %v8545
        %8751 = vmatpush.bf16.msra.mxu0 %v8544
        %8752 = vmatpush.bf16.msra.mxu0 %v8543
        %8753 = vmatpush.bf16.msra.mxu0 %v8542
        %8754 = vmatpush.bf16.msra.mxu0 %v8541
        %8755 = vmatpush.bf16.msra.mxu0 %v8540
        %8756 = vmatpush.bf16.msra.mxu0 %v8539
        %8757 = vmatmul.bf16.gmra.mxu0 %v709
        %v8758 = vpop.f32.mrf.mxu0
        %v8759 = vadd.f32 %v8670, %v8758
        %v8760 = vpop.f32.mrf.mxu0
        %v8761 = vadd.f32 %v8672, %v8760
        %8762 = vmatmul.bf16.gmra.mxu0 %v7849
        %v8763 = vpop.f32.mrf.mxu0
        %v8764 = vadd.f32 %v8675, %v8763
        %v8765 = vpop.f32.mrf.mxu0
        %v8766 = vadd.f32 %v8677, %v8765
        %8767 = vmatmul.bf16.gmra.mxu0 %v7852
        %v8768 = vpop.f32.mrf.mxu0
        %v8769 = vadd.f32 %v8680, %v8768
        %v8770 = vpop.f32.mrf.mxu0
        %v8771 = vadd.f32 %v8682, %v8770
        %8772 = vmatmul.bf16.gmra.mxu0 %v7855
        %v8773 = vpop.f32.mrf.mxu0
        %v8774 = vadd.f32 %v8685, %v8773
        %v8775 = vpop.f32.mrf.mxu0
        %v8776 = vadd.f32 %v8687, %v8775
        %8777 = vmatmul.bf16.gmra.mxu0 %v7858
        %v8778 = vpop.f32.mrf.mxu0
        %v8779 = vadd.f32 %v8690, %v8778
        %v8780 = vpop.f32.mrf.mxu0
        %v8781 = vadd.f32 %v8692, %v8780
        %8782 = vmatmul.bf16.gmra.mxu0 %v7861
        %v8783 = vpop.f32.mrf.mxu0
        %v8784 = vadd.f32 %v8695, %v8783
        %v8785 = vpop.f32.mrf.mxu0
        %v8786 = vadd.f32 %v8697, %v8785
        %8787 = vmatmul.bf16.gmra.mxu0 %v7864
        %v8788 = vpop.f32.mrf.mxu0
        %v8789 = vadd.f32 %v8700, %v8788
        %v8790 = vpop.f32.mrf.mxu0
        %v8791 = vadd.f32 %v8702, %v8790
        %8792 = vmatmul.bf16.gmra.mxu0 %v7867
        %v8793 = vpop.f32.mrf.mxu0
        %v8794 = vadd.f32 %v8705, %v8793
        %v8795 = vpop.f32.mrf.mxu0
        %v8796 = vadd.f32 %v8707, %v8795
        %8797 = vmatmul.bf16.gmra.mxu0 %v7870
        %v8798 = vpop.f32.mrf.mxu0
        %v8799 = vadd.f32 %v8710, %v8798
        %v8800 = vpop.f32.mrf.mxu0
        %v8801 = vadd.f32 %v8712, %v8800
        %8802 = vmatmul.bf16.gmra.mxu0 %v7873
        %v8803 = vpop.f32.mrf.mxu0
        %v8804 = vadd.f32 %v8715, %v8803
        %v8805 = vpop.f32.mrf.mxu0
        %v8806 = vadd.f32 %v8717, %v8805
        %8807 = vmatmul.bf16.gmra.mxu0 %v7876
        %v8808 = vpop.f32.mrf.mxu0
        %v8809 = vadd.f32 %v8720, %v8808
        %v8810 = vpop.f32.mrf.mxu0
        %v8811 = vadd.f32 %v8722, %v8810
        %8812 = vmatmul.bf16.gmra.mxu0 %v7879
        %v8813 = vpop.f32.mrf.mxu0
        %v8814 = vadd.f32 %v8725, %v8813
        %v8815 = vpop.f32.mrf.mxu0
        %v8816 = vadd.f32 %v8727, %v8815
        %8817 = vmatmul.bf16.gmra.mxu0 %v7882
        %v8818 = vpop.f32.mrf.mxu0
        %v8819 = vadd.f32 %v8730, %v8818
        %v8820 = vpop.f32.mrf.mxu0
        %v8821 = vadd.f32 %v8732, %v8820
        %8822 = vmatmul.bf16.gmra.mxu0 %v7885
        %v8823 = vpop.f32.mrf.mxu0
        %v8824 = vadd.f32 %v8735, %v8823
        %v8825 = vpop.f32.mrf.mxu0
        %v8826 = vadd.f32 %v8737, %v8825
        %8827 = vmatmul.bf16.gmra.mxu0 %v7888
        %v8828 = vpop.f32.mrf.mxu0
        %v8829 = vadd.f32 %v8740, %v8828
        %v8830 = vpop.f32.mrf.mxu0
        %v8831 = vadd.f32 %v8742, %v8830
        %8832 = vmatmul.bf16.gmra.mxu0 %v7891
        %v8833 = vpop.f32.mrf.mxu0
        %v8834 = vadd.f32 %v8745, %v8833
        %v8835 = vpop.f32.mrf.mxu0
        %v8836 = vadd.f32 %v8747, %v8835
        %8837 = vdwg.mxu0
        %v8838 = vld [vmem:[%s8 + $0x180] sm:$0xf]
        %v8839 = vld [vmem:[%s8 + $0x184] sm:$0xf]
        %v8840 = vld [vmem:[%s8 + $0x188] sm:$0xf]
        %v8841 = vld [vmem:[%s8 + $0x18c] sm:$0xf]
        %v8842 = vld [vmem:[%s8 + $0x190] sm:$0xf]
        %v8843 = vld [vmem:[%s8 + $0x194] sm:$0xf]
        %v8844 = vld [vmem:[%s8 + $0x198] sm:$0xf]
        %v8845 = vld [vmem:[%s8 + $0x19c] sm:$0xf]
        %v8846 = vld [vmem:[%s8 + $0x1a0] sm:$0xf]
        %v8847 = vld [vmem:[%s8 + $0x1a4] sm:$0xf]
        %v8848 = vld [vmem:[%s8 + $0x1a8] sm:$0xf]
        %v8849 = vld [vmem:[%s8 + $0x1ac] sm:$0xf]
        %v8850 = vld [vmem:[%s8 + $0x1b0] sm:$0xf]
        %v8851 = vld [vmem:[%s8 + $0x1b4] sm:$0xf]
        %v8852 = vld [vmem:[%s8 + $0x1b8] sm:$0xf]
        %v8853 = vld [vmem:[%s8 + $0x1bc] sm:$0xf]
        %v8854 = vld [vmem:[%s8 + $0x1c0] sm:$0xf]
        %v8855 = vld [vmem:[%s8 + $0x1c4] sm:$0xf]
        %v8856 = vld [vmem:[%s8 + $0x1c8] sm:$0xf]
        %v8857 = vld [vmem:[%s8 + $0x1cc] sm:$0xf]
        %v8858 = vld [vmem:[%s8 + $0x1d0] sm:$0xf]
        %v8859 = vld [vmem:[%s8 + $0x1d4] sm:$0xf]
        %v8860 = vld [vmem:[%s8 + $0x1d8] sm:$0xf]
        %v8861 = vld [vmem:[%s8 + $0x1dc] sm:$0xf]
        %v8862 = vld [vmem:[%s8 + $0x1e0] sm:$0xf]
        %v8863 = vld [vmem:[%s8 + $0x1e4] sm:$0xf]
        %v8864 = vld [vmem:[%s8 + $0x1e8] sm:$0xf]
        %v8865 = vld [vmem:[%s8 + $0x1ec] sm:$0xf]
        %v8866 = vld [vmem:[%s8 + $0x1f0] sm:$0xf]
        %v8867 = vld [vmem:[%s8 + $0x1f4] sm:$0xf]
        %v8868 = vld [vmem:[%s8 + $0x1f8] sm:$0xf]
        %v8869 = vld [vmem:[%s8 + $0x1fc] sm:$0xf]
        %v8870 = vld [vmem:[%s8 + $0x200] sm:$0xf]
        %v8871 = vld [vmem:[%s8 + $0x204] sm:$0xf]
        %v8872 = vld [vmem:[%s8 + $0x208] sm:$0xf]
        %v8873 = vld [vmem:[%s8 + $0x20c] sm:$0xf]
        %v8874 = vld [vmem:[%s8 + $0x210] sm:$0xf]
        %v8875 = vld [vmem:[%s8 + $0x214] sm:$0xf]
        %v8876 = vld [vmem:[%s8 + $0x218] sm:$0xf]
        %v8877 = vld [vmem:[%s8 + $0x21c] sm:$0xf]
        %v8878 = vld [vmem:[%s8 + $0x220] sm:$0xf]
        %v8879 = vld [vmem:[%s8 + $0x224] sm:$0xf]
        %v8880 = vld [vmem:[%s8 + $0x228] sm:$0xf]
        %v8881 = vld [vmem:[%s8 + $0x22c] sm:$0xf]
        %v8882 = vld [vmem:[%s8 + $0x230] sm:$0xf]
        %v8883 = vld [vmem:[%s8 + $0x234] sm:$0xf]
        %v8884 = vld [vmem:[%s8 + $0x238] sm:$0xf]
        %v8885 = vld [vmem:[%s8 + $0x23c] sm:$0xf]
        %v8934 = vunpack.c.l.b16 %v8838
        %v8935 = vunpack.c.l.b16 %v8839
        %v8936 = vunpack.c.l.b16 %v8840
        %v8937 = vunpack.c.l.b16 %v8841
        %v8938 = vunpack.c.l.b16 %v8842
        %v8939 = vunpack.c.l.b16 %v8843
        %v8940 = vunpack.c.l.b16 %v8844
        %v8941 = vunpack.c.l.b16 %v8845
        %v8942 = vunpack.c.l.b16 %v8846
        %v8943 = vunpack.c.l.b16 %v8847
        %v8944 = vunpack.c.l.b16 %v8848
        %v8945 = vunpack.c.l.b16 %v8849
        %v8946 = vunpack.c.l.b16 %v8850
        %v8947 = vunpack.c.l.b16 %v8851
        %v8948 = vunpack.c.l.b16 %v8852
        %v8949 = vunpack.c.l.b16 %v8853
        %v8950 = vunpack.c.l.b16 %v8854
        %v8951 = vunpack.c.l.b16 %v8855
        %v8952 = vunpack.c.l.b16 %v8856
        %v8953 = vunpack.c.l.b16 %v8857
        %v8954 = vunpack.c.l.b16 %v8858
        %v8955 = vunpack.c.l.b16 %v8859
        %v8956 = vunpack.c.l.b16 %v8860
        %v8957 = vunpack.c.l.b16 %v8861
        %v8958 = vunpack.c.l.b16 %v8862
        %v8959 = vunpack.c.l.b16 %v8863
        %v8960 = vunpack.c.l.b16 %v8864
        %v8961 = vunpack.c.l.b16 %v8865
        %v8962 = vunpack.c.l.b16 %v8866
        %v8963 = vunpack.c.l.b16 %v8867
        %v8964 = vunpack.c.l.b16 %v8868
        %v8965 = vunpack.c.l.b16 %v8869
        %v8966 = vunpack.c.l.b16 %v8870
        %v8967 = vunpack.c.l.b16 %v8871
        %v8968 = vunpack.c.l.b16 %v8872
        %v8969 = vunpack.c.l.b16 %v8873
        %v8970 = vunpack.c.l.b16 %v8874
        %v8971 = vunpack.c.l.b16 %v8875
        %v8972 = vunpack.c.l.b16 %v8876
        %v8973 = vunpack.c.l.b16 %v8877
        %v8974 = vunpack.c.l.b16 %v8878
        %v8975 = vunpack.c.l.b16 %v8879
        %v8976 = vunpack.c.l.b16 %v8880
        %v8977 = vunpack.c.l.b16 %v8881
        %v8978 = vunpack.c.l.b16 %v8882
        %v8979 = vunpack.c.l.b16 %v8883
        %v8980 = vunpack.c.l.b16 %v8884
        %v8981 = vunpack.c.l.b16 %v8885
        %v8982 = vpack.c.b16 %v8935, %v8934
        %v8983 = vpack.c.b16 %v8937, %v8936
        %v8984 = vpack.c.b16 %v8939, %v8938
        %v8985 = vpack.c.b16 %v8941, %v8940
        %v8986 = vpack.c.b16 %v8943, %v8942
        %v8987 = vpack.c.b16 %v8945, %v8944
        %v8988 = vpack.c.b16 %v8947, %v8946
        %v8989 = vpack.c.b16 %v8949, %v8948
        %v8990 = vpack.c.b16 %v8951, %v8950
        %v8991 = vpack.c.b16 %v8953, %v8952
        %v8992 = vpack.c.b16 %v8955, %v8954
        %v8993 = vpack.c.b16 %v8957, %v8956
        %v8994 = vpack.c.b16 %v8959, %v8958
        %v8995 = vpack.c.b16 %v8961, %v8960
        %v8996 = vpack.c.b16 %v8963, %v8962
        %v8997 = vpack.c.b16 %v8965, %v8964
        %v8998 = vpack.c.b16 %v8967, %v8966
        %v8999 = vpack.c.b16 %v8969, %v8968
        %v9000 = vpack.c.b16 %v8971, %v8970
        %v9001 = vpack.c.b16 %v8973, %v8972
        %v9002 = vpack.c.b16 %v8975, %v8974
        %v9003 = vpack.c.b16 %v8977, %v8976
        %v9004 = vpack.c.b16 %v8979, %v8978
        %v9005 = vpack.c.b16 %v8981, %v8980
        %9030 = vmatpush.bf16.msra.mxu0 %v8989
        %9031 = vmatpush.bf16.msra.mxu0 %v8988
        %9032 = vmatpush.bf16.msra.mxu0 %v8987
        %9033 = vmatpush.bf16.msra.mxu0 %v8986
        %9034 = vmatpush.bf16.msra.mxu0 %v8985
        %9035 = vmatpush.bf16.msra.mxu0 %v8984
        %9036 = vmatpush.bf16.msra.mxu0 %v8983
        %9037 = vmatpush.bf16.msra.mxu0 %v8982
        %9038 = vmatmul.bf16.gmra.mxu0 %v7727
        %v9039 = vpop.f32.mrf.mxu0
        %v9040 = vadd.f32 0.0, %v9039
        %v9041 = vpop.f32.mrf.mxu0
        %v9042 = vadd.f32 0.0, %v9041
        %9043 = vmatmul.bf16.gmra.mxu0 %v7735
        %v9044 = vpop.f32.mrf.mxu0
        %v9045 = vadd.f32 0.0, %v9044
        %v9046 = vpop.f32.mrf.mxu0
        %v9047 = vadd.f32 0.0, %v9046
        %9048 = vmatmul.bf16.gmra.mxu0 %v7743
        %v9049 = vpop.f32.mrf.mxu0
        %v9050 = vadd.f32 0.0, %v9049
        %v9051 = vpop.f32.mrf.mxu0
        %v9052 = vadd.f32 0.0, %v9051
        %9053 = vmatmul.bf16.gmra.mxu0 %v7751
        %v9054 = vpop.f32.mrf.mxu0
        %v9055 = vadd.f32 0.0, %v9054
        %v9056 = vpop.f32.mrf.mxu0
        %v9057 = vadd.f32 0.0, %v9056
        %9058 = vmatmul.bf16.gmra.mxu0 %v7759
        %v9059 = vpop.f32.mrf.mxu0
        %v9060 = vadd.f32 0.0, %v9059
        %v9061 = vpop.f32.mrf.mxu0
        %v9062 = vadd.f32 0.0, %v9061
        %9063 = vmatmul.bf16.gmra.mxu0 %v7767
        %v9064 = vpop.f32.mrf.mxu0
        %v9065 = vadd.f32 0.0, %v9064
        %v9066 = vpop.f32.mrf.mxu0
        %v9067 = vadd.f32 0.0, %v9066
        %9068 = vmatmul.bf16.gmra.mxu0 %v7775
        %v9069 = vpop.f32.mrf.mxu0
        %v9070 = vadd.f32 0.0, %v9069
        %v9071 = vpop.f32.mrf.mxu0
        %v9072 = vadd.f32 0.0, %v9071
        %9073 = vmatmul.bf16.gmra.mxu0 %v7783
        %v9074 = vpop.f32.mrf.mxu0
        %v9075 = vadd.f32 0.0, %v9074
        %v9076 = vpop.f32.mrf.mxu0
        %v9077 = vadd.f32 0.0, %v9076
        %9078 = vmatmul.bf16.gmra.mxu0 %v7791
        %v9079 = vpop.f32.mrf.mxu0
        %v9080 = vadd.f32 0.0, %v9079
        %v9081 = vpop.f32.mrf.mxu0
        %v9082 = vadd.f32 0.0, %v9081
        %9083 = vmatmul.bf16.gmra.mxu0 %v7799
        %v9084 = vpop.f32.mrf.mxu0
        %v9085 = vadd.f32 0.0, %v9084
        %v9086 = vpop.f32.mrf.mxu0
        %v9087 = vadd.f32 0.0, %v9086
        %9088 = vmatmul.bf16.gmra.mxu0 %v7807
        %v9089 = vpop.f32.mrf.mxu0
        %v9090 = vadd.f32 0.0, %v9089
        %v9091 = vpop.f32.mrf.mxu0
        %v9092 = vadd.f32 0.0, %v9091
        %9093 = vmatmul.bf16.gmra.mxu0 %v7815
        %v9094 = vpop.f32.mrf.mxu0
        %v9095 = vadd.f32 0.0, %v9094
        %v9096 = vpop.f32.mrf.mxu0
        %v9097 = vadd.f32 0.0, %v9096
        %9098 = vmatmul.bf16.gmra.mxu0 %v7823
        %v9099 = vpop.f32.mrf.mxu0
        %v9100 = vadd.f32 0.0, %v9099
        %v9101 = vpop.f32.mrf.mxu0
        %v9102 = vadd.f32 0.0, %v9101
        %9103 = vmatmul.bf16.gmra.mxu0 %v7831
        %v9104 = vpop.f32.mrf.mxu0
        %v9105 = vadd.f32 0.0, %v9104
        %v9106 = vpop.f32.mrf.mxu0
        %v9107 = vadd.f32 0.0, %v9106
        %9108 = vmatmul.bf16.gmra.mxu0 %v7962
        %v9109 = vpop.f32.mrf.mxu0
        %v9110 = vadd.f32 0.0, %v9109
        %v9111 = vpop.f32.mrf.mxu0
        %v9112 = vadd.f32 0.0, %v9111
        %9113 = vmatmul.bf16.gmra.mxu0 %v569
        %v9114 = vpop.f32.mrf.mxu0
        %v9115 = vadd.f32 0.0, %v9114
        %v9116 = vpop.f32.mrf.mxu0
        %v9117 = vadd.f32 0.0, %v9116
        %9118 = vdwg.mxu0
        %9119 = vmatpush.bf16.msra.mxu0 %v8997
        %9120 = vmatpush.bf16.msra.mxu0 %v8996
        %9121 = vmatpush.bf16.msra.mxu0 %v8995
        %9122 = vmatpush.bf16.msra.mxu0 %v8994
        %9123 = vmatpush.bf16.msra.mxu0 %v8993
        %9124 = vmatpush.bf16.msra.mxu0 %v8992
        %9125 = vmatpush.bf16.msra.mxu0 %v8991
        %9126 = vmatpush.bf16.msra.mxu0 %v8990
        %9127 = vmatmul.bf16.gmra.mxu0 %v7681
        %v9128 = vpop.f32.mrf.mxu0
        %v9129 = vadd.f32 %v9040, %v9128
        %v9130 = vpop.f32.mrf.mxu0
        %v9131 = vadd.f32 %v9042, %v9130
        %9132 = vmatmul.bf16.gmra.mxu0 %v7682
        %v9133 = vpop.f32.mrf.mxu0
        %v9134 = vadd.f32 %v9045, %v9133
        %v9135 = vpop.f32.mrf.mxu0
        %v9136 = vadd.f32 %v9047, %v9135
        %9137 = vmatmul.bf16.gmra.mxu0 %v7683
        %v9138 = vpop.f32.mrf.mxu0
        %v9139 = vadd.f32 %v9050, %v9138
        %v9140 = vpop.f32.mrf.mxu0
        %v9141 = vadd.f32 %v9052, %v9140
        %9142 = vmatmul.bf16.gmra.mxu0 %v7684
        %v9143 = vpop.f32.mrf.mxu0
        %v9144 = vadd.f32 %v9055, %v9143
        %v9145 = vpop.f32.mrf.mxu0
        %v9146 = vadd.f32 %v9057, %v9145
        %9147 = vmatmul.bf16.gmra.mxu0 %v7685
        %v9148 = vpop.f32.mrf.mxu0
        %v9149 = vadd.f32 %v9060, %v9148
        %v9150 = vpop.f32.mrf.mxu0
        %v9151 = vadd.f32 %v9062, %v9150
        %9152 = vmatmul.bf16.gmra.mxu0 %v7686
        %v9153 = vpop.f32.mrf.mxu0
        %v9154 = vadd.f32 %v9065, %v9153
        %v9155 = vpop.f32.mrf.mxu0
        %v9156 = vadd.f32 %v9067, %v9155
        %9157 = vmatmul.bf16.gmra.mxu0 %v7687
        %v9158 = vpop.f32.mrf.mxu0
        %v9159 = vadd.f32 %v9070, %v9158
        %v9160 = vpop.f32.mrf.mxu0
        %v9161 = vadd.f32 %v9072, %v9160
        %9162 = vmatmul.bf16.gmra.mxu0 %v7688
        %v9163 = vpop.f32.mrf.mxu0
        %v9164 = vadd.f32 %v9075, %v9163
        %v9165 = vpop.f32.mrf.mxu0
        %v9166 = vadd.f32 %v9077, %v9165
        %9167 = vmatmul.bf16.gmra.mxu0 %v7689
        %v9168 = vpop.f32.mrf.mxu0
        %v9169 = vadd.f32 %v9080, %v9168
        %v9170 = vpop.f32.mrf.mxu0
        %v9171 = vadd.f32 %v9082, %v9170
        %9172 = vmatmul.bf16.gmra.mxu0 %v7690
        %v9173 = vpop.f32.mrf.mxu0
        %v9174 = vadd.f32 %v9085, %v9173
        %v9175 = vpop.f32.mrf.mxu0
        %v9176 = vadd.f32 %v9087, %v9175
        %9177 = vmatmul.bf16.gmra.mxu0 %v7691
        %v9178 = vpop.f32.mrf.mxu0
        %v9179 = vadd.f32 %v9090, %v9178
        %v9180 = vpop.f32.mrf.mxu0
        %v9181 = vadd.f32 %v9092, %v9180
        %9182 = vmatmul.bf16.gmra.mxu0 %v7692
        %v9183 = vpop.f32.mrf.mxu0
        %v9184 = vadd.f32 %v9095, %v9183
        %v9185 = vpop.f32.mrf.mxu0
        %v9186 = vadd.f32 %v9097, %v9185
        %9187 = vmatmul.bf16.gmra.mxu0 %v7693
        %v9188 = vpop.f32.mrf.mxu0
        %v9189 = vadd.f32 %v9100, %v9188
        %v9190 = vpop.f32.mrf.mxu0
        %v9191 = vadd.f32 %v9102, %v9190
        %9192 = vmatmul.bf16.gmra.mxu0 %v7694
        %v9193 = vpop.f32.mrf.mxu0
        %v9194 = vadd.f32 %v9105, %v9193
        %v9195 = vpop.f32.mrf.mxu0
        %v9196 = vadd.f32 %v9107, %v9195
        %9197 = vmatmul.bf16.gmra.mxu0 %v7695
        %v9198 = vpop.f32.mrf.mxu0
        %v9199 = vadd.f32 %v9110, %v9198
        %v9200 = vpop.f32.mrf.mxu0
        %v9201 = vadd.f32 %v9112, %v9200
        %9202 = vmatmul.bf16.gmra.mxu0 0
        %v9203 = vpop.f32.mrf.mxu0
        %v9204 = vadd.f32 %v9115, %v9203
        %v9205 = vpop.f32.mrf.mxu0
        %v9206 = vadd.f32 %v9117, %v9205
        %9207 = vdwg.mxu0
        %9208 = vmatpush.bf16.msra.mxu0 %v9005
        %9209 = vmatpush.bf16.msra.mxu0 %v9004
        %9210 = vmatpush.bf16.msra.mxu0 %v9003
        %9211 = vmatpush.bf16.msra.mxu0 %v9002
        %9212 = vmatpush.bf16.msra.mxu0 %v9001
        %9213 = vmatpush.bf16.msra.mxu0 %v9000
        %9214 = vmatpush.bf16.msra.mxu0 %v8999
        %9215 = vmatpush.bf16.msra.mxu0 %v8998
        %9216 = vmatmul.bf16.gmra.mxu0 %v7852
        %v9217 = vpop.f32.mrf.mxu0
        %v9218 = vadd.f32 %v9129, %v9217
        %v9219 = vpop.f32.mrf.mxu0
        %v9220 = vadd.f32 %v9131, %v9219
        %9221 = vmatmul.bf16.gmra.mxu0 %v7855
        %v9222 = vpop.f32.mrf.mxu0
        %v9223 = vadd.f32 %v9134, %v9222
        %v9224 = vpop.f32.mrf.mxu0
        %v9225 = vadd.f32 %v9136, %v9224
        %9226 = vmatmul.bf16.gmra.mxu0 %v7858
        %v9227 = vpop.f32.mrf.mxu0
        %v9228 = vadd.f32 %v9139, %v9227
        %v9229 = vpop.f32.mrf.mxu0
        %v9230 = vadd.f32 %v9141, %v9229
        %9231 = vmatmul.bf16.gmra.mxu0 %v7861
        %v9232 = vpop.f32.mrf.mxu0
        %v9233 = vadd.f32 %v9144, %v9232
        %v9234 = vpop.f32.mrf.mxu0
        %v9235 = vadd.f32 %v9146, %v9234
        %9236 = vmatmul.bf16.gmra.mxu0 %v7864
        %v9237 = vpop.f32.mrf.mxu0
        %v9238 = vadd.f32 %v9149, %v9237
        %v9239 = vpop.f32.mrf.mxu0
        %v9240 = vadd.f32 %v9151, %v9239
        %9241 = vmatmul.bf16.gmra.mxu0 %v7867
        %v9242 = vpop.f32.mrf.mxu0
        %v9243 = vadd.f32 %v9154, %v9242
        %v9244 = vpop.f32.mrf.mxu0
        %v9245 = vadd.f32 %v9156, %v9244
        %9246 = vmatmul.bf16.gmra.mxu0 %v7870
        %v9247 = vpop.f32.mrf.mxu0
        %v9248 = vadd.f32 %v9159, %v9247
        %v9249 = vpop.f32.mrf.mxu0
        %v9250 = vadd.f32 %v9161, %v9249
        %9251 = vmatmul.bf16.gmra.mxu0 %v7873
        %v9252 = vpop.f32.mrf.mxu0
        %v9253 = vadd.f32 %v9164, %v9252
        %v9254 = vpop.f32.mrf.mxu0
        %v9255 = vadd.f32 %v9166, %v9254
        %9256 = vmatmul.bf16.gmra.mxu0 %v7876
        %v9257 = vpop.f32.mrf.mxu0
        %v9258 = vadd.f32 %v9169, %v9257
        %v9259 = vpop.f32.mrf.mxu0
        %v9260 = vadd.f32 %v9171, %v9259
        %9261 = vmatmul.bf16.gmra.mxu0 %v7879
        %v9262 = vpop.f32.mrf.mxu0
        %v9263 = vadd.f32 %v9174, %v9262
        %v9264 = vpop.f32.mrf.mxu0
        %v9265 = vadd.f32 %v9176, %v9264
        %9266 = vmatmul.bf16.gmra.mxu0 %v7882
        %v9267 = vpop.f32.mrf.mxu0
        %v9268 = vadd.f32 %v9179, %v9267
        %v9269 = vpop.f32.mrf.mxu0
        %v9270 = vadd.f32 %v9181, %v9269
        %9271 = vmatmul.bf16.gmra.mxu0 %v7885
        %v9272 = vpop.f32.mrf.mxu0
        %v9273 = vadd.f32 %v9184, %v9272
        %v9274 = vpop.f32.mrf.mxu0
        %v9275 = vadd.f32 %v9186, %v9274
        %9276 = vmatmul.bf16.gmra.mxu0 %v7888
        %v9277 = vpop.f32.mrf.mxu0
        %v9278 = vadd.f32 %v9189, %v9277
        %v9279 = vpop.f32.mrf.mxu0
        %v9280 = vadd.f32 %v9191, %v9279
        %9281 = vmatmul.bf16.gmra.mxu0 %v7891
        %v9282 = vpop.f32.mrf.mxu0
        %v9283 = vadd.f32 %v9194, %v9282
        %v9284 = vpop.f32.mrf.mxu0
        %v9285 = vadd.f32 %v9196, %v9284
        %9286 = vmatmul.bf16.gmra.mxu0 %v7966
        %v9287 = vpop.f32.mrf.mxu0
        %v9288 = vadd.f32 %v9199, %v9287
        %v9289 = vpop.f32.mrf.mxu0
        %v9290 = vadd.f32 %v9201, %v9289
        %9291 = vmatmul.bf16.gmra.mxu0 %v709
        %v9292 = vpop.f32.mrf.mxu0
        %v9293 = vadd.f32 %v9204, %v9292
        %v9294 = vpop.f32.mrf.mxu0
        %v9295 = vadd.f32 %v9206, %v9294
        %9296 = vdwg.mxu0
        %v9297 = vadd.f32 %v8759, %v9218
        %v9298 = vadd.f32 %v8761, %v9220
        %v9299 = vadd.f32 %v8764, %v9223
        %v9300 = vadd.f32 %v8766, %v9225
        %v9301 = vadd.f32 %v8769, %v9228
        %v9302 = vadd.f32 %v8771, %v9230
        %v9303 = vadd.f32 %v8774, %v9233
        %v9304 = vadd.f32 %v8776, %v9235
        %v9305 = vadd.f32 %v8779, %v9238
        %v9306 = vadd.f32 %v8781, %v9240
        %v9307 = vadd.f32 %v8784, %v9243
        %v9308 = vadd.f32 %v8786, %v9245
        %v9309 = vadd.f32 %v8789, %v9248
        %v9310 = vadd.f32 %v8791, %v9250
        %v9311 = vadd.f32 %v8794, %v9253
        %v9312 = vadd.f32 %v8796, %v9255
        %v9313 = vadd.f32 %v8799, %v9258
        %v9314 = vadd.f32 %v8801, %v9260
        %v9315 = vadd.f32 %v8804, %v9263
        %v9316 = vadd.f32 %v8806, %v9265
        %v9317 = vadd.f32 %v8809, %v9268
        %v9318 = vadd.f32 %v8811, %v9270
        %v9319 = vadd.f32 %v8814, %v9273
        %v9320 = vadd.f32 %v8816, %v9275
        %v9321 = vadd.f32 %v8819, %v9278
        %v9322 = vadd.f32 %v8821, %v9280
        %v9323 = vadd.f32 %v8824, %v9283
        %v9324 = vadd.f32 %v8826, %v9285
        %v9325 = vadd.f32 %v8829, %v9288
        %v9326 = vadd.f32 %v8831, %v9290
        %v9327 = vadd.f32 %v8834, %v9293
        %v9328 = vadd.f32 %v8836, %v9295
        %v9329 = vld [vmem:[%s9] sm:$0x1]
        %v9331 = vperm.slane %v9329, 0
        %v9333 = vadd.f32 %v9297, %v9331
        %v9334 = vadd.f32 %v9298, %v9331
        %v9335 = vadd.f32 %v9299, %v9331
        %v9336 = vadd.f32 %v9300, %v9331
        %v9337 = vadd.f32 %v9301, %v9331
        %v9338 = vadd.f32 %v9302, %v9331
        %v9339 = vadd.f32 %v9303, %v9331
        %v9340 = vadd.f32 %v9304, %v9331
        %v9341 = vadd.f32 %v9305, %v9331
        %v9342 = vadd.f32 %v9306, %v9331
        %v9343 = vadd.f32 %v9307, %v9331
        %v9344 = vadd.f32 %v9308, %v9331
        %v9345 = vadd.f32 %v9309, %v9331
        %v9346 = vadd.f32 %v9310, %v9331
        %v9347 = vadd.f32 %v9311, %v9331
        %v9348 = vadd.f32 %v9312, %v9331
        %v9349 = vadd.f32 %v9313, %v9331
        %v9350 = vadd.f32 %v9314, %v9331
        %v9351 = vadd.f32 %v9315, %v9331
        %v9352 = vadd.f32 %v9316, %v9331
        %v9353 = vadd.f32 %v9317, %v9331
        %v9354 = vadd.f32 %v9318, %v9331
        %v9355 = vadd.f32 %v9319, %v9331
        %v9356 = vadd.f32 %v9320, %v9331
        %v9357 = vadd.f32 %v9321, %v9331
        %v9358 = vadd.f32 %v9322, %v9331
        %v9359 = vadd.f32 %v9323, %v9331
        %v9360 = vadd.f32 %v9324, %v9331
        %v9361 = vadd.f32 %v9325, %v9331
        %v9362 = vadd.f32 %v9326, %v9331
        %v9363 = vadd.f32 %v9327, %v9331
        %v9364 = vadd.f32 %v9328, %v9331
        %v9365 = vpack.c.bf16 %v9333, %v9333
        %v9366 = vpack.c.bf16 %v9334, %v9334
        %v9367 = vpack.c.bf16 %v9335, %v9335
        %v9368 = vpack.c.bf16 %v9336, %v9336
        %v9369 = vpack.c.bf16 %v9337, %v9337
        %v9370 = vpack.c.bf16 %v9338, %v9338
        %v9371 = vpack.c.bf16 %v9339, %v9339
        %v9372 = vpack.c.bf16 %v9340, %v9340
        %v9373 = vpack.c.bf16 %v9341, %v9341
        %v9374 = vpack.c.bf16 %v9342, %v9342
        %v9375 = vpack.c.bf16 %v9343, %v9343
        %v9376 = vpack.c.bf16 %v9344, %v9344
        %v9377 = vpack.c.bf16 %v9345, %v9345
        %v9378 = vpack.c.bf16 %v9346, %v9346
        %v9379 = vpack.c.bf16 %v9347, %v9347
        %v9380 = vpack.c.bf16 %v9348, %v9348
        %v9381 = vpack.c.bf16 %v9349, %v9349
        %v9382 = vpack.c.bf16 %v9350, %v9350
        %v9383 = vpack.c.bf16 %v9351, %v9351
        %v9384 = vpack.c.bf16 %v9352, %v9352
        %v9385 = vpack.c.bf16 %v9353, %v9353
        %v9386 = vpack.c.bf16 %v9354, %v9354
        %v9387 = vpack.c.bf16 %v9355, %v9355
        %v9388 = vpack.c.bf16 %v9356, %v9356
        %v9389 = vpack.c.bf16 %v9357, %v9357
        %v9390 = vpack.c.bf16 %v9358, %v9358
        %v9391 = vpack.c.bf16 %v9359, %v9359
        %v9392 = vpack.c.bf16 %v9360, %v9360
        %v9393 = vpack.c.bf16 %v9361, %v9361
        %v9394 = vpack.c.bf16 %v9362, %v9362
        %v9395 = vpack.c.bf16 %v9363, %v9363
        %v9396 = vpack.c.bf16 %v9364, %v9364
        %v9397 = vunpack.c.l.bf16 %v9365
        %v9398 = vunpack.c.l.bf16 %v9366
        %v9399 = vunpack.c.l.bf16 %v9367
        %v9400 = vunpack.c.l.bf16 %v9368
        %v9401 = vunpack.c.l.bf16 %v9369
        %v9402 = vunpack.c.l.bf16 %v9370
        %v9403 = vunpack.c.l.bf16 %v9371
        %v9404 = vunpack.c.l.bf16 %v9372
        %v9405 = vunpack.c.l.bf16 %v9373
        %v9406 = vunpack.c.l.bf16 %v9374
        %v9407 = vunpack.c.l.bf16 %v9375
        %v9408 = vunpack.c.l.bf16 %v9376
        %v9409 = vunpack.c.l.bf16 %v9377
        %v9410 = vunpack.c.l.bf16 %v9378
        %v9411 = vunpack.c.l.bf16 %v9379
        %v9412 = vunpack.c.l.bf16 %v9380
        %v9413 = vunpack.c.l.bf16 %v9381
        %v9414 = vunpack.c.l.bf16 %v9382
        %v9415 = vunpack.c.l.bf16 %v9383
        %v9416 = vunpack.c.l.bf16 %v9384
        %v9417 = vunpack.c.l.bf16 %v9385
        %v9418 = vunpack.c.l.bf16 %v9386
        %v9419 = vunpack.c.l.bf16 %v9387
        %v9420 = vunpack.c.l.bf16 %v9388
        %v9421 = vunpack.c.l.bf16 %v9389
        %v9422 = vunpack.c.l.bf16 %v9390
        %v9423 = vunpack.c.l.bf16 %v9391
        %v9424 = vunpack.c.l.bf16 %v9392
        %v9425 = vunpack.c.l.bf16 %v9393
        %v9426 = vunpack.c.l.bf16 %v9394
        %v9427 = vunpack.c.l.bf16 %v9395
        %v9428 = vunpack.c.l.bf16 %v9396
        %v9429 = vmax.f32 %v9397, 0.0
        %v9430 = vmax.f32 %v9398, 0.0
        %v9431 = vmax.f32 %v9399, 0.0
        %v9432 = vmax.f32 %v9400, 0.0
        %v9433 = vmax.f32 %v9401, 0.0
        %v9434 = vmax.f32 %v9402, 0.0
        %v9435 = vmax.f32 %v9403, 0.0
        %v9436 = vmax.f32 %v9404, 0.0
        %v9437 = vmax.f32 %v9405, 0.0
        %v9438 = vmax.f32 %v9406, 0.0
        %v9439 = vmax.f32 %v9407, 0.0
        %v9440 = vmax.f32 %v9408, 0.0
        %v9441 = vmax.f32 %v9409, 0.0
        %v9442 = vmax.f32 %v9410, 0.0
        %v9443 = vmax.f32 %v9411, 0.0
        %v9444 = vmax.f32 %v9412, 0.0
        %v9445 = vmax.f32 %v9413, 0.0
        %v9446 = vmax.f32 %v9414, 0.0
        %v9447 = vmax.f32 %v9415, 0.0
        %v9448 = vmax.f32 %v9416, 0.0
        %v9449 = vmax.f32 %v9417, 0.0
        %v9450 = vmax.f32 %v9418, 0.0
        %v9451 = vmax.f32 %v9419, 0.0
        %v9452 = vmax.f32 %v9420, 0.0
        %v9453 = vmax.f32 %v9421, 0.0
        %v9454 = vmax.f32 %v9422, 0.0
        %v9455 = vmax.f32 %v9423, 0.0
        %v9456 = vmax.f32 %v9424, 0.0
        %v9457 = vmax.f32 %v9425, 0.0
        %v9458 = vmax.f32 %v9426, 0.0
        %v9459 = vmax.f32 %v9427, 0.0
        %v9460 = vmax.f32 %v9428, 0.0
        %v9461 = vpack.c.bf16 %v9429, %v9429
        %v9462 = vpack.c.bf16 %v9430, %v9430
        %v9463 = vpack.c.bf16 %v9431, %v9431
        %v9464 = vpack.c.bf16 %v9432, %v9432
        %v9465 = vpack.c.bf16 %v9433, %v9433
        %v9466 = vpack.c.bf16 %v9434, %v9434
        %v9467 = vpack.c.bf16 %v9435, %v9435
        %v9468 = vpack.c.bf16 %v9436, %v9436
        %v9469 = vpack.c.bf16 %v9437, %v9437
        %v9470 = vpack.c.bf16 %v9438, %v9438
        %v9471 = vpack.c.bf16 %v9439, %v9439
        %v9472 = vpack.c.bf16 %v9440, %v9440
        %v9473 = vpack.c.bf16 %v9441, %v9441
        %v9474 = vpack.c.bf16 %v9442, %v9442
        %v9475 = vpack.c.bf16 %v9443, %v9443
        %v9476 = vpack.c.bf16 %v9444, %v9444
        %v9477 = vpack.c.bf16 %v9445, %v9445
        %v9478 = vpack.c.bf16 %v9446, %v9446
        %v9479 = vpack.c.bf16 %v9447, %v9447
        %v9480 = vpack.c.bf16 %v9448, %v9448
        %v9481 = vpack.c.bf16 %v9449, %v9449
        %v9482 = vpack.c.bf16 %v9450, %v9450
        %v9483 = vpack.c.bf16 %v9451, %v9451
        %v9484 = vpack.c.bf16 %v9452, %v9452
        %v9485 = vpack.c.bf16 %v9453, %v9453
        %v9486 = vpack.c.bf16 %v9454, %v9454
        %v9487 = vpack.c.bf16 %v9455, %v9455
        %v9488 = vpack.c.bf16 %v9456, %v9456
        %v9489 = vpack.c.bf16 %v9457, %v9457
        %v9490 = vpack.c.bf16 %v9458, %v9458
        %v9491 = vpack.c.bf16 %v9459, %v9459
        %v9492 = vpack.c.bf16 %v9460, %v9460
        %v9525 = vunpack.c.l.b16 %v9461
        %v9526 = vunpack.c.l.b16 %v9462
        %v9527 = vunpack.c.l.b16 %v9463
        %v9528 = vunpack.c.l.b16 %v9464
        %v9529 = vunpack.c.l.b16 %v9465
        %v9530 = vunpack.c.l.b16 %v9466
        %v9531 = vunpack.c.l.b16 %v9467
        %v9532 = vunpack.c.l.b16 %v9468
        %v9533 = vunpack.c.l.b16 %v9469
        %v9534 = vunpack.c.l.b16 %v9470
        %v9535 = vunpack.c.l.b16 %v9471
        %v9536 = vunpack.c.l.b16 %v9472
        %v9537 = vunpack.c.l.b16 %v9473
        %v9538 = vunpack.c.l.b16 %v9474
        %v9539 = vunpack.c.l.b16 %v9475
        %v9540 = vunpack.c.l.b16 %v9476
        %v9541 = vunpack.c.l.b16 %v9477
        %v9542 = vunpack.c.l.b16 %v9478
        %v9543 = vunpack.c.l.b16 %v9479
        %v9544 = vunpack.c.l.b16 %v9480
        %v9545 = vunpack.c.l.b16 %v9481
        %v9546 = vunpack.c.l.b16 %v9482
        %v9547 = vunpack.c.l.b16 %v9483
        %v9548 = vunpack.c.l.b16 %v9484
        %v9549 = vunpack.c.l.b16 %v9485
        %v9550 = vunpack.c.l.b16 %v9486
        %v9551 = vunpack.c.l.b16 %v9487
        %v9552 = vunpack.c.l.b16 %v9488
        %v9553 = vunpack.c.l.b16 %v9489
        %v9554 = vunpack.c.l.b16 %v9490
        %v9555 = vunpack.c.l.b16 %v9491
        %v9556 = vunpack.c.l.b16 %v9492
        %v9557 = vpack.c.b16 %v9526, %v9525
        %v9558 = vpack.c.b16 %v9528, %v9527
        %v9559 = vpack.c.b16 %v9530, %v9529
        %v9560 = vpack.c.b16 %v9532, %v9531
        %v9561 = vpack.c.b16 %v9534, %v9533
        %v9562 = vpack.c.b16 %v9536, %v9535
        %v9563 = vpack.c.b16 %v9538, %v9537
        %v9564 = vpack.c.b16 %v9540, %v9539
        %v9565 = vpack.c.b16 %v9542, %v9541
        %v9566 = vpack.c.b16 %v9544, %v9543
        %v9567 = vpack.c.b16 %v9546, %v9545
        %v9568 = vpack.c.b16 %v9548, %v9547
        %v9569 = vpack.c.b16 %v9550, %v9549
        %v9570 = vpack.c.b16 %v9552, %v9551
        %v9571 = vpack.c.b16 %v9554, %v9553
        %v9572 = vpack.c.b16 %v9556, %v9555
        %v9590 = vshrl.u32 %v9557, 16
        %v9592 = vrot.slane %v9590, 7
        %v9593 = vshll.u32 %v9557, 16
        %v9595 = vor.u32 %v9592, %v9593
        %v9596 = vsel %vm561, %v565, %v9595
        %v9598 = vshrl.u32 %v9558, 16
        %v9600 = vrot.slane %v9598, 7
        %v9601 = vshll.u32 %v9558, 16
        %v9603 = vor.u32 %v9600, %v9601
        %v9604 = vsel %vm561, %v565, %v9603
        %v9606 = vshrl.u32 %v9559, 16
        %v9608 = vrot.slane %v9606, 7
        %v9609 = vshll.u32 %v9559, 16
        %v9611 = vor.u32 %v9608, %v9609
        %v9612 = vsel %vm561, %v565, %v9611
        %v9614 = vshrl.u32 %v9560, 16
        %v9616 = vrot.slane %v9614, 7
        %v9617 = vshll.u32 %v9560, 16
        %v9619 = vor.u32 %v9616, %v9617
        %v9620 = vsel %vm561, %v565, %v9619
        %v9622 = vshrl.u32 %v9561, 16
        %v9624 = vrot.slane %v9622, 7
        %v9625 = vshll.u32 %v9561, 16
        %v9627 = vor.u32 %v9624, %v9625
        %v9628 = vsel %vm561, %v565, %v9627
        %v9630 = vshrl.u32 %v9562, 16
        %v9632 = vrot.slane %v9630, 7
        %v9633 = vshll.u32 %v9562, 16
        %v9635 = vor.u32 %v9632, %v9633
        %v9636 = vsel %vm561, %v565, %v9635
        %v9638 = vshrl.u32 %v9563, 16
        %v9640 = vrot.slane %v9638, 7
        %v9641 = vshll.u32 %v9563, 16
        %v9643 = vor.u32 %v9640, %v9641
        %v9644 = vsel %vm561, %v565, %v9643
        %v9646 = vshrl.u32 %v9564, 16
        %v9648 = vrot.slane %v9646, 7
        %v9649 = vshll.u32 %v9564, 16
        %v9651 = vor.u32 %v9648, %v9649
        %v9652 = vsel %vm561, %v565, %v9651
        %v9654 = vshrl.u32 %v9565, 16
        %v9656 = vrot.slane %v9654, 7
        %v9657 = vshll.u32 %v9565, 16
        %v9659 = vor.u32 %v9656, %v9657
        %v9660 = vsel %vm561, %v565, %v9659
        %v9662 = vshrl.u32 %v9566, 16
        %v9664 = vrot.slane %v9662, 7
        %v9665 = vshll.u32 %v9566, 16
        %v9667 = vor.u32 %v9664, %v9665
        %v9668 = vsel %vm561, %v565, %v9667
        %v9670 = vshrl.u32 %v9567, 16
        %v9672 = vrot.slane %v9670, 7
        %v9673 = vshll.u32 %v9567, 16
        %v9675 = vor.u32 %v9672, %v9673
        %v9676 = vsel %vm561, %v565, %v9675
        %v9678 = vshrl.u32 %v9568, 16
        %v9680 = vrot.slane %v9678, 7
        %v9681 = vshll.u32 %v9568, 16
        %v9683 = vor.u32 %v9680, %v9681
        %v9684 = vsel %vm561, %v565, %v9683
        %v9686 = vshrl.u32 %v9569, 16
        %v9688 = vrot.slane %v9686, 7
        %v9689 = vshll.u32 %v9569, 16
        %v9691 = vor.u32 %v9688, %v9689
        %v9692 = vsel %vm561, %v565, %v9691
        %v9694 = vshrl.u32 %v9570, 16
        %v9696 = vrot.slane %v9694, 7
        %v9697 = vshll.u32 %v9570, 16
        %v9699 = vor.u32 %v9696, %v9697
        %v9700 = vsel %vm561, %v565, %v9699
        %v9702 = vshrl.u32 %v9571, 16
        %v9704 = vrot.slane %v9702, 7
        %v9705 = vshll.u32 %v9571, 16
        %v9707 = vor.u32 %v9704, %v9705
        %v9708 = vsel %vm561, %v565, %v9707
        %v9724 = vrot.slane %v9593, 1
        %v9725 = vor.u32 %v9590, %v9724
        %v9726 = vsel %vm706, %v9725, %v707
        %v9727 = vrot.slane %v9601, 1
        %v9728 = vor.u32 %v9598, %v9727
        %v9729 = vsel %vm706, %v9728, %v707
        %v9730 = vrot.slane %v9609, 1
        %v9731 = vor.u32 %v9606, %v9730
        %v9732 = vsel %vm706, %v9731, %v707
        %v9733 = vrot.slane %v9617, 1
        %v9734 = vor.u32 %v9614, %v9733
        %v9735 = vsel %vm706, %v9734, %v707
        %v9736 = vrot.slane %v9625, 1
        %v9737 = vor.u32 %v9622, %v9736
        %v9738 = vsel %vm706, %v9737, %v707
        %v9739 = vrot.slane %v9633, 1
        %v9740 = vor.u32 %v9630, %v9739
        %v9741 = vsel %vm706, %v9740, %v707
        %v9742 = vrot.slane %v9641, 1
        %v9743 = vor.u32 %v9638, %v9742
        %v9744 = vsel %vm706, %v9743, %v707
        %v9745 = vrot.slane %v9649, 1
        %v9746 = vor.u32 %v9646, %v9745
        %v9747 = vsel %vm706, %v9746, %v707
        %v9748 = vrot.slane %v9657, 1
        %v9749 = vor.u32 %v9654, %v9748
        %v9750 = vsel %vm706, %v9749, %v707
        %v9751 = vrot.slane %v9665, 1
        %v9752 = vor.u32 %v9662, %v9751
        %v9753 = vsel %vm706, %v9752, %v707
        %v9754 = vrot.slane %v9673, 1
        %v9755 = vor.u32 %v9670, %v9754
        %v9756 = vsel %vm706, %v9755, %v707
        %v9757 = vrot.slane %v9681, 1
        %v9758 = vor.u32 %v9678, %v9757
        %v9759 = vsel %vm706, %v9758, %v707
        %v9760 = vrot.slane %v9689, 1
        %v9761 = vor.u32 %v9686, %v9760
        %v9762 = vsel %vm706, %v9761, %v707
        %v9763 = vrot.slane %v9697, 1
        %v9764 = vor.u32 %v9694, %v9763
        %v9765 = vsel %vm706, %v9764, %v707
        %v9766 = vrot.slane %v9705, 1
        %v9767 = vor.u32 %v9702, %v9766
        %v9768 = vsel %vm706, %v9767, %v707
        %v9784 = vld [vmem:[%s10] sm:$0xf]
        %v9785 = vld [vmem:[%s10 + $0x4] sm:$0xf]
        %v9786 = vld [vmem:[%s10 + $0x8] sm:$0xf]
        %v9787 = vld [vmem:[%s10 + $0xc] sm:$0xf]
        %v9788 = vld [vmem:[%s10 + $0x10] sm:$0xf]
        %v9789 = vld [vmem:[%s10 + $0x14] sm:$0xf]
        %v9790 = vld [vmem:[%s10 + $0x18] sm:$0xf]
        %v9791 = vld [vmem:[%s10 + $0x1c] sm:$0xf]
        %v9792 = vld [vmem:[%s10 + $0x20] sm:$0xf]
        %v9793 = vld [vmem:[%s10 + $0x24] sm:$0xf]
        %v9794 = vld [vmem:[%s10 + $0x28] sm:$0xf]
        %v9795 = vld [vmem:[%s10 + $0x2c] sm:$0xf]
        %v9796 = vld [vmem:[%s10 + $0x30] sm:$0xf]
        %v9797 = vld [vmem:[%s10 + $0x34] sm:$0xf]
        %v9798 = vld [vmem:[%s10 + $0x38] sm:$0xf]
        %v9799 = vld [vmem:[%s10 + $0x3c] sm:$0xf]
        %v9800 = vld [vmem:[%s10 + $0x40] sm:$0xf]
        %v9801 = vld [vmem:[%s10 + $0x44] sm:$0xf]
        %v9802 = vld [vmem:[%s10 + $0x48] sm:$0xf]
        %v9803 = vld [vmem:[%s10 + $0x4c] sm:$0xf]
        %v9804 = vld [vmem:[%s10 + $0x50] sm:$0xf]
        %v9805 = vld [vmem:[%s10 + $0x54] sm:$0xf]
        %v9806 = vld [vmem:[%s10 + $0x58] sm:$0xf]
        %v9807 = vld [vmem:[%s10 + $0x5c] sm:$0xf]
        %v9808 = vld [vmem:[%s10 + $0x60] sm:$0xf]
        %v9809 = vld [vmem:[%s10 + $0x64] sm:$0xf]
        %v9810 = vld [vmem:[%s10 + $0x68] sm:$0xf]
        %v9811 = vld [vmem:[%s10 + $0x6c] sm:$0xf]
        %v9812 = vld [vmem:[%s10 + $0x70] sm:$0xf]
        %v9813 = vld [vmem:[%s10 + $0x74] sm:$0xf]
        %v9814 = vld [vmem:[%s10 + $0x78] sm:$0xf]
        %v9815 = vld [vmem:[%s10 + $0x7c] sm:$0xf]
        %v9816 = vld [vmem:[%s10 + $0x80] sm:$0xf]
        %v9817 = vld [vmem:[%s10 + $0x84] sm:$0xf]
        %v9818 = vld [vmem:[%s10 + $0x88] sm:$0xf]
        %v9819 = vld [vmem:[%s10 + $0x8c] sm:$0xf]
        %v9820 = vld [vmem:[%s10 + $0x90] sm:$0xf]
        %v9821 = vld [vmem:[%s10 + $0x94] sm:$0xf]
        %v9822 = vld [vmem:[%s10 + $0x98] sm:$0xf]
        %v9823 = vld [vmem:[%s10 + $0x9c] sm:$0xf]
        %v9824 = vld [vmem:[%s10 + $0xa0] sm:$0xf]
        %v9825 = vld [vmem:[%s10 + $0xa4] sm:$0xf]
        %v9826 = vld [vmem:[%s10 + $0xa8] sm:$0xf]
        %v9827 = vld [vmem:[%s10 + $0xac] sm:$0xf]
        %v9828 = vld [vmem:[%s10 + $0xb0] sm:$0xf]
        %v9829 = vld [vmem:[%s10 + $0xb4] sm:$0xf]
        %v9830 = vld [vmem:[%s10 + $0xb8] sm:$0xf]
        %v9831 = vld [vmem:[%s10 + $0xbc] sm:$0xf]
        %v9833 = vshrl.u32 %v9572, 16
        %v9835 = vrot.slane %v9833, 7
        %v9836 = vshll.u32 %v9572, 16
        %v9838 = vor.u32 %v9835, %v9836
        %v9839 = vsel %vm561, %v565, %v9838
        %v9841 = vrot.slane %v9836, 1
        %v9842 = vor.u32 %v9833, %v9841
        %v9843 = vsel %vm706, %v9842, %v707
        %v9845 = vld [vmem:[%s10 + $0xc0] sm:$0xf]
        %v9846 = vld [vmem:[%s10 + $0xc4] sm:$0xf]
        %v9847 = vld [vmem:[%s10 + $0xc8] sm:$0xf]
        %v9848 = vld [vmem:[%s10 + $0xcc] sm:$0xf]
        %v9849 = vld [vmem:[%s10 + $0xd0] sm:$0xf]
        %v9850 = vld [vmem:[%s10 + $0xd4] sm:$0xf]
        %v9851 = vld [vmem:[%s10 + $0xd8] sm:$0xf]
        %v9852 = vld [vmem:[%s10 + $0xdc] sm:$0xf]
        %v9853 = vld [vmem:[%s10 + $0xe0] sm:$0xf]
        %v9854 = vld [vmem:[%s10 + $0xe4] sm:$0xf]
        %v9855 = vld [vmem:[%s10 + $0xe8] sm:$0xf]
        %v9856 = vld [vmem:[%s10 + $0xec] sm:$0xf]
        %v9857 = vld [vmem:[%s10 + $0xf0] sm:$0xf]
        %v9858 = vld [vmem:[%s10 + $0xf4] sm:$0xf]
        %v9859 = vld [vmem:[%s10 + $0xf8] sm:$0xf]
        %v9860 = vld [vmem:[%s10 + $0xfc] sm:$0xf]
        %v9861 = vld [vmem:[%s10 + $0x100] sm:$0xf]
        %v9862 = vld [vmem:[%s10 + $0x104] sm:$0xf]
        %v9863 = vld [vmem:[%s10 + $0x108] sm:$0xf]
        %v9864 = vld [vmem:[%s10 + $0x10c] sm:$0xf]
        %v9865 = vld [vmem:[%s10 + $0x110] sm:$0xf]
        %v9866 = vld [vmem:[%s10 + $0x114] sm:$0xf]
        %v9867 = vld [vmem:[%s10 + $0x118] sm:$0xf]
        %v9868 = vld [vmem:[%s10 + $0x11c] sm:$0xf]
        %v9869 = vld [vmem:[%s10 + $0x120] sm:$0xf]
        %v9870 = vld [vmem:[%s10 + $0x124] sm:$0xf]
        %v9871 = vld [vmem:[%s10 + $0x128] sm:$0xf]
        %v9872 = vld [vmem:[%s10 + $0x12c] sm:$0xf]
        %v9873 = vld [vmem:[%s10 + $0x130] sm:$0xf]
        %v9874 = vld [vmem:[%s10 + $0x134] sm:$0xf]
        %v9875 = vld [vmem:[%s10 + $0x138] sm:$0xf]
        %v9876 = vld [vmem:[%s10 + $0x13c] sm:$0xf]
        %v9877 = vld [vmem:[%s10 + $0x140] sm:$0xf]
        %v9878 = vld [vmem:[%s10 + $0x144] sm:$0xf]
        %v9879 = vld [vmem:[%s10 + $0x148] sm:$0xf]
        %v9880 = vld [vmem:[%s10 + $0x14c] sm:$0xf]
        %v9881 = vld [vmem:[%s10 + $0x150] sm:$0xf]
        %v9882 = vld [vmem:[%s10 + $0x154] sm:$0xf]
        %v9883 = vld [vmem:[%s10 + $0x158] sm:$0xf]
        %v9884 = vld [vmem:[%s10 + $0x15c] sm:$0xf]
        %v9885 = vld [vmem:[%s10 + $0x160] sm:$0xf]
        %v9886 = vld [vmem:[%s10 + $0x164] sm:$0xf]
        %v9887 = vld [vmem:[%s10 + $0x168] sm:$0xf]
        %v9888 = vld [vmem:[%s10 + $0x16c] sm:$0xf]
        %v9889 = vld [vmem:[%s10 + $0x170] sm:$0xf]
        %v9890 = vld [vmem:[%s10 + $0x174] sm:$0xf]
        %v9891 = vld [vmem:[%s10 + $0x178] sm:$0xf]
        %v9892 = vld [vmem:[%s10 + $0x17c] sm:$0xf]
        %v9941 = vunpack.c.l.b16 %v9845
        %v9942 = vunpack.c.l.b16 %v9846
        %v9943 = vunpack.c.l.b16 %v9847
        %v9944 = vunpack.c.l.b16 %v9848
        %v9945 = vunpack.c.l.b16 %v9849
        %v9946 = vunpack.c.l.b16 %v9850
        %v9947 = vunpack.c.l.b16 %v9851
        %v9948 = vunpack.c.l.b16 %v9852
        %v9949 = vunpack.c.l.b16 %v9853
        %v9950 = vunpack.c.l.b16 %v9854
        %v9951 = vunpack.c.l.b16 %v9855
        %v9952 = vunpack.c.l.b16 %v9856
        %v9953 = vunpack.c.l.b16 %v9857
        %v9954 = vunpack.c.l.b16 %v9858
        %v9955 = vunpack.c.l.b16 %v9859
        %v9956 = vunpack.c.l.b16 %v9860
        %v9957 = vunpack.c.l.b16 %v9861
        %v9958 = vunpack.c.l.b16 %v9862
        %v9959 = vunpack.c.l.b16 %v9863
        %v9960 = vunpack.c.l.b16 %v9864
        %v9961 = vunpack.c.l.b16 %v9865
        %v9962 = vunpack.c.l.b16 %v9866
        %v9963 = vunpack.c.l.b16 %v9867
        %v9964 = vunpack.c.l.b16 %v9868
        %v9965 = vunpack.c.l.b16 %v9869
        %v9966 = vunpack.c.l.b16 %v9870
        %v9967 = vunpack.c.l.b16 %v9871
        %v9968 = vunpack.c.l.b16 %v9872
        %v9969 = vunpack.c.l.b16 %v9873
        %v9970 = vunpack.c.l.b16 %v9874
        %v9971 = vunpack.c.l.b16 %v9875
        %v9972 = vunpack.c.l.b16 %v9876
        %v9973 = vunpack.c.l.b16 %v9877
        %v9974 = vunpack.c.l.b16 %v9878
        %v9975 = vunpack.c.l.b16 %v9879
        %v9976 = vunpack.c.l.b16 %v9880
        %v9977 = vunpack.c.l.b16 %v9881
        %v9978 = vunpack.c.l.b16 %v9882
        %v9979 = vunpack.c.l.b16 %v9883
        %v9980 = vunpack.c.l.b16 %v9884
        %v9981 = vunpack.c.l.b16 %v9885
        %v9982 = vunpack.c.l.b16 %v9886
        %v9983 = vunpack.c.l.b16 %v9887
        %v9984 = vunpack.c.l.b16 %v9888
        %v9985 = vunpack.c.l.b16 %v9889
        %v9986 = vunpack.c.l.b16 %v9890
        %v9987 = vunpack.c.l.b16 %v9891
        %v9988 = vunpack.c.l.b16 %v9892
        %v9989 = vpack.c.b16 %v9942, %v9941
        %v9990 = vpack.c.b16 %v9944, %v9943
        %v9991 = vpack.c.b16 %v9946, %v9945
        %v9992 = vpack.c.b16 %v9948, %v9947
        %v9993 = vpack.c.b16 %v9950, %v9949
        %v9994 = vpack.c.b16 %v9952, %v9951
        %v9995 = vpack.c.b16 %v9954, %v9953
        %v9996 = vpack.c.b16 %v9956, %v9955
        %v9997 = vpack.c.b16 %v9958, %v9957
        %v9998 = vpack.c.b16 %v9960, %v9959
        %v9999 = vpack.c.b16 %v9962, %v9961
        %v10000 = vpack.c.b16 %v9964, %v9963
        %v10001 = vpack.c.b16 %v9966, %v9965
        %v10002 = vpack.c.b16 %v9968, %v9967
        %v10003 = vpack.c.b16 %v9970, %v9969
        %v10004 = vpack.c.b16 %v9972, %v9971
        %v10005 = vpack.c.b16 %v9974, %v9973
        %v10006 = vpack.c.b16 %v9976, %v9975
        %v10007 = vpack.c.b16 %v9978, %v9977
        %v10008 = vpack.c.b16 %v9980, %v9979
        %v10009 = vpack.c.b16 %v9982, %v9981
        %v10010 = vpack.c.b16 %v9984, %v9983
        %v10011 = vpack.c.b16 %v9986, %v9985
        %v10012 = vpack.c.b16 %v9988, %v9987
        %10037 = vmatpush.bf16.msra.mxu0 %v9996
        %10038 = vmatpush.bf16.msra.mxu0 %v9995
        %10039 = vmatpush.bf16.msra.mxu0 %v9994
        %10040 = vmatpush.bf16.msra.mxu0 %v9993
        %10041 = vmatpush.bf16.msra.mxu0 %v9992
        %10042 = vmatpush.bf16.msra.mxu0 %v9991
        %10043 = vmatpush.bf16.msra.mxu0 %v9990
        %10044 = vmatpush.bf16.msra.mxu0 %v9989
        %10045 = vmatmul.bf16.gmra.mxu0 %v9596
        %v10046 = vpop.f32.mrf.mxu0
        %v10047 = vadd.f32 0.0, %v10046
        %v10048 = vpop.f32.mrf.mxu0
        %v10049 = vadd.f32 0.0, %v10048
        %10050 = vmatmul.bf16.gmra.mxu0 %v9604
        %v10051 = vpop.f32.mrf.mxu0
        %v10052 = vadd.f32 0.0, %v10051
        %v10053 = vpop.f32.mrf.mxu0
        %v10054 = vadd.f32 0.0, %v10053
        %10055 = vmatmul.bf16.gmra.mxu0 %v9612
        %v10056 = vpop.f32.mrf.mxu0
        %v10057 = vadd.f32 0.0, %v10056
        %v10058 = vpop.f32.mrf.mxu0
        %v10059 = vadd.f32 0.0, %v10058
        %10060 = vmatmul.bf16.gmra.mxu0 %v9620
        %v10061 = vpop.f32.mrf.mxu0
        %v10062 = vadd.f32 0.0, %v10061
        %v10063 = vpop.f32.mrf.mxu0
        %v10064 = vadd.f32 0.0, %v10063
        %10065 = vmatmul.bf16.gmra.mxu0 %v9628
        %v10066 = vpop.f32.mrf.mxu0
        %v10067 = vadd.f32 0.0, %v10066
        %v10068 = vpop.f32.mrf.mxu0
        %v10069 = vadd.f32 0.0, %v10068
        %10070 = vmatmul.bf16.gmra.mxu0 %v9636
        %v10071 = vpop.f32.mrf.mxu0
        %v10072 = vadd.f32 0.0, %v10071
        %v10073 = vpop.f32.mrf.mxu0
        %v10074 = vadd.f32 0.0, %v10073
        %10075 = vmatmul.bf16.gmra.mxu0 %v9644
        %v10076 = vpop.f32.mrf.mxu0
        %v10077 = vadd.f32 0.0, %v10076
        %v10078 = vpop.f32.mrf.mxu0
        %v10079 = vadd.f32 0.0, %v10078
        %10080 = vmatmul.bf16.gmra.mxu0 %v9652
        %v10081 = vpop.f32.mrf.mxu0
        %v10082 = vadd.f32 0.0, %v10081
        %v10083 = vpop.f32.mrf.mxu0
        %v10084 = vadd.f32 0.0, %v10083
        %10085 = vmatmul.bf16.gmra.mxu0 %v9660
        %v10086 = vpop.f32.mrf.mxu0
        %v10087 = vadd.f32 0.0, %v10086
        %v10088 = vpop.f32.mrf.mxu0
        %v10089 = vadd.f32 0.0, %v10088
        %10090 = vmatmul.bf16.gmra.mxu0 %v9668
        %v10091 = vpop.f32.mrf.mxu0
        %v10092 = vadd.f32 0.0, %v10091
        %v10093 = vpop.f32.mrf.mxu0
        %v10094 = vadd.f32 0.0, %v10093
        %10095 = vmatmul.bf16.gmra.mxu0 %v9676
        %v10096 = vpop.f32.mrf.mxu0
        %v10097 = vadd.f32 0.0, %v10096
        %v10098 = vpop.f32.mrf.mxu0
        %v10099 = vadd.f32 0.0, %v10098
        %10100 = vmatmul.bf16.gmra.mxu0 %v9684
        %v10101 = vpop.f32.mrf.mxu0
        %v10102 = vadd.f32 0.0, %v10101
        %v10103 = vpop.f32.mrf.mxu0
        %v10104 = vadd.f32 0.0, %v10103
        %10105 = vmatmul.bf16.gmra.mxu0 %v9692
        %v10106 = vpop.f32.mrf.mxu0
        %v10107 = vadd.f32 0.0, %v10106
        %v10108 = vpop.f32.mrf.mxu0
        %v10109 = vadd.f32 0.0, %v10108
        %10110 = vmatmul.bf16.gmra.mxu0 %v9700
        %v10111 = vpop.f32.mrf.mxu0
        %v10112 = vadd.f32 0.0, %v10111
        %v10113 = vpop.f32.mrf.mxu0
        %v10114 = vadd.f32 0.0, %v10113
        %10115 = vmatmul.bf16.gmra.mxu0 %v9708
        %v10116 = vpop.f32.mrf.mxu0
        %v10117 = vadd.f32 0.0, %v10116
        %v10118 = vpop.f32.mrf.mxu0
        %v10119 = vadd.f32 0.0, %v10118
        %10120 = vmatmul.bf16.gmra.mxu0 %v9839
        %v10121 = vpop.f32.mrf.mxu0
        %v10122 = vadd.f32 0.0, %v10121
        %v10123 = vpop.f32.mrf.mxu0
        %v10124 = vadd.f32 0.0, %v10123
        %10125 = vdwg.mxu0
        %10126 = vmatpush.bf16.msra.mxu0 %v10004
        %10127 = vmatpush.bf16.msra.mxu0 %v10003
        %10128 = vmatpush.bf16.msra.mxu0 %v10002
        %10129 = vmatpush.bf16.msra.mxu0 %v10001
        %10130 = vmatpush.bf16.msra.mxu0 %v10000
        %10131 = vmatpush.bf16.msra.mxu0 %v9999
        %10132 = vmatpush.bf16.msra.mxu0 %v9998
        %10133 = vmatpush.bf16.msra.mxu0 %v9997
        %10134 = vmatmul.bf16.gmra.mxu0 %v9557
        %v10135 = vpop.f32.mrf.mxu0
        %v10136 = vadd.f32 %v10047, %v10135
        %v10137 = vpop.f32.mrf.mxu0
        %v10138 = vadd.f32 %v10049, %v10137
        %10139 = vmatmul.bf16.gmra.mxu0 %v9558
        %v10140 = vpop.f32.mrf.mxu0
        %v10141 = vadd.f32 %v10052, %v10140
        %v10142 = vpop.f32.mrf.mxu0
        %v10143 = vadd.f32 %v10054, %v10142
        %10144 = vmatmul.bf16.gmra.mxu0 %v9559
        %v10145 = vpop.f32.mrf.mxu0
        %v10146 = vadd.f32 %v10057, %v10145
        %v10147 = vpop.f32.mrf.mxu0
        %v10148 = vadd.f32 %v10059, %v10147
        %10149 = vmatmul.bf16.gmra.mxu0 %v9560
        %v10150 = vpop.f32.mrf.mxu0
        %v10151 = vadd.f32 %v10062, %v10150
        %v10152 = vpop.f32.mrf.mxu0
        %v10153 = vadd.f32 %v10064, %v10152
        %10154 = vmatmul.bf16.gmra.mxu0 %v9561
        %v10155 = vpop.f32.mrf.mxu0
        %v10156 = vadd.f32 %v10067, %v10155
        %v10157 = vpop.f32.mrf.mxu0
        %v10158 = vadd.f32 %v10069, %v10157
        %10159 = vmatmul.bf16.gmra.mxu0 %v9562
        %v10160 = vpop.f32.mrf.mxu0
        %v10161 = vadd.f32 %v10072, %v10160
        %v10162 = vpop.f32.mrf.mxu0
        %v10163 = vadd.f32 %v10074, %v10162
        %10164 = vmatmul.bf16.gmra.mxu0 %v9563
        %v10165 = vpop.f32.mrf.mxu0
        %v10166 = vadd.f32 %v10077, %v10165
        %v10167 = vpop.f32.mrf.mxu0
        %v10168 = vadd.f32 %v10079, %v10167
        %10169 = vmatmul.bf16.gmra.mxu0 %v9564
        %v10170 = vpop.f32.mrf.mxu0
        %v10171 = vadd.f32 %v10082, %v10170
        %v10172 = vpop.f32.mrf.mxu0
        %v10173 = vadd.f32 %v10084, %v10172
        %10174 = vmatmul.bf16.gmra.mxu0 %v9565
        %v10175 = vpop.f32.mrf.mxu0
        %v10176 = vadd.f32 %v10087, %v10175
        %v10177 = vpop.f32.mrf.mxu0
        %v10178 = vadd.f32 %v10089, %v10177
        %10179 = vmatmul.bf16.gmra.mxu0 %v9566
        %v10180 = vpop.f32.mrf.mxu0
        %v10181 = vadd.f32 %v10092, %v10180
        %v10182 = vpop.f32.mrf.mxu0
        %v10183 = vadd.f32 %v10094, %v10182
        %10184 = vmatmul.bf16.gmra.mxu0 %v9567
        %v10185 = vpop.f32.mrf.mxu0
        %v10186 = vadd.f32 %v10097, %v10185
        %v10187 = vpop.f32.mrf.mxu0
        %v10188 = vadd.f32 %v10099, %v10187
        %10189 = vmatmul.bf16.gmra.mxu0 %v9568
        %v10190 = vpop.f32.mrf.mxu0
        %v10191 = vadd.f32 %v10102, %v10190
        %v10192 = vpop.f32.mrf.mxu0
        %v10193 = vadd.f32 %v10104, %v10192
        %10194 = vmatmul.bf16.gmra.mxu0 %v9569
        %v10195 = vpop.f32.mrf.mxu0
        %v10196 = vadd.f32 %v10107, %v10195
        %v10197 = vpop.f32.mrf.mxu0
        %v10198 = vadd.f32 %v10109, %v10197
        %10199 = vmatmul.bf16.gmra.mxu0 %v9570
        %v10200 = vpop.f32.mrf.mxu0
        %v10201 = vadd.f32 %v10112, %v10200
        %v10202 = vpop.f32.mrf.mxu0
        %v10203 = vadd.f32 %v10114, %v10202
        %10204 = vmatmul.bf16.gmra.mxu0 %v9571
        %v10205 = vpop.f32.mrf.mxu0
        %v10206 = vadd.f32 %v10117, %v10205
        %v10207 = vpop.f32.mrf.mxu0
        %v10208 = vadd.f32 %v10119, %v10207
        %10209 = vmatmul.bf16.gmra.mxu0 %v9572
        %v10210 = vpop.f32.mrf.mxu0
        %v10211 = vadd.f32 %v10122, %v10210
        %v10212 = vpop.f32.mrf.mxu0
        %v10213 = vadd.f32 %v10124, %v10212
        %10214 = vdwg.mxu0
        %10215 = vmatpush.bf16.msra.mxu0 %v10012
        %10216 = vmatpush.bf16.msra.mxu0 %v10011
        %10217 = vmatpush.bf16.msra.mxu0 %v10010
        %10218 = vmatpush.bf16.msra.mxu0 %v10009
        %10219 = vmatpush.bf16.msra.mxu0 %v10008
        %10220 = vmatpush.bf16.msra.mxu0 %v10007
        %10221 = vmatpush.bf16.msra.mxu0 %v10006
        %10222 = vmatpush.bf16.msra.mxu0 %v10005
        %10223 = vmatmul.bf16.gmra.mxu0 %v9726
        %v10224 = vpop.f32.mrf.mxu0
        %v10225 = vadd.f32 %v10136, %v10224
        %v10226 = vpop.f32.mrf.mxu0
        %v10227 = vadd.f32 %v10138, %v10226
        %10228 = vmatmul.bf16.gmra.mxu0 %v9729
        %v10229 = vpop.f32.mrf.mxu0
        %v10230 = vadd.f32 %v10141, %v10229
        %v10231 = vpop.f32.mrf.mxu0
        %v10232 = vadd.f32 %v10143, %v10231
        %10233 = vmatmul.bf16.gmra.mxu0 %v9732
        %v10234 = vpop.f32.mrf.mxu0
        %v10235 = vadd.f32 %v10146, %v10234
        %v10236 = vpop.f32.mrf.mxu0
        %v10237 = vadd.f32 %v10148, %v10236
        %10238 = vmatmul.bf16.gmra.mxu0 %v9735
        %v10239 = vpop.f32.mrf.mxu0
        %v10240 = vadd.f32 %v10151, %v10239
        %v10241 = vpop.f32.mrf.mxu0
        %v10242 = vadd.f32 %v10153, %v10241
        %10243 = vmatmul.bf16.gmra.mxu0 %v9738
        %v10244 = vpop.f32.mrf.mxu0
        %v10245 = vadd.f32 %v10156, %v10244
        %v10246 = vpop.f32.mrf.mxu0
        %v10247 = vadd.f32 %v10158, %v10246
        %10248 = vmatmul.bf16.gmra.mxu0 %v9741
        %v10249 = vpop.f32.mrf.mxu0
        %v10250 = vadd.f32 %v10161, %v10249
        %v10251 = vpop.f32.mrf.mxu0
        %v10252 = vadd.f32 %v10163, %v10251
        %10253 = vmatmul.bf16.gmra.mxu0 %v9744
        %v10254 = vpop.f32.mrf.mxu0
        %v10255 = vadd.f32 %v10166, %v10254
        %v10256 = vpop.f32.mrf.mxu0
        %v10257 = vadd.f32 %v10168, %v10256
        %10258 = vmatmul.bf16.gmra.mxu0 %v9747
        %v10259 = vpop.f32.mrf.mxu0
        %v10260 = vadd.f32 %v10171, %v10259
        %v10261 = vpop.f32.mrf.mxu0
        %v10262 = vadd.f32 %v10173, %v10261
        %10263 = vmatmul.bf16.gmra.mxu0 %v9750
        %v10264 = vpop.f32.mrf.mxu0
        %v10265 = vadd.f32 %v10176, %v10264
        %v10266 = vpop.f32.mrf.mxu0
        %v10267 = vadd.f32 %v10178, %v10266
        %10268 = vmatmul.bf16.gmra.mxu0 %v9753
        %v10269 = vpop.f32.mrf.mxu0
        %v10270 = vadd.f32 %v10181, %v10269
        %v10271 = vpop.f32.mrf.mxu0
        %v10272 = vadd.f32 %v10183, %v10271
        %10273 = vmatmul.bf16.gmra.mxu0 %v9756
        %v10274 = vpop.f32.mrf.mxu0
        %v10275 = vadd.f32 %v10186, %v10274
        %v10276 = vpop.f32.mrf.mxu0
        %v10277 = vadd.f32 %v10188, %v10276
        %10278 = vmatmul.bf16.gmra.mxu0 %v9759
        %v10279 = vpop.f32.mrf.mxu0
        %v10280 = vadd.f32 %v10191, %v10279
        %v10281 = vpop.f32.mrf.mxu0
        %v10282 = vadd.f32 %v10193, %v10281
        %10283 = vmatmul.bf16.gmra.mxu0 %v9762
        %v10284 = vpop.f32.mrf.mxu0
        %v10285 = vadd.f32 %v10196, %v10284
        %v10286 = vpop.f32.mrf.mxu0
        %v10287 = vadd.f32 %v10198, %v10286
        %10288 = vmatmul.bf16.gmra.mxu0 %v9765
        %v10289 = vpop.f32.mrf.mxu0
        %v10290 = vadd.f32 %v10201, %v10289
        %v10291 = vpop.f32.mrf.mxu0
        %v10292 = vadd.f32 %v10203, %v10291
        %10293 = vmatmul.bf16.gmra.mxu0 %v9768
        %v10294 = vpop.f32.mrf.mxu0
        %v10295 = vadd.f32 %v10206, %v10294
        %v10296 = vpop.f32.mrf.mxu0
        %v10297 = vadd.f32 %v10208, %v10296
        %10298 = vmatmul.bf16.gmra.mxu0 %v9843
        %v10299 = vpop.f32.mrf.mxu0
        %v10300 = vadd.f32 %v10211, %v10299
        %v10301 = vpop.f32.mrf.mxu0
        %v10302 = vadd.f32 %v10213, %v10301
        %10303 = vdwg.mxu0
        %v10352 = vunpack.c.l.b16 %v9784
        %v10353 = vunpack.c.l.b16 %v9785
        %v10354 = vunpack.c.l.b16 %v9786
        %v10355 = vunpack.c.l.b16 %v9787
        %v10356 = vunpack.c.l.b16 %v9788
        %v10357 = vunpack.c.l.b16 %v9789
        %v10358 = vunpack.c.l.b16 %v9790
        %v10359 = vunpack.c.l.b16 %v9791
        %v10360 = vunpack.c.l.b16 %v9792
        %v10361 = vunpack.c.l.b16 %v9793
        %v10362 = vunpack.c.l.b16 %v9794
        %v10363 = vunpack.c.l.b16 %v9795
        %v10364 = vunpack.c.l.b16 %v9796
        %v10365 = vunpack.c.l.b16 %v9797
        %v10366 = vunpack.c.l.b16 %v9798
        %v10367 = vunpack.c.l.b16 %v9799
        %v10368 = vunpack.c.l.b16 %v9800
        %v10369 = vunpack.c.l.b16 %v9801
        %v10370 = vunpack.c.l.b16 %v9802
        %v10371 = vunpack.c.l.b16 %v9803
        %v10372 = vunpack.c.l.b16 %v9804
        %v10373 = vunpack.c.l.b16 %v9805
        %v10374 = vunpack.c.l.b16 %v9806
        %v10375 = vunpack.c.l.b16 %v9807
        %v10376 = vunpack.c.l.b16 %v9808
        %v10377 = vunpack.c.l.b16 %v9809
        %v10378 = vunpack.c.l.b16 %v9810
        %v10379 = vunpack.c.l.b16 %v9811
        %v10380 = vunpack.c.l.b16 %v9812
        %v10381 = vunpack.c.l.b16 %v9813
        %v10382 = vunpack.c.l.b16 %v9814
        %v10383 = vunpack.c.l.b16 %v9815
        %v10384 = vunpack.c.l.b16 %v9816
        %v10385 = vunpack.c.l.b16 %v9817
        %v10386 = vunpack.c.l.b16 %v9818
        %v10387 = vunpack.c.l.b16 %v9819
        %v10388 = vunpack.c.l.b16 %v9820
        %v10389 = vunpack.c.l.b16 %v9821
        %v10390 = vunpack.c.l.b16 %v9822
        %v10391 = vunpack.c.l.b16 %v9823
        %v10392 = vunpack.c.l.b16 %v9824
        %v10393 = vunpack.c.l.b16 %v9825
        %v10394 = vunpack.c.l.b16 %v9826
        %v10395 = vunpack.c.l.b16 %v9827
        %v10396 = vunpack.c.l.b16 %v9828
        %v10397 = vunpack.c.l.b16 %v9829
        %v10398 = vunpack.c.l.b16 %v9830
        %v10399 = vunpack.c.l.b16 %v9831
        %v10400 = vpack.c.b16 %v10353, %v10352
        %v10401 = vpack.c.b16 %v10355, %v10354
        %v10402 = vpack.c.b16 %v10357, %v10356
        %v10403 = vpack.c.b16 %v10359, %v10358
        %v10404 = vpack.c.b16 %v10361, %v10360
        %v10405 = vpack.c.b16 %v10363, %v10362
        %v10406 = vpack.c.b16 %v10365, %v10364
        %v10407 = vpack.c.b16 %v10367, %v10366
        %v10408 = vpack.c.b16 %v10369, %v10368
        %v10409 = vpack.c.b16 %v10371, %v10370
        %v10410 = vpack.c.b16 %v10373, %v10372
        %v10411 = vpack.c.b16 %v10375, %v10374
        %v10412 = vpack.c.b16 %v10377, %v10376
        %v10413 = vpack.c.b16 %v10379, %v10378
        %v10414 = vpack.c.b16 %v10381, %v10380
        %v10415 = vpack.c.b16 %v10383, %v10382
        %v10416 = vpack.c.b16 %v10385, %v10384
        %v10417 = vpack.c.b16 %v10387, %v10386
        %v10418 = vpack.c.b16 %v10389, %v10388
        %v10419 = vpack.c.b16 %v10391, %v10390
        %v10420 = vpack.c.b16 %v10393, %v10392
        %v10421 = vpack.c.b16 %v10395, %v10394
        %v10422 = vpack.c.b16 %v10397, %v10396
        %v10423 = vpack.c.b16 %v10399, %v10398
        %10448 = vmatpush.bf16.msra.mxu0 %v10407
        %10449 = vmatpush.bf16.msra.mxu0 %v10406
        %10450 = vmatpush.bf16.msra.mxu0 %v10405
        %10451 = vmatpush.bf16.msra.mxu0 %v10404
        %10452 = vmatpush.bf16.msra.mxu0 %v10403
        %10453 = vmatpush.bf16.msra.mxu0 %v10402
        %10454 = vmatpush.bf16.msra.mxu0 %v10401
        %10455 = vmatpush.bf16.msra.mxu0 %v10400
        %10456 = vmatmul.bf16.gmra.mxu0 %v569
        %v10457 = vpop.f32.mrf.mxu0
        %v10458 = vadd.f32 %v10225, %v10457
        %v10459 = vpop.f32.mrf.mxu0
        %v10460 = vadd.f32 %v10227, %v10459
        %10461 = vmatmul.bf16.gmra.mxu0 %v9596
        %v10462 = vpop.f32.mrf.mxu0
        %v10463 = vadd.f32 %v10230, %v10462
        %v10464 = vpop.f32.mrf.mxu0
        %v10465 = vadd.f32 %v10232, %v10464
        %10466 = vmatmul.bf16.gmra.mxu0 %v9604
        %v10467 = vpop.f32.mrf.mxu0
        %v10468 = vadd.f32 %v10235, %v10467
        %v10469 = vpop.f32.mrf.mxu0
        %v10470 = vadd.f32 %v10237, %v10469
        %10471 = vmatmul.bf16.gmra.mxu0 %v9612
        %v10472 = vpop.f32.mrf.mxu0
        %v10473 = vadd.f32 %v10240, %v10472
        %v10474 = vpop.f32.mrf.mxu0
        %v10475 = vadd.f32 %v10242, %v10474
        %10476 = vmatmul.bf16.gmra.mxu0 %v9620
        %v10477 = vpop.f32.mrf.mxu0
        %v10478 = vadd.f32 %v10245, %v10477
        %v10479 = vpop.f32.mrf.mxu0
        %v10480 = vadd.f32 %v10247, %v10479
        %10481 = vmatmul.bf16.gmra.mxu0 %v9628
        %v10482 = vpop.f32.mrf.mxu0
        %v10483 = vadd.f32 %v10250, %v10482
        %v10484 = vpop.f32.mrf.mxu0
        %v10485 = vadd.f32 %v10252, %v10484
        %10486 = vmatmul.bf16.gmra.mxu0 %v9636
        %v10487 = vpop.f32.mrf.mxu0
        %v10488 = vadd.f32 %v10255, %v10487
        %v10489 = vpop.f32.mrf.mxu0
        %v10490 = vadd.f32 %v10257, %v10489
        %10491 = vmatmul.bf16.gmra.mxu0 %v9644
        %v10492 = vpop.f32.mrf.mxu0
        %v10493 = vadd.f32 %v10260, %v10492
        %v10494 = vpop.f32.mrf.mxu0
        %v10495 = vadd.f32 %v10262, %v10494
        %10496 = vmatmul.bf16.gmra.mxu0 %v9652
        %v10497 = vpop.f32.mrf.mxu0
        %v10498 = vadd.f32 %v10265, %v10497
        %v10499 = vpop.f32.mrf.mxu0
        %v10500 = vadd.f32 %v10267, %v10499
        %10501 = vmatmul.bf16.gmra.mxu0 %v9660
        %v10502 = vpop.f32.mrf.mxu0
        %v10503 = vadd.f32 %v10270, %v10502
        %v10504 = vpop.f32.mrf.mxu0
        %v10505 = vadd.f32 %v10272, %v10504
        %10506 = vmatmul.bf16.gmra.mxu0 %v9668
        %v10507 = vpop.f32.mrf.mxu0
        %v10508 = vadd.f32 %v10275, %v10507
        %v10509 = vpop.f32.mrf.mxu0
        %v10510 = vadd.f32 %v10277, %v10509
        %10511 = vmatmul.bf16.gmra.mxu0 %v9676
        %v10512 = vpop.f32.mrf.mxu0
        %v10513 = vadd.f32 %v10280, %v10512
        %v10514 = vpop.f32.mrf.mxu0
        %v10515 = vadd.f32 %v10282, %v10514
        %10516 = vmatmul.bf16.gmra.mxu0 %v9684
        %v10517 = vpop.f32.mrf.mxu0
        %v10518 = vadd.f32 %v10285, %v10517
        %v10519 = vpop.f32.mrf.mxu0
        %v10520 = vadd.f32 %v10287, %v10519
        %10521 = vmatmul.bf16.gmra.mxu0 %v9692
        %v10522 = vpop.f32.mrf.mxu0
        %v10523 = vadd.f32 %v10290, %v10522
        %v10524 = vpop.f32.mrf.mxu0
        %v10525 = vadd.f32 %v10292, %v10524
        %10526 = vmatmul.bf16.gmra.mxu0 %v9700
        %v10527 = vpop.f32.mrf.mxu0
        %v10528 = vadd.f32 %v10295, %v10527
        %v10529 = vpop.f32.mrf.mxu0
        %v10530 = vadd.f32 %v10297, %v10529
        %10531 = vmatmul.bf16.gmra.mxu0 %v9708
        %v10532 = vpop.f32.mrf.mxu0
        %v10533 = vadd.f32 %v10300, %v10532
        %v10534 = vpop.f32.mrf.mxu0
        %v10535 = vadd.f32 %v10302, %v10534
        %10536 = vdwg.mxu0
        %10537 = vmatpush.bf16.msra.mxu0 %v10415
        %10538 = vmatpush.bf16.msra.mxu0 %v10414
        %10539 = vmatpush.bf16.msra.mxu0 %v10413
        %10540 = vmatpush.bf16.msra.mxu0 %v10412
        %10541 = vmatpush.bf16.msra.mxu0 %v10411
        %10542 = vmatpush.bf16.msra.mxu0 %v10410
        %10543 = vmatpush.bf16.msra.mxu0 %v10409
        %10544 = vmatpush.bf16.msra.mxu0 %v10408
        %10545 = vmatmul.bf16.gmra.mxu0 0
        %v10546 = vpop.f32.mrf.mxu0
        %v10547 = vadd.f32 %v10458, %v10546
        %v10548 = vpop.f32.mrf.mxu0
        %v10549 = vadd.f32 %v10460, %v10548
        %10550 = vmatmul.bf16.gmra.mxu0 %v9557
        %v10551 = vpop.f32.mrf.mxu0
        %v10552 = vadd.f32 %v10463, %v10551
        %v10553 = vpop.f32.mrf.mxu0
        %v10554 = vadd.f32 %v10465, %v10553
        %10555 = vmatmul.bf16.gmra.mxu0 %v9558
        %v10556 = vpop.f32.mrf.mxu0
        %v10557 = vadd.f32 %v10468, %v10556
        %v10558 = vpop.f32.mrf.mxu0
        %v10559 = vadd.f32 %v10470, %v10558
        %10560 = vmatmul.bf16.gmra.mxu0 %v9559
        %v10561 = vpop.f32.mrf.mxu0
        %v10562 = vadd.f32 %v10473, %v10561
        %v10563 = vpop.f32.mrf.mxu0
        %v10564 = vadd.f32 %v10475, %v10563
        %10565 = vmatmul.bf16.gmra.mxu0 %v9560
        %v10566 = vpop.f32.mrf.mxu0
        %v10567 = vadd.f32 %v10478, %v10566
        %v10568 = vpop.f32.mrf.mxu0
        %v10569 = vadd.f32 %v10480, %v10568
        %10570 = vmatmul.bf16.gmra.mxu0 %v9561
        %v10571 = vpop.f32.mrf.mxu0
        %v10572 = vadd.f32 %v10483, %v10571
        %v10573 = vpop.f32.mrf.mxu0
        %v10574 = vadd.f32 %v10485, %v10573
        %10575 = vmatmul.bf16.gmra.mxu0 %v9562
        %v10576 = vpop.f32.mrf.mxu0
        %v10577 = vadd.f32 %v10488, %v10576
        %v10578 = vpop.f32.mrf.mxu0
        %v10579 = vadd.f32 %v10490, %v10578
        %10580 = vmatmul.bf16.gmra.mxu0 %v9563
        %v10581 = vpop.f32.mrf.mxu0
        %v10582 = vadd.f32 %v10493, %v10581
        %v10583 = vpop.f32.mrf.mxu0
        %v10584 = vadd.f32 %v10495, %v10583
        %10585 = vmatmul.bf16.gmra.mxu0 %v9564
        %v10586 = vpop.f32.mrf.mxu0
        %v10587 = vadd.f32 %v10498, %v10586
        %v10588 = vpop.f32.mrf.mxu0
        %v10589 = vadd.f32 %v10500, %v10588
        %10590 = vmatmul.bf16.gmra.mxu0 %v9565
        %v10591 = vpop.f32.mrf.mxu0
        %v10592 = vadd.f32 %v10503, %v10591
        %v10593 = vpop.f32.mrf.mxu0
        %v10594 = vadd.f32 %v10505, %v10593
        %10595 = vmatmul.bf16.gmra.mxu0 %v9566
        %v10596 = vpop.f32.mrf.mxu0
        %v10597 = vadd.f32 %v10508, %v10596
        %v10598 = vpop.f32.mrf.mxu0
        %v10599 = vadd.f32 %v10510, %v10598
        %10600 = vmatmul.bf16.gmra.mxu0 %v9567
        %v10601 = vpop.f32.mrf.mxu0
        %v10602 = vadd.f32 %v10513, %v10601
        %v10603 = vpop.f32.mrf.mxu0
        %v10604 = vadd.f32 %v10515, %v10603
        %10605 = vmatmul.bf16.gmra.mxu0 %v9568
        %v10606 = vpop.f32.mrf.mxu0
        %v10607 = vadd.f32 %v10518, %v10606
        %v10608 = vpop.f32.mrf.mxu0
        %v10609 = vadd.f32 %v10520, %v10608
        %10610 = vmatmul.bf16.gmra.mxu0 %v9569
        %v10611 = vpop.f32.mrf.mxu0
        %v10612 = vadd.f32 %v10523, %v10611
        %v10613 = vpop.f32.mrf.mxu0
        %v10614 = vadd.f32 %v10525, %v10613
        %10615 = vmatmul.bf16.gmra.mxu0 %v9570
        %v10616 = vpop.f32.mrf.mxu0
        %v10617 = vadd.f32 %v10528, %v10616
        %v10618 = vpop.f32.mrf.mxu0
        %v10619 = vadd.f32 %v10530, %v10618
        %10620 = vmatmul.bf16.gmra.mxu0 %v9571
        %v10621 = vpop.f32.mrf.mxu0
        %v10622 = vadd.f32 %v10533, %v10621
        %v10623 = vpop.f32.mrf.mxu0
        %v10624 = vadd.f32 %v10535, %v10623
        %10625 = vdwg.mxu0
        %10626 = vmatpush.bf16.msra.mxu0 %v10423
        %10627 = vmatpush.bf16.msra.mxu0 %v10422
        %10628 = vmatpush.bf16.msra.mxu0 %v10421
        %10629 = vmatpush.bf16.msra.mxu0 %v10420
        %10630 = vmatpush.bf16.msra.mxu0 %v10419
        %10631 = vmatpush.bf16.msra.mxu0 %v10418
        %10632 = vmatpush.bf16.msra.mxu0 %v10417
        %10633 = vmatpush.bf16.msra.mxu0 %v10416
        %10634 = vmatmul.bf16.gmra.mxu0 %v709
        %v10635 = vpop.f32.mrf.mxu0
        %v10636 = vadd.f32 %v10547, %v10635
        %v10637 = vpop.f32.mrf.mxu0
        %v10638 = vadd.f32 %v10549, %v10637
        %10639 = vmatmul.bf16.gmra.mxu0 %v9726
        %v10640 = vpop.f32.mrf.mxu0
        %v10641 = vadd.f32 %v10552, %v10640
        %v10642 = vpop.f32.mrf.mxu0
        %v10643 = vadd.f32 %v10554, %v10642
        %10644 = vmatmul.bf16.gmra.mxu0 %v9729
        %v10645 = vpop.f32.mrf.mxu0
        %v10646 = vadd.f32 %v10557, %v10645
        %v10647 = vpop.f32.mrf.mxu0
        %v10648 = vadd.f32 %v10559, %v10647
        %10649 = vmatmul.bf16.gmra.mxu0 %v9732
        %v10650 = vpop.f32.mrf.mxu0
        %v10651 = vadd.f32 %v10562, %v10650
        %v10652 = vpop.f32.mrf.mxu0
        %v10653 = vadd.f32 %v10564, %v10652
        %10654 = vmatmul.bf16.gmra.mxu0 %v9735
        %v10655 = vpop.f32.mrf.mxu0
        %v10656 = vadd.f32 %v10567, %v10655
        %v10657 = vpop.f32.mrf.mxu0
        %v10658 = vadd.f32 %v10569, %v10657
        %10659 = vmatmul.bf16.gmra.mxu0 %v9738
        %v10660 = vpop.f32.mrf.mxu0
        %v10661 = vadd.f32 %v10572, %v10660
        %v10662 = vpop.f32.mrf.mxu0
        %v10663 = vadd.f32 %v10574, %v10662
        %10664 = vmatmul.bf16.gmra.mxu0 %v9741
        %v10665 = vpop.f32.mrf.mxu0
        %v10666 = vadd.f32 %v10577, %v10665
        %v10667 = vpop.f32.mrf.mxu0
        %v10668 = vadd.f32 %v10579, %v10667
        %10669 = vmatmul.bf16.gmra.mxu0 %v9744
        %v10670 = vpop.f32.mrf.mxu0
        %v10671 = vadd.f32 %v10582, %v10670
        %v10672 = vpop.f32.mrf.mxu0
        %v10673 = vadd.f32 %v10584, %v10672
        %10674 = vmatmul.bf16.gmra.mxu0 %v9747
        %v10675 = vpop.f32.mrf.mxu0
        %v10676 = vadd.f32 %v10587, %v10675
        %v10677 = vpop.f32.mrf.mxu0
        %v10678 = vadd.f32 %v10589, %v10677
        %10679 = vmatmul.bf16.gmra.mxu0 %v9750
        %v10680 = vpop.f32.mrf.mxu0
        %v10681 = vadd.f32 %v10592, %v10680
        %v10682 = vpop.f32.mrf.mxu0
        %v10683 = vadd.f32 %v10594, %v10682
        %10684 = vmatmul.bf16.gmra.mxu0 %v9753
        %v10685 = vpop.f32.mrf.mxu0
        %v10686 = vadd.f32 %v10597, %v10685
        %v10687 = vpop.f32.mrf.mxu0
        %v10688 = vadd.f32 %v10599, %v10687
        %10689 = vmatmul.bf16.gmra.mxu0 %v9756
        %v10690 = vpop.f32.mrf.mxu0
        %v10691 = vadd.f32 %v10602, %v10690
        %v10692 = vpop.f32.mrf.mxu0
        %v10693 = vadd.f32 %v10604, %v10692
        %10694 = vmatmul.bf16.gmra.mxu0 %v9759
        %v10695 = vpop.f32.mrf.mxu0
        %v10696 = vadd.f32 %v10607, %v10695
        %v10697 = vpop.f32.mrf.mxu0
        %v10698 = vadd.f32 %v10609, %v10697
        %10699 = vmatmul.bf16.gmra.mxu0 %v9762
        %v10700 = vpop.f32.mrf.mxu0
        %v10701 = vadd.f32 %v10612, %v10700
        %v10702 = vpop.f32.mrf.mxu0
        %v10703 = vadd.f32 %v10614, %v10702
        %10704 = vmatmul.bf16.gmra.mxu0 %v9765
        %v10705 = vpop.f32.mrf.mxu0
        %v10706 = vadd.f32 %v10617, %v10705
        %v10707 = vpop.f32.mrf.mxu0
        %v10708 = vadd.f32 %v10619, %v10707
        %10709 = vmatmul.bf16.gmra.mxu0 %v9768
        %v10710 = vpop.f32.mrf.mxu0
        %v10711 = vadd.f32 %v10622, %v10710
        %v10712 = vpop.f32.mrf.mxu0
        %v10713 = vadd.f32 %v10624, %v10712
        %10714 = vdwg.mxu0
        %v10715 = vld [vmem:[%s10 + $0x180] sm:$0xf]
        %v10716 = vld [vmem:[%s10 + $0x184] sm:$0xf]
        %v10717 = vld [vmem:[%s10 + $0x188] sm:$0xf]
        %v10718 = vld [vmem:[%s10 + $0x18c] sm:$0xf]
        %v10719 = vld [vmem:[%s10 + $0x190] sm:$0xf]
        %v10720 = vld [vmem:[%s10 + $0x194] sm:$0xf]
        %v10721 = vld [vmem:[%s10 + $0x198] sm:$0xf]
        %v10722 = vld [vmem:[%s10 + $0x19c] sm:$0xf]
        %v10723 = vld [vmem:[%s10 + $0x1a0] sm:$0xf]
        %v10724 = vld [vmem:[%s10 + $0x1a4] sm:$0xf]
        %v10725 = vld [vmem:[%s10 + $0x1a8] sm:$0xf]
        %v10726 = vld [vmem:[%s10 + $0x1ac] sm:$0xf]
        %v10727 = vld [vmem:[%s10 + $0x1b0] sm:$0xf]
        %v10728 = vld [vmem:[%s10 + $0x1b4] sm:$0xf]
        %v10729 = vld [vmem:[%s10 + $0x1b8] sm:$0xf]
        %v10730 = vld [vmem:[%s10 + $0x1bc] sm:$0xf]
        %v10731 = vld [vmem:[%s10 + $0x1c0] sm:$0xf]
        %v10732 = vld [vmem:[%s10 + $0x1c4] sm:$0xf]
        %v10733 = vld [vmem:[%s10 + $0x1c8] sm:$0xf]
        %v10734 = vld [vmem:[%s10 + $0x1cc] sm:$0xf]
        %v10735 = vld [vmem:[%s10 + $0x1d0] sm:$0xf]
        %v10736 = vld [vmem:[%s10 + $0x1d4] sm:$0xf]
        %v10737 = vld [vmem:[%s10 + $0x1d8] sm:$0xf]
        %v10738 = vld [vmem:[%s10 + $0x1dc] sm:$0xf]
        %v10739 = vld [vmem:[%s10 + $0x1e0] sm:$0xf]
        %v10740 = vld [vmem:[%s10 + $0x1e4] sm:$0xf]
        %v10741 = vld [vmem:[%s10 + $0x1e8] sm:$0xf]
        %v10742 = vld [vmem:[%s10 + $0x1ec] sm:$0xf]
        %v10743 = vld [vmem:[%s10 + $0x1f0] sm:$0xf]
        %v10744 = vld [vmem:[%s10 + $0x1f4] sm:$0xf]
        %v10745 = vld [vmem:[%s10 + $0x1f8] sm:$0xf]
        %v10746 = vld [vmem:[%s10 + $0x1fc] sm:$0xf]
        %v10747 = vld [vmem:[%s10 + $0x200] sm:$0xf]
        %v10748 = vld [vmem:[%s10 + $0x204] sm:$0xf]
        %v10749 = vld [vmem:[%s10 + $0x208] sm:$0xf]
        %v10750 = vld [vmem:[%s10 + $0x20c] sm:$0xf]
        %v10751 = vld [vmem:[%s10 + $0x210] sm:$0xf]
        %v10752 = vld [vmem:[%s10 + $0x214] sm:$0xf]
        %v10753 = vld [vmem:[%s10 + $0x218] sm:$0xf]
        %v10754 = vld [vmem:[%s10 + $0x21c] sm:$0xf]
        %v10755 = vld [vmem:[%s10 + $0x220] sm:$0xf]
        %v10756 = vld [vmem:[%s10 + $0x224] sm:$0xf]
        %v10757 = vld [vmem:[%s10 + $0x228] sm:$0xf]
        %v10758 = vld [vmem:[%s10 + $0x22c] sm:$0xf]
        %v10759 = vld [vmem:[%s10 + $0x230] sm:$0xf]
        %v10760 = vld [vmem:[%s10 + $0x234] sm:$0xf]
        %v10761 = vld [vmem:[%s10 + $0x238] sm:$0xf]
        %v10762 = vld [vmem:[%s10 + $0x23c] sm:$0xf]
        %v10811 = vunpack.c.l.b16 %v10715
        %v10812 = vunpack.c.l.b16 %v10716
        %v10813 = vunpack.c.l.b16 %v10717
        %v10814 = vunpack.c.l.b16 %v10718
        %v10815 = vunpack.c.l.b16 %v10719
        %v10816 = vunpack.c.l.b16 %v10720
        %v10817 = vunpack.c.l.b16 %v10721
        %v10818 = vunpack.c.l.b16 %v10722
        %v10819 = vunpack.c.l.b16 %v10723
        %v10820 = vunpack.c.l.b16 %v10724
        %v10821 = vunpack.c.l.b16 %v10725
        %v10822 = vunpack.c.l.b16 %v10726
        %v10823 = vunpack.c.l.b16 %v10727
        %v10824 = vunpack.c.l.b16 %v10728
        %v10825 = vunpack.c.l.b16 %v10729
        %v10826 = vunpack.c.l.b16 %v10730
        %v10827 = vunpack.c.l.b16 %v10731
        %v10828 = vunpack.c.l.b16 %v10732
        %v10829 = vunpack.c.l.b16 %v10733
        %v10830 = vunpack.c.l.b16 %v10734
        %v10831 = vunpack.c.l.b16 %v10735
        %v10832 = vunpack.c.l.b16 %v10736
        %v10833 = vunpack.c.l.b16 %v10737
        %v10834 = vunpack.c.l.b16 %v10738
        %v10835 = vunpack.c.l.b16 %v10739
        %v10836 = vunpack.c.l.b16 %v10740
        %v10837 = vunpack.c.l.b16 %v10741
        %v10838 = vunpack.c.l.b16 %v10742
        %v10839 = vunpack.c.l.b16 %v10743
        %v10840 = vunpack.c.l.b16 %v10744
        %v10841 = vunpack.c.l.b16 %v10745
        %v10842 = vunpack.c.l.b16 %v10746
        %v10843 = vunpack.c.l.b16 %v10747
        %v10844 = vunpack.c.l.b16 %v10748
        %v10845 = vunpack.c.l.b16 %v10749
        %v10846 = vunpack.c.l.b16 %v10750
        %v10847 = vunpack.c.l.b16 %v10751
        %v10848 = vunpack.c.l.b16 %v10752
        %v10849 = vunpack.c.l.b16 %v10753
        %v10850 = vunpack.c.l.b16 %v10754
        %v10851 = vunpack.c.l.b16 %v10755
        %v10852 = vunpack.c.l.b16 %v10756
        %v10853 = vunpack.c.l.b16 %v10757
        %v10854 = vunpack.c.l.b16 %v10758
        %v10855 = vunpack.c.l.b16 %v10759
        %v10856 = vunpack.c.l.b16 %v10760
        %v10857 = vunpack.c.l.b16 %v10761
        %v10858 = vunpack.c.l.b16 %v10762
        %v10859 = vpack.c.b16 %v10812, %v10811
        %v10860 = vpack.c.b16 %v10814, %v10813
        %v10861 = vpack.c.b16 %v10816, %v10815
        %v10862 = vpack.c.b16 %v10818, %v10817
        %v10863 = vpack.c.b16 %v10820, %v10819
        %v10864 = vpack.c.b16 %v10822, %v10821
        %v10865 = vpack.c.b16 %v10824, %v10823
        %v10866 = vpack.c.b16 %v10826, %v10825
        %v10867 = vpack.c.b16 %v10828, %v10827
        %v10868 = vpack.c.b16 %v10830, %v10829
        %v10869 = vpack.c.b16 %v10832, %v10831
        %v10870 = vpack.c.b16 %v10834, %v10833
        %v10871 = vpack.c.b16 %v10836, %v10835
        %v10872 = vpack.c.b16 %v10838, %v10837
        %v10873 = vpack.c.b16 %v10840, %v10839
        %v10874 = vpack.c.b16 %v10842, %v10841
        %v10875 = vpack.c.b16 %v10844, %v10843
        %v10876 = vpack.c.b16 %v10846, %v10845
        %v10877 = vpack.c.b16 %v10848, %v10847
        %v10878 = vpack.c.b16 %v10850, %v10849
        %v10879 = vpack.c.b16 %v10852, %v10851
        %v10880 = vpack.c.b16 %v10854, %v10853
        %v10881 = vpack.c.b16 %v10856, %v10855
        %v10882 = vpack.c.b16 %v10858, %v10857
        %10907 = vmatpush.bf16.msra.mxu0 %v10866
        %10908 = vmatpush.bf16.msra.mxu0 %v10865
        %10909 = vmatpush.bf16.msra.mxu0 %v10864
        %10910 = vmatpush.bf16.msra.mxu0 %v10863
        %10911 = vmatpush.bf16.msra.mxu0 %v10862
        %10912 = vmatpush.bf16.msra.mxu0 %v10861
        %10913 = vmatpush.bf16.msra.mxu0 %v10860
        %10914 = vmatpush.bf16.msra.mxu0 %v10859
        %10915 = vmatmul.bf16.gmra.mxu0 %v9604
        %v10916 = vpop.f32.mrf.mxu0
        %v10917 = vadd.f32 0.0, %v10916
        %v10918 = vpop.f32.mrf.mxu0
        %v10919 = vadd.f32 0.0, %v10918
        %10920 = vmatmul.bf16.gmra.mxu0 %v9612
        %v10921 = vpop.f32.mrf.mxu0
        %v10922 = vadd.f32 0.0, %v10921
        %v10923 = vpop.f32.mrf.mxu0
        %v10924 = vadd.f32 0.0, %v10923
        %10925 = vmatmul.bf16.gmra.mxu0 %v9620
        %v10926 = vpop.f32.mrf.mxu0
        %v10927 = vadd.f32 0.0, %v10926
        %v10928 = vpop.f32.mrf.mxu0
        %v10929 = vadd.f32 0.0, %v10928
        %10930 = vmatmul.bf16.gmra.mxu0 %v9628
        %v10931 = vpop.f32.mrf.mxu0
        %v10932 = vadd.f32 0.0, %v10931
        %v10933 = vpop.f32.mrf.mxu0
        %v10934 = vadd.f32 0.0, %v10933
        %10935 = vmatmul.bf16.gmra.mxu0 %v9636
        %v10936 = vpop.f32.mrf.mxu0
        %v10937 = vadd.f32 0.0, %v10936
        %v10938 = vpop.f32.mrf.mxu0
        %v10939 = vadd.f32 0.0, %v10938
        %10940 = vmatmul.bf16.gmra.mxu0 %v9644
        %v10941 = vpop.f32.mrf.mxu0
        %v10942 = vadd.f32 0.0, %v10941
        %v10943 = vpop.f32.mrf.mxu0
        %v10944 = vadd.f32 0.0, %v10943
        %10945 = vmatmul.bf16.gmra.mxu0 %v9652
        %v10946 = vpop.f32.mrf.mxu0
        %v10947 = vadd.f32 0.0, %v10946
        %v10948 = vpop.f32.mrf.mxu0
        %v10949 = vadd.f32 0.0, %v10948
        %10950 = vmatmul.bf16.gmra.mxu0 %v9660
        %v10951 = vpop.f32.mrf.mxu0
        %v10952 = vadd.f32 0.0, %v10951
        %v10953 = vpop.f32.mrf.mxu0
        %v10954 = vadd.f32 0.0, %v10953
        %10955 = vmatmul.bf16.gmra.mxu0 %v9668
        %v10956 = vpop.f32.mrf.mxu0
        %v10957 = vadd.f32 0.0, %v10956
        %v10958 = vpop.f32.mrf.mxu0
        %v10959 = vadd.f32 0.0, %v10958
        %10960 = vmatmul.bf16.gmra.mxu0 %v9676
        %v10961 = vpop.f32.mrf.mxu0
        %v10962 = vadd.f32 0.0, %v10961
        %v10963 = vpop.f32.mrf.mxu0
        %v10964 = vadd.f32 0.0, %v10963
        %10965 = vmatmul.bf16.gmra.mxu0 %v9684
        %v10966 = vpop.f32.mrf.mxu0
        %v10967 = vadd.f32 0.0, %v10966
        %v10968 = vpop.f32.mrf.mxu0
        %v10969 = vadd.f32 0.0, %v10968
        %10970 = vmatmul.bf16.gmra.mxu0 %v9692
        %v10971 = vpop.f32.mrf.mxu0
        %v10972 = vadd.f32 0.0, %v10971
        %v10973 = vpop.f32.mrf.mxu0
        %v10974 = vadd.f32 0.0, %v10973
        %10975 = vmatmul.bf16.gmra.mxu0 %v9700
        %v10976 = vpop.f32.mrf.mxu0
        %v10977 = vadd.f32 0.0, %v10976
        %v10978 = vpop.f32.mrf.mxu0
        %v10979 = vadd.f32 0.0, %v10978
        %10980 = vmatmul.bf16.gmra.mxu0 %v9708
        %v10981 = vpop.f32.mrf.mxu0
        %v10982 = vadd.f32 0.0, %v10981
        %v10983 = vpop.f32.mrf.mxu0
        %v10984 = vadd.f32 0.0, %v10983
        %10985 = vmatmul.bf16.gmra.mxu0 %v9839
        %v10986 = vpop.f32.mrf.mxu0
        %v10987 = vadd.f32 0.0, %v10986
        %v10988 = vpop.f32.mrf.mxu0
        %v10989 = vadd.f32 0.0, %v10988
        %10990 = vmatmul.bf16.gmra.mxu0 %v569
        %v10991 = vpop.f32.mrf.mxu0
        %v10992 = vadd.f32 0.0, %v10991
        %v10993 = vpop.f32.mrf.mxu0
        %v10994 = vadd.f32 0.0, %v10993
        %10995 = vdwg.mxu0
        %10996 = vmatpush.bf16.msra.mxu0 %v10874
        %10997 = vmatpush.bf16.msra.mxu0 %v10873
        %10998 = vmatpush.bf16.msra.mxu0 %v10872
        %10999 = vmatpush.bf16.msra.mxu0 %v10871
        %11000 = vmatpush.bf16.msra.mxu0 %v10870
        %11001 = vmatpush.bf16.msra.mxu0 %v10869
        %11002 = vmatpush.bf16.msra.mxu0 %v10868
        %11003 = vmatpush.bf16.msra.mxu0 %v10867
        %11004 = vmatmul.bf16.gmra.mxu0 %v9558
        %v11005 = vpop.f32.mrf.mxu0
        %v11006 = vadd.f32 %v10917, %v11005
        %v11007 = vpop.f32.mrf.mxu0
        %v11008 = vadd.f32 %v10919, %v11007
        %11009 = vmatmul.bf16.gmra.mxu0 %v9559
        %v11010 = vpop.f32.mrf.mxu0
        %v11011 = vadd.f32 %v10922, %v11010
        %v11012 = vpop.f32.mrf.mxu0
        %v11013 = vadd.f32 %v10924, %v11012
        %11014 = vmatmul.bf16.gmra.mxu0 %v9560
        %v11015 = vpop.f32.mrf.mxu0
        %v11016 = vadd.f32 %v10927, %v11015
        %v11017 = vpop.f32.mrf.mxu0
        %v11018 = vadd.f32 %v10929, %v11017
        %11019 = vmatmul.bf16.gmra.mxu0 %v9561
        %v11020 = vpop.f32.mrf.mxu0
        %v11021 = vadd.f32 %v10932, %v11020
        %v11022 = vpop.f32.mrf.mxu0
        %v11023 = vadd.f32 %v10934, %v11022
        %11024 = vmatmul.bf16.gmra.mxu0 %v9562
        %v11025 = vpop.f32.mrf.mxu0
        %v11026 = vadd.f32 %v10937, %v11025
        %v11027 = vpop.f32.mrf.mxu0
        %v11028 = vadd.f32 %v10939, %v11027
        %11029 = vmatmul.bf16.gmra.mxu0 %v9563
        %v11030 = vpop.f32.mrf.mxu0
        %v11031 = vadd.f32 %v10942, %v11030
        %v11032 = vpop.f32.mrf.mxu0
        %v11033 = vadd.f32 %v10944, %v11032
        %11034 = vmatmul.bf16.gmra.mxu0 %v9564
        %v11035 = vpop.f32.mrf.mxu0
        %v11036 = vadd.f32 %v10947, %v11035
        %v11037 = vpop.f32.mrf.mxu0
        %v11038 = vadd.f32 %v10949, %v11037
        %11039 = vmatmul.bf16.gmra.mxu0 %v9565
        %v11040 = vpop.f32.mrf.mxu0
        %v11041 = vadd.f32 %v10952, %v11040
        %v11042 = vpop.f32.mrf.mxu0
        %v11043 = vadd.f32 %v10954, %v11042
        %11044 = vmatmul.bf16.gmra.mxu0 %v9566
        %v11045 = vpop.f32.mrf.mxu0
        %v11046 = vadd.f32 %v10957, %v11045
        %v11047 = vpop.f32.mrf.mxu0
        %v11048 = vadd.f32 %v10959, %v11047
        %11049 = vmatmul.bf16.gmra.mxu0 %v9567
        %v11050 = vpop.f32.mrf.mxu0
        %v11051 = vadd.f32 %v10962, %v11050
        %v11052 = vpop.f32.mrf.mxu0
        %v11053 = vadd.f32 %v10964, %v11052
        %11054 = vmatmul.bf16.gmra.mxu0 %v9568
        %v11055 = vpop.f32.mrf.mxu0
        %v11056 = vadd.f32 %v10967, %v11055
        %v11057 = vpop.f32.mrf.mxu0
        %v11058 = vadd.f32 %v10969, %v11057
        %11059 = vmatmul.bf16.gmra.mxu0 %v9569
        %v11060 = vpop.f32.mrf.mxu0
        %v11061 = vadd.f32 %v10972, %v11060
        %v11062 = vpop.f32.mrf.mxu0
        %v11063 = vadd.f32 %v10974, %v11062
        %11064 = vmatmul.bf16.gmra.mxu0 %v9570
        %v11065 = vpop.f32.mrf.mxu0
        %v11066 = vadd.f32 %v10977, %v11065
        %v11067 = vpop.f32.mrf.mxu0
        %v11068 = vadd.f32 %v10979, %v11067
        %11069 = vmatmul.bf16.gmra.mxu0 %v9571
        %v11070 = vpop.f32.mrf.mxu0
        %v11071 = vadd.f32 %v10982, %v11070
        %v11072 = vpop.f32.mrf.mxu0
        %v11073 = vadd.f32 %v10984, %v11072
        %11074 = vmatmul.bf16.gmra.mxu0 %v9572
        %v11075 = vpop.f32.mrf.mxu0
        %v11076 = vadd.f32 %v10987, %v11075
        %v11077 = vpop.f32.mrf.mxu0
        %v11078 = vadd.f32 %v10989, %v11077
        %11079 = vmatmul.bf16.gmra.mxu0 0
        %v11080 = vpop.f32.mrf.mxu0
        %v11081 = vadd.f32 %v10992, %v11080
        %v11082 = vpop.f32.mrf.mxu0
        %v11083 = vadd.f32 %v10994, %v11082
        %11084 = vdwg.mxu0
        %11085 = vmatpush.bf16.msra.mxu0 %v10882
        %11086 = vmatpush.bf16.msra.mxu0 %v10881
        %11087 = vmatpush.bf16.msra.mxu0 %v10880
        %11088 = vmatpush.bf16.msra.mxu0 %v10879
        %11089 = vmatpush.bf16.msra.mxu0 %v10878
        %11090 = vmatpush.bf16.msra.mxu0 %v10877
        %11091 = vmatpush.bf16.msra.mxu0 %v10876
        %11092 = vmatpush.bf16.msra.mxu0 %v10875
        %11093 = vmatmul.bf16.gmra.mxu0 %v9729
        %v11094 = vpop.f32.mrf.mxu0
        %v11095 = vadd.f32 %v11006, %v11094
        %v11096 = vpop.f32.mrf.mxu0
        %v11097 = vadd.f32 %v11008, %v11096
        %11098 = vmatmul.bf16.gmra.mxu0 %v9732
        %v11099 = vpop.f32.mrf.mxu0
        %v11100 = vadd.f32 %v11011, %v11099
        %v11101 = vpop.f32.mrf.mxu0
        %v11102 = vadd.f32 %v11013, %v11101
        %11103 = vmatmul.bf16.gmra.mxu0 %v9735
        %v11104 = vpop.f32.mrf.mxu0
        %v11105 = vadd.f32 %v11016, %v11104
        %v11106 = vpop.f32.mrf.mxu0
        %v11107 = vadd.f32 %v11018, %v11106
        %11108 = vmatmul.bf16.gmra.mxu0 %v9738
        %v11109 = vpop.f32.mrf.mxu0
        %v11110 = vadd.f32 %v11021, %v11109
        %v11111 = vpop.f32.mrf.mxu0
        %v11112 = vadd.f32 %v11023, %v11111
        %11113 = vmatmul.bf16.gmra.mxu0 %v9741
        %v11114 = vpop.f32.mrf.mxu0
        %v11115 = vadd.f32 %v11026, %v11114
        %v11116 = vpop.f32.mrf.mxu0
        %v11117 = vadd.f32 %v11028, %v11116
        %11118 = vmatmul.bf16.gmra.mxu0 %v9744
        %v11119 = vpop.f32.mrf.mxu0
        %v11120 = vadd.f32 %v11031, %v11119
        %v11121 = vpop.f32.mrf.mxu0
        %v11122 = vadd.f32 %v11033, %v11121
        %11123 = vmatmul.bf16.gmra.mxu0 %v9747
        %v11124 = vpop.f32.mrf.mxu0
        %v11125 = vadd.f32 %v11036, %v11124
        %v11126 = vpop.f32.mrf.mxu0
        %v11127 = vadd.f32 %v11038, %v11126
        %11128 = vmatmul.bf16.gmra.mxu0 %v9750
        %v11129 = vpop.f32.mrf.mxu0
        %v11130 = vadd.f32 %v11041, %v11129
        %v11131 = vpop.f32.mrf.mxu0
        %v11132 = vadd.f32 %v11043, %v11131
        %11133 = vmatmul.bf16.gmra.mxu0 %v9753
        %v11134 = vpop.f32.mrf.mxu0
        %v11135 = vadd.f32 %v11046, %v11134
        %v11136 = vpop.f32.mrf.mxu0
        %v11137 = vadd.f32 %v11048, %v11136
        %11138 = vmatmul.bf16.gmra.mxu0 %v9756
        %v11139 = vpop.f32.mrf.mxu0
        %v11140 = vadd.f32 %v11051, %v11139
        %v11141 = vpop.f32.mrf.mxu0
        %v11142 = vadd.f32 %v11053, %v11141
        %11143 = vmatmul.bf16.gmra.mxu0 %v9759
        %v11144 = vpop.f32.mrf.mxu0
        %v11145 = vadd.f32 %v11056, %v11144
        %v11146 = vpop.f32.mrf.mxu0
        %v11147 = vadd.f32 %v11058, %v11146
        %11148 = vmatmul.bf16.gmra.mxu0 %v9762
        %v11149 = vpop.f32.mrf.mxu0
        %v11150 = vadd.f32 %v11061, %v11149
        %v11151 = vpop.f32.mrf.mxu0
        %v11152 = vadd.f32 %v11063, %v11151
        %11153 = vmatmul.bf16.gmra.mxu0 %v9765
        %v11154 = vpop.f32.mrf.mxu0
        %v11155 = vadd.f32 %v11066, %v11154
        %v11156 = vpop.f32.mrf.mxu0
        %v11157 = vadd.f32 %v11068, %v11156
        %11158 = vmatmul.bf16.gmra.mxu0 %v9768
        %v11159 = vpop.f32.mrf.mxu0
        %v11160 = vadd.f32 %v11071, %v11159
        %v11161 = vpop.f32.mrf.mxu0
        %v11162 = vadd.f32 %v11073, %v11161
        %11163 = vmatmul.bf16.gmra.mxu0 %v9843
        %v11164 = vpop.f32.mrf.mxu0
        %v11165 = vadd.f32 %v11076, %v11164
        %v11166 = vpop.f32.mrf.mxu0
        %v11167 = vadd.f32 %v11078, %v11166
        %11168 = vmatmul.bf16.gmra.mxu0 %v709
        %v11169 = vpop.f32.mrf.mxu0
        %v11170 = vadd.f32 %v11081, %v11169
        %v11171 = vpop.f32.mrf.mxu0
        %v11172 = vadd.f32 %v11083, %v11171
        %11173 = vdwg.mxu0
        %v11174 = vadd.f32 %v10636, %v11095
        %v11175 = vadd.f32 %v10638, %v11097
        %v11176 = vadd.f32 %v10641, %v11100
        %v11177 = vadd.f32 %v10643, %v11102
        %v11178 = vadd.f32 %v10646, %v11105
        %v11179 = vadd.f32 %v10648, %v11107
        %v11180 = vadd.f32 %v10651, %v11110
        %v11181 = vadd.f32 %v10653, %v11112
        %v11182 = vadd.f32 %v10656, %v11115
        %v11183 = vadd.f32 %v10658, %v11117
        %v11184 = vadd.f32 %v10661, %v11120
        %v11185 = vadd.f32 %v10663, %v11122
        %v11186 = vadd.f32 %v10666, %v11125
        %v11187 = vadd.f32 %v10668, %v11127
        %v11188 = vadd.f32 %v10671, %v11130
        %v11189 = vadd.f32 %v10673, %v11132
        %v11190 = vadd.f32 %v10676, %v11135
        %v11191 = vadd.f32 %v10678, %v11137
        %v11192 = vadd.f32 %v10681, %v11140
        %v11193 = vadd.f32 %v10683, %v11142
        %v11194 = vadd.f32 %v10686, %v11145
        %v11195 = vadd.f32 %v10688, %v11147
        %v11196 = vadd.f32 %v10691, %v11150
        %v11197 = vadd.f32 %v10693, %v11152
        %v11198 = vadd.f32 %v10696, %v11155
        %v11199 = vadd.f32 %v10698, %v11157
        %v11200 = vadd.f32 %v10701, %v11160
        %v11201 = vadd.f32 %v10703, %v11162
        %v11202 = vadd.f32 %v10706, %v11165
        %v11203 = vadd.f32 %v10708, %v11167
        %v11204 = vadd.f32 %v10711, %v11170
        %v11205 = vadd.f32 %v10713, %v11172
        %v11206 = vld [vmem:[%s11] sm:$0x1]
        %v11208 = vperm.slane %v11206, 0
        %v11210 = vadd.f32 %v11174, %v11208
        %v11211 = vadd.f32 %v11175, %v11208
        %v11212 = vadd.f32 %v11176, %v11208
        %v11213 = vadd.f32 %v11177, %v11208
        %v11214 = vadd.f32 %v11178, %v11208
        %v11215 = vadd.f32 %v11179, %v11208
        %v11216 = vadd.f32 %v11180, %v11208
        %v11217 = vadd.f32 %v11181, %v11208
        %v11218 = vadd.f32 %v11182, %v11208
        %v11219 = vadd.f32 %v11183, %v11208
        %v11220 = vadd.f32 %v11184, %v11208
        %v11221 = vadd.f32 %v11185, %v11208
        %v11222 = vadd.f32 %v11186, %v11208
        %v11223 = vadd.f32 %v11187, %v11208
        %v11224 = vadd.f32 %v11188, %v11208
        %v11225 = vadd.f32 %v11189, %v11208
        %v11226 = vadd.f32 %v11190, %v11208
        %v11227 = vadd.f32 %v11191, %v11208
        %v11228 = vadd.f32 %v11192, %v11208
        %v11229 = vadd.f32 %v11193, %v11208
        %v11230 = vadd.f32 %v11194, %v11208
        %v11231 = vadd.f32 %v11195, %v11208
        %v11232 = vadd.f32 %v11196, %v11208
        %v11233 = vadd.f32 %v11197, %v11208
        %v11234 = vadd.f32 %v11198, %v11208
        %v11235 = vadd.f32 %v11199, %v11208
        %v11236 = vadd.f32 %v11200, %v11208
        %v11237 = vadd.f32 %v11201, %v11208
        %v11238 = vadd.f32 %v11202, %v11208
        %v11239 = vadd.f32 %v11203, %v11208
        %v11240 = vadd.f32 %v11204, %v11208
        %v11241 = vadd.f32 %v11205, %v11208
        %v11242 = vadd.f32 %v7456, %v11210
        %v11243 = vadd.f32 %v7457, %v11211
        %v11244 = vadd.f32 %v7458, %v11212
        %v11245 = vadd.f32 %v7459, %v11213
        %v11246 = vadd.f32 %v7460, %v11214
        %v11247 = vadd.f32 %v7461, %v11215
        %v11248 = vadd.f32 %v7462, %v11216
        %v11249 = vadd.f32 %v7463, %v11217
        %v11250 = vadd.f32 %v7464, %v11218
        %v11251 = vadd.f32 %v7465, %v11219
        %v11252 = vadd.f32 %v7466, %v11220
        %v11253 = vadd.f32 %v7467, %v11221
        %v11254 = vadd.f32 %v7468, %v11222
        %v11255 = vadd.f32 %v7469, %v11223
        %v11256 = vadd.f32 %v7470, %v11224
        %v11257 = vadd.f32 %v7471, %v11225
        %v11258 = vadd.f32 %v7472, %v11226
        %v11259 = vadd.f32 %v7473, %v11227
        %v11260 = vadd.f32 %v7474, %v11228
        %v11261 = vadd.f32 %v7475, %v11229
        %v11262 = vadd.f32 %v7476, %v11230
        %v11263 = vadd.f32 %v7477, %v11231
        %v11264 = vadd.f32 %v7478, %v11232
        %v11265 = vadd.f32 %v7479, %v11233
        %v11266 = vadd.f32 %v7480, %v11234
        %v11267 = vadd.f32 %v7481, %v11235
        %v11268 = vadd.f32 %v7482, %v11236
        %v11269 = vadd.f32 %v7483, %v11237
        %v11270 = vadd.f32 %v7484, %v11238
        %v11271 = vadd.f32 %v7485, %v11239
        %v11272 = vadd.f32 %v7486, %v11240
        %v11273 = vadd.f32 %v7487, %v11241
        %11274 = vst [vmem:[%s421] sm:$0xff] %v11242
        %11275 = vst [vmem:[%s421 + $0x8] sm:$0xff] %v11243
        %11276 = vst [vmem:[%s421 + $0x10] sm:$0xff] %v11244
        %11277 = vst [vmem:[%s421 + $0x18] sm:$0xff] %v11245
        %11278 = vst [vmem:[%s421 + $0x20] sm:$0xff] %v11246
        %11279 = vst [vmem:[%s421 + $0x28] sm:$0xff] %v11247
        %11280 = vst [vmem:[%s421 + $0x30] sm:$0xff] %v11248
        %11281 = vst [vmem:[%s421 + $0x38] sm:$0xff] %v11249
        %11282 = vst [vmem:[%s421 + $0x40] sm:$0xff] %v11250
        %11283 = vst [vmem:[%s421 + $0x48] sm:$0xff] %v11251
        %11284 = vst [vmem:[%s421 + $0x50] sm:$0xff] %v11252
        %11285 = vst [vmem:[%s421 + $0x58] sm:$0xff] %v11253
        %11286 = vst [vmem:[%s421 + $0x60] sm:$0xff] %v11254
        %11287 = vst [vmem:[%s421 + $0x68] sm:$0xff] %v11255
        %11288 = vst [vmem:[%s421 + $0x70] sm:$0xff] %v11256
        %11289 = vst [vmem:[%s421 + $0x78] sm:$0xff] %v11257
        %11290 = vst [vmem:[%s421 + $0x80] sm:$0xff] %v11258
        %11291 = vst [vmem:[%s421 + $0x88] sm:$0xff] %v11259
        %11292 = vst [vmem:[%s421 + $0x90] sm:$0xff] %v11260
        %11293 = vst [vmem:[%s421 + $0x98] sm:$0xff] %v11261
        %11294 = vst [vmem:[%s421 + $0xa0] sm:$0xff] %v11262
        %11295 = vst [vmem:[%s421 + $0xa8] sm:$0xff] %v11263
        %11296 = vst [vmem:[%s421 + $0xb0] sm:$0xff] %v11264
        %11297 = vst [vmem:[%s421 + $0xb8] sm:$0xff] %v11265
        %11298 = vst [vmem:[%s421 + $0xc0] sm:$0xff] %v11266
        %11299 = vst [vmem:[%s421 + $0xc8] sm:$0xff] %v11267
        %11300 = vst [vmem:[%s421 + $0xd0] sm:$0xff] %v11268
        %11301 = vst [vmem:[%s421 + $0xd8] sm:$0xff] %v11269
        %11302 = vst [vmem:[%s421 + $0xe0] sm:$0xff] %v11270
        %11303 = vst [vmem:[%s421 + $0xe8] sm:$0xff] %v11271
        %11304 = vst [vmem:[%s421 + $0xf0] sm:$0xff] %v11272
        %11305 = vst [vmem:[%s421 + $0xf8] sm:$0xff] %v11273
        %s11306 = sand.u32 %s296, 1
        %s11307 = scalar_lea.sflag [#allocation5], %s11306
        %s11308 = sand.u32 %s296, 1
        %s11309 = smul.addr %s11308, 256
        %s11310 = scalar_lea.vmem [#allocation4], %s11309
        // Predicated region
        $region69: #{refine_forward.1} parent=67 // pred_check
          %p11311 = pneg %p306
        $region70: #{refine_forward.1} parent=67 // pred_check_branch
          %11313 = sbr.rel (%p11311) target = $region72
        $region71: #{refine_forward.1} parent=67 // pred_region
          %11315 = vsyncadd %s11307, 0
          %s11316 = smul.addr %s26, 32
          %s11317 = smul.addr %s11316, 8
          %s11318 = scalar_lea.hbm %s12, %s11317
          %s11319 = sshll.u32 %s11310, 4
          %s11320 = int_to_ptr.vmem [resolvable:$true] %s11319
          %s11321 = sshll.u32 %s11318, 4
          %s11322 = int_to_ptr.hbm [resolvable:$true] %s11321
          %11327 = dma.vmem_to_hbm [thread:$0]  %s11320, 4096, %s11322, %s11307, 128, 128, 8
        $region72: #{refine_forward.1} parent=67 // pred_fallthru
          _
      $region68: #{refine_forward.1} parent=5 // pred_fallthru
        _
      %p11328 = scmp.le.s32.totalorder 2, %s21
      // Predicated region
      $region73: #{refine_forward.1} parent=5 // pred_check
        %p11329 = pneg %p11328
      $region74: #{refine_forward.1} parent=5 // pred_check_branch
        %11331 = sbr.rel (%p11329) target = $region76
      $region75: #{refine_forward.1} parent=5 // pred_region
        %s11332 = ssub.s32 %s21, 2
        // Predicated region
        $region77: #{refine_forward.1} parent=75 // pred_check
          %p11333 = pneg %p312
        $region78: #{refine_forward.1} parent=75 // pred_check_branch
          %11335 = sbr.rel (%p11333) target = $region80
        $region79: #{refine_forward.1} parent=75 // pred_region
          %s11336 = sand.u32 %s297, 1
          %s11337 = scalar_lea.sflag [#allocation5], %s11336
          %s11338 = sand.u32 %s297, 1
          %s11339 = smul.addr %s11338, 256
          %s11340 = scalar_lea.vmem [#allocation4], %s11339
          %11342 = dma.done %s11337, 4096
        $region80: #{refine_forward.1} parent=75 // pred_fallthru
          _
      $region76: #{refine_forward.1} parent=5 // pred_fallthru
        _
    $region6: #{refine_forward.1} parent=1 // loop_footer
      %s25 = sadd.s32 1, %s21
    $region7: #{refine_forward.1} parent=1 // loop_footer_branch
      %20 = sbr.rel target = $region3
    $region8: #{refine_forward.1} parent=1 // loop_exit
      _
    %11343 = vsyncpa [#allocation5], 1
    %s11344 = scalar_lea.sflag [#allocation5], 1
    %11345 = vsyncpa %s11344, 1

</llo_original>
